<compile_context>
chip_gen: v5e
topology: v5e:2x2
jax: 0.10.0
libtpu: 0.0.40
codegen_flags: <defaults>
</compile_context>

<pallas_src>
import jax
import jax.numpy as jnp
from jax.experimental import pallas as pl
from jax.experimental.pallas import tpu as pltpu

H = W = 32
C_IN = 3
C_OUT = 16
KH = KW = 3
HP = WP = 16                  # pooled spatial dims (32 / 2)
N_PIX = HP * WP               # 256 pooled pixels
PATCH = KH * KW * C_IN        # 27
K_PAD = 32                    # patch dim zero-padded for clean sublane tiling
FC_IN = C_OUT * N_PIX         # 4096
N_CLASSES = 10
N_PAD = 128                   # FC output lanes padded to one full lane tile
BLOCK_N = 8                   # images per grid step (raise to 32 to further
                              #  amortize the FC weight pass; still VMEM-safe)


# ---------------------------------------------------------------------------
# Fused kernel: conv (im2col matmul) + bias + ReLU + 2x2 maxpool + flatten + FC
# ---------------------------------------------------------------------------
def convnet3_fused_kernel(p_ref, wc_ref, bc_ref, wf_ref, bf_ref, out_ref, acc_ref):
    """
    p_ref  : (BLOCK_N, K_PAD, 4*N_PIX) bf16  im2col patches
    wc_ref : (C_OUT, K_PAD)            bf16  conv weight
    bc_ref : (C_OUT, 1)                f32   conv bias
    wf_ref : (FC_IN, N_PAD)            bf16  fc weight (rows = c*256+hw, cols padded)
    bf_ref : (1, N_PAD)                f32   fc bias (padded)
    out_ref: (BLOCK_N, N_PAD)          f32
    acc_ref: (BLOCK_N, FC_IN)          f32   VMEM-resident pooled activations
    """
    wc = wc_ref[...]
    bc = bc_ref[...]
    for b in range(BLOCK_N):
        # conv as one MXU stream per image: (16,32)@(32,1024) -> (16,1024) f32
        conv = jnp.dot(wc, p_ref[b], preferred_element_type=jnp.float32)
        conv = jnp.maximum(conv + bc, 0.0)                       # bias + ReLU (f32)
        # 2x2 max-pool == max over the 4 pool-window lane groups (256 lanes each)
        pooled = jnp.maximum(
            jnp.maximum(conv[:, 0 * N_PIX:1 * N_PIX], conv[:, 1 * N_PIX:2 * N_PIX]),
            jnp.maximum(conv[:, 2 * N_PIX:3 * N_PIX], conv[:, 3 * N_PIX:4 * N_PIX]))
        # flatten (cout, hw) -> lane index cout*256 + hw (== PyTorch .view order),
        # stored straight into the VMEM scratch (never leaves VMEM)
        for c in range(C_OUT):
            acc_ref[b:b + 1, c * N_PIX:(c + 1) * N_PIX] = pooled[c:c + 1, :]
    # fused FC on the whole batch block: (BLOCK_N,4096)@(4096,128) + bias
    out_ref[...] = (
        jnp.dot(acc_ref[...].astype(jnp.bfloat16), wf_ref[...],
                preferred_element_type=jnp.float32)
        + bf_ref[...])


def convnet3_pallas(patches, wc, bc, wf, bf):
    n_pad = patches.shape[0]
    return pl.pallas_call(
        convnet3_fused_kernel,
        out_shape=jax.ShapeDtypeStruct((n_pad, N_PAD), jnp.float32),
        grid=(n_pad // BLOCK_N,),
        in_specs=[
            pl.BlockSpec((BLOCK_N, K_PAD, 4 * N_PIX), lambda i: (i, 0, 0)),
            pl.BlockSpec((C_OUT, K_PAD), lambda i: (0, 0)),
            pl.BlockSpec((C_OUT, 1), lambda i: (0, 0)),
            pl.BlockSpec((FC_IN, N_PAD), lambda i: (0, 0)),   # fc weight stays resident
            pl.BlockSpec((1, N_PAD), lambda i: (0, 0)),
        ],
        out_specs=pl.BlockSpec((BLOCK_N, N_PAD), lambda i: (i, 0)),
        scratch_shapes=[pltpu.VMEM((BLOCK_N, FC_IN), jnp.float32)],
        compiler_params=pltpu.CompilerParams(
            dimension_semantics=("parallel",)),
    )(patches, wc, bc, wf, bf)


# ---------------------------------------------------------------------------
# Glue: parameter setup, im2col / layout packing (plain JAX)
# ---------------------------------------------------------------------------
def make_params(key):
    """Deterministic init mimicking PyTorch default uniform(-1/sqrt(fan_in), ...)."""
    k1, k2, k3, k4 = jax.random.split(key, 4)
    bcv = 1.0 / jnp.sqrt(float(C_IN * KH * KW))
    w_conv = jax.random.uniform(k1, (C_OUT, C_IN, KH, KW), jnp.float32, -bcv, bcv)
    b_conv = jax.random.uniform(k2, (C_OUT,), jnp.float32, -bcv, bcv)
    bfv = 1.0 / jnp.sqrt(float(FC_IN))
    w_fc = jax.random.uniform(k3, (N_CLASSES, FC_IN), jnp.float32, -bfv, bfv)
    b_fc = jax.random.uniform(k4, (N_CLASSES,), jnp.float32, -bfv, bfv)
    return w_conv, b_conv, w_fc, b_fc


def convnet3_forward(x_nchw, w_conv, b_conv, w_fc, b_fc):
    n = x_nchw.shape[0]
    n_pad = ((n + BLOCK_N - 1) // BLOCK_N) * BLOCK_N

    # NCHW -> NHWC (bf16), pad batch to a multiple of BLOCK_N, zero-pad spatial by 1
    x = jnp.transpose(x_nchw, (0, 2, 3, 1)).astype(jnp.bfloat16)
    if n_pad != n:
        x = jnp.pad(x, ((0, n_pad - n), (0, 0), (0, 0), (0, 0)))
    x_pad = jnp.pad(x, ((0, 0), (1, 1), (1, 1), (0, 0)))

    # im2col with lane-dense packing:
    #   row  index = (ky*3+kx)*3 + cin            (zero-padded 27 -> 32)
    #   lane index = (wy*2+wx)*256 + ph*16 + pw   (pool window major, pooled pixel minor)
    taps = [x_pad[:, ky:ky + H, kx:kx + W, :] for ky in range(KH) for kx in range(KW)]
    p = jnp.stack(taps, axis=1)                                # (n, 9, 32, 32, 3)
    p = p.reshape(n_pad, KH * KW, HP, 2, WP, 2, C_IN)          # y=(ph,wy), x=(pw,wx)
    p = p.transpose(0, 1, 6, 3, 5, 2, 4)                       # (n, 9, cin, wy, wx, ph, pw)
    p = p.reshape(n_pad, PATCH, 4 * N_PIX)                     # (n, 27, 1024)
    p = jnp.pad(p, ((0, 0), (0, K_PAD - PATCH), (0, 0)))       # (n, 32, 1024) bf16

    # conv weight (cout, cin, ky, kx) -> (cout, (ky,kx,cin)) zero-padded to 32
    wc = jnp.transpose(w_conv, (0, 2, 3, 1)).reshape(C_OUT, PATCH)
    wc = jnp.pad(wc, ((0, 0), (0, K_PAD - PATCH))).astype(jnp.bfloat16)
    bc = b_conv.reshape(C_OUT, 1).astype(jnp.float32)

    # fc weight: pooled flatten order is already PyTorch's c*256+hw -> just transpose,
    # pad classes 10 -> 128 for lane-dense (unmasked) output stores
    wf = jnp.pad(w_fc.T, ((0, 0), (0, N_PAD - N_CLASSES))).astype(jnp.bfloat16)
    bf = jnp.pad(b_fc, (0, N_PAD - N_CLASSES)).reshape(1, N_PAD).astype(jnp.float32)

    out = convnet3_pallas(p, wc, bc, wf, bf)                   # (n_pad, 128) f32
    return out[:n, :N_CLASSES]


def reference_forward(x_nchw, w_conv, b_conv, w_fc, b_fc):
    """Plain-JAX f32 reference with PyTorch semantics, for correctness check."""
    y = jax.lax.conv_general_dilated(
        x_nchw, w_conv, window_strides=(1, 1), padding=((1, 1), (1, 1)),
        dimension_numbers=("NCHW", "OIHW", "NCHW"))
    y = jax.nn.relu(y + b_conv.reshape(1, C_OUT, 1, 1))
    y = jax.lax.reduce_window(
        y, -jnp.inf, jax.lax.max,
        window_dimensions=(1, 1, 2, 2), window_strides=(1, 1, 2, 2),
        padding="VALID")
    y = y.reshape(y.shape[0], -1)
    return y @ w_fc.T + b_fc


if __name__ == "__main__":
    key = jax.random.PRNGKey(0)
    kx, kp = jax.random.split(key)
    x = jax.random.normal(kx, (2, C_IN, H, W), jnp.float32)
    w_conv, b_conv, w_fc, b_fc = make_params(kp)

    out = jax.jit(convnet3_forward)(x, w_conv, b_conv, w_fc, b_fc)
    out = jax.block_until_ready(out)

    ref = reference_forward(x, w_conv, b_conv, w_fc, b_fc)
    assert out.shape == (2, N_CLASSES)
    max_err = float(jnp.max(jnp.abs(out - ref)))
    assert jnp.allclose(out, ref, atol=5e-2, rtol=5e-2), f"max abs err {max_err}"
    print("KERNEL_OK")
</pallas_src>

<mosaic_0001>
module attributes {stable_mosaic.version = 11 : i64} {
  func.func @convnet3_fused_kernel(%arg0: i32, %arg1: memref<8x32x1024xbf16, #tpu.memory_space<vmem>>, %arg2: memref<16x32xbf16, #tpu.memory_space<vmem>>, %arg3: memref<16x1xf32, #tpu.memory_space<vmem>>, %arg4: memref<4096x128xbf16, #tpu.memory_space<vmem>>, %arg5: memref<1x128xf32, #tpu.memory_space<vmem>>, %arg6: memref<8x128xf32, #tpu.memory_space<vmem>>, %arg7: memref<8x4096xf32, #tpu.memory_space<vmem>>) attributes {dimension_semantics = [#tpu.dimension_semantics<parallel>], iteration_bounds = array<i64: 1>, scalar_prefetch = 0 : i64, scratch_operands = 1 : i64, tpu.core_type = #tpu.core_type<tc>, window_params = [{transform_indices = @transform_0, window_bounds = array<i64: 8, 32, 1024>}, {pipeline_mode = #tpu.pipeline_mode<synchronous>, transform_indices = @transform_1, window_bounds = array<i64: 16, 32>}, {pipeline_mode = #tpu.pipeline_mode<synchronous>, transform_indices = @transform_2, window_bounds = array<i64: 16, 1>}, {pipeline_mode = #tpu.pipeline_mode<synchronous>, transform_indices = @transform_3, window_bounds = array<i64: 4096, 128>}, {pipeline_mode = #tpu.pipeline_mode<synchronous>, transform_indices = @transform_4, window_bounds = array<i64: 1, 128>}, {transform_indices = @transform_5, window_bounds = array<i64: 8, 128>}]} {
    %c0 = arith.constant 0 : index
    %c0_0 = arith.constant 0 : index
    %0 = vector.load %arg2[%c0, %c0_0] : memref<16x32xbf16, #tpu.memory_space<vmem>>, vector<16x32xbf16>
    %c0_1 = arith.constant 0 : index
    %c0_2 = arith.constant 0 : index
    %1 = vector.load %arg3[%c0_1, %c0_2] : memref<16x1xf32, #tpu.memory_space<vmem>>, vector<16x1xf32>
    %c0_3 = arith.constant 0 : index
    %c0_4 = arith.constant 0 : index
    %c0_5 = arith.constant 0 : index
    %2 = vector.load %arg1[%c0_3, %c0_4, %c0_5] : memref<8x32x1024xbf16, #tpu.memory_space<vmem>>, vector<1x32x1024xbf16>
    %3 = vector.shape_cast %2 : vector<1x32x1024xbf16> to vector<32x1024xbf16>
    %cst = arith.constant dense<0.000000e+00> : vector<16x1024xf32>
    %4 = tpu.matmul %0, %3, %cst {dimension_numbers = #tpu.dot_dimension_numbers<[1], [0], [0], [1], [0, 0, 1, 1], [], []>} : vector<16x32xbf16>, vector<32x1024xbf16>, vector<16x1024xf32> -> vector<16x1024xf32>
    %5 = vector.broadcast %1 : vector<16x1xf32> to vector<16x1024xf32>
    %6 = arith.addf %4, %5 : vector<16x1024xf32>
    %cst_6 = arith.constant 0.000000e+00 : f32
    %7 = vector.broadcast %cst_6 : f32 to vector<16x1024xf32>
    %8 = arith.maximumf %6, %7 : vector<16x1024xf32>
    %9 = vector.extract_strided_slice %8 {offsets = [0, 0], sizes = [16, 256], strides = [1, 1]} : vector<16x1024xf32> to vector<16x256xf32>
    %10 = vector.extract_strided_slice %8 {offsets = [0, 256], sizes = [16, 256], strides = [1, 1]} : vector<16x1024xf32> to vector<16x256xf32>
    %11 = arith.maximumf %9, %10 : vector<16x256xf32>
    %12 = vector.extract_strided_slice %8 {offsets = [0, 512], sizes = [16, 256], strides = [1, 1]} : vector<16x1024xf32> to vector<16x256xf32>
    %13 = vector.extract_strided_slice %8 {offsets = [0, 768], sizes = [16, 256], strides = [1, 1]} : vector<16x1024xf32> to vector<16x256xf32>
    %14 = arith.maximumf %12, %13 : vector<16x256xf32>
    %15 = arith.maximumf %11, %14 : vector<16x256xf32>
    %16 = vector.extract_strided_slice %15 {offsets = [0, 0], sizes = [1, 256], strides = [1, 1]} : vector<16x256xf32> to vector<1x256xf32>
    %c0_7 = arith.constant 0 : index
    %c0_8 = arith.constant 0 : index
    %17 = vector.load %arg7[%c0_7, %c0_8] : memref<8x4096xf32, #tpu.memory_space<vmem>>, vector<1x256xf32>
    tpu.vector_store %arg7[%c0_7, %c0_8], %16 {strides = array<i32>} : memref<8x4096xf32, #tpu.memory_space<vmem>>, vector<1x256xf32>,
    %18 = vector.extract_strided_slice %15 {offsets = [1, 0], sizes = [1, 256], strides = [1, 1]} : vector<16x256xf32> to vector<1x256xf32>
    %c0_9 = arith.constant 0 : index
    %c256 = arith.constant 256 : index
    %19 = vector.load %arg7[%c0_9, %c256] : memref<8x4096xf32, #tpu.memory_space<vmem>>, vector<1x256xf32>
    tpu.vector_store %arg7[%c0_9, %c256], %18 {strides = array<i32>} : memref<8x4096xf32, #tpu.memory_space<vmem>>, vector<1x256xf32>,
    %20 = vector.extract_strided_slice %15 {offsets = [2, 0], sizes = [1, 256], strides = [1, 1]} : vector<16x256xf32> to vector<1x256xf32>
    %c0_10 = arith.constant 0 : index
    %c512 = arith.constant 512 : index
    %21 = vector.load %arg7[%c0_10, %c512] : memref<8x4096xf32, #tpu.memory_space<vmem>>, vector<1x256xf32>
    tpu.vector_store %arg7[%c0_10, %c512], %20 {strides = array<i32>} : memref<8x4096xf32, #tpu.memory_space<vmem>>, vector<1x256xf32>,
    %22 = vector.extract_strided_slice %15 {offsets = [3, 0], sizes = [1, 256], strides = [1, 1]} : vector<16x256xf32> to vector<1x256xf32>
    %c0_11 = arith.constant 0 : index
    %c768 = arith.constant 768 : index
    %23 = vector.load %arg7[%c0_11, %c768] : memref<8x4096xf32, #tpu.memory_space<vmem>>, vector<1x256xf32>
    tpu.vector_store %arg7[%c0_11, %c768], %22 {strides = array<i32>} : memref<8x4096xf32, #tpu.memory_space<vmem>>, vector<1x256xf32>,
    %24 = vector.extract_strided_slice %15 {offsets = [4, 0], sizes = [1, 256], strides = [1, 1]} : vector<16x256xf32> to vector<1x256xf32>
    %c0_12 = arith.constant 0 : index
    %c1024 = arith.constant 1024 : index
    %25 = vector.load %arg7[%c0_12, %c1024] : memref<8x4096xf32, #tpu.memory_space<vmem>>, vector<1x256xf32>
    tpu.vector_store %arg7[%c0_12, %c1024], %24 {strides = array<i32>} : memref<8x4096xf32, #tpu.memory_space<vmem>>, vector<1x256xf32>,
    %26 = vector.extract_strided_slice %15 {offsets = [5, 0], sizes = [1, 256], strides = [1, 1]} : vector<16x256xf32> to vector<1x256xf32>
    %c0_13 = arith.constant 0 : index
    %c1280 = arith.constant 1280 : index
    %27 = vector.load %arg7[%c0_13, %c1280] : memref<8x4096xf32, #tpu.memory_space<vmem>>, vector<1x256xf32>
    tpu.vector_store %arg7[%c0_13, %c1280], %26 {strides = array<i32>} : memref<8x4096xf32, #tpu.memory_space<vmem>>, vector<1x256xf32>,
    %28 = vector.extract_strided_slice %15 {offsets = [6, 0], sizes = [1, 256], strides = [1, 1]} : vector<16x256xf32> to vector<1x256xf32>
    %c0_14 = arith.constant 0 : index
    %c1536 = arith.constant 1536 : index
    %29 = vector.load %arg7[%c0_14, %c1536] : memref<8x4096xf32, #tpu.memory_space<vmem>>, vector<1x256xf32>
    tpu.vector_store %arg7[%c0_14, %c1536], %28 {strides = array<i32>} : memref<8x4096xf32, #tpu.memory_space<vmem>>, vector<1x256xf32>,
    %30 = vector.extract_strided_slice %15 {offsets = [7, 0], sizes = [1, 256], strides = [1, 1]} : vector<16x256xf32> to vector<1x256xf32>
    %c0_15 = arith.constant 0 : index
    %c1792 = arith.constant 1792 : index
    %31 = vector.load %arg7[%c0_15, %c1792] : memref<8x4096xf32, #tpu.memory_space<vmem>>, vector<1x256xf32>
    tpu.vector_store %arg7[%c0_15, %c1792], %30 {strides = array<i32>} : memref<8x4096xf32, #tpu.memory_space<vmem>>, vector<1x256xf32>,
    %32 = vector.extract_strided_slice %15 {offsets = [8, 0], sizes = [1, 256], strides = [1, 1]} : vector<16x256xf32> to vector<1x256xf32>
    %c0_16 = arith.constant 0 : index
    %c2048 = arith.constant 2048 : index
    %33 = vector.load %arg7[%c0_16, %c2048] : memref<8x4096xf32, #tpu.memory_space<vmem>>, vector<1x256xf32>
    tpu.vector_store %arg7[%c0_16, %c2048], %32 {strides = array<i32>} : memref<8x4096xf32, #tpu.memory_space<vmem>>, vector<1x256xf32>,
    %34 = vector.extract_strided_slice %15 {offsets = [9, 0], sizes = [1, 256], strides = [1, 1]} : vector<16x256xf32> to vector<1x256xf32>
    %c0_17 = arith.constant 0 : index
    %c2304 = arith.constant 2304 : index
    %35 = vector.load %arg7[%c0_17, %c2304] : memref<8x4096xf32, #tpu.memory_space<vmem>>, vector<1x256xf32>
    tpu.vector_store %arg7[%c0_17, %c2304], %34 {strides = array<i32>} : memref<8x4096xf32, #tpu.memory_space<vmem>>, vector<1x256xf32>,
    %36 = vector.extract_strided_slice %15 {offsets = [10, 0], sizes = [1, 256], strides = [1, 1]} : vector<16x256xf32> to vector<1x256xf32>
    %c0_18 = arith.constant 0 : index
    %c2560 = arith.constant 2560 : index
    %37 = vector.load %arg7[%c0_18, %c2560] : memref<8x4096xf32, #tpu.memory_space<vmem>>, vector<1x256xf32>
    tpu.vector_store %arg7[%c0_18, %c2560], %36 {strides = array<i32>} : memref<8x4096xf32, #tpu.memory_space<vmem>>, vector<1x256xf32>,
    %38 = vector.extract_strided_slice %15 {offsets = [11, 0], sizes = [1, 256], strides = [1, 1]} : vector<16x256xf32> to vector<1x256xf32>
    %c0_19 = arith.constant 0 : index
    %c2816 = arith.constant 2816 : index
    %39 = vector.load %arg7[%c0_19, %c2816] : memref<8x4096xf32, #tpu.memory_space<vmem>>, vector<1x256xf32>
    tpu.vector_store %arg7[%c0_19, %c2816], %38 {strides = array<i32>} : memref<8x4096xf32, #tpu.memory_space<vmem>>, vector<1x256xf32>,
    %40 = vector.extract_strided_slice %15 {offsets = [12, 0], sizes = [1, 256], strides = [1, 1]} : vector<16x256xf32> to vector<1x256xf32>
    %c0_20 = arith.constant 0 : index
    %c3072 = arith.constant 3072 : index
    %41 = vector.load %arg7[%c0_20, %c3072] : memref<8x4096xf32, #tpu.memory_space<vmem>>, vector<1x256xf32>
    tpu.vector_store %arg7[%c0_20, %c3072], %40 {strides = array<i32>} : memref<8x4096xf32, #tpu.memory_space<vmem>>, vector<1x256xf32>,
    %42 = vector.extract_strided_slice %15 {offsets = [13, 0], sizes = [1, 256], strides = [1, 1]} : vector<16x256xf32> to vector<1x256xf32>
    %c0_21 = arith.constant 0 : index
    %c3328 = arith.constant 3328 : index
    %43 = vector.load %arg7[%c0_21, %c3328] : memref<8x4096xf32, #tpu.memory_space<vmem>>, vector<1x256xf32>
    tpu.vector_store %arg7[%c0_21, %c3328], %42 {strides = array<i32>} : memref<8x4096xf32, #tpu.memory_space<vmem>>, vector<1x256xf32>,
    %44 = vector.extract_strided_slice %15 {offsets = [14, 0], sizes = [1, 256], strides = [1, 1]} : vector<16x256xf32> to vector<1x256xf32>
    %c0_22 = arith.constant 0 : index
    %c3584 = arith.constant 3584 : index
    %45 = vector.load %arg7[%c0_22, %c3584] : memref<8x4096xf32, #tpu.memory_space<vmem>>, vector<1x256xf32>
    tpu.vector_store %arg7[%c0_22, %c3584], %44 {strides = array<i32>} : memref<8x4096xf32, #tpu.memory_space<vmem>>, vector<1x256xf32>,
    %46 = vector.extract_strided_slice %15 {offsets = [15, 0], sizes = [1, 256], strides = [1, 1]} : vector<16x256xf32> to vector<1x256xf32>
    %c0_23 = arith.constant 0 : index
    %c3840 = arith.constant 3840 : index
    %47 = vector.load %arg7[%c0_23, %c3840] : memref<8x4096xf32, #tpu.memory_space<vmem>>, vector<1x256xf32>
    tpu.vector_store %arg7[%c0_23, %c3840], %46 {strides = array<i32>} : memref<8x4096xf32, #tpu.memory_space<vmem>>, vector<1x256xf32>,
    %c1 = arith.constant 1 : index
    %c0_24 = arith.constant 0 : index
    %c0_25 = arith.constant 0 : index
    %48 = vector.load %arg1[%c1, %c0_24, %c0_25] : memref<8x32x1024xbf16, #tpu.memory_space<vmem>>, vector<1x32x1024xbf16>
    %49 = vector.shape_cast %48 : vector<1x32x1024xbf16> to vector<32x1024xbf16>
    %cst_26 = arith.constant dense<0.000000e+00> : vector<16x1024xf32>
    %50 = tpu.matmul %0, %49, %cst_26 {dimension_numbers = #tpu.dot_dimension_numbers<[1], [0], [0], [1], [0, 0, 1, 1], [], []>} : vector<16x32xbf16>, vector<32x1024xbf16>, vector<16x1024xf32> -> vector<16x1024xf32>
    %51 = vector.broadcast %1 : vector<16x1xf32> to vector<16x1024xf32>
    %52 = arith.addf %50, %51 : vector<16x1024xf32>
    %cst_27 = arith.constant 0.000000e+00 : f32
    %53 = vector.broadcast %cst_27 : f32 to vector<16x1024xf32>
    %54 = arith.maximumf %52, %53 : vector<16x1024xf32>
    %55 = vector.extract_strided_slice %54 {offsets = [0, 0], sizes = [16, 256], strides = [1, 1]} : vector<16x1024xf32> to vector<16x256xf32>
    %56 = vector.extract_strided_slice %54 {offsets = [0, 256], sizes = [16, 256], strides = [1, 1]} : vector<16x1024xf32> to vector<16x256xf32>
    %57 = arith.maximumf %55, %56 : vector<16x256xf32>
    %58 = vector.extract_strided_slice %54 {offsets = [0, 512], sizes = [16, 256], strides = [1, 1]} : vector<16x1024xf32> to vector<16x256xf32>
    %59 = vector.extract_strided_slice %54 {offsets = [0, 768], sizes = [16, 256], strides = [1, 1]} : vector<16x1024xf32> to vector<16x256xf32>
    %60 = arith.maximumf %58, %59 : vector<16x256xf32>
    %61 = arith.maximumf %57, %60 : vector<16x256xf32>
    %62 = vector.extract_strided_slice %61 {offsets = [0, 0], sizes = [1, 256], strides = [1, 1]} : vector<16x256xf32> to vector<1x256xf32>
    %c1_28 = arith.constant 1 : index
    %c0_29 = arith.constant 0 : index
    %63 = vector.load %arg7[%c1_28, %c0_29] : memref<8x4096xf32, #tpu.memory_space<vmem>>, vector<1x256xf32>
    tpu.vector_store %arg7[%c1_28, %c0_29], %62 {strides = array<i32>} : memref<8x4096xf32, #tpu.memory_space<vmem>>, vector<1x256xf32>,
    %64 = vector.extract_strided_slice %61 {offsets = [1, 0], sizes = [1, 256], strides = [1, 1]} : vector<16x256xf32> to vector<1x256xf32>
    %c1_30 = arith.constant 1 : index
    %c256_31 = arith.constant 256 : index
    %65 = vector.load %arg7[%c1_30, %c256_31] : memref<8x4096xf32, #tpu.memory_space<vmem>>, vector<1x256xf32>
    tpu.vector_store %arg7[%c1_30, %c256_31], %64 {strides = array<i32>} : memref<8x4096xf32, #tpu.memory_space<vmem>>, vector<1x256xf32>,
    %66 = vector.extract_strided_slice %61 {offsets = [2, 0], sizes = [1, 256], strides = [1, 1]} : vector<16x256xf32> to vector<1x256xf32>
    %c1_32 = arith.constant 1 : index
    %c512_33 = arith.constant 512 : index
    %67 = vector.load %arg7[%c1_32, %c512_33] : memref<8x4096xf32, #tpu.memory_space<vmem>>, vector<1x256xf32>
    tpu.vector_store %arg7[%c1_32, %c512_33], %66 {strides = array<i32>} : memref<8x4096xf32, #tpu.memory_space<vmem>>, vector<1x256xf32>,
    %68 = vector.extract_strided_slice %61 {offsets = [3, 0], sizes = [1, 256], strides = [1, 1]} : vector<16x256xf32> to vector<1x256xf32>
    %c1_34 = arith.constant 1 : index
    %c768_35 = arith.constant 768 : index
    %69 = vector.load %arg7[%c1_34, %c768_35] : memref<8x4096xf32, #tpu.memory_space<vmem>>, vector<1x256xf32>
    tpu.vector_store %arg7[%c1_34, %c768_35], %68 {strides = array<i32>} : memref<8x4096xf32, #tpu.memory_space<vmem>>, vector<1x256xf32>,
    %70 = vector.extract_strided_slice %61 {offsets = [4, 0], sizes = [1, 256], strides = [1, 1]} : vector<16x256xf32> to vector<1x256xf32>
    %c1_36 = arith.constant 1 : index
    %c1024_37 = arith.constant 1024 : index
    %71 = vector.load %arg7[%c1_36, %c1024_37] : memref<8x4096xf32, #tpu.memory_space<vmem>>, vector<1x256xf32>
    tpu.vector_store %arg7[%c1_36, %c1024_37], %70 {strides = array<i32>} : memref<8x4096xf32, #tpu.memory_space<vmem>>, vector<1x256xf32>,
    %72 = vector.extract_strided_slice %61 {offsets = [5, 0], sizes = [1, 256], strides = [1, 1]} : vector<16x256xf32> to vector<1x256xf32>
    %c1_38 = arith.constant 1 : index
    %c1280_39 = arith.constant 1280 : index
    %73 = vector.load %arg7[%c1_38, %c1280_39] : memref<8x4096xf32, #tpu.memory_space<vmem>>, vector<1x256xf32>
    tpu.vector_store %arg7[%c1_38, %c1280_39], %72 {strides = array<i32>} : memref<8x4096xf32, #tpu.memory_space<vmem>>, vector<1x256xf32>,
    %74 = vector.extract_strided_slice %61 {offsets = [6, 0], sizes = [1, 256], strides = [1, 1]} : vector<16x256xf32> to vector<1x256xf32>
    %c1_40 = arith.constant 1 : index
    %c1536_41 = arith.constant 1536 : index
    %75 = vector.load %arg7[%c1_40, %c1536_41] : memref<8x4096xf32, #tpu.memory_space<vmem>>, vector<1x256xf32>
    tpu.vector_store %arg7[%c1_40, %c1536_41], %74 {strides = array<i32>} : memref<8x4096xf32, #tpu.memory_space<vmem>>, vector<1x256xf32>,
    %76 = vector.extract_strided_slice %61 {offsets = [7, 0], sizes = [1, 256], strides = [1, 1]} : vector<16x256xf32> to vector<1x256xf32>
    %c1_42 = arith.constant 1 : index
    %c1792_43 = arith.constant 1792 : index
    %77 = vector.load %arg7[%c1_42, %c1792_43] : memref<8x4096xf32, #tpu.memory_space<vmem>>, vector<1x256xf32>
    tpu.vector_store %arg7[%c1_42, %c1792_43], %76 {strides = array<i32>} : memref<8x4096xf32, #tpu.memory_space<vmem>>, vector<1x256xf32>,
    %78 = vector.extract_strided_slice %61 {offsets = [8, 0], sizes = [1, 256], strides = [1, 1]} : vector<16x256xf32> to vector<1x256xf32>
    %c1_44 = arith.constant 1 : index
    %c2048_45 = arith.constant 2048 : index
    %79 = vector.load %arg7[%c1_44, %c2048_45] : memref<8x4096xf32, #tpu.memory_space<vmem>>, vector<1x256xf32>
    tpu.vector_store %arg7[%c1_44, %c2048_45], %78 {strides = array<i32>} : memref<8x4096xf32, #tpu.memory_space<vmem>>, vector<1x256xf32>,
    %80 = vector.extract_strided_slice %61 {offsets = [9, 0], sizes = [1, 256], strides = [1, 1]} : vector<16x256xf32> to vector<1x256xf32>
    %c1_46 = arith.constant 1 : index
    %c2304_47 = arith.constant 2304 : index
    %81 = vector.load %arg7[%c1_46, %c2304_47] : memref<8x4096xf32, #tpu.memory_space<vmem>>, vector<1x256xf32>
    tpu.vector_store %arg7[%c1_46, %c2304_47], %80 {strides = array<i32>} : memref<8x4096xf32, #tpu.memory_space<vmem>>, vector<1x256xf32>,
    %82 = vector.extract_strided_slice %61 {offsets = [10, 0], sizes = [1, 256], strides = [1, 1]} : vector<16x256xf32> to vector<1x256xf32>
    %c1_48 = arith.constant 1 : index
    %c2560_49 = arith.constant 2560 : index
    %83 = vector.load %arg7[%c1_48, %c2560_49] : memref<8x4096xf32, #tpu.memory_space<vmem>>, vector<1x256xf32>
    tpu.vector_store %arg7[%c1_48, %c2560_49], %82 {strides = array<i32>} : memref<8x4096xf32, #tpu.memory_space<vmem>>, vector<1x256xf32>,
    %84 = vector.extract_strided_slice %61 {offsets = [11, 0], sizes = [1, 256], strides = [1, 1]} : vector<16x256xf32> to vector<1x256xf32>
    %c1_50 = arith.constant 1 : index
    %c2816_51 = arith.constant 2816 : index
    %85 = vector.load %arg7[%c1_50, %c2816_51] : memref<8x4096xf32, #tpu.memory_space<vmem>>, vector<1x256xf32>
    tpu.vector_store %arg7[%c1_50, %c2816_51], %84 {strides = array<i32>} : memref<8x4096xf32, #tpu.memory_space<vmem>>, vector<1x256xf32>,
    %86 = vector.extract_strided_slice %61 {offsets = [12, 0], sizes = [1, 256], strides = [1, 1]} : vector<16x256xf32> to vector<1x256xf32>
    %c1_52 = arith.constant 1 : index
    %c3072_53 = arith.constant 3072 : index
    %87 = vector.load %arg7[%c1_52, %c3072_53] : memref<8x4096xf32, #tpu.memory_space<vmem>>, vector<1x256xf32>
    tpu.vector_store %arg7[%c1_52, %c3072_53], %86 {strides = array<i32>} : memref<8x4096xf32, #tpu.memory_space<vmem>>, vector<1x256xf32>,
    %88 = vector.extract_strided_slice %61 {offsets = [13, 0], sizes = [1, 256], strides = [1, 1]} : vector<16x256xf32> to vector<1x256xf32>
    %c1_54 = arith.constant 1 : index
    %c3328_55 = arith.constant 3328 : index
    %89 = vector.load %arg7[%c1_54, %c3328_55] : memref<8x4096xf32, #tpu.memory_space<vmem>>, vector<1x256xf32>
    tpu.vector_store %arg7[%c1_54, %c3328_55], %88 {strides = array<i32>} : memref<8x4096xf32, #tpu.memory_space<vmem>>, vector<1x256xf32>,
    %90 = vector.extract_strided_slice %61 {offsets = [14, 0], sizes = [1, 256], strides = [1, 1]} : vector<16x256xf32> to vector<1x256xf32>
    %c1_56 = arith.constant 1 : index
    %c3584_57 = arith.constant 3584 : index
    %91 = vector.load %arg7[%c1_56, %c3584_57] : memref<8x4096xf32, #tpu.memory_space<vmem>>, vector<1x256xf32>
    tpu.vector_store %arg7[%c1_56, %c3584_57], %90 {strides = array<i32>} : memref<8x4096xf32, #tpu.memory_space<vmem>>, vector<1x256xf32>,
    %92 = vector.extract_strided_slice %61 {offsets = [15, 0], sizes = [1, 256], strides = [1, 1]} : vector<16x256xf32> to vector<1x256xf32>
    %c1_58 = arith.constant 1 : index
    %c3840_59 = arith.constant 3840 : index
    %93 = vector.load %arg7[%c1_58, %c3840_59] : memref<8x4096xf32, #tpu.memory_space<vmem>>, vector<1x256xf32>
    tpu.vector_store %arg7[%c1_58, %c3840_59], %92 {strides = array<i32>} : memref<8x4096xf32, #tpu.memory_space<vmem>>, vector<1x256xf32>,
    %c2 = arith.constant 2 : index
    %c0_60 = arith.constant 0 : index
    %c0_61 = arith.constant 0 : index
    %94 = vector.load %arg1[%c2, %c0_60, %c0_61] : memref<8x32x1024xbf16, #tpu.memory_space<vmem>>, vector<1x32x1024xbf16>
    %95 = vector.shape_cast %94 : vector<1x32x1024xbf16> to vector<32x1024xbf16>
    %cst_62 = arith.constant dense<0.000000e+00> : vector<16x1024xf32>
    %96 = tpu.matmul %0, %95, %cst_62 {dimension_numbers = #tpu.dot_dimension_numbers<[1], [0], [0], [1], [0, 0, 1, 1], [], []>} : vector<16x32xbf16>, vector<32x1024xbf16>, vector<16x1024xf32> -> vector<16x1024xf32>
    %97 = vector.broadcast %1 : vector<16x1xf32> to vector<16x1024xf32>
    %98 = arith.addf %96, %97 : vector<16x1024xf32>
    %cst_63 = arith.constant 0.000000e+00 : f32
    %99 = vector.broadcast %cst_63 : f32 to vector<16x1024xf32>
    %100 = arith.maximumf %98, %99 : vector<16x1024xf32>
    %101 = vector.extract_strided_slice %100 {offsets = [0, 0], sizes = [16, 256], strides = [1, 1]} : vector<16x1024xf32> to vector<16x256xf32>
    %102 = vector.extract_strided_slice %100 {offsets = [0, 256], sizes = [16, 256], strides = [1, 1]} : vector<16x1024xf32> to vector<16x256xf32>
    %103 = arith.maximumf %101, %102 : vector<16x256xf32>
    %104 = vector.extract_strided_slice %100 {offsets = [0, 512], sizes = [16, 256], strides = [1, 1]} : vector<16x1024xf32> to vector<16x256xf32>
    %105 = vector.extract_strided_slice %100 {offsets = [0, 768], sizes = [16, 256], strides = [1, 1]} : vector<16x1024xf32> to vector<16x256xf32>
    %106 = arith.maximumf %104, %105 : vector<16x256xf32>
    %107 = arith.maximumf %103, %106 : vector<16x256xf32>
    %108 = vector.extract_strided_slice %107 {offsets = [0, 0], sizes = [1, 256], strides = [1, 1]} : vector<16x256xf32> to vector<1x256xf32>
    %c2_64 = arith.constant 2 : index
    %c0_65 = arith.constant 0 : index
    %109 = vector.load %arg7[%c2_64, %c0_65] : memref<8x4096xf32, #tpu.memory_space<vmem>>, vector<1x256xf32>
    tpu.vector_store %arg7[%c2_64, %c0_65], %108 {strides = array<i32>} : memref<8x4096xf32, #tpu.memory_space<vmem>>, vector<1x256xf32>,
    %110 = vector.extract_strided_slice %107 {offsets = [1, 0], sizes = [1, 256], strides = [1, 1]} : vector<16x256xf32> to vector<1x256xf32>
    %c2_66 = arith.constant 2 : index
    %c256_67 = arith.constant 256 : index
    %111 = vector.load %arg7[%c2_66, %c256_67] : memref<8x4096xf32, #tpu.memory_space<vmem>>, vector<1x256xf32>
    tpu.vector_store %arg7[%c2_66, %c256_67], %110 {strides = array<i32>} : memref<8x4096xf32, #tpu.memory_space<vmem>>, vector<1x256xf32>,
    %112 = vector.extract_strided_slice %107 {offsets = [2, 0], sizes = [1, 256], strides = [1, 1]} : vector<16x256xf32> to vector<1x256xf32>
    %c2_68 = arith.constant 2 : index
    %c512_69 = arith.constant 512 : index
    %113 = vector.load %arg7[%c2_68, %c512_69] : memref<8x4096xf32, #tpu.memory_space<vmem>>, vector<1x256xf32>
    tpu.vector_store %arg7[%c2_68, %c512_69], %112 {strides = array<i32>} : memref<8x4096xf32, #tpu.memory_space<vmem>>, vector<1x256xf32>,
    %114 = vector.extract_strided_slice %107 {offsets = [3, 0], sizes = [1, 256], strides = [1, 1]} : vector<16x256xf32> to vector<1x256xf32>
    %c2_70 = arith.constant 2 : index
    %c768_71 = arith.constant 768 : index
    %115 = vector.load %arg7[%c2_70, %c768_71] : memref<8x4096xf32, #tpu.memory_space<vmem>>, vector<1x256xf32>
    tpu.vector_store %arg7[%c2_70, %c768_71], %114 {strides = array<i32>} : memref<8x4096xf32, #tpu.memory_space<vmem>>, vector<1x256xf32>,
    %116 = vector.extract_strided_slice %107 {offsets = [4, 0], sizes = [1, 256], strides = [1, 1]} : vector<16x256xf32> to vector<1x256xf32>
    %c2_72 = arith.constant 2 : index
    %c1024_73 = arith.constant 1024 : index
    %117 = vector.load %arg7[%c2_72, %c1024_73] : memref<8x4096xf32, #tpu.memory_space<vmem>>, vector<1x256xf32>
    tpu.vector_store %arg7[%c2_72, %c1024_73], %116 {strides = array<i32>} : memref<8x4096xf32, #tpu.memory_space<vmem>>, vector<1x256xf32>,
    %118 = vector.extract_strided_slice %107 {offsets = [5, 0], sizes = [1, 256], strides = [1, 1]} : vector<16x256xf32> to vector<1x256xf32>
    %c2_74 = arith.constant 2 : index
    %c1280_75 = arith.constant 1280 : index
    %119 = vector.load %arg7[%c2_74, %c1280_75] : memref<8x4096xf32, #tpu.memory_space<vmem>>, vector<1x256xf32>
    tpu.vector_store %arg7[%c2_74, %c1280_75], %118 {strides = array<i32>} : memref<8x4096xf32, #tpu.memory_space<vmem>>, vector<1x256xf32>,
    %120 = vector.extract_strided_slice %107 {offsets = [6, 0], sizes = [1, 256], strides = [1, 1]} : vector<16x256xf32> to vector<1x256xf32>
    %c2_76 = arith.constant 2 : index
    %c1536_77 = arith.constant 1536 : index
    %121 = vector.load %arg7[%c2_76, %c1536_77] : memref<8x4096xf32, #tpu.memory_space<vmem>>, vector<1x256xf32>
    tpu.vector_store %arg7[%c2_76, %c1536_77], %120 {strides = array<i32>} : memref<8x4096xf32, #tpu.memory_space<vmem>>, vector<1x256xf32>,
    %122 = vector.extract_strided_slice %107 {offsets = [7, 0], sizes = [1, 256], strides = [1, 1]} : vector<16x256xf32> to vector<1x256xf32>
    %c2_78 = arith.constant 2 : index
    %c1792_79 = arith.constant 1792 : index
    %123 = vector.load %arg7[%c2_78, %c1792_79] : memref<8x4096xf32, #tpu.memory_space<vmem>>, vector<1x256xf32>
    tpu.vector_store %arg7[%c2_78, %c1792_79], %122 {strides = array<i32>} : memref<8x4096xf32, #tpu.memory_space<vmem>>, vector<1x256xf32>,
    %124 = vector.extract_strided_slice %107 {offsets = [8, 0], sizes = [1, 256], strides = [1, 1]} : vector<16x256xf32> to vector<1x256xf32>
    %c2_80 = arith.constant 2 : index
    %c2048_81 = arith.constant 2048 : index
    %125 = vector.load %arg7[%c2_80, %c2048_81] : memref<8x4096xf32, #tpu.memory_space<vmem>>, vector<1x256xf32>
    tpu.vector_store %arg7[%c2_80, %c2048_81], %124 {strides = array<i32>} : memref<8x4096xf32, #tpu.memory_space<vmem>>, vector<1x256xf32>,
    %126 = vector.extract_strided_slice %107 {offsets = [9, 0], sizes = [1, 256], strides = [1, 1]} : vector<16x256xf32> to vector<1x256xf32>
    %c2_82 = arith.constant 2 : index
    %c2304_83 = arith.constant 2304 : index
    %127 = vector.load %arg7[%c2_82, %c2304_83] : memref<8x4096xf32, #tpu.memory_space<vmem>>, vector<1x256xf32>
    tpu.vector_store %arg7[%c2_82, %c2304_83], %126 {strides = array<i32>} : memref<8x4096xf32, #tpu.memory_space<vmem>>, vector<1x256xf32>,
    %128 = vector.extract_strided_slice %107 {offsets = [10, 0], sizes = [1, 256], strides = [1, 1]} : vector<16x256xf32> to vector<1x256xf32>
    %c2_84 = arith.constant 2 : index
    %c2560_85 = arith.constant 2560 : index
    %129 = vector.load %arg7[%c2_84, %c2560_85] : memref<8x4096xf32, #tpu.memory_space<vmem>>, vector<1x256xf32>
    tpu.vector_store %arg7[%c2_84, %c2560_85], %128 {strides = array<i32>} : memref<8x4096xf32, #tpu.memory_space<vmem>>, vector<1x256xf32>,
    %130 = vector.extract_strided_slice %107 {offsets = [11, 0], sizes = [1, 256], strides = [1, 1]} : vector<16x256xf32> to vector<1x256xf32>
    %c2_86 = arith.constant 2 : index
    %c2816_87 = arith.constant 2816 : index
    %131 = vector.load %arg7[%c2_86, %c2816_87] : memref<8x4096xf32, #tpu.memory_space<vmem>>, vector<1x256xf32>
    tpu.vector_store %arg7[%c2_86, %c2816_87], %130 {strides = array<i32>} : memref<8x4096xf32, #tpu.memory_space<vmem>>, vector<1x256xf32>,
    %132 = vector.extract_strided_slice %107 {offsets = [12, 0], sizes = [1, 256], strides = [1, 1]} : vector<16x256xf32> to vector<1x256xf32>
    %c2_88 = arith.constant 2 : index
    %c3072_89 = arith.constant 3072 : index
    %133 = vector.load %arg7[%c2_88, %c3072_89] : memref<8x4096xf32, #tpu.memory_space<vmem>>, vector<1x256xf32>
    tpu.vector_store %arg7[%c2_88, %c3072_89], %132 {strides = array<i32>} : memref<8x4096xf32, #tpu.memory_space<vmem>>, vector<1x256xf32>,
    %134 = vector.extract_strided_slice %107 {offsets = [13, 0], sizes = [1, 256], strides = [1, 1]} : vector<16x256xf32> to vector<1x256xf32>
    %c2_90 = arith.constant 2 : index
    %c3328_91 = arith.constant 3328 : index
    %135 = vector.load %arg7[%c2_90, %c3328_91] : memref<8x4096xf32, #tpu.memory_space<vmem>>, vector<1x256xf32>
    tpu.vector_store %arg7[%c2_90, %c3328_91], %134 {strides = array<i32>} : memref<8x4096xf32, #tpu.memory_space<vmem>>, vector<1x256xf32>,
    %136 = vector.extract_strided_slice %107 {offsets = [14, 0], sizes = [1, 256], strides = [1, 1]} : vector<16x256xf32> to vector<1x256xf32>
    %c2_92 = arith.constant 2 : index
    %c3584_93 = arith.constant 3584 : index
    %137 = vector.load %arg7[%c2_92, %c3584_93] : memref<8x4096xf32, #tpu.memory_space<vmem>>, vector<1x256xf32>
    tpu.vector_store %arg7[%c2_92, %c3584_93], %136 {strides = array<i32>} : memref<8x4096xf32, #tpu.memory_space<vmem>>, vector<1x256xf32>,
    %138 = vector.extract_strided_slice %107 {offsets = [15, 0], sizes = [1, 256], strides = [1, 1]} : vector<16x256xf32> to vector<1x256xf32>
    %c2_94 = arith.constant 2 : index
    %c3840_95 = arith.constant 3840 : index
    %139 = vector.load %arg7[%c2_94, %c3840_95] : memref<8x4096xf32, #tpu.memory_space<vmem>>, vector<1x256xf32>
    tpu.vector_store %arg7[%c2_94, %c3840_95], %138 {strides = array<i32>} : memref<8x4096xf32, #tpu.memory_space<vmem>>, vector<1x256xf32>,
    %c3 = arith.constant 3 : index
    %c0_96 = arith.constant 0 : index
    %c0_97 = arith.constant 0 : index
    %140 = vector.load %arg1[%c3, %c0_96, %c0_97] : memref<8x32x1024xbf16, #tpu.memory_space<vmem>>, vector<1x32x1024xbf16>
    %141 = vector.shape_cast %140 : vector<1x32x1024xbf16> to vector<32x1024xbf16>
    %cst_98 = arith.constant dense<0.000000e+00> : vector<16x1024xf32>
    %142 = tpu.matmul %0, %141, %cst_98 {dimension_numbers = #tpu.dot_dimension_numbers<[1], [0], [0], [1], [0, 0, 1, 1], [], []>} : vector<16x32xbf16>, vector<32x1024xbf16>, vector<16x1024xf32> -> vector<16x1024xf32>
    %143 = vector.broadcast %1 : vector<16x1xf32> to vector<16x1024xf32>
    %144 = arith.addf %142, %143 : vector<16x1024xf32>
    %cst_99 = arith.constant 0.000000e+00 : f32
    %145 = vector.broadcast %cst_99 : f32 to vector<16x1024xf32>
    %146 = arith.maximumf %144, %145 : vector<16x1024xf32>
    %147 = vector.extract_strided_slice %146 {offsets = [0, 0], sizes = [16, 256], strides = [1, 1]} : vector<16x1024xf32> to vector<16x256xf32>
    %148 = vector.extract_strided_slice %146 {offsets = [0, 256], sizes = [16, 256], strides = [1, 1]} : vector<16x1024xf32> to vector<16x256xf32>
    %149 = arith.maximumf %147, %148 : vector<16x256xf32>
    %150 = vector.extract_strided_slice %146 {offsets = [0, 512], sizes = [16, 256], strides = [1, 1]} : vector<16x1024xf32> to vector<16x256xf32>
    %151 = vector.extract_strided_slice %146 {offsets = [0, 768], sizes = [16, 256], strides = [1, 1]} : vector<16x1024xf32> to vector<16x256xf32>
    %152 = arith.maximumf %150, %151 : vector<16x256xf32>
    %153 = arith.maximumf %149, %152 : vector<16x256xf32>
    %154 = vector.extract_strided_slice %153 {offsets = [0, 0], sizes = [1, 256], strides = [1, 1]} : vector<16x256xf32> to vector<1x256xf32>
    %c3_100 = arith.constant 3 : index
    %c0_101 = arith.constant 0 : index
    %155 = vector.load %arg7[%c3_100, %c0_101] : memref<8x4096xf32, #tpu.memory_space<vmem>>, vector<1x256xf32>
    tpu.vector_store %arg7[%c3_100, %c0_101], %154 {strides = array<i32>} : memref<8x4096xf32, #tpu.memory_space<vmem>>, vector<1x256xf32>,
    %156 = vector.extract_strided_slice %153 {offsets = [1, 0], sizes = [1, 256], strides = [1, 1]} : vector<16x256xf32> to vector<1x256xf32>
    %c3_102 = arith.constant 3 : index
    %c256_103 = arith.constant 256 : index
    %157 = vector.load %arg7[%c3_102, %c256_103] : memref<8x4096xf32, #tpu.memory_space<vmem>>, vector<1x256xf32>
    tpu.vector_store %arg7[%c3_102, %c256_103], %156 {strides = array<i32>} : memref<8x4096xf32, #tpu.memory_space<vmem>>, vector<1x256xf32>,
    %158 = vector.extract_strided_slice %153 {offsets = [2, 0], sizes = [1, 256], strides = [1, 1]} : vector<16x256xf32> to vector<1x256xf32>
    %c3_104 = arith.constant 3 : index
    %c512_105 = arith.constant 512 : index
    %159 = vector.load %arg7[%c3_104, %c512_105] : memref<8x4096xf32, #tpu.memory_space<vmem>>, vector<1x256xf32>
    tpu.vector_store %arg7[%c3_104, %c512_105], %158 {strides = array<i32>} : memref<8x4096xf32, #tpu.memory_space<vmem>>, vector<1x256xf32>,
    %160 = vector.extract_strided_slice %153 {offsets = [3, 0], sizes = [1, 256], strides = [1, 1]} : vector<16x256xf32> to vector<1x256xf32>
    %c3_106 = arith.constant 3 : index
    %c768_107 = arith.constant 768 : index
    %161 = vector.load %arg7[%c3_106, %c768_107] : memref<8x4096xf32, #tpu.memory_space<vmem>>, vector<1x256xf32>
    tpu.vector_store %arg7[%c3_106, %c768_107], %160 {strides = array<i32>} : memref<8x4096xf32, #tpu.memory_space<vmem>>, vector<1x256xf32>,
    %162 = vector.extract_strided_slice %153 {offsets = [4, 0], sizes = [1, 256], strides = [1, 1]} : vector<16x256xf32> to vector<1x256xf32>
    %c3_108 = arith.constant 3 : index
    %c1024_109 = arith.constant 1024 : index
    %163 = vector.load %arg7[%c3_108, %c1024_109] : memref<8x4096xf32, #tpu.memory_space<vmem>>, vector<1x256xf32>
    tpu.vector_store %arg7[%c3_108, %c1024_109], %162 {strides = array<i32>} : memref<8x4096xf32, #tpu.memory_space<vmem>>, vector<1x256xf32>,
    %164 = vector.extract_strided_slice %153 {offsets = [5, 0], sizes = [1, 256], strides = [1, 1]} : vector<16x256xf32> to vector<1x256xf32>
    %c3_110 = arith.constant 3 : index
    %c1280_111 = arith.constant 1280 : index
    %165 = vector.load %arg7[%c3_110, %c1280_111] : memref<8x4096xf32, #tpu.memory_space<vmem>>, vector<1x256xf32>
    tpu.vector_store %arg7[%c3_110, %c1280_111], %164 {strides = array<i32>} : memref<8x4096xf32, #tpu.memory_space<vmem>>, vector<1x256xf32>,
    %166 = vector.extract_strided_slice %153 {offsets = [6, 0], sizes = [1, 256], strides = [1, 1]} : vector<16x256xf32> to vector<1x256xf32>
    %c3_112 = arith.constant 3 : index
    %c1536_113 = arith.constant 1536 : index
    %167 = vector.load %arg7[%c3_112, %c1536_113] : memref<8x4096xf32, #tpu.memory_space<vmem>>, vector<1x256xf32>
    tpu.vector_store %arg7[%c3_112, %c1536_113], %166 {strides = array<i32>} : memref<8x4096xf32, #tpu.memory_space<vmem>>, vector<1x256xf32>,
    %168 = vector.extract_strided_slice %153 {offsets = [7, 0], sizes = [1, 256], strides = [1, 1]} : vector<16x256xf32> to vector<1x256xf32>
    %c3_114 = arith.constant 3 : index
    %c1792_115 = arith.constant 1792 : index
    %169 = vector.load %arg7[%c3_114, %c1792_115] : memref<8x4096xf32, #tpu.memory_space<vmem>>, vector<1x256xf32>
    tpu.vector_store %arg7[%c3_114, %c1792_115], %168 {strides = array<i32>} : memref<8x4096xf32, #tpu.memory_space<vmem>>, vector<1x256xf32>,
    %170 = vector.extract_strided_slice %153 {offsets = [8, 0], sizes = [1, 256], strides = [1, 1]} : vector<16x256xf32> to vector<1x256xf32>
    %c3_116 = arith.constant 3 : index
    %c2048_117 = arith.constant 2048 : index
    %171 = vector.load %arg7[%c3_116, %c2048_117] : memref<8x4096xf32, #tpu.memory_space<vmem>>, vector<1x256xf32>
    tpu.vector_store %arg7[%c3_116, %c2048_117], %170 {strides = array<i32>} : memref<8x4096xf32, #tpu.memory_space<vmem>>, vector<1x256xf32>,
    %172 = vector.extract_strided_slice %153 {offsets = [9, 0], sizes = [1, 256], strides = [1, 1]} : vector<16x256xf32> to vector<1x256xf32>
    %c3_118 = arith.constant 3 : index
    %c2304_119 = arith.constant 2304 : index
    %173 = vector.load %arg7[%c3_118, %c2304_119] : memref<8x4096xf32, #tpu.memory_space<vmem>>, vector<1x256xf32>
    tpu.vector_store %arg7[%c3_118, %c2304_119], %172 {strides = array<i32>} : memref<8x4096xf32, #tpu.memory_space<vmem>>, vector<1x256xf32>,
    %174 = vector.extract_strided_slice %153 {offsets = [10, 0], sizes = [1, 256], strides = [1, 1]} : vector<16x256xf32> to vector<1x256xf32>
    %c3_120 = arith.constant 3 : index
    %c2560_121 = arith.constant 2560 : index
    %175 = vector.load %arg7[%c3_120, %c2560_121] : memref<8x4096xf32, #tpu.memory_space<vmem>>, vector<1x256xf32>
    tpu.vector_store %arg7[%c3_120, %c2560_121], %174 {strides = array<i32>} : memref<8x4096xf32, #tpu.memory_space<vmem>>, vector<1x256xf32>,
    %176 = vector.extract_strided_slice %153 {offsets = [11, 0], sizes = [1, 256], strides = [1, 1]} : vector<16x256xf32> to vector<1x256xf32>
    %c3_122 = arith.constant 3 : index
    %c2816_123 = arith.constant 2816 : index
    %177 = vector.load %arg7[%c3_122, %c2816_123] : memref<8x4096xf32, #tpu.memory_space<vmem>>, vector<1x256xf32>
    tpu.vector_store %arg7[%c3_122, %c2816_123], %176 {strides = array<i32>} : memref<8x4096xf32, #tpu.memory_space<vmem>>, vector<1x256xf32>,
    %178 = vector.extract_strided_slice %153 {offsets = [12, 0], sizes = [1, 256], strides = [1, 1]} : vector<16x256xf32> to vector<1x256xf32>
    %c3_124 = arith.constant 3 : index
    %c3072_125 = arith.constant 3072 : index
    %179 = vector.load %arg7[%c3_124, %c3072_125] : memref<8x4096xf32, #tpu.memory_space<vmem>>, vector<1x256xf32>
    tpu.vector_store %arg7[%c3_124, %c3072_125], %178 {strides = array<i32>} : memref<8x4096xf32, #tpu.memory_space<vmem>>, vector<1x256xf32>,
    %180 = vector.extract_strided_slice %153 {offsets = [13, 0], sizes = [1, 256], strides = [1, 1]} : vector<16x256xf32> to vector<1x256xf32>
    %c3_126 = arith.constant 3 : index
    %c3328_127 = arith.constant 3328 : index
    %181 = vector.load %arg7[%c3_126, %c3328_127] : memref<8x4096xf32, #tpu.memory_space<vmem>>, vector<1x256xf32>
    tpu.vector_store %arg7[%c3_126, %c3328_127], %180 {strides = array<i32>} : memref<8x4096xf32, #tpu.memory_space<vmem>>, vector<1x256xf32>,
    %182 = vector.extract_strided_slice %153 {offsets = [14, 0], sizes = [1, 256], strides = [1, 1]} : vector<16x256xf32> to vector<1x256xf32>
    %c3_128 = arith.constant 3 : index
    %c3584_129 = arith.constant 3584 : index
    %183 = vector.load %arg7[%c3_128, %c3584_129] : memref<8x4096xf32, #tpu.memory_space<vmem>>, vector<1x256xf32>
    tpu.vector_store %arg7[%c3_128, %c3584_129], %182 {strides = array<i32>} : memref<8x4096xf32, #tpu.memory_space<vmem>>, vector<1x256xf32>,
    %184 = vector.extract_strided_slice %153 {offsets = [15, 0], sizes = [1, 256], strides = [1, 1]} : vector<16x256xf32> to vector<1x256xf32>
    %c3_130 = arith.constant 3 : index
    %c3840_131 = arith.constant 3840 : index
    %185 = vector.load %arg7[%c3_130, %c3840_131] : memref<8x4096xf32, #tpu.memory_space<vmem>>, vector<1x256xf32>
    tpu.vector_store %arg7[%c3_130, %c3840_131], %184 {strides = array<i32>} : memref<8x4096xf32, #tpu.memory_space<vmem>>, vector<1x256xf32>,
    %c4 = arith.constant 4 : index
    %c0_132 = arith.constant 0 : index
    %c0_133 = arith.constant 0 : index
    %186 = vector.load %arg1[%c4, %c0_132, %c0_133] : memref<8x32x1024xbf16, #tpu.memory_space<vmem>>, vector<1x32x1024xbf16>
    %187 = vector.shape_cast %186 : vector<1x32x1024xbf16> to vector<32x1024xbf16>
    %cst_134 = arith.constant dense<0.000000e+00> : vector<16x1024xf32>
    %188 = tpu.matmul %0, %187, %cst_134 {dimension_numbers = #tpu.dot_dimension_numbers<[1], [0], [0], [1], [0, 0, 1, 1], [], []>} : vector<16x32xbf16>, vector<32x1024xbf16>, vector<16x1024xf32> -> vector<16x1024xf32>
    %189 = vector.broadcast %1 : vector<16x1xf32> to vector<16x1024xf32>
    %190 = arith.addf %188, %189 : vector<16x1024xf32>
    %cst_135 = arith.constant 0.000000e+00 : f32
    %191 = vector.broadcast %cst_135 : f32 to vector<16x1024xf32>
    %192 = arith.maximumf %190, %191 : vector<16x1024xf32>
    %193 = vector.extract_strided_slice %192 {offsets = [0, 0], sizes = [16, 256], strides = [1, 1]} : vector<16x1024xf32> to vector<16x256xf32>
    %194 = vector.extract_strided_slice %192 {offsets = [0, 256], sizes = [16, 256], strides = [1, 1]} : vector<16x1024xf32> to vector<16x256xf32>
    %195 = arith.maximumf %193, %194 : vector<16x256xf32>
    %196 = vector.extract_strided_slice %192 {offsets = [0, 512], sizes = [16, 256], strides = [1, 1]} : vector<16x1024xf32> to vector<16x256xf32>
    %197 = vector.extract_strided_slice %192 {offsets = [0, 768], sizes = [16, 256], strides = [1, 1]} : vector<16x1024xf32> to vector<16x256xf32>
    %198 = arith.maximumf %196, %197 : vector<16x256xf32>
    %199 = arith.maximumf %195, %198 : vector<16x256xf32>
    %200 = vector.extract_strided_slice %199 {offsets = [0, 0], sizes = [1, 256], strides = [1, 1]} : vector<16x256xf32> to vector<1x256xf32>
    %c4_136 = arith.constant 4 : index
    %c0_137 = arith.constant 0 : index
    %201 = vector.load %arg7[%c4_136, %c0_137] : memref<8x4096xf32, #tpu.memory_space<vmem>>, vector<1x256xf32>
    tpu.vector_store %arg7[%c4_136, %c0_137], %200 {strides = array<i32>} : memref<8x4096xf32, #tpu.memory_space<vmem>>, vector<1x256xf32>,
    %202 = vector.extract_strided_slice %199 {offsets = [1, 0], sizes = [1, 256], strides = [1, 1]} : vector<16x256xf32> to vector<1x256xf32>
    %c4_138 = arith.constant 4 : index
    %c256_139 = arith.constant 256 : index
    %203 = vector.load %arg7[%c4_138, %c256_139] : memref<8x4096xf32, #tpu.memory_space<vmem>>, vector<1x256xf32>
    tpu.vector_store %arg7[%c4_138, %c256_139], %202 {strides = array<i32>} : memref<8x4096xf32, #tpu.memory_space<vmem>>, vector<1x256xf32>,
    %204 = vector.extract_strided_slice %199 {offsets = [2, 0], sizes = [1, 256], strides = [1, 1]} : vector<16x256xf32> to vector<1x256xf32>
    %c4_140 = arith.constant 4 : index
    %c512_141 = arith.constant 512 : index
    %205 = vector.load %arg7[%c4_140, %c512_141] : memref<8x4096xf32, #tpu.memory_space<vmem>>, vector<1x256xf32>
    tpu.vector_store %arg7[%c4_140, %c512_141], %204 {strides = array<i32>} : memref<8x4096xf32, #tpu.memory_space<vmem>>, vector<1x256xf32>,
    %206 = vector.extract_strided_slice %199 {offsets = [3, 0], sizes = [1, 256], strides = [1, 1]} : vector<16x256xf32> to vector<1x256xf32>
    %c4_142 = arith.constant 4 : index
    %c768_143 = arith.constant 768 : index
    %207 = vector.load %arg7[%c4_142, %c768_143] : memref<8x4096xf32, #tpu.memory_space<vmem>>, vector<1x256xf32>
    tpu.vector_store %arg7[%c4_142, %c768_143], %206 {strides = array<i32>} : memref<8x4096xf32, #tpu.memory_space<vmem>>, vector<1x256xf32>,
    %208 = vector.extract_strided_slice %199 {offsets = [4, 0], sizes = [1, 256], strides = [1, 1]} : vector<16x256xf32> to vector<1x256xf32>
    %c4_144 = arith.constant 4 : index
    %c1024_145 = arith.constant 1024 : index
    %209 = vector.load %arg7[%c4_144, %c1024_145] : memref<8x4096xf32, #tpu.memory_space<vmem>>, vector<1x256xf32>
    tpu.vector_store %arg7[%c4_144, %c1024_145], %208 {strides = array<i32>} : memref<8x4096xf32, #tpu.memory_space<vmem>>, vector<1x256xf32>,
    %210 = vector.extract_strided_slice %199 {offsets = [5, 0], sizes = [1, 256], strides = [1, 1]} : vector<16x256xf32> to vector<1x256xf32>
    %c4_146 = arith.constant 4 : index
    %c1280_147 = arith.constant 1280 : index
    %211 = vector.load %arg7[%c4_146, %c1280_147] : memref<8x4096xf32, #tpu.memory_space<vmem>>, vector<1x256xf32>
    tpu.vector_store %arg7[%c4_146, %c1280_147], %210 {strides = array<i32>} : memref<8x4096xf32, #tpu.memory_space<vmem>>, vector<1x256xf32>,
    %212 = vector.extract_strided_slice %199 {offsets = [6, 0], sizes = [1, 256], strides = [1, 1]} : vector<16x256xf32> to vector<1x256xf32>
    %c4_148 = arith.constant 4 : index
    %c1536_149 = arith.constant 1536 : index
    %213 = vector.load %arg7[%c4_148, %c1536_149] : memref<8x4096xf32, #tpu.memory_space<vmem>>, vector<1x256xf32>
    tpu.vector_store %arg7[%c4_148, %c1536_149], %212 {strides = array<i32>} : memref<8x4096xf32, #tpu.memory_space<vmem>>, vector<1x256xf32>,
    %214 = vector.extract_strided_slice %199 {offsets = [7, 0], sizes = [1, 256], strides = [1, 1]} : vector<16x256xf32> to vector<1x256xf32>
    %c4_150 = arith.constant 4 : index
    %c1792_151 = arith.constant 1792 : index
    %215 = vector.load %arg7[%c4_150, %c1792_151] : memref<8x4096xf32, #tpu.memory_space<vmem>>, vector<1x256xf32>
    tpu.vector_store %arg7[%c4_150, %c1792_151], %214 {strides = array<i32>} : memref<8x4096xf32, #tpu.memory_space<vmem>>, vector<1x256xf32>,
    %216 = vector.extract_strided_slice %199 {offsets = [8, 0], sizes = [1, 256], strides = [1, 1]} : vector<16x256xf32> to vector<1x256xf32>
    %c4_152 = arith.constant 4 : index
    %c2048_153 = arith.constant 2048 : index
    %217 = vector.load %arg7[%c4_152, %c2048_153] : memref<8x4096xf32, #tpu.memory_space<vmem>>, vector<1x256xf32>
    tpu.vector_store %arg7[%c4_152, %c2048_153], %216 {strides = array<i32>} : memref<8x4096xf32, #tpu.memory_space<vmem>>, vector<1x256xf32>,
    %218 = vector.extract_strided_slice %199 {offsets = [9, 0], sizes = [1, 256], strides = [1, 1]} : vector<16x256xf32> to vector<1x256xf32>
    %c4_154 = arith.constant 4 : index
    %c2304_155 = arith.constant 2304 : index
    %219 = vector.load %arg7[%c4_154, %c2304_155] : memref<8x4096xf32, #tpu.memory_space<vmem>>, vector<1x256xf32>
    tpu.vector_store %arg7[%c4_154, %c2304_155], %218 {strides = array<i32>} : memref<8x4096xf32, #tpu.memory_space<vmem>>, vector<1x256xf32>,
    %220 = vector.extract_strided_slice %199 {offsets = [10, 0], sizes = [1, 256], strides = [1, 1]} : vector<16x256xf32> to vector<1x256xf32>
    %c4_156 = arith.constant 4 : index
    %c2560_157 = arith.constant 2560 : index
    %221 = vector.load %arg7[%c4_156, %c2560_157] : memref<8x4096xf32, #tpu.memory_space<vmem>>, vector<1x256xf32>
    tpu.vector_store %arg7[%c4_156, %c2560_157], %220 {strides = array<i32>} : memref<8x4096xf32, #tpu.memory_space<vmem>>, vector<1x256xf32>,
    %222 = vector.extract_strided_slice %199 {offsets = [11, 0], sizes = [1, 256], strides = [1, 1]} : vector<16x256xf32> to vector<1x256xf32>
    %c4_158 = arith.constant 4 : index
    %c2816_159 = arith.constant 2816 : index
    %223 = vector.load %arg7[%c4_158, %c2816_159] : memref<8x4096xf32, #tpu.memory_space<vmem>>, vector<1x256xf32>
    tpu.vector_store %arg7[%c4_158, %c2816_159], %222 {strides = array<i32>} : memref<8x4096xf32, #tpu.memory_space<vmem>>, vector<1x256xf32>,
    %224 = vector.extract_strided_slice %199 {offsets = [12, 0], sizes = [1, 256], strides = [1, 1]} : vector<16x256xf32> to vector<1x256xf32>
    %c4_160 = arith.constant 4 : index
    %c3072_161 = arith.constant 3072 : index
    %225 = vector.load %arg7[%c4_160, %c3072_161] : memref<8x4096xf32, #tpu.memory_space<vmem>>, vector<1x256xf32>
    tpu.vector_store %arg7[%c4_160, %c3072_161], %224 {strides = array<i32>} : memref<8x4096xf32, #tpu.memory_space<vmem>>, vector<1x256xf32>,
    %226 = vector.extract_strided_slice %199 {offsets = [13, 0], sizes = [1, 256], strides = [1, 1]} : vector<16x256xf32> to vector<1x256xf32>
    %c4_162 = arith.constant 4 : index
    %c3328_163 = arith.constant 3328 : index
    %227 = vector.load %arg7[%c4_162, %c3328_163] : memref<8x4096xf32, #tpu.memory_space<vmem>>, vector<1x256xf32>
    tpu.vector_store %arg7[%c4_162, %c3328_163], %226 {strides = array<i32>} : memref<8x4096xf32, #tpu.memory_space<vmem>>, vector<1x256xf32>,
    %228 = vector.extract_strided_slice %199 {offsets = [14, 0], sizes = [1, 256], strides = [1, 1]} : vector<16x256xf32> to vector<1x256xf32>
    %c4_164 = arith.constant 4 : index
    %c3584_165 = arith.constant 3584 : index
    %229 = vector.load %arg7[%c4_164, %c3584_165] : memref<8x4096xf32, #tpu.memory_space<vmem>>, vector<1x256xf32>
    tpu.vector_store %arg7[%c4_164, %c3584_165], %228 {strides = array<i32>} : memref<8x4096xf32, #tpu.memory_space<vmem>>, vector<1x256xf32>,
    %230 = vector.extract_strided_slice %199 {offsets = [15, 0], sizes = [1, 256], strides = [1, 1]} : vector<16x256xf32> to vector<1x256xf32>
    %c4_166 = arith.constant 4 : index
    %c3840_167 = arith.constant 3840 : index
    %231 = vector.load %arg7[%c4_166, %c3840_167] : memref<8x4096xf32, #tpu.memory_space<vmem>>, vector<1x256xf32>
    tpu.vector_store %arg7[%c4_166, %c3840_167], %230 {strides = array<i32>} : memref<8x4096xf32, #tpu.memory_space<vmem>>, vector<1x256xf32>,
    %c5 = arith.constant 5 : index
    %c0_168 = arith.constant 0 : index
    %c0_169 = arith.constant 0 : index
    %232 = vector.load %arg1[%c5, %c0_168, %c0_169] : memref<8x32x1024xbf16, #tpu.memory_space<vmem>>, vector<1x32x1024xbf16>
    %233 = vector.shape_cast %232 : vector<1x32x1024xbf16> to vector<32x1024xbf16>
    %cst_170 = arith.constant dense<0.000000e+00> : vector<16x1024xf32>
    %234 = tpu.matmul %0, %233, %cst_170 {dimension_numbers = #tpu.dot_dimension_numbers<[1], [0], [0], [1], [0, 0, 1, 1], [], []>} : vector<16x32xbf16>, vector<32x1024xbf16>, vector<16x1024xf32> -> vector<16x1024xf32>
    %235 = vector.broadcast %1 : vector<16x1xf32> to vector<16x1024xf32>
    %236 = arith.addf %234, %235 : vector<16x1024xf32>
    %cst_171 = arith.constant 0.000000e+00 : f32
    %237 = vector.broadcast %cst_171 : f32 to vector<16x1024xf32>
    %238 = arith.maximumf %236, %237 : vector<16x1024xf32>
    %239 = vector.extract_strided_slice %238 {offsets = [0, 0], sizes = [16, 256], strides = [1, 1]} : vector<16x1024xf32> to vector<16x256xf32>
    %240 = vector.extract_strided_slice %238 {offsets = [0, 256], sizes = [16, 256], strides = [1, 1]} : vector<16x1024xf32> to vector<16x256xf32>
    %241 = arith.maximumf %239, %240 : vector<16x256xf32>
    %242 = vector.extract_strided_slice %238 {offsets = [0, 512], sizes = [16, 256], strides = [1, 1]} : vector<16x1024xf32> to vector<16x256xf32>
    %243 = vector.extract_strided_slice %238 {offsets = [0, 768], sizes = [16, 256], strides = [1, 1]} : vector<16x1024xf32> to vector<16x256xf32>
    %244 = arith.maximumf %242, %243 : vector<16x256xf32>
    %245 = arith.maximumf %241, %244 : vector<16x256xf32>
    %246 = vector.extract_strided_slice %245 {offsets = [0, 0], sizes = [1, 256], strides = [1, 1]} : vector<16x256xf32> to vector<1x256xf32>
    %c5_172 = arith.constant 5 : index
    %c0_173 = arith.constant 0 : index
    %247 = vector.load %arg7[%c5_172, %c0_173] : memref<8x4096xf32, #tpu.memory_space<vmem>>, vector<1x256xf32>
    tpu.vector_store %arg7[%c5_172, %c0_173], %246 {strides = array<i32>} : memref<8x4096xf32, #tpu.memory_space<vmem>>, vector<1x256xf32>,
    %248 = vector.extract_strided_slice %245 {offsets = [1, 0], sizes = [1, 256], strides = [1, 1]} : vector<16x256xf32> to vector<1x256xf32>
    %c5_174 = arith.constant 5 : index
    %c256_175 = arith.constant 256 : index
    %249 = vector.load %arg7[%c5_174, %c256_175] : memref<8x4096xf32, #tpu.memory_space<vmem>>, vector<1x256xf32>
    tpu.vector_store %arg7[%c5_174, %c256_175], %248 {strides = array<i32>} : memref<8x4096xf32, #tpu.memory_space<vmem>>, vector<1x256xf32>,
    %250 = vector.extract_strided_slice %245 {offsets = [2, 0], sizes = [1, 256], strides = [1, 1]} : vector<16x256xf32> to vector<1x256xf32>
    %c5_176 = arith.constant 5 : index
    %c512_177 = arith.constant 512 : index
    %251 = vector.load %arg7[%c5_176, %c512_177] : memref<8x4096xf32, #tpu.memory_space<vmem>>, vector<1x256xf32>
    tpu.vector_store %arg7[%c5_176, %c512_177], %250 {strides = array<i32>} : memref<8x4096xf32, #tpu.memory_space<vmem>>, vector<1x256xf32>,
    %252 = vector.extract_strided_slice %245 {offsets = [3, 0], sizes = [1, 256], strides = [1, 1]} : vector<16x256xf32> to vector<1x256xf32>
    %c5_178 = arith.constant 5 : index
    %c768_179 = arith.constant 768 : index
    %253 = vector.load %arg7[%c5_178, %c768_179] : memref<8x4096xf32, #tpu.memory_space<vmem>>, vector<1x256xf32>
    tpu.vector_store %arg7[%c5_178, %c768_179], %252 {strides = array<i32>} : memref<8x4096xf32, #tpu.memory_space<vmem>>, vector<1x256xf32>,
    %254 = vector.extract_strided_slice %245 {offsets = [4, 0], sizes = [1, 256], strides = [1, 1]} : vector<16x256xf32> to vector<1x256xf32>
    %c5_180 = arith.constant 5 : index
    %c1024_181 = arith.constant 1024 : index
    %255 = vector.load %arg7[%c5_180, %c1024_181] : memref<8x4096xf32, #tpu.memory_space<vmem>>, vector<1x256xf32>
    tpu.vector_store %arg7[%c5_180, %c1024_181], %254 {strides = array<i32>} : memref<8x4096xf32, #tpu.memory_space<vmem>>, vector<1x256xf32>,
    %256 = vector.extract_strided_slice %245 {offsets = [5, 0], sizes = [1, 256], strides = [1, 1]} : vector<16x256xf32> to vector<1x256xf32>
    %c5_182 = arith.constant 5 : index
    %c1280_183 = arith.constant 1280 : index
    %257 = vector.load %arg7[%c5_182, %c1280_183] : memref<8x4096xf32, #tpu.memory_space<vmem>>, vector<1x256xf32>
    tpu.vector_store %arg7[%c5_182, %c1280_183], %256 {strides = array<i32>} : memref<8x4096xf32, #tpu.memory_space<vmem>>, vector<1x256xf32>,
    %258 = vector.extract_strided_slice %245 {offsets = [6, 0], sizes = [1, 256], strides = [1, 1]} : vector<16x256xf32> to vector<1x256xf32>
    %c5_184 = arith.constant 5 : index
    %c1536_185 = arith.constant 1536 : index
    %259 = vector.load %arg7[%c5_184, %c1536_185] : memref<8x4096xf32, #tpu.memory_space<vmem>>, vector<1x256xf32>
    tpu.vector_store %arg7[%c5_184, %c1536_185], %258 {strides = array<i32>} : memref<8x4096xf32, #tpu.memory_space<vmem>>, vector<1x256xf32>,
    %260 = vector.extract_strided_slice %245 {offsets = [7, 0], sizes = [1, 256], strides = [1, 1]} : vector<16x256xf32> to vector<1x256xf32>
    %c5_186 = arith.constant 5 : index
    %c1792_187 = arith.constant 1792 : index
    %261 = vector.load %arg7[%c5_186, %c1792_187] : memref<8x4096xf32, #tpu.memory_space<vmem>>, vector<1x256xf32>
    tpu.vector_store %arg7[%c5_186, %c1792_187], %260 {strides = array<i32>} : memref<8x4096xf32, #tpu.memory_space<vmem>>, vector<1x256xf32>,
    %262 = vector.extract_strided_slice %245 {offsets = [8, 0], sizes = [1, 256], strides = [1, 1]} : vector<16x256xf32> to vector<1x256xf32>
    %c5_188 = arith.constant 5 : index
    %c2048_189 = arith.constant 2048 : index
    %263 = vector.load %arg7[%c5_188, %c2048_189] : memref<8x4096xf32, #tpu.memory_space<vmem>>, vector<1x256xf32>
    tpu.vector_store %arg7[%c5_188, %c2048_189], %262 {strides = array<i32>} : memref<8x4096xf32, #tpu.memory_space<vmem>>, vector<1x256xf32>,
    %264 = vector.extract_strided_slice %245 {offsets = [9, 0], sizes = [1, 256], strides = [1, 1]} : vector<16x256xf32> to vector<1x256xf32>
    %c5_190 = arith.constant 5 : index
    %c2304_191 = arith.constant 2304 : index
    %265 = vector.load %arg7[%c5_190, %c2304_191] : memref<8x4096xf32, #tpu.memory_space<vmem>>, vector<1x256xf32>
    tpu.vector_store %arg7[%c5_190, %c2304_191], %264 {strides = array<i32>} : memref<8x4096xf32, #tpu.memory_space<vmem>>, vector<1x256xf32>,
    %266 = vector.extract_strided_slice %245 {offsets = [10, 0], sizes = [1, 256], strides = [1, 1]} : vector<16x256xf32> to vector<1x256xf32>
    %c5_192 = arith.constant 5 : index
    %c2560_193 = arith.constant 2560 : index
    %267 = vector.load %arg7[%c5_192, %c2560_193] : memref<8x4096xf32, #tpu.memory_space<vmem>>, vector<1x256xf32>
    tpu.vector_store %arg7[%c5_192, %c2560_193], %266 {strides = array<i32>} : memref<8x4096xf32, #tpu.memory_space<vmem>>, vector<1x256xf32>,
    %268 = vector.extract_strided_slice %245 {offsets = [11, 0], sizes = [1, 256], strides = [1, 1]} : vector<16x256xf32> to vector<1x256xf32>
    %c5_194 = arith.constant 5 : index
    %c2816_195 = arith.constant 2816 : index
    %269 = vector.load %arg7[%c5_194, %c2816_195] : memref<8x4096xf32, #tpu.memory_space<vmem>>, vector<1x256xf32>
    tpu.vector_store %arg7[%c5_194, %c2816_195], %268 {strides = array<i32>} : memref<8x4096xf32, #tpu.memory_space<vmem>>, vector<1x256xf32>,
    %270 = vector.extract_strided_slice %245 {offsets = [12, 0], sizes = [1, 256], strides = [1, 1]} : vector<16x256xf32> to vector<1x256xf32>
    %c5_196 = arith.constant 5 : index
    %c3072_197 = arith.constant 3072 : index
    %271 = vector.load %arg7[%c5_196, %c3072_197] : memref<8x4096xf32, #tpu.memory_space<vmem>>, vector<1x256xf32>
    tpu.vector_store %arg7[%c5_196, %c3072_197], %270 {strides = array<i32>} : memref<8x4096xf32, #tpu.memory_space<vmem>>, vector<1x256xf32>,
    %272 = vector.extract_strided_slice %245 {offsets = [13, 0], sizes = [1, 256], strides = [1, 1]} : vector<16x256xf32> to vector<1x256xf32>
    %c5_198 = arith.constant 5 : index
    %c3328_199 = arith.constant 3328 : index
    %273 = vector.load %arg7[%c5_198, %c3328_199] : memref<8x4096xf32, #tpu.memory_space<vmem>>, vector<1x256xf32>
    tpu.vector_store %arg7[%c5_198, %c3328_199], %272 {strides = array<i32>} : memref<8x4096xf32, #tpu.memory_space<vmem>>, vector<1x256xf32>,
    %274 = vector.extract_strided_slice %245 {offsets = [14, 0], sizes = [1, 256], strides = [1, 1]} : vector<16x256xf32> to vector<1x256xf32>
    %c5_200 = arith.constant 5 : index
    %c3584_201 = arith.constant 3584 : index
    %275 = vector.load %arg7[%c5_200, %c3584_201] : memref<8x4096xf32, #tpu.memory_space<vmem>>, vector<1x256xf32>
    tpu.vector_store %arg7[%c5_200, %c3584_201], %274 {strides = array<i32>} : memref<8x4096xf32, #tpu.memory_space<vmem>>, vector<1x256xf32>,
    %276 = vector.extract_strided_slice %245 {offsets = [15, 0], sizes = [1, 256], strides = [1, 1]} : vector<16x256xf32> to vector<1x256xf32>
    %c5_202 = arith.constant 5 : index
    %c3840_203 = arith.constant 3840 : index
    %277 = vector.load %arg7[%c5_202, %c3840_203] : memref<8x4096xf32, #tpu.memory_space<vmem>>, vector<1x256xf32>
    tpu.vector_store %arg7[%c5_202, %c3840_203], %276 {strides = array<i32>} : memref<8x4096xf32, #tpu.memory_space<vmem>>, vector<1x256xf32>,
    %c6 = arith.constant 6 : index
    %c0_204 = arith.constant 0 : index
    %c0_205 = arith.constant 0 : index
    %278 = vector.load %arg1[%c6, %c0_204, %c0_205] : memref<8x32x1024xbf16, #tpu.memory_space<vmem>>, vector<1x32x1024xbf16>
    %279 = vector.shape_cast %278 : vector<1x32x1024xbf16> to vector<32x1024xbf16>
    %cst_206 = arith.constant dense<0.000000e+00> : vector<16x1024xf32>
    %280 = tpu.matmul %0, %279, %cst_206 {dimension_numbers = #tpu.dot_dimension_numbers<[1], [0], [0], [1], [0, 0, 1, 1], [], []>} : vector<16x32xbf16>, vector<32x1024xbf16>, vector<16x1024xf32> -> vector<16x1024xf32>
    %281 = vector.broadcast %1 : vector<16x1xf32> to vector<16x1024xf32>
    %282 = arith.addf %280, %281 : vector<16x1024xf32>
    %cst_207 = arith.constant 0.000000e+00 : f32
    %283 = vector.broadcast %cst_207 : f32 to vector<16x1024xf32>
    %284 = arith.maximumf %282, %283 : vector<16x1024xf32>
    %285 = vector.extract_strided_slice %284 {offsets = [0, 0], sizes = [16, 256], strides = [1, 1]} : vector<16x1024xf32> to vector<16x256xf32>
    %286 = vector.extract_strided_slice %284 {offsets = [0, 256], sizes = [16, 256], strides = [1, 1]} : vector<16x1024xf32> to vector<16x256xf32>
    %287 = arith.maximumf %285, %286 : vector<16x256xf32>
    %288 = vector.extract_strided_slice %284 {offsets = [0, 512], sizes = [16, 256], strides = [1, 1]} : vector<16x1024xf32> to vector<16x256xf32>
    %289 = vector.extract_strided_slice %284 {offsets = [0, 768], sizes = [16, 256], strides = [1, 1]} : vector<16x1024xf32> to vector<16x256xf32>
    %290 = arith.maximumf %288, %289 : vector<16x256xf32>
    %291 = arith.maximumf %287, %290 : vector<16x256xf32>
    %292 = vector.extract_strided_slice %291 {offsets = [0, 0], sizes = [1, 256], strides = [1, 1]} : vector<16x256xf32> to vector<1x256xf32>
    %c6_208 = arith.constant 6 : index
    %c0_209 = arith.constant 0 : index
    %293 = vector.load %arg7[%c6_208, %c0_209] : memref<8x4096xf32, #tpu.memory_space<vmem>>, vector<1x256xf32>
    tpu.vector_store %arg7[%c6_208, %c0_209], %292 {strides = array<i32>} : memref<8x4096xf32, #tpu.memory_space<vmem>>, vector<1x256xf32>,
    %294 = vector.extract_strided_slice %291 {offsets = [1, 0], sizes = [1, 256], strides = [1, 1]} : vector<16x256xf32> to vector<1x256xf32>
    %c6_210 = arith.constant 6 : index
    %c256_211 = arith.constant 256 : index
    %295 = vector.load %arg7[%c6_210, %c256_211] : memref<8x4096xf32, #tpu.memory_space<vmem>>, vector<1x256xf32>
    tpu.vector_store %arg7[%c6_210, %c256_211], %294 {strides = array<i32>} : memref<8x4096xf32, #tpu.memory_space<vmem>>, vector<1x256xf32>,
    %296 = vector.extract_strided_slice %291 {offsets = [2, 0], sizes = [1, 256], strides = [1, 1]} : vector<16x256xf32> to vector<1x256xf32>
    %c6_212 = arith.constant 6 : index
    %c512_213 = arith.constant 512 : index
    %297 = vector.load %arg7[%c6_212, %c512_213] : memref<8x4096xf32, #tpu.memory_space<vmem>>, vector<1x256xf32>
    tpu.vector_store %arg7[%c6_212, %c512_213], %296 {strides = array<i32>} : memref<8x4096xf32, #tpu.memory_space<vmem>>, vector<1x256xf32>,
    %298 = vector.extract_strided_slice %291 {offsets = [3, 0], sizes = [1, 256], strides = [1, 1]} : vector<16x256xf32> to vector<1x256xf32>
    %c6_214 = arith.constant 6 : index
    %c768_215 = arith.constant 768 : index
    %299 = vector.load %arg7[%c6_214, %c768_215] : memref<8x4096xf32, #tpu.memory_space<vmem>>, vector<1x256xf32>
    tpu.vector_store %arg7[%c6_214, %c768_215], %298 {strides = array<i32>} : memref<8x4096xf32, #tpu.memory_space<vmem>>, vector<1x256xf32>,
    %300 = vector.extract_strided_slice %291 {offsets = [4, 0], sizes = [1, 256], strides = [1, 1]} : vector<16x256xf32> to vector<1x256xf32>
    %c6_216 = arith.constant 6 : index
    %c1024_217 = arith.constant 1024 : index
    %301 = vector.load %arg7[%c6_216, %c1024_217] : memref<8x4096xf32, #tpu.memory_space<vmem>>, vector<1x256xf32>
    tpu.vector_store %arg7[%c6_216, %c1024_217], %300 {strides = array<i32>} : memref<8x4096xf32, #tpu.memory_space<vmem>>, vector<1x256xf32>,
    %302 = vector.extract_strided_slice %291 {offsets = [5, 0], sizes = [1, 256], strides = [1, 1]} : vector<16x256xf32> to vector<1x256xf32>
    %c6_218 = arith.constant 6 : index
    %c1280_219 = arith.constant 1280 : index
    %303 = vector.load %arg7[%c6_218, %c1280_219] : memref<8x4096xf32, #tpu.memory_space<vmem>>, vector<1x256xf32>
    tpu.vector_store %arg7[%c6_218, %c1280_219], %302 {strides = array<i32>} : memref<8x4096xf32, #tpu.memory_space<vmem>>, vector<1x256xf32>,
    %304 = vector.extract_strided_slice %291 {offsets = [6, 0], sizes = [1, 256], strides = [1, 1]} : vector<16x256xf32> to vector<1x256xf32>
    %c6_220 = arith.constant 6 : index
    %c1536_221 = arith.constant 1536 : index
    %305 = vector.load %arg7[%c6_220, %c1536_221] : memref<8x4096xf32, #tpu.memory_space<vmem>>, vector<1x256xf32>
    tpu.vector_store %arg7[%c6_220, %c1536_221], %304 {strides = array<i32>} : memref<8x4096xf32, #tpu.memory_space<vmem>>, vector<1x256xf32>,
    %306 = vector.extract_strided_slice %291 {offsets = [7, 0], sizes = [1, 256], strides = [1, 1]} : vector<16x256xf32> to vector<1x256xf32>
    %c6_222 = arith.constant 6 : index
    %c1792_223 = arith.constant 1792 : index
    %307 = vector.load %arg7[%c6_222, %c1792_223] : memref<8x4096xf32, #tpu.memory_space<vmem>>, vector<1x256xf32>
    tpu.vector_store %arg7[%c6_222, %c1792_223], %306 {strides = array<i32>} : memref<8x4096xf32, #tpu.memory_space<vmem>>, vector<1x256xf32>,
    %308 = vector.extract_strided_slice %291 {offsets = [8, 0], sizes = [1, 256], strides = [1, 1]} : vector<16x256xf32> to vector<1x256xf32>
    %c6_224 = arith.constant 6 : index
    %c2048_225 = arith.constant 2048 : index
    %309 = vector.load %arg7[%c6_224, %c2048_225] : memref<8x4096xf32, #tpu.memory_space<vmem>>, vector<1x256xf32>
    tpu.vector_store %arg7[%c6_224, %c2048_225], %308 {strides = array<i32>} : memref<8x4096xf32, #tpu.memory_space<vmem>>, vector<1x256xf32>,
    %310 = vector.extract_strided_slice %291 {offsets = [9, 0], sizes = [1, 256], strides = [1, 1]} : vector<16x256xf32> to vector<1x256xf32>
    %c6_226 = arith.constant 6 : index
    %c2304_227 = arith.constant 2304 : index
    %311 = vector.load %arg7[%c6_226, %c2304_227] : memref<8x4096xf32, #tpu.memory_space<vmem>>, vector<1x256xf32>
    tpu.vector_store %arg7[%c6_226, %c2304_227], %310 {strides = array<i32>} : memref<8x4096xf32, #tpu.memory_space<vmem>>, vector<1x256xf32>,
    %312 = vector.extract_strided_slice %291 {offsets = [10, 0], sizes = [1, 256], strides = [1, 1]} : vector<16x256xf32> to vector<1x256xf32>
    %c6_228 = arith.constant 6 : index
    %c2560_229 = arith.constant 2560 : index
    %313 = vector.load %arg7[%c6_228, %c2560_229] : memref<8x4096xf32, #tpu.memory_space<vmem>>, vector<1x256xf32>
    tpu.vector_store %arg7[%c6_228, %c2560_229], %312 {strides = array<i32>} : memref<8x4096xf32, #tpu.memory_space<vmem>>, vector<1x256xf32>,
    %314 = vector.extract_strided_slice %291 {offsets = [11, 0], sizes = [1, 256], strides = [1, 1]} : vector<16x256xf32> to vector<1x256xf32>
    %c6_230 = arith.constant 6 : index
    %c2816_231 = arith.constant 2816 : index
    %315 = vector.load %arg7[%c6_230, %c2816_231] : memref<8x4096xf32, #tpu.memory_space<vmem>>, vector<1x256xf32>
    tpu.vector_store %arg7[%c6_230, %c2816_231], %314 {strides = array<i32>} : memref<8x4096xf32, #tpu.memory_space<vmem>>, vector<1x256xf32>,
    %316 = vector.extract_strided_slice %291 {offsets = [12, 0], sizes = [1, 256], strides = [1, 1]} : vector<16x256xf32> to vector<1x256xf32>
    %c6_232 = arith.constant 6 : index
    %c3072_233 = arith.constant 3072 : index
    %317 = vector.load %arg7[%c6_232, %c3072_233] : memref<8x4096xf32, #tpu.memory_space<vmem>>, vector<1x256xf32>
    tpu.vector_store %arg7[%c6_232, %c3072_233], %316 {strides = array<i32>} : memref<8x4096xf32, #tpu.memory_space<vmem>>, vector<1x256xf32>,
    %318 = vector.extract_strided_slice %291 {offsets = [13, 0], sizes = [1, 256], strides = [1, 1]} : vector<16x256xf32> to vector<1x256xf32>
    %c6_234 = arith.constant 6 : index
    %c3328_235 = arith.constant 3328 : index
    %319 = vector.load %arg7[%c6_234, %c3328_235] : memref<8x4096xf32, #tpu.memory_space<vmem>>, vector<1x256xf32>
    tpu.vector_store %arg7[%c6_234, %c3328_235], %318 {strides = array<i32>} : memref<8x4096xf32, #tpu.memory_space<vmem>>, vector<1x256xf32>,
    %320 = vector.extract_strided_slice %291 {offsets = [14, 0], sizes = [1, 256], strides = [1, 1]} : vector<16x256xf32> to vector<1x256xf32>
    %c6_236 = arith.constant 6 : index
    %c3584_237 = arith.constant 3584 : index
    %321 = vector.load %arg7[%c6_236, %c3584_237] : memref<8x4096xf32, #tpu.memory_space<vmem>>, vector<1x256xf32>
    tpu.vector_store %arg7[%c6_236, %c3584_237], %320 {strides = array<i32>} : memref<8x4096xf32, #tpu.memory_space<vmem>>, vector<1x256xf32>,
    %322 = vector.extract_strided_slice %291 {offsets = [15, 0], sizes = [1, 256], strides = [1, 1]} : vector<16x256xf32> to vector<1x256xf32>
    %c6_238 = arith.constant 6 : index
    %c3840_239 = arith.constant 3840 : index
    %323 = vector.load %arg7[%c6_238, %c3840_239] : memref<8x4096xf32, #tpu.memory_space<vmem>>, vector<1x256xf32>
    tpu.vector_store %arg7[%c6_238, %c3840_239], %322 {strides = array<i32>} : memref<8x4096xf32, #tpu.memory_space<vmem>>, vector<1x256xf32>,
    %c7 = arith.constant 7 : index
    %c0_240 = arith.constant 0 : index
    %c0_241 = arith.constant 0 : index
    %324 = vector.load %arg1[%c7, %c0_240, %c0_241] : memref<8x32x1024xbf16, #tpu.memory_space<vmem>>, vector<1x32x1024xbf16>
    %325 = vector.shape_cast %324 : vector<1x32x1024xbf16> to vector<32x1024xbf16>
    %cst_242 = arith.constant dense<0.000000e+00> : vector<16x1024xf32>
    %326 = tpu.matmul %0, %325, %cst_242 {dimension_numbers = #tpu.dot_dimension_numbers<[1], [0], [0], [1], [0, 0, 1, 1], [], []>} : vector<16x32xbf16>, vector<32x1024xbf16>, vector<16x1024xf32> -> vector<16x1024xf32>
    %327 = vector.broadcast %1 : vector<16x1xf32> to vector<16x1024xf32>
    %328 = arith.addf %326, %327 : vector<16x1024xf32>
    %cst_243 = arith.constant 0.000000e+00 : f32
    %329 = vector.broadcast %cst_243 : f32 to vector<16x1024xf32>
    %330 = arith.maximumf %328, %329 : vector<16x1024xf32>
    %331 = vector.extract_strided_slice %330 {offsets = [0, 0], sizes = [16, 256], strides = [1, 1]} : vector<16x1024xf32> to vector<16x256xf32>
    %332 = vector.extract_strided_slice %330 {offsets = [0, 256], sizes = [16, 256], strides = [1, 1]} : vector<16x1024xf32> to vector<16x256xf32>
    %333 = arith.maximumf %331, %332 : vector<16x256xf32>
    %334 = vector.extract_strided_slice %330 {offsets = [0, 512], sizes = [16, 256], strides = [1, 1]} : vector<16x1024xf32> to vector<16x256xf32>
    %335 = vector.extract_strided_slice %330 {offsets = [0, 768], sizes = [16, 256], strides = [1, 1]} : vector<16x1024xf32> to vector<16x256xf32>
    %336 = arith.maximumf %334, %335 : vector<16x256xf32>
    %337 = arith.maximumf %333, %336 : vector<16x256xf32>
    %338 = vector.extract_strided_slice %337 {offsets = [0, 0], sizes = [1, 256], strides = [1, 1]} : vector<16x256xf32> to vector<1x256xf32>
    %c7_244 = arith.constant 7 : index
    %c0_245 = arith.constant 0 : index
    %339 = vector.load %arg7[%c7_244, %c0_245] : memref<8x4096xf32, #tpu.memory_space<vmem>>, vector<1x256xf32>
    tpu.vector_store %arg7[%c7_244, %c0_245], %338 {strides = array<i32>} : memref<8x4096xf32, #tpu.memory_space<vmem>>, vector<1x256xf32>,
    %340 = vector.extract_strided_slice %337 {offsets = [1, 0], sizes = [1, 256], strides = [1, 1]} : vector<16x256xf32> to vector<1x256xf32>
    %c7_246 = arith.constant 7 : index
    %c256_247 = arith.constant 256 : index
    %341 = vector.load %arg7[%c7_246, %c256_247] : memref<8x4096xf32, #tpu.memory_space<vmem>>, vector<1x256xf32>
    tpu.vector_store %arg7[%c7_246, %c256_247], %340 {strides = array<i32>} : memref<8x4096xf32, #tpu.memory_space<vmem>>, vector<1x256xf32>,
    %342 = vector.extract_strided_slice %337 {offsets = [2, 0], sizes = [1, 256], strides = [1, 1]} : vector<16x256xf32> to vector<1x256xf32>
    %c7_248 = arith.constant 7 : index
    %c512_249 = arith.constant 512 : index
    %343 = vector.load %arg7[%c7_248, %c512_249] : memref<8x4096xf32, #tpu.memory_space<vmem>>, vector<1x256xf32>
    tpu.vector_store %arg7[%c7_248, %c512_249], %342 {strides = array<i32>} : memref<8x4096xf32, #tpu.memory_space<vmem>>, vector<1x256xf32>,
    %344 = vector.extract_strided_slice %337 {offsets = [3, 0], sizes = [1, 256], strides = [1, 1]} : vector<16x256xf32> to vector<1x256xf32>
    %c7_250 = arith.constant 7 : index
    %c768_251 = arith.constant 768 : index
    %345 = vector.load %arg7[%c7_250, %c768_251] : memref<8x4096xf32, #tpu.memory_space<vmem>>, vector<1x256xf32>
    tpu.vector_store %arg7[%c7_250, %c768_251], %344 {strides = array<i32>} : memref<8x4096xf32, #tpu.memory_space<vmem>>, vector<1x256xf32>,
    %346 = vector.extract_strided_slice %337 {offsets = [4, 0], sizes = [1, 256], strides = [1, 1]} : vector<16x256xf32> to vector<1x256xf32>
    %c7_252 = arith.constant 7 : index
    %c1024_253 = arith.constant 1024 : index
    %347 = vector.load %arg7[%c7_252, %c1024_253] : memref<8x4096xf32, #tpu.memory_space<vmem>>, vector<1x256xf32>
    tpu.vector_store %arg7[%c7_252, %c1024_253], %346 {strides = array<i32>} : memref<8x4096xf32, #tpu.memory_space<vmem>>, vector<1x256xf32>,
    %348 = vector.extract_strided_slice %337 {offsets = [5, 0], sizes = [1, 256], strides = [1, 1]} : vector<16x256xf32> to vector<1x256xf32>
    %c7_254 = arith.constant 7 : index
    %c1280_255 = arith.constant 1280 : index
    %349 = vector.load %arg7[%c7_254, %c1280_255] : memref<8x4096xf32, #tpu.memory_space<vmem>>, vector<1x256xf32>
    tpu.vector_store %arg7[%c7_254, %c1280_255], %348 {strides = array<i32>} : memref<8x4096xf32, #tpu.memory_space<vmem>>, vector<1x256xf32>,
    %350 = vector.extract_strided_slice %337 {offsets = [6, 0], sizes = [1, 256], strides = [1, 1]} : vector<16x256xf32> to vector<1x256xf32>
    %c7_256 = arith.constant 7 : index
    %c1536_257 = arith.constant 1536 : index
    %351 = vector.load %arg7[%c7_256, %c1536_257] : memref<8x4096xf32, #tpu.memory_space<vmem>>, vector<1x256xf32>
    tpu.vector_store %arg7[%c7_256, %c1536_257], %350 {strides = array<i32>} : memref<8x4096xf32, #tpu.memory_space<vmem>>, vector<1x256xf32>,
    %352 = vector.extract_strided_slice %337 {offsets = [7, 0], sizes = [1, 256], strides = [1, 1]} : vector<16x256xf32> to vector<1x256xf32>
    %c7_258 = arith.constant 7 : index
    %c1792_259 = arith.constant 1792 : index
    %353 = vector.load %arg7[%c7_258, %c1792_259] : memref<8x4096xf32, #tpu.memory_space<vmem>>, vector<1x256xf32>
    tpu.vector_store %arg7[%c7_258, %c1792_259], %352 {strides = array<i32>} : memref<8x4096xf32, #tpu.memory_space<vmem>>, vector<1x256xf32>,
    %354 = vector.extract_strided_slice %337 {offsets = [8, 0], sizes = [1, 256], strides = [1, 1]} : vector<16x256xf32> to vector<1x256xf32>
    %c7_260 = arith.constant 7 : index
    %c2048_261 = arith.constant 2048 : index
    %355 = vector.load %arg7[%c7_260, %c2048_261] : memref<8x4096xf32, #tpu.memory_space<vmem>>, vector<1x256xf32>
    tpu.vector_store %arg7[%c7_260, %c2048_261], %354 {strides = array<i32>} : memref<8x4096xf32, #tpu.memory_space<vmem>>, vector<1x256xf32>,
    %356 = vector.extract_strided_slice %337 {offsets = [9, 0], sizes = [1, 256], strides = [1, 1]} : vector<16x256xf32> to vector<1x256xf32>
    %c7_262 = arith.constant 7 : index
    %c2304_263 = arith.constant 2304 : index
    %357 = vector.load %arg7[%c7_262, %c2304_263] : memref<8x4096xf32, #tpu.memory_space<vmem>>, vector<1x256xf32>
    tpu.vector_store %arg7[%c7_262, %c2304_263], %356 {strides = array<i32>} : memref<8x4096xf32, #tpu.memory_space<vmem>>, vector<1x256xf32>,
    %358 = vector.extract_strided_slice %337 {offsets = [10, 0], sizes = [1, 256], strides = [1, 1]} : vector<16x256xf32> to vector<1x256xf32>
    %c7_264 = arith.constant 7 : index
    %c2560_265 = arith.constant 2560 : index
    %359 = vector.load %arg7[%c7_264, %c2560_265] : memref<8x4096xf32, #tpu.memory_space<vmem>>, vector<1x256xf32>
    tpu.vector_store %arg7[%c7_264, %c2560_265], %358 {strides = array<i32>} : memref<8x4096xf32, #tpu.memory_space<vmem>>, vector<1x256xf32>,
    %360 = vector.extract_strided_slice %337 {offsets = [11, 0], sizes = [1, 256], strides = [1, 1]} : vector<16x256xf32> to vector<1x256xf32>
    %c7_266 = arith.constant 7 : index
    %c2816_267 = arith.constant 2816 : index
    %361 = vector.load %arg7[%c7_266, %c2816_267] : memref<8x4096xf32, #tpu.memory_space<vmem>>, vector<1x256xf32>
    tpu.vector_store %arg7[%c7_266, %c2816_267], %360 {strides = array<i32>} : memref<8x4096xf32, #tpu.memory_space<vmem>>, vector<1x256xf32>,
    %362 = vector.extract_strided_slice %337 {offsets = [12, 0], sizes = [1, 256], strides = [1, 1]} : vector<16x256xf32> to vector<1x256xf32>
    %c7_268 = arith.constant 7 : index
    %c3072_269 = arith.constant 3072 : index
    %363 = vector.load %arg7[%c7_268, %c3072_269] : memref<8x4096xf32, #tpu.memory_space<vmem>>, vector<1x256xf32>
    tpu.vector_store %arg7[%c7_268, %c3072_269], %362 {strides = array<i32>} : memref<8x4096xf32, #tpu.memory_space<vmem>>, vector<1x256xf32>,
    %364 = vector.extract_strided_slice %337 {offsets = [13, 0], sizes = [1, 256], strides = [1, 1]} : vector<16x256xf32> to vector<1x256xf32>
    %c7_270 = arith.constant 7 : index
    %c3328_271 = arith.constant 3328 : index
    %365 = vector.load %arg7[%c7_270, %c3328_271] : memref<8x4096xf32, #tpu.memory_space<vmem>>, vector<1x256xf32>
    tpu.vector_store %arg7[%c7_270, %c3328_271], %364 {strides = array<i32>} : memref<8x4096xf32, #tpu.memory_space<vmem>>, vector<1x256xf32>,
    %366 = vector.extract_strided_slice %337 {offsets = [14, 0], sizes = [1, 256], strides = [1, 1]} : vector<16x256xf32> to vector<1x256xf32>
    %c7_272 = arith.constant 7 : index
    %c3584_273 = arith.constant 3584 : index
    %367 = vector.load %arg7[%c7_272, %c3584_273] : memref<8x4096xf32, #tpu.memory_space<vmem>>, vector<1x256xf32>
    tpu.vector_store %arg7[%c7_272, %c3584_273], %366 {strides = array<i32>} : memref<8x4096xf32, #tpu.memory_space<vmem>>, vector<1x256xf32>,
    %368 = vector.extract_strided_slice %337 {offsets = [15, 0], sizes = [1, 256], strides = [1, 1]} : vector<16x256xf32> to vector<1x256xf32>
    %c7_274 = arith.constant 7 : index
    %c3840_275 = arith.constant 3840 : index
    %369 = vector.load %arg7[%c7_274, %c3840_275] : memref<8x4096xf32, #tpu.memory_space<vmem>>, vector<1x256xf32>
    tpu.vector_store %arg7[%c7_274, %c3840_275], %368 {strides = array<i32>} : memref<8x4096xf32, #tpu.memory_space<vmem>>, vector<1x256xf32>,
    %c0_276 = arith.constant 0 : index
    %c0_277 = arith.constant 0 : index
    %370 = vector.load %arg7[%c0_276, %c0_277] : memref<8x4096xf32, #tpu.memory_space<vmem>>, vector<8x4096xf32>
    %371 = arith.truncf %370 : vector<8x4096xf32> to vector<8x4096xbf16>
    %c0_278 = arith.constant 0 : index
    %c0_279 = arith.constant 0 : index
    %372 = vector.load %arg4[%c0_278, %c0_279] : memref<4096x128xbf16, #tpu.memory_space<vmem>>, vector<4096x128xbf16>
    %cst_280 = arith.constant dense<0.000000e+00> : vector<8x128xf32>
    %373 = tpu.matmul %371, %372, %cst_280 {dimension_numbers = #tpu.dot_dimension_numbers<[1], [0], [0], [1], [0, 0, 1, 1], [], []>} : vector<8x4096xbf16>, vector<4096x128xbf16>, vector<8x128xf32> -> vector<8x128xf32>
    %c0_281 = arith.constant 0 : index
    %c0_282 = arith.constant 0 : index
    %374 = vector.load %arg5[%c0_281, %c0_282] : memref<1x128xf32, #tpu.memory_space<vmem>>, vector<1x128xf32>
    %375 = vector.broadcast %374 : vector<1x128xf32> to vector<8x128xf32>
    %376 = arith.addf %373, %375 : vector<8x128xf32>
    %c0_283 = arith.constant 0 : index
    %c0_284 = arith.constant 0 : index
    %377 = vector.load %arg6[%c0_283, %c0_284] : memref<8x128xf32, #tpu.memory_space<vmem>>, vector<8x128xf32>
    tpu.vector_store %arg6[%c0_283, %c0_284], %376 {strides = array<i32>} : memref<8x128xf32, #tpu.memory_space<vmem>>, vector<8x128xf32>,
    return
  }
  func.func @transform_0(%arg0: i32) -> (i32, i32, i32) {
    %c0_i32 = arith.constant 0 : i32
    %c0_i32_0 = arith.constant 0 : i32
    %c0_i32_1 = arith.constant 0 : i32
    return %arg0, %c0_i32, %c0_i32_0 : i32, i32, i32
  }
  func.func @transform_1(%arg0: i32) -> (i32, i32) {
    %c0_i32 = arith.constant 0 : i32
    %c0_i32_0 = arith.constant 0 : i32
    %c0_i32_1 = arith.constant 0 : i32
    return %c0_i32, %c0_i32_0 : i32, i32
  }
  func.func @transform_2(%arg0: i32) -> (i32, i32) {
    %c0_i32 = arith.constant 0 : i32
    %c0_i32_0 = arith.constant 0 : i32
    %c0_i32_1 = arith.constant 0 : i32
    return %c0_i32, %c0_i32_0 : i32, i32
  }
  func.func @transform_3(%arg0: i32) -> (i32, i32) {
    %c0_i32 = arith.constant 0 : i32
    %c0_i32_0 = arith.constant 0 : i32
    %c0_i32_1 = arith.constant 0 : i32
    return %c0_i32, %c0_i32_0 : i32, i32
  }
  func.func @transform_4(%arg0: i32) -> (i32, i32) {
    %c0_i32 = arith.constant 0 : i32
    %c0_i32_0 = arith.constant 0 : i32
    %c0_i32_1 = arith.constant 0 : i32
    return %c0_i32, %c0_i32_0 : i32, i32
  }
  func.func @transform_5(%arg0: i32) -> (i32, i32) {
    %c0_i32 = arith.constant 0 : i32
    %c0_i32_0 = arith.constant 0 : i32
    return %arg0, %c0_i32 : i32, i32
  }
}

</mosaic_0001>

<llo_original>
// kernel: convnet3_forward.1
$region0: #{convnet3_forward.1}
  #allocation0 [shape = 'u32[]', space=smem, size = 0x4, offset = 0x4, fixed_abs, tag = 'smem constant byte address 0x4 - core index']
  #allocation1 [shape = 'u32[72,128]{1,0:T(1,128)}', space=vmem, size = 0x9000, scoped, tag = 'internal scratch']
  #allocation2 [shape = 'f32[8,4096]{1,0:T(8,128)}', space=vmem, size = 0x20000, scoped, tag = 'scratch operand']
  %s0 = inlined_call_operand.vmem [shape: bf16[8,32,1024], index: 0, kind: input, shape index: {}]
  %s1 = inlined_call_operand.vmem [shape: bf16[16,32], index: 1, kind: input, shape index: {}]
  %s2 = inlined_call_operand.vmem [shape: f32[16,1], index: 2, kind: input, shape index: {}]
  %s3 = inlined_call_operand.vmem [shape: bf16[4096,128], index: 3, kind: input, shape index: {}]
  %s4 = inlined_call_operand.vmem [shape: f32[1,128], index: 4, kind: input, shape index: {}]
  %s5 = inlined_call_operand.vmem [shape: f32[8,128], index: 5, kind: output, shape index: {}]
  %s6 = sld [smem:[#allocation0]]
  $region30: #{convnet3_forward.1} parent=0
    _
  %s8 = ssub.s32 1, %s6
  %s9 = scalar_select 0, %s8, %s6
  // Predicated region
  $region2: #{convnet3_forward.1} parent=0 // pred_check
    _
  $region3: #{convnet3_forward.1} parent=0 // pred_check_branch
    %11 = sbr.rel (0) target = $region5
  $region4: #{convnet3_forward.1} parent=0 // pred_region
    _
  $region5: #{convnet3_forward.1} parent=0 // pred_fallthru
    _
  // Predicated region
  $region6: #{convnet3_forward.1} parent=0 // pred_check
    _
  $region7: #{convnet3_forward.1} parent=0 // pred_check_branch
    %13 = sbr.rel (0) target = $region9
  $region8: #{convnet3_forward.1} parent=0 // pred_region
    _
  $region9: #{convnet3_forward.1} parent=0 // pred_fallthru
    _
  // Predicated region
  $region10: #{convnet3_forward.1} parent=0 // pred_check
    _
  $region11: #{convnet3_forward.1} parent=0 // pred_check_branch
    %15 = sbr.rel (0) target = $region13
  $region12: #{convnet3_forward.1} parent=0 // pred_region
    _
  $region13: #{convnet3_forward.1} parent=0 // pred_fallthru
    _
  // Predicated region
  $region14: #{convnet3_forward.1} parent=0 // pred_check
    _
  $region15: #{convnet3_forward.1} parent=0 // pred_check_branch
    %17 = sbr.rel (0) target = $region17
  $region16: #{convnet3_forward.1} parent=0 // pred_region
    _
  $region17: #{convnet3_forward.1} parent=0 // pred_fallthru
    _
  // Predicated region
  $region18: #{convnet3_forward.1} parent=0 // pred_check
    _
  $region19: #{convnet3_forward.1} parent=0 // pred_check_branch
    %19 = sbr.rel (0) target = $region21
  $region20: #{convnet3_forward.1} parent=0 // pred_region
    _
  $region21: #{convnet3_forward.1} parent=0 // pred_fallthru
    _
  %v21 = vld [vmem:[%s1] sm:$0xf]
  %v22 = vld [vmem:[%s1 + $0x4] sm:$0xf]
  %v23 = vld [vmem:[%s2] sm:$0xff]
  %v24 = vld [vmem:[%s2 + $0x8] sm:$0xff]
  %v25 = vld [vmem:[%s0] sm:$0xff]
  %v26 = vld [vmem:[%s0 + $0x8] sm:$0xff]
  %v27 = vld [vmem:[%s0 + $0x10] sm:$0xff]
  %v28 = vld [vmem:[%s0 + $0x18] sm:$0xff]
  %v29 = vld [vmem:[%s0 + $0x20] sm:$0xff]
  %v30 = vld [vmem:[%s0 + $0x28] sm:$0xff]
  %v31 = vld [vmem:[%s0 + $0x30] sm:$0xff]
  %v32 = vld [vmem:[%s0 + $0x38] sm:$0xff]
  %v33 = vld [vmem:[%s0 + $0x40] sm:$0xff]
  %v34 = vld [vmem:[%s0 + $0x48] sm:$0xff]
  %v35 = vld [vmem:[%s0 + $0x50] sm:$0xff]
  %v36 = vld [vmem:[%s0 + $0x58] sm:$0xff]
  %v37 = vld [vmem:[%s0 + $0x60] sm:$0xff]
  %v38 = vld [vmem:[%s0 + $0x68] sm:$0xff]
  %v39 = vld [vmem:[%s0 + $0x70] sm:$0xff]
  %v40 = vld [vmem:[%s0 + $0x78] sm:$0xff]
  %42 = vset.pattern.permute.xlu0 0
  %43 = vperm.xlu0 %42, %v23
  %v44 = vpop.permute.xlu0 %43
  %47 = vset.pattern.permute.xlu0 0
  %48 = vperm.xlu0 %47, %v24
  %v49 = vpop.permute.xlu0 %48
  %v53 = vunpack.c.l.b16 %v21
  %v54 = vunpack.c.l.b16 %v22
  %v55 = vpack.c.b16 %v54, %v53
  %v72 = vunpack.c.l.b16 %v25
  %v73 = vunpack.c.h.b16 %v25
  %v74 = vunpack.c.l.b16 %v26
  %v75 = vunpack.c.h.b16 %v26
  %v76 = vunpack.c.l.b16 %v27
  %v77 = vunpack.c.h.b16 %v27
  %v78 = vunpack.c.l.b16 %v28
  %v79 = vunpack.c.h.b16 %v28
  %v80 = vunpack.c.l.b16 %v29
  %v81 = vunpack.c.h.b16 %v29
  %v82 = vunpack.c.l.b16 %v30
  %v83 = vunpack.c.h.b16 %v30
  %v84 = vunpack.c.l.b16 %v31
  %v85 = vunpack.c.h.b16 %v31
  %v86 = vunpack.c.l.b16 %v32
  %v87 = vunpack.c.h.b16 %v32
  %v88 = vunpack.c.l.b16 %v33
  %v89 = vunpack.c.h.b16 %v33
  %v90 = vunpack.c.l.b16 %v34
  %v91 = vunpack.c.h.b16 %v34
  %v92 = vunpack.c.l.b16 %v35
  %v93 = vunpack.c.h.b16 %v35
  %v94 = vunpack.c.l.b16 %v36
  %v95 = vunpack.c.h.b16 %v36
  %v96 = vunpack.c.l.b16 %v37
  %v97 = vunpack.c.h.b16 %v37
  %v98 = vunpack.c.l.b16 %v38
  %v99 = vunpack.c.h.b16 %v38
  %v100 = vunpack.c.l.b16 %v39
  %v101 = vunpack.c.h.b16 %v39
  %v102 = vunpack.c.l.b16 %v40
  %v103 = vunpack.c.h.b16 %v40
  %v104 = vpack.c.b16 %v80, %v72
  %v105 = vpack.c.b16 %v81, %v73
  %v106 = vpack.c.b16 %v82, %v74
  %v107 = vpack.c.b16 %v83, %v75
  %v108 = vpack.c.b16 %v84, %v76
  %v109 = vpack.c.b16 %v85, %v77
  %v110 = vpack.c.b16 %v86, %v78
  %v111 = vpack.c.b16 %v87, %v79
  %v112 = vpack.c.b16 %v96, %v88
  %v113 = vpack.c.b16 %v97, %v89
  %v114 = vpack.c.b16 %v98, %v90
  %v115 = vpack.c.b16 %v99, %v91
  %v116 = vpack.c.b16 %v100, %v92
  %v117 = vpack.c.b16 %v101, %v93
  %v118 = vpack.c.b16 %v102, %v94
  %v119 = vpack.c.b16 %v103, %v95
  %vm136 = vcmask 261120
  %v138 = vsel %vm136, %v55, 0
  %140 = vmatpush.bf16.msra.mxu0 0
  %141 = vmatpush.bf16.msra.mxu0 0
  %142 = vmatpush.bf16.msra.mxu0 0
  %143 = vmatpush.bf16.msra.mxu0 0
  %144 = vmatpush.bf16.msra.mxu0 0
  %145 = vmatpush.bf16.msra.mxu0 0
  %146 = vmatpush.bf16.msra.mxu0 %v112
  %147 = vmatpush.bf16.msra.mxu0 %v104
  %148 = vmatmul.bf16.gmra.mxu0 %v138
  %v149 = vpop.f32.mrf.mxu0
  %v150 = vadd.f32 %v44, %v149
  %v151 = vpop.f32.mrf.mxu0
  %v152 = vadd.f32 %v49, %v151
  %153 = vdwg.mxu0
  %154 = vmatpush.bf16.msra.mxu0 0
  %155 = vmatpush.bf16.msra.mxu0 0
  %156 = vmatpush.bf16.msra.mxu0 0
  %157 = vmatpush.bf16.msra.mxu0 0
  %158 = vmatpush.bf16.msra.mxu0 0
  %159 = vmatpush.bf16.msra.mxu0 0
  %160 = vmatpush.bf16.msra.mxu0 %v113
  %161 = vmatpush.bf16.msra.mxu0 %v105
  %162 = vmatmul.bf16.gmra.mxu0 %v138
  %v163 = vpop.f32.mrf.mxu0
  %v164 = vadd.f32 %v44, %v163
  %v165 = vpop.f32.mrf.mxu0
  %v166 = vadd.f32 %v49, %v165
  %167 = vdwg.mxu0
  %168 = vmatpush.bf16.msra.mxu0 0
  %169 = vmatpush.bf16.msra.mxu0 0
  %170 = vmatpush.bf16.msra.mxu0 0
  %171 = vmatpush.bf16.msra.mxu0 0
  %172 = vmatpush.bf16.msra.mxu0 0
  %173 = vmatpush.bf16.msra.mxu0 0
  %174 = vmatpush.bf16.msra.mxu0 %v114
  %175 = vmatpush.bf16.msra.mxu0 %v106
  %176 = vmatmul.bf16.gmra.mxu0 %v138
  %v177 = vpop.f32.mrf.mxu0
  %v178 = vadd.f32 %v44, %v177
  %v179 = vpop.f32.mrf.mxu0
  %v180 = vadd.f32 %v49, %v179
  %181 = vdwg.mxu0
  %182 = vmatpush.bf16.msra.mxu0 0
  %183 = vmatpush.bf16.msra.mxu0 0
  %184 = vmatpush.bf16.msra.mxu0 0
  %185 = vmatpush.bf16.msra.mxu0 0
  %186 = vmatpush.bf16.msra.mxu0 0
  %187 = vmatpush.bf16.msra.mxu0 0
  %188 = vmatpush.bf16.msra.mxu0 %v115
  %189 = vmatpush.bf16.msra.mxu0 %v107
  %190 = vmatmul.bf16.gmra.mxu0 %v138
  %v191 = vpop.f32.mrf.mxu0
  %v192 = vadd.f32 %v44, %v191
  %v193 = vpop.f32.mrf.mxu0
  %v194 = vadd.f32 %v49, %v193
  %195 = vdwg.mxu0
  %196 = vmatpush.bf16.msra.mxu0 0
  %197 = vmatpush.bf16.msra.mxu0 0
  %198 = vmatpush.bf16.msra.mxu0 0
  %199 = vmatpush.bf16.msra.mxu0 0
  %200 = vmatpush.bf16.msra.mxu0 0
  %201 = vmatpush.bf16.msra.mxu0 0
  %202 = vmatpush.bf16.msra.mxu0 %v116
  %203 = vmatpush.bf16.msra.mxu0 %v108
  %204 = vmatmul.bf16.gmra.mxu0 %v138
  %v205 = vpop.f32.mrf.mxu0
  %v206 = vadd.f32 %v44, %v205
  %v207 = vpop.f32.mrf.mxu0
  %v208 = vadd.f32 %v49, %v207
  %209 = vdwg.mxu0
  %210 = vmatpush.bf16.msra.mxu0 0
  %211 = vmatpush.bf16.msra.mxu0 0
  %212 = vmatpush.bf16.msra.mxu0 0
  %213 = vmatpush.bf16.msra.mxu0 0
  %214 = vmatpush.bf16.msra.mxu0 0
  %215 = vmatpush.bf16.msra.mxu0 0
  %216 = vmatpush.bf16.msra.mxu0 %v117
  %217 = vmatpush.bf16.msra.mxu0 %v109
  %218 = vmatmul.bf16.gmra.mxu0 %v138
  %v219 = vpop.f32.mrf.mxu0
  %v220 = vadd.f32 %v44, %v219
  %v221 = vpop.f32.mrf.mxu0
  %v222 = vadd.f32 %v49, %v221
  %223 = vdwg.mxu0
  %224 = vmatpush.bf16.msra.mxu0 0
  %225 = vmatpush.bf16.msra.mxu0 0
  %226 = vmatpush.bf16.msra.mxu0 0
  %227 = vmatpush.bf16.msra.mxu0 0
  %228 = vmatpush.bf16.msra.mxu0 0
  %229 = vmatpush.bf16.msra.mxu0 0
  %230 = vmatpush.bf16.msra.mxu0 %v118
  %231 = vmatpush.bf16.msra.mxu0 %v110
  %232 = vmatmul.bf16.gmra.mxu0 %v138
  %v233 = vpop.f32.mrf.mxu0
  %v234 = vadd.f32 %v44, %v233
  %v235 = vpop.f32.mrf.mxu0
  %v236 = vadd.f32 %v49, %v235
  %237 = vdwg.mxu0
  %238 = vmatpush.bf16.msra.mxu0 0
  %239 = vmatpush.bf16.msra.mxu0 0
  %240 = vmatpush.bf16.msra.mxu0 0
  %241 = vmatpush.bf16.msra.mxu0 0
  %242 = vmatpush.bf16.msra.mxu0 0
  %243 = vmatpush.bf16.msra.mxu0 0
  %244 = vmatpush.bf16.msra.mxu0 %v119
  %245 = vmatpush.bf16.msra.mxu0 %v111
  %246 = vmatmul.bf16.gmra.mxu0 %v138
  %v247 = vpop.f32.mrf.mxu0
  %v248 = vadd.f32 %v44, %v247
  %v249 = vpop.f32.mrf.mxu0
  %v250 = vadd.f32 %v49, %v249
  %251 = vdwg.mxu0
  %v252 = vmax.f32 %v150, 0.0
  %v253 = vmax.f32 %v164, 0.0
  %v254 = vmax.f32 %v178, 0.0
  %v255 = vmax.f32 %v192, 0.0
  %v256 = vmax.f32 %v206, 0.0
  %v257 = vmax.f32 %v220, 0.0
  %v258 = vmax.f32 %v234, 0.0
  %v259 = vmax.f32 %v248, 0.0
  %v260 = vmax.f32 %v152, 0.0
  %v261 = vmax.f32 %v166, 0.0
  %v262 = vmax.f32 %v180, 0.0
  %v263 = vmax.f32 %v194, 0.0
  %v264 = vmax.f32 %v208, 0.0
  %v265 = vmax.f32 %v222, 0.0
  %v266 = vmax.f32 %v236, 0.0
  %v267 = vmax.f32 %v250, 0.0
  %v268 = vmax.f32 %v252, %v254
  %v269 = vmax.f32 %v253, %v255
  %v270 = vmax.f32 %v260, %v262
  %v271 = vmax.f32 %v261, %v263
  %v272 = vmax.f32 %v256, %v258
  %v273 = vmax.f32 %v257, %v259
  %v274 = vmax.f32 %v264, %v266
  %v275 = vmax.f32 %v265, %v267
  %v276 = vmax.f32 %v268, %v272
  %v277 = vmax.f32 %v269, %v273
  %v278 = vmax.f32 %v270, %v274
  %v279 = vmax.f32 %v271, %v275
  %v282 = vrot.slane %v277, 7
  %vm283 = vcmask 1040384
  %v284 = vsel %vm283, %v276, %v282
  %v286 = vlaneseq
  %vm287 = vcmp.ge.s32.totalorder %v286, 0
  %vm288 = vcmp.lt.s32.totalorder %v286, 256
  %vm289 = vmand %vm287, %vm288
  %290 = vst.msk [vmem:[#allocation2] ss:$8 sm:$0x3] %vm289, %v284
  %291 = vst.msk [vmem:[#allocation2] ss:$8 sm:$0x0] %vm289, %v284
  %292 = vst [vmem:[#allocation1] sm:$0xff] %v276
  %293 = vst [vmem:[#allocation1 + $0x9] sm:$0xff] %v277
  %s294 = scalar_lea.vmem [#allocation1], 1
  %v295 = vld [vmem:[%s294] ss:$9 sm:$0xff]
  %s297 = scalar_lea.vmem [#allocation2], 16
  %298 = vst.msk [vmem:[%s297] ss:$8 sm:$0x3] %vm289, %v295
  %299 = vst.msk [vmem:[%s297] ss:$8 sm:$0x0] %vm289, %v295
  %300 = vst [vmem:[#allocation1] sm:$0xff] %v276
  %301 = vst [vmem:[#allocation1 + $0x9] sm:$0xff] %v277
  %s302 = scalar_lea.vmem [#allocation1], 2
  %v303 = vld [vmem:[%s302] ss:$9 sm:$0xff]
  %s305 = scalar_lea.vmem [#allocation2], 32
  %306 = vst.msk [vmem:[%s305] ss:$8 sm:$0x3] %vm289, %v303
  %307 = vst.msk [vmem:[%s305] ss:$8 sm:$0x0] %vm289, %v303
  %308 = vst [vmem:[#allocation1] sm:$0xff] %v276
  %309 = vst [vmem:[#allocation1 + $0x9] sm:$0xff] %v277
  %s310 = scalar_lea.vmem [#allocation1], 3
  %v311 = vld [vmem:[%s310] ss:$9 sm:$0xff]
  %s313 = scalar_lea.vmem [#allocation2], 48
  %314 = vst.msk [vmem:[%s313] ss:$8 sm:$0x3] %vm289, %v311
  %315 = vst.msk [vmem:[%s313] ss:$8 sm:$0x0] %vm289, %v311
  %316 = vst [vmem:[#allocation1] sm:$0xff] %v276
  %317 = vst [vmem:[#allocation1 + $0x9] sm:$0xff] %v277
  %s318 = scalar_lea.vmem [#allocation1], 4
  %v319 = vld [vmem:[%s318] ss:$9 sm:$0xff]
  %s321 = scalar_lea.vmem [#allocation2], 64
  %322 = vst.msk [vmem:[%s321] ss:$8 sm:$0x3] %vm289, %v319
  %323 = vst.msk [vmem:[%s321] ss:$8 sm:$0x0] %vm289, %v319
  %324 = vst [vmem:[#allocation1] sm:$0xff] %v276
  %325 = vst [vmem:[#allocation1 + $0x9] sm:$0xff] %v277
  %s326 = scalar_lea.vmem [#allocation1], 5
  %v327 = vld [vmem:[%s326] ss:$9 sm:$0xff]
  %s329 = scalar_lea.vmem [#allocation2], 80
  %330 = vst.msk [vmem:[%s329] ss:$8 sm:$0x3] %vm289, %v327
  %331 = vst.msk [vmem:[%s329] ss:$8 sm:$0x0] %vm289, %v327
  %332 = vst [vmem:[#allocation1] sm:$0xff] %v276
  %333 = vst [vmem:[#allocation1 + $0x9] sm:$0xff] %v277
  %s334 = scalar_lea.vmem [#allocation1], 6
  %v335 = vld [vmem:[%s334] ss:$9 sm:$0xff]
  %s337 = scalar_lea.vmem [#allocation2], 96
  %338 = vst.msk [vmem:[%s337] ss:$8 sm:$0x3] %vm289, %v335
  %339 = vst.msk [vmem:[%s337] ss:$8 sm:$0x0] %vm289, %v335
  %340 = vst [vmem:[#allocation1] sm:$0xff] %v276
  %341 = vst [vmem:[#allocation1 + $0x9] sm:$0xff] %v277
  %s342 = scalar_lea.vmem [#allocation1], 7
  %v343 = vld [vmem:[%s342] ss:$9 sm:$0xff]
  %s345 = scalar_lea.vmem [#allocation2], 112
  %346 = vst.msk [vmem:[%s345] ss:$8 sm:$0x3] %vm289, %v343
  %347 = vst.msk [vmem:[%s345] ss:$8 sm:$0x0] %vm289, %v343
  %v350 = vrot.slane %v279, 7
  %v351 = vsel %vm283, %v278, %v350
  %s353 = scalar_lea.vmem [#allocation2], 128
  %354 = vst.msk [vmem:[%s353] ss:$8 sm:$0x3] %vm289, %v351
  %355 = vst.msk [vmem:[%s353] ss:$8 sm:$0x0] %vm289, %v351
  %356 = vst [vmem:[#allocation1] sm:$0xff] %v278
  %357 = vst [vmem:[#allocation1 + $0x9] sm:$0xff] %v279
  %s358 = scalar_lea.vmem [#allocation1], 1
  %v359 = vld [vmem:[%s358] ss:$9 sm:$0xff]
  %s361 = scalar_lea.vmem [#allocation2], 144
  %362 = vst.msk [vmem:[%s361] ss:$8 sm:$0x3] %vm289, %v359
  %363 = vst.msk [vmem:[%s361] ss:$8 sm:$0x0] %vm289, %v359
  %364 = vst [vmem:[#allocation1] sm:$0xff] %v278
  %365 = vst [vmem:[#allocation1 + $0x9] sm:$0xff] %v279
  %s366 = scalar_lea.vmem [#allocation1], 2
  %v367 = vld [vmem:[%s366] ss:$9 sm:$0xff]
  %s369 = scalar_lea.vmem [#allocation2], 160
  %370 = vst.msk [vmem:[%s369] ss:$8 sm:$0x3] %vm289, %v367
  %371 = vst.msk [vmem:[%s369] ss:$8 sm:$0x0] %vm289, %v367
  %372 = vst [vmem:[#allocation1] sm:$0xff] %v278
  %373 = vst [vmem:[#allocation1 + $0x9] sm:$0xff] %v279
  %s374 = scalar_lea.vmem [#allocation1], 3
  %v375 = vld [vmem:[%s374] ss:$9 sm:$0xff]
  %s377 = scalar_lea.vmem [#allocation2], 176
  %378 = vst.msk [vmem:[%s377] ss:$8 sm:$0x3] %vm289, %v375
  %379 = vst.msk [vmem:[%s377] ss:$8 sm:$0x0] %vm289, %v375
  %380 = vst [vmem:[#allocation1] sm:$0xff] %v278
  %381 = vst [vmem:[#allocation1 + $0x9] sm:$0xff] %v279
  %s382 = scalar_lea.vmem [#allocation1], 4
  %v383 = vld [vmem:[%s382] ss:$9 sm:$0xff]
  %s385 = scalar_lea.vmem [#allocation2], 192
  %386 = vst.msk [vmem:[%s385] ss:$8 sm:$0x3] %vm289, %v383
  %387 = vst.msk [vmem:[%s385] ss:$8 sm:$0x0] %vm289, %v383
  %388 = vst [vmem:[#allocation1] sm:$0xff] %v278
  %389 = vst [vmem:[#allocation1 + $0x9] sm:$0xff] %v279
  %s390 = scalar_lea.vmem [#allocation1], 5
  %v391 = vld [vmem:[%s390] ss:$9 sm:$0xff]
  %s393 = scalar_lea.vmem [#allocation2], 208
  %394 = vst.msk [vmem:[%s393] ss:$8 sm:$0x3] %vm289, %v391
  %395 = vst.msk [vmem:[%s393] ss:$8 sm:$0x0] %vm289, %v391
  %396 = vst [vmem:[#allocation1] sm:$0xff] %v278
  %397 = vst [vmem:[#allocation1 + $0x9] sm:$0xff] %v279
  %s398 = scalar_lea.vmem [#allocation1], 6
  %v399 = vld [vmem:[%s398] ss:$9 sm:$0xff]
  %s401 = scalar_lea.vmem [#allocation2], 224
  %402 = vst.msk [vmem:[%s401] ss:$8 sm:$0x3] %vm289, %v399
  %403 = vst.msk [vmem:[%s401] ss:$8 sm:$0x0] %vm289, %v399
  %404 = vst [vmem:[#allocation1] sm:$0xff] %v278
  %405 = vst [vmem:[#allocation1 + $0x9] sm:$0xff] %v279
  %s406 = scalar_lea.vmem [#allocation1], 7
  %v407 = vld [vmem:[%s406] ss:$9 sm:$0xff]
  %s409 = scalar_lea.vmem [#allocation2], 240
  %410 = vst.msk [vmem:[%s409] ss:$8 sm:$0x3] %vm289, %v407
  %411 = vst.msk [vmem:[%s409] ss:$8 sm:$0x0] %vm289, %v407
  %s412 = scalar_lea.vmem %s0, 128
  %v413 = vld [vmem:[%s412] sm:$0xff]
  %v414 = vld [vmem:[%s412 + $0x8] sm:$0xff]
  %v415 = vld [vmem:[%s412 + $0x10] sm:$0xff]
  %v416 = vld [vmem:[%s412 + $0x18] sm:$0xff]
  %v417 = vld [vmem:[%s412 + $0x20] sm:$0xff]
  %v418 = vld [vmem:[%s412 + $0x28] sm:$0xff]
  %v419 = vld [vmem:[%s412 + $0x30] sm:$0xff]
  %v420 = vld [vmem:[%s412 + $0x38] sm:$0xff]
  %v421 = vld [vmem:[%s412 + $0x40] sm:$0xff]
  %v422 = vld [vmem:[%s412 + $0x48] sm:$0xff]
  %v423 = vld [vmem:[%s412 + $0x50] sm:$0xff]
  %v424 = vld [vmem:[%s412 + $0x58] sm:$0xff]
  %v425 = vld [vmem:[%s412 + $0x60] sm:$0xff]
  %v426 = vld [vmem:[%s412 + $0x68] sm:$0xff]
  %v427 = vld [vmem:[%s412 + $0x70] sm:$0xff]
  %v428 = vld [vmem:[%s412 + $0x78] sm:$0xff]
  %v445 = vunpack.c.l.b16 %v413
  %v446 = vunpack.c.h.b16 %v413
  %v447 = vunpack.c.l.b16 %v414
  %v448 = vunpack.c.h.b16 %v414
  %v449 = vunpack.c.l.b16 %v415
  %v450 = vunpack.c.h.b16 %v415
  %v451 = vunpack.c.l.b16 %v416
  %v452 = vunpack.c.h.b16 %v416
  %v453 = vunpack.c.l.b16 %v417
  %v454 = vunpack.c.h.b16 %v417
  %v455 = vunpack.c.l.b16 %v418
  %v456 = vunpack.c.h.b16 %v418
  %v457 = vunpack.c.l.b16 %v419
  %v458 = vunpack.c.h.b16 %v419
  %v459 = vunpack.c.l.b16 %v420
  %v460 = vunpack.c.h.b16 %v420
  %v461 = vunpack.c.l.b16 %v421
  %v462 = vunpack.c.h.b16 %v421
  %v463 = vunpack.c.l.b16 %v422
  %v464 = vunpack.c.h.b16 %v422
  %v465 = vunpack.c.l.b16 %v423
  %v466 = vunpack.c.h.b16 %v423
  %v467 = vunpack.c.l.b16 %v424
  %v468 = vunpack.c.h.b16 %v424
  %v469 = vunpack.c.l.b16 %v425
  %v470 = vunpack.c.h.b16 %v425
  %v471 = vunpack.c.l.b16 %v426
  %v472 = vunpack.c.h.b16 %v426
  %v473 = vunpack.c.l.b16 %v427
  %v474 = vunpack.c.h.b16 %v427
  %v475 = vunpack.c.l.b16 %v428
  %v476 = vunpack.c.h.b16 %v428
  %v477 = vpack.c.b16 %v453, %v445
  %v478 = vpack.c.b16 %v454, %v446
  %v479 = vpack.c.b16 %v455, %v447
  %v480 = vpack.c.b16 %v456, %v448
  %v481 = vpack.c.b16 %v457, %v449
  %v482 = vpack.c.b16 %v458, %v450
  %v483 = vpack.c.b16 %v459, %v451
  %v484 = vpack.c.b16 %v460, %v452
  %v485 = vpack.c.b16 %v469, %v461
  %v486 = vpack.c.b16 %v470, %v462
  %v487 = vpack.c.b16 %v471, %v463
  %v488 = vpack.c.b16 %v472, %v464
  %v489 = vpack.c.b16 %v473, %v465
  %v490 = vpack.c.b16 %v474, %v466
  %v491 = vpack.c.b16 %v475, %v467
  %v492 = vpack.c.b16 %v476, %v468
  %509 = vmatpush.bf16.msra.mxu0 0
  %510 = vmatpush.bf16.msra.mxu0 0
  %511 = vmatpush.bf16.msra.mxu0 0
  %512 = vmatpush.bf16.msra.mxu0 0
  %513 = vmatpush.bf16.msra.mxu0 0
  %514 = vmatpush.bf16.msra.mxu0 0
  %515 = vmatpush.bf16.msra.mxu0 %v485
  %516 = vmatpush.bf16.msra.mxu0 %v477
  %517 = vmatmul.bf16.gmra.mxu0 %v138
  %v518 = vpop.f32.mrf.mxu0
  %v519 = vadd.f32 %v44, %v518
  %v520 = vpop.f32.mrf.mxu0
  %v521 = vadd.f32 %v49, %v520
  %522 = vdwg.mxu0
  %523 = vmatpush.bf16.msra.mxu0 0
  %524 = vmatpush.bf16.msra.mxu0 0
  %525 = vmatpush.bf16.msra.mxu0 0
  %526 = vmatpush.bf16.msra.mxu0 0
  %527 = vmatpush.bf16.msra.mxu0 0
  %528 = vmatpush.bf16.msra.mxu0 0
  %529 = vmatpush.bf16.msra.mxu0 %v486
  %530 = vmatpush.bf16.msra.mxu0 %v478
  %531 = vmatmul.bf16.gmra.mxu0 %v138
  %v532 = vpop.f32.mrf.mxu0
  %v533 = vadd.f32 %v44, %v532
  %v534 = vpop.f32.mrf.mxu0
  %v535 = vadd.f32 %v49, %v534
  %536 = vdwg.mxu0
  %537 = vmatpush.bf16.msra.mxu0 0
  %538 = vmatpush.bf16.msra.mxu0 0
  %539 = vmatpush.bf16.msra.mxu0 0
  %540 = vmatpush.bf16.msra.mxu0 0
  %541 = vmatpush.bf16.msra.mxu0 0
  %542 = vmatpush.bf16.msra.mxu0 0
  %543 = vmatpush.bf16.msra.mxu0 %v487
  %544 = vmatpush.bf16.msra.mxu0 %v479
  %545 = vmatmul.bf16.gmra.mxu0 %v138
  %v546 = vpop.f32.mrf.mxu0
  %v547 = vadd.f32 %v44, %v546
  %v548 = vpop.f32.mrf.mxu0
  %v549 = vadd.f32 %v49, %v548
  %550 = vdwg.mxu0
  %551 = vmatpush.bf16.msra.mxu0 0
  %552 = vmatpush.bf16.msra.mxu0 0
  %553 = vmatpush.bf16.msra.mxu0 0
  %554 = vmatpush.bf16.msra.mxu0 0
  %555 = vmatpush.bf16.msra.mxu0 0
  %556 = vmatpush.bf16.msra.mxu0 0
  %557 = vmatpush.bf16.msra.mxu0 %v488
  %558 = vmatpush.bf16.msra.mxu0 %v480
  %559 = vmatmul.bf16.gmra.mxu0 %v138
  %v560 = vpop.f32.mrf.mxu0
  %v561 = vadd.f32 %v44, %v560
  %v562 = vpop.f32.mrf.mxu0
  %v563 = vadd.f32 %v49, %v562
  %564 = vdwg.mxu0
  %565 = vmatpush.bf16.msra.mxu0 0
  %566 = vmatpush.bf16.msra.mxu0 0
  %567 = vmatpush.bf16.msra.mxu0 0
  %568 = vmatpush.bf16.msra.mxu0 0
  %569 = vmatpush.bf16.msra.mxu0 0
  %570 = vmatpush.bf16.msra.mxu0 0
  %571 = vmatpush.bf16.msra.mxu0 %v489
  %572 = vmatpush.bf16.msra.mxu0 %v481
  %573 = vmatmul.bf16.gmra.mxu0 %v138
  %v574 = vpop.f32.mrf.mxu0
  %v575 = vadd.f32 %v44, %v574
  %v576 = vpop.f32.mrf.mxu0
  %v577 = vadd.f32 %v49, %v576
  %578 = vdwg.mxu0
  %579 = vmatpush.bf16.msra.mxu0 0
  %580 = vmatpush.bf16.msra.mxu0 0
  %581 = vmatpush.bf16.msra.mxu0 0
  %582 = vmatpush.bf16.msra.mxu0 0
  %583 = vmatpush.bf16.msra.mxu0 0
  %584 = vmatpush.bf16.msra.mxu0 0
  %585 = vmatpush.bf16.msra.mxu0 %v490
  %586 = vmatpush.bf16.msra.mxu0 %v482
  %587 = vmatmul.bf16.gmra.mxu0 %v138
  %v588 = vpop.f32.mrf.mxu0
  %v589 = vadd.f32 %v44, %v588
  %v590 = vpop.f32.mrf.mxu0
  %v591 = vadd.f32 %v49, %v590
  %592 = vdwg.mxu0
  %593 = vmatpush.bf16.msra.mxu0 0
  %594 = vmatpush.bf16.msra.mxu0 0
  %595 = vmatpush.bf16.msra.mxu0 0
  %596 = vmatpush.bf16.msra.mxu0 0
  %597 = vmatpush.bf16.msra.mxu0 0
  %598 = vmatpush.bf16.msra.mxu0 0
  %599 = vmatpush.bf16.msra.mxu0 %v491
  %600 = vmatpush.bf16.msra.mxu0 %v483
  %601 = vmatmul.bf16.gmra.mxu0 %v138
  %v602 = vpop.f32.mrf.mxu0
  %v603 = vadd.f32 %v44, %v602
  %v604 = vpop.f32.mrf.mxu0
  %v605 = vadd.f32 %v49, %v604
  %606 = vdwg.mxu0
  %607 = vmatpush.bf16.msra.mxu0 0
  %608 = vmatpush.bf16.msra.mxu0 0
  %609 = vmatpush.bf16.msra.mxu0 0
  %610 = vmatpush.bf16.msra.mxu0 0
  %611 = vmatpush.bf16.msra.mxu0 0
  %612 = vmatpush.bf16.msra.mxu0 0
  %613 = vmatpush.bf16.msra.mxu0 %v492
  %614 = vmatpush.bf16.msra.mxu0 %v484
  %615 = vmatmul.bf16.gmra.mxu0 %v138
  %v616 = vpop.f32.mrf.mxu0
  %v617 = vadd.f32 %v44, %v616
  %v618 = vpop.f32.mrf.mxu0
  %v619 = vadd.f32 %v49, %v618
  %620 = vdwg.mxu0
  %v621 = vmax.f32 %v519, 0.0
  %v622 = vmax.f32 %v533, 0.0
  %v623 = vmax.f32 %v547, 0.0
  %v624 = vmax.f32 %v561, 0.0
  %v625 = vmax.f32 %v575, 0.0
  %v626 = vmax.f32 %v589, 0.0
  %v627 = vmax.f32 %v603, 0.0
  %v628 = vmax.f32 %v617, 0.0
  %v629 = vmax.f32 %v521, 0.0
  %v630 = vmax.f32 %v535, 0.0
  %v631 = vmax.f32 %v549, 0.0
  %v632 = vmax.f32 %v563, 0.0
  %v633 = vmax.f32 %v577, 0.0
  %v634 = vmax.f32 %v591, 0.0
  %v635 = vmax.f32 %v605, 0.0
  %v636 = vmax.f32 %v619, 0.0
  %v637 = vmax.f32 %v621, %v623
  %v638 = vmax.f32 %v622, %v624
  %v639 = vmax.f32 %v629, %v631
  %v640 = vmax.f32 %v630, %v632
  %v641 = vmax.f32 %v625, %v627
  %v642 = vmax.f32 %v626, %v628
  %v643 = vmax.f32 %v633, %v635
  %v644 = vmax.f32 %v634, %v636
  %v645 = vmax.f32 %v637, %v641
  %v646 = vmax.f32 %v638, %v642
  %v647 = vmax.f32 %v639, %v643
  %v648 = vmax.f32 %v640, %v644
  %v651 = vrot.slane %v646, 7
  %v652 = vsel %vm283, %v645, %v651
  %s654 = scalar_lea.vmem [#allocation2], 1
  %655 = vst.msk [vmem:[%s654] ss:$8 sm:$0x3] %vm289, %v652
  %656 = vst.msk [vmem:[%s654] ss:$8 sm:$0x0] %vm289, %v652
  %657 = vst [vmem:[#allocation1] sm:$0xff] %v645
  %658 = vst [vmem:[#allocation1 + $0x9] sm:$0xff] %v646
  %s659 = scalar_lea.vmem [#allocation1], 1
  %v660 = vld [vmem:[%s659] ss:$9 sm:$0xff]
  %s662 = scalar_lea.vmem [#allocation2], 17
  %663 = vst.msk [vmem:[%s662] ss:$8 sm:$0x3] %vm289, %v660
  %664 = vst.msk [vmem:[%s662] ss:$8 sm:$0x0] %vm289, %v660
  %665 = vst [vmem:[#allocation1] sm:$0xff] %v645
  %666 = vst [vmem:[#allocation1 + $0x9] sm:$0xff] %v646
  %s667 = scalar_lea.vmem [#allocation1], 2
  %v668 = vld [vmem:[%s667] ss:$9 sm:$0xff]
  %s670 = scalar_lea.vmem [#allocation2], 33
  %671 = vst.msk [vmem:[%s670] ss:$8 sm:$0x3] %vm289, %v668
  %672 = vst.msk [vmem:[%s670] ss:$8 sm:$0x0] %vm289, %v668
  %673 = vst [vmem:[#allocation1] sm:$0xff] %v645
  %674 = vst [vmem:[#allocation1 + $0x9] sm:$0xff] %v646
  %s675 = scalar_lea.vmem [#allocation1], 3
  %v676 = vld [vmem:[%s675] ss:$9 sm:$0xff]
  %s678 = scalar_lea.vmem [#allocation2], 49
  %679 = vst.msk [vmem:[%s678] ss:$8 sm:$0x3] %vm289, %v676
  %680 = vst.msk [vmem:[%s678] ss:$8 sm:$0x0] %vm289, %v676
  %681 = vst [vmem:[#allocation1] sm:$0xff] %v645
  %682 = vst [vmem:[#allocation1 + $0x9] sm:$0xff] %v646
  %s683 = scalar_lea.vmem [#allocation1], 4
  %v684 = vld [vmem:[%s683] ss:$9 sm:$0xff]
  %s686 = scalar_lea.vmem [#allocation2], 65
  %687 = vst.msk [vmem:[%s686] ss:$8 sm:$0x3] %vm289, %v684
  %688 = vst.msk [vmem:[%s686] ss:$8 sm:$0x0] %vm289, %v684
  %689 = vst [vmem:[#allocation1] sm:$0xff] %v645
  %690 = vst [vmem:[#allocation1 + $0x9] sm:$0xff] %v646
  %s691 = scalar_lea.vmem [#allocation1], 5
  %v692 = vld [vmem:[%s691] ss:$9 sm:$0xff]
  %s694 = scalar_lea.vmem [#allocation2], 81
  %695 = vst.msk [vmem:[%s694] ss:$8 sm:$0x3] %vm289, %v692
  %696 = vst.msk [vmem:[%s694] ss:$8 sm:$0x0] %vm289, %v692
  %697 = vst [vmem:[#allocation1] sm:$0xff] %v645
  %698 = vst [vmem:[#allocation1 + $0x9] sm:$0xff] %v646
  %s699 = scalar_lea.vmem [#allocation1], 6
  %v700 = vld [vmem:[%s699] ss:$9 sm:$0xff]
  %s702 = scalar_lea.vmem [#allocation2], 97
  %703 = vst.msk [vmem:[%s702] ss:$8 sm:$0x3] %vm289, %v700
  %704 = vst.msk [vmem:[%s702] ss:$8 sm:$0x0] %vm289, %v700
  %705 = vst [vmem:[#allocation1] sm:$0xff] %v645
  %706 = vst [vmem:[#allocation1 + $0x9] sm:$0xff] %v646
  %s707 = scalar_lea.vmem [#allocation1], 7
  %v708 = vld [vmem:[%s707] ss:$9 sm:$0xff]
  %s710 = scalar_lea.vmem [#allocation2], 113
  %711 = vst.msk [vmem:[%s710] ss:$8 sm:$0x3] %vm289, %v708
  %712 = vst.msk [vmem:[%s710] ss:$8 sm:$0x0] %vm289, %v708
  %v715 = vrot.slane %v648, 7
  %v716 = vsel %vm283, %v647, %v715
  %s718 = scalar_lea.vmem [#allocation2], 129
  %719 = vst.msk [vmem:[%s718] ss:$8 sm:$0x3] %vm289, %v716
  %720 = vst.msk [vmem:[%s718] ss:$8 sm:$0x0] %vm289, %v716
  %721 = vst [vmem:[#allocation1] sm:$0xff] %v647
  %722 = vst [vmem:[#allocation1 + $0x9] sm:$0xff] %v648
  %s723 = scalar_lea.vmem [#allocation1], 1
  %v724 = vld [vmem:[%s723] ss:$9 sm:$0xff]
  %s726 = scalar_lea.vmem [#allocation2], 145
  %727 = vst.msk [vmem:[%s726] ss:$8 sm:$0x3] %vm289, %v724
  %728 = vst.msk [vmem:[%s726] ss:$8 sm:$0x0] %vm289, %v724
  %729 = vst [vmem:[#allocation1] sm:$0xff] %v647
  %730 = vst [vmem:[#allocation1 + $0x9] sm:$0xff] %v648
  %s731 = scalar_lea.vmem [#allocation1], 2
  %v732 = vld [vmem:[%s731] ss:$9 sm:$0xff]
  %s734 = scalar_lea.vmem [#allocation2], 161
  %735 = vst.msk [vmem:[%s734] ss:$8 sm:$0x3] %vm289, %v732
  %736 = vst.msk [vmem:[%s734] ss:$8 sm:$0x0] %vm289, %v732
  %737 = vst [vmem:[#allocation1] sm:$0xff] %v647
  %738 = vst [vmem:[#allocation1 + $0x9] sm:$0xff] %v648
  %s739 = scalar_lea.vmem [#allocation1], 3
  %v740 = vld [vmem:[%s739] ss:$9 sm:$0xff]
  %s742 = scalar_lea.vmem [#allocation2], 177
  %743 = vst.msk [vmem:[%s742] ss:$8 sm:$0x3] %vm289, %v740
  %744 = vst.msk [vmem:[%s742] ss:$8 sm:$0x0] %vm289, %v740
  %745 = vst [vmem:[#allocation1] sm:$0xff] %v647
  %746 = vst [vmem:[#allocation1 + $0x9] sm:$0xff] %v648
  %s747 = scalar_lea.vmem [#allocation1], 4
  %v748 = vld [vmem:[%s747] ss:$9 sm:$0xff]
  %s750 = scalar_lea.vmem [#allocation2], 193
  %751 = vst.msk [vmem:[%s750] ss:$8 sm:$0x3] %vm289, %v748
  %752 = vst.msk [vmem:[%s750] ss:$8 sm:$0x0] %vm289, %v748
  %753 = vst [vmem:[#allocation1] sm:$0xff] %v647
  %754 = vst [vmem:[#allocation1 + $0x9] sm:$0xff] %v648
  %s755 = scalar_lea.vmem [#allocation1], 5
  %v756 = vld [vmem:[%s755] ss:$9 sm:$0xff]
  %s758 = scalar_lea.vmem [#allocation2], 209
  %759 = vst.msk [vmem:[%s758] ss:$8 sm:$0x3] %vm289, %v756
  %760 = vst.msk [vmem:[%s758] ss:$8 sm:$0x0] %vm289, %v756
  %761 = vst [vmem:[#allocation1] sm:$0xff] %v647
  %762 = vst [vmem:[#allocation1 + $0x9] sm:$0xff] %v648
  %s763 = scalar_lea.vmem [#allocation1], 6
  %v764 = vld [vmem:[%s763] ss:$9 sm:$0xff]
  %s766 = scalar_lea.vmem [#allocation2], 225
  %767 = vst.msk [vmem:[%s766] ss:$8 sm:$0x3] %vm289, %v764
  %768 = vst.msk [vmem:[%s766] ss:$8 sm:$0x0] %vm289, %v764
  %769 = vst [vmem:[#allocation1] sm:$0xff] %v647
  %770 = vst [vmem:[#allocation1 + $0x9] sm:$0xff] %v648
  %s771 = scalar_lea.vmem [#allocation1], 7
  %v772 = vld [vmem:[%s771] ss:$9 sm:$0xff]
  %s774 = scalar_lea.vmem [#allocation2], 241
  %775 = vst.msk [vmem:[%s774] ss:$8 sm:$0x3] %vm289, %v772
  %776 = vst.msk [vmem:[%s774] ss:$8 sm:$0x0] %vm289, %v772
  %s777 = scalar_lea.vmem %s0, 256
  %v778 = vld [vmem:[%s777] sm:$0xff]
  %v779 = vld [vmem:[%s777 + $0x8] sm:$0xff]
  %v780 = vld [vmem:[%s777 + $0x10] sm:$0xff]
  %v781 = vld [vmem:[%s777 + $0x18] sm:$0xff]
  %v782 = vld [vmem:[%s777 + $0x20] sm:$0xff]
  %v783 = vld [vmem:[%s777 + $0x28] sm:$0xff]
  %v784 = vld [vmem:[%s777 + $0x30] sm:$0xff]
  %v785 = vld [vmem:[%s777 + $0x38] sm:$0xff]
  %v786 = vld [vmem:[%s777 + $0x40] sm:$0xff]
  %v787 = vld [vmem:[%s777 + $0x48] sm:$0xff]
  %v788 = vld [vmem:[%s777 + $0x50] sm:$0xff]
  %v789 = vld [vmem:[%s777 + $0x58] sm:$0xff]
  %v790 = vld [vmem:[%s777 + $0x60] sm:$0xff]
  %v791 = vld [vmem:[%s777 + $0x68] sm:$0xff]
  %v792 = vld [vmem:[%s777 + $0x70] sm:$0xff]
  %v793 = vld [vmem:[%s777 + $0x78] sm:$0xff]
  %v810 = vunpack.c.l.b16 %v778
  %v811 = vunpack.c.h.b16 %v778
  %v812 = vunpack.c.l.b16 %v779
  %v813 = vunpack.c.h.b16 %v779
  %v814 = vunpack.c.l.b16 %v780
  %v815 = vunpack.c.h.b16 %v780
  %v816 = vunpack.c.l.b16 %v781
  %v817 = vunpack.c.h.b16 %v781
  %v818 = vunpack.c.l.b16 %v782
  %v819 = vunpack.c.h.b16 %v782
  %v820 = vunpack.c.l.b16 %v783
  %v821 = vunpack.c.h.b16 %v783
  %v822 = vunpack.c.l.b16 %v784
  %v823 = vunpack.c.h.b16 %v784
  %v824 = vunpack.c.l.b16 %v785
  %v825 = vunpack.c.h.b16 %v785
  %v826 = vunpack.c.l.b16 %v786
  %v827 = vunpack.c.h.b16 %v786
  %v828 = vunpack.c.l.b16 %v787
  %v829 = vunpack.c.h.b16 %v787
  %v830 = vunpack.c.l.b16 %v788
  %v831 = vunpack.c.h.b16 %v788
  %v832 = vunpack.c.l.b16 %v789
  %v833 = vunpack.c.h.b16 %v789
  %v834 = vunpack.c.l.b16 %v790
  %v835 = vunpack.c.h.b16 %v790
  %v836 = vunpack.c.l.b16 %v791
  %v837 = vunpack.c.h.b16 %v791
  %v838 = vunpack.c.l.b16 %v792
  %v839 = vunpack.c.h.b16 %v792
  %v840 = vunpack.c.l.b16 %v793
  %v841 = vunpack.c.h.b16 %v793
  %v842 = vpack.c.b16 %v818, %v810
  %v843 = vpack.c.b16 %v819, %v811
  %v844 = vpack.c.b16 %v820, %v812
  %v845 = vpack.c.b16 %v821, %v813
  %v846 = vpack.c.b16 %v822, %v814
  %v847 = vpack.c.b16 %v823, %v815
  %v848 = vpack.c.b16 %v824, %v816
  %v849 = vpack.c.b16 %v825, %v817
  %v850 = vpack.c.b16 %v834, %v826
  %v851 = vpack.c.b16 %v835, %v827
  %v852 = vpack.c.b16 %v836, %v828
  %v853 = vpack.c.b16 %v837, %v829
  %v854 = vpack.c.b16 %v838, %v830
  %v855 = vpack.c.b16 %v839, %v831
  %v856 = vpack.c.b16 %v840, %v832
  %v857 = vpack.c.b16 %v841, %v833
  %874 = vmatpush.bf16.msra.mxu0 0
  %875 = vmatpush.bf16.msra.mxu0 0
  %876 = vmatpush.bf16.msra.mxu0 0
  %877 = vmatpush.bf16.msra.mxu0 0
  %878 = vmatpush.bf16.msra.mxu0 0
  %879 = vmatpush.bf16.msra.mxu0 0
  %880 = vmatpush.bf16.msra.mxu0 %v850
  %881 = vmatpush.bf16.msra.mxu0 %v842
  %882 = vmatmul.bf16.gmra.mxu0 %v138
  %v883 = vpop.f32.mrf.mxu0
  %v884 = vadd.f32 %v44, %v883
  %v885 = vpop.f32.mrf.mxu0
  %v886 = vadd.f32 %v49, %v885
  %887 = vdwg.mxu0
  %888 = vmatpush.bf16.msra.mxu0 0
  %889 = vmatpush.bf16.msra.mxu0 0
  %890 = vmatpush.bf16.msra.mxu0 0
  %891 = vmatpush.bf16.msra.mxu0 0
  %892 = vmatpush.bf16.msra.mxu0 0
  %893 = vmatpush.bf16.msra.mxu0 0
  %894 = vmatpush.bf16.msra.mxu0 %v851
  %895 = vmatpush.bf16.msra.mxu0 %v843
  %896 = vmatmul.bf16.gmra.mxu0 %v138
  %v897 = vpop.f32.mrf.mxu0
  %v898 = vadd.f32 %v44, %v897
  %v899 = vpop.f32.mrf.mxu0
  %v900 = vadd.f32 %v49, %v899
  %901 = vdwg.mxu0
  %902 = vmatpush.bf16.msra.mxu0 0
  %903 = vmatpush.bf16.msra.mxu0 0
  %904 = vmatpush.bf16.msra.mxu0 0
  %905 = vmatpush.bf16.msra.mxu0 0
  %906 = vmatpush.bf16.msra.mxu0 0
  %907 = vmatpush.bf16.msra.mxu0 0
  %908 = vmatpush.bf16.msra.mxu0 %v852
  %909 = vmatpush.bf16.msra.mxu0 %v844
  %910 = vmatmul.bf16.gmra.mxu0 %v138
  %v911 = vpop.f32.mrf.mxu0
  %v912 = vadd.f32 %v44, %v911
  %v913 = vpop.f32.mrf.mxu0
  %v914 = vadd.f32 %v49, %v913
  %915 = vdwg.mxu0
  %916 = vmatpush.bf16.msra.mxu0 0
  %917 = vmatpush.bf16.msra.mxu0 0
  %918 = vmatpush.bf16.msra.mxu0 0
  %919 = vmatpush.bf16.msra.mxu0 0
  %920 = vmatpush.bf16.msra.mxu0 0
  %921 = vmatpush.bf16.msra.mxu0 0
  %922 = vmatpush.bf16.msra.mxu0 %v853
  %923 = vmatpush.bf16.msra.mxu0 %v845
  %924 = vmatmul.bf16.gmra.mxu0 %v138
  %v925 = vpop.f32.mrf.mxu0
  %v926 = vadd.f32 %v44, %v925
  %v927 = vpop.f32.mrf.mxu0
  %v928 = vadd.f32 %v49, %v927
  %929 = vdwg.mxu0
  %930 = vmatpush.bf16.msra.mxu0 0
  %931 = vmatpush.bf16.msra.mxu0 0
  %932 = vmatpush.bf16.msra.mxu0 0
  %933 = vmatpush.bf16.msra.mxu0 0
  %934 = vmatpush.bf16.msra.mxu0 0
  %935 = vmatpush.bf16.msra.mxu0 0
  %936 = vmatpush.bf16.msra.mxu0 %v854
  %937 = vmatpush.bf16.msra.mxu0 %v846
  %938 = vmatmul.bf16.gmra.mxu0 %v138
  %v939 = vpop.f32.mrf.mxu0
  %v940 = vadd.f32 %v44, %v939
  %v941 = vpop.f32.mrf.mxu0
  %v942 = vadd.f32 %v49, %v941
  %943 = vdwg.mxu0
  %944 = vmatpush.bf16.msra.mxu0 0
  %945 = vmatpush.bf16.msra.mxu0 0
  %946 = vmatpush.bf16.msra.mxu0 0
  %947 = vmatpush.bf16.msra.mxu0 0
  %948 = vmatpush.bf16.msra.mxu0 0
  %949 = vmatpush.bf16.msra.mxu0 0
  %950 = vmatpush.bf16.msra.mxu0 %v855
  %951 = vmatpush.bf16.msra.mxu0 %v847
  %952 = vmatmul.bf16.gmra.mxu0 %v138
  %v953 = vpop.f32.mrf.mxu0
  %v954 = vadd.f32 %v44, %v953
  %v955 = vpop.f32.mrf.mxu0
  %v956 = vadd.f32 %v49, %v955
  %957 = vdwg.mxu0
  %958 = vmatpush.bf16.msra.mxu0 0
  %959 = vmatpush.bf16.msra.mxu0 0
  %960 = vmatpush.bf16.msra.mxu0 0
  %961 = vmatpush.bf16.msra.mxu0 0
  %962 = vmatpush.bf16.msra.mxu0 0
  %963 = vmatpush.bf16.msra.mxu0 0
  %964 = vmatpush.bf16.msra.mxu0 %v856
  %965 = vmatpush.bf16.msra.mxu0 %v848
  %966 = vmatmul.bf16.gmra.mxu0 %v138
  %v967 = vpop.f32.mrf.mxu0
  %v968 = vadd.f32 %v44, %v967
  %v969 = vpop.f32.mrf.mxu0
  %v970 = vadd.f32 %v49, %v969
  %971 = vdwg.mxu0
  %972 = vmatpush.bf16.msra.mxu0 0
  %973 = vmatpush.bf16.msra.mxu0 0
  %974 = vmatpush.bf16.msra.mxu0 0
  %975 = vmatpush.bf16.msra.mxu0 0
  %976 = vmatpush.bf16.msra.mxu0 0
  %977 = vmatpush.bf16.msra.mxu0 0
  %978 = vmatpush.bf16.msra.mxu0 %v857
  %979 = vmatpush.bf16.msra.mxu0 %v849
  %980 = vmatmul.bf16.gmra.mxu0 %v138
  %v981 = vpop.f32.mrf.mxu0
  %v982 = vadd.f32 %v44, %v981
  %v983 = vpop.f32.mrf.mxu0
  %v984 = vadd.f32 %v49, %v983
  %985 = vdwg.mxu0
  %v986 = vmax.f32 %v884, 0.0
  %v987 = vmax.f32 %v898, 0.0
  %v988 = vmax.f32 %v912, 0.0
  %v989 = vmax.f32 %v926, 0.0
  %v990 = vmax.f32 %v940, 0.0
  %v991 = vmax.f32 %v954, 0.0
  %v992 = vmax.f32 %v968, 0.0
  %v993 = vmax.f32 %v982, 0.0
  %v994 = vmax.f32 %v886, 0.0
  %v995 = vmax.f32 %v900, 0.0
  %v996 = vmax.f32 %v914, 0.0
  %v997 = vmax.f32 %v928, 0.0
  %v998 = vmax.f32 %v942, 0.0
  %v999 = vmax.f32 %v956, 0.0
  %v1000 = vmax.f32 %v970, 0.0
  %v1001 = vmax.f32 %v984, 0.0
  %v1002 = vmax.f32 %v986, %v988
  %v1003 = vmax.f32 %v987, %v989
  %v1004 = vmax.f32 %v994, %v996
  %v1005 = vmax.f32 %v995, %v997
  %v1006 = vmax.f32 %v990, %v992
  %v1007 = vmax.f32 %v991, %v993
  %v1008 = vmax.f32 %v998, %v1000
  %v1009 = vmax.f32 %v999, %v1001
  %v1010 = vmax.f32 %v1002, %v1006
  %v1011 = vmax.f32 %v1003, %v1007
  %v1012 = vmax.f32 %v1004, %v1008
  %v1013 = vmax.f32 %v1005, %v1009
  %v1016 = vrot.slane %v1011, 7
  %v1017 = vsel %vm283, %v1010, %v1016
  %s1019 = scalar_lea.vmem [#allocation2], 2
  %1020 = vst.msk [vmem:[%s1019] ss:$8 sm:$0x3] %vm289, %v1017
  %1021 = vst.msk [vmem:[%s1019] ss:$8 sm:$0x0] %vm289, %v1017
  %1022 = vst [vmem:[#allocation1] sm:$0xff] %v1010
  %1023 = vst [vmem:[#allocation1 + $0x9] sm:$0xff] %v1011
  %s1024 = scalar_lea.vmem [#allocation1], 1
  %v1025 = vld [vmem:[%s1024] ss:$9 sm:$0xff]
  %s1027 = scalar_lea.vmem [#allocation2], 18
  %1028 = vst.msk [vmem:[%s1027] ss:$8 sm:$0x3] %vm289, %v1025
  %1029 = vst.msk [vmem:[%s1027] ss:$8 sm:$0x0] %vm289, %v1025
  %1030 = vst [vmem:[#allocation1] sm:$0xff] %v1010
  %1031 = vst [vmem:[#allocation1 + $0x9] sm:$0xff] %v1011
  %s1032 = scalar_lea.vmem [#allocation1], 2
  %v1033 = vld [vmem:[%s1032] ss:$9 sm:$0xff]
  %s1035 = scalar_lea.vmem [#allocation2], 34
  %1036 = vst.msk [vmem:[%s1035] ss:$8 sm:$0x3] %vm289, %v1033
  %1037 = vst.msk [vmem:[%s1035] ss:$8 sm:$0x0] %vm289, %v1033
  %1038 = vst [vmem:[#allocation1] sm:$0xff] %v1010
  %1039 = vst [vmem:[#allocation1 + $0x9] sm:$0xff] %v1011
  %s1040 = scalar_lea.vmem [#allocation1], 3
  %v1041 = vld [vmem:[%s1040] ss:$9 sm:$0xff]
  %s1043 = scalar_lea.vmem [#allocation2], 50
  %1044 = vst.msk [vmem:[%s1043] ss:$8 sm:$0x3] %vm289, %v1041
  %1045 = vst.msk [vmem:[%s1043] ss:$8 sm:$0x0] %vm289, %v1041
  %1046 = vst [vmem:[#allocation1] sm:$0xff] %v1010
  %1047 = vst [vmem:[#allocation1 + $0x9] sm:$0xff] %v1011
  %s1048 = scalar_lea.vmem [#allocation1], 4
  %v1049 = vld [vmem:[%s1048] ss:$9 sm:$0xff]
  %s1051 = scalar_lea.vmem [#allocation2], 66
  %1052 = vst.msk [vmem:[%s1051] ss:$8 sm:$0x3] %vm289, %v1049
  %1053 = vst.msk [vmem:[%s1051] ss:$8 sm:$0x0] %vm289, %v1049
  %1054 = vst [vmem:[#allocation1] sm:$0xff] %v1010
  %1055 = vst [vmem:[#allocation1 + $0x9] sm:$0xff] %v1011
  %s1056 = scalar_lea.vmem [#allocation1], 5
  %v1057 = vld [vmem:[%s1056] ss:$9 sm:$0xff]
  %s1059 = scalar_lea.vmem [#allocation2], 82
  %1060 = vst.msk [vmem:[%s1059] ss:$8 sm:$0x3] %vm289, %v1057
  %1061 = vst.msk [vmem:[%s1059] ss:$8 sm:$0x0] %vm289, %v1057
  %1062 = vst [vmem:[#allocation1] sm:$0xff] %v1010
  %1063 = vst [vmem:[#allocation1 + $0x9] sm:$0xff] %v1011
  %s1064 = scalar_lea.vmem [#allocation1], 6
  %v1065 = vld [vmem:[%s1064] ss:$9 sm:$0xff]
  %s1067 = scalar_lea.vmem [#allocation2], 98
  %1068 = vst.msk [vmem:[%s1067] ss:$8 sm:$0x3] %vm289, %v1065
  %1069 = vst.msk [vmem:[%s1067] ss:$8 sm:$0x0] %vm289, %v1065
  %1070 = vst [vmem:[#allocation1] sm:$0xff] %v1010
  %1071 = vst [vmem:[#allocation1 + $0x9] sm:$0xff] %v1011
  %s1072 = scalar_lea.vmem [#allocation1], 7
  %v1073 = vld [vmem:[%s1072] ss:$9 sm:$0xff]
  %s1075 = scalar_lea.vmem [#allocation2], 114
  %1076 = vst.msk [vmem:[%s1075] ss:$8 sm:$0x3] %vm289, %v1073
  %1077 = vst.msk [vmem:[%s1075] ss:$8 sm:$0x0] %vm289, %v1073
  %v1080 = vrot.slane %v1013, 7
  %v1081 = vsel %vm283, %v1012, %v1080
  %s1083 = scalar_lea.vmem [#allocation2], 130
  %1084 = vst.msk [vmem:[%s1083] ss:$8 sm:$0x3] %vm289, %v1081
  %1085 = vst.msk [vmem:[%s1083] ss:$8 sm:$0x0] %vm289, %v1081
  %1086 = vst [vmem:[#allocation1] sm:$0xff] %v1012
  %1087 = vst [vmem:[#allocation1 + $0x9] sm:$0xff] %v1013
  %s1088 = scalar_lea.vmem [#allocation1], 1
  %v1089 = vld [vmem:[%s1088] ss:$9 sm:$0xff]
  %s1091 = scalar_lea.vmem [#allocation2], 146
  %1092 = vst.msk [vmem:[%s1091] ss:$8 sm:$0x3] %vm289, %v1089
  %1093 = vst.msk [vmem:[%s1091] ss:$8 sm:$0x0] %vm289, %v1089
  %1094 = vst [vmem:[#allocation1] sm:$0xff] %v1012
  %1095 = vst [vmem:[#allocation1 + $0x9] sm:$0xff] %v1013
  %s1096 = scalar_lea.vmem [#allocation1], 2
  %v1097 = vld [vmem:[%s1096] ss:$9 sm:$0xff]
  %s1099 = scalar_lea.vmem [#allocation2], 162
  %1100 = vst.msk [vmem:[%s1099] ss:$8 sm:$0x3] %vm289, %v1097
  %1101 = vst.msk [vmem:[%s1099] ss:$8 sm:$0x0] %vm289, %v1097
  %1102 = vst [vmem:[#allocation1] sm:$0xff] %v1012
  %1103 = vst [vmem:[#allocation1 + $0x9] sm:$0xff] %v1013
  %s1104 = scalar_lea.vmem [#allocation1], 3
  %v1105 = vld [vmem:[%s1104] ss:$9 sm:$0xff]
  %s1107 = scalar_lea.vmem [#allocation2], 178
  %1108 = vst.msk [vmem:[%s1107] ss:$8 sm:$0x3] %vm289, %v1105
  %1109 = vst.msk [vmem:[%s1107] ss:$8 sm:$0x0] %vm289, %v1105
  %1110 = vst [vmem:[#allocation1] sm:$0xff] %v1012
  %1111 = vst [vmem:[#allocation1 + $0x9] sm:$0xff] %v1013
  %s1112 = scalar_lea.vmem [#allocation1], 4
  %v1113 = vld [vmem:[%s1112] ss:$9 sm:$0xff]
  %s1115 = scalar_lea.vmem [#allocation2], 194
  %1116 = vst.msk [vmem:[%s1115] ss:$8 sm:$0x3] %vm289, %v1113
  %1117 = vst.msk [vmem:[%s1115] ss:$8 sm:$0x0] %vm289, %v1113
  %1118 = vst [vmem:[#allocation1] sm:$0xff] %v1012
  %1119 = vst [vmem:[#allocation1 + $0x9] sm:$0xff] %v1013
  %s1120 = scalar_lea.vmem [#allocation1], 5
  %v1121 = vld [vmem:[%s1120] ss:$9 sm:$0xff]
  %s1123 = scalar_lea.vmem [#allocation2], 210
  %1124 = vst.msk [vmem:[%s1123] ss:$8 sm:$0x3] %vm289, %v1121
  %1125 = vst.msk [vmem:[%s1123] ss:$8 sm:$0x0] %vm289, %v1121
  %1126 = vst [vmem:[#allocation1] sm:$0xff] %v1012
  %1127 = vst [vmem:[#allocation1 + $0x9] sm:$0xff] %v1013
  %s1128 = scalar_lea.vmem [#allocation1], 6
  %v1129 = vld [vmem:[%s1128] ss:$9 sm:$0xff]
  %s1131 = scalar_lea.vmem [#allocation2], 226
  %1132 = vst.msk [vmem:[%s1131] ss:$8 sm:$0x3] %vm289, %v1129
  %1133 = vst.msk [vmem:[%s1131] ss:$8 sm:$0x0] %vm289, %v1129
  %1134 = vst [vmem:[#allocation1] sm:$0xff] %v1012
  %1135 = vst [vmem:[#allocation1 + $0x9] sm:$0xff] %v1013
  %s1136 = scalar_lea.vmem [#allocation1], 7
  %v1137 = vld [vmem:[%s1136] ss:$9 sm:$0xff]
  %s1139 = scalar_lea.vmem [#allocation2], 242
  %1140 = vst.msk [vmem:[%s1139] ss:$8 sm:$0x3] %vm289, %v1137
  %1141 = vst.msk [vmem:[%s1139] ss:$8 sm:$0x0] %vm289, %v1137
  %s1142 = scalar_lea.vmem %s0, 384
  %v1143 = vld [vmem:[%s1142] sm:$0xff]
  %v1144 = vld [vmem:[%s1142 + $0x8] sm:$0xff]
  %v1145 = vld [vmem:[%s1142 + $0x10] sm:$0xff]
  %v1146 = vld [vmem:[%s1142 + $0x18] sm:$0xff]
  %v1147 = vld [vmem:[%s1142 + $0x20] sm:$0xff]
  %v1148 = vld [vmem:[%s1142 + $0x28] sm:$0xff]
  %v1149 = vld [vmem:[%s1142 + $0x30] sm:$0xff]
  %v1150 = vld [vmem:[%s1142 + $0x38] sm:$0xff]
  %v1151 = vld [vmem:[%s1142 + $0x40] sm:$0xff]
  %v1152 = vld [vmem:[%s1142 + $0x48] sm:$0xff]
  %v1153 = vld [vmem:[%s1142 + $0x50] sm:$0xff]
  %v1154 = vld [vmem:[%s1142 + $0x58] sm:$0xff]
  %v1155 = vld [vmem:[%s1142 + $0x60] sm:$0xff]
  %v1156 = vld [vmem:[%s1142 + $0x68] sm:$0xff]
  %v1157 = vld [vmem:[%s1142 + $0x70] sm:$0xff]
  %v1158 = vld [vmem:[%s1142 + $0x78] sm:$0xff]
  %v1175 = vunpack.c.l.b16 %v1143
  %v1176 = vunpack.c.h.b16 %v1143
  %v1177 = vunpack.c.l.b16 %v1144
  %v1178 = vunpack.c.h.b16 %v1144
  %v1179 = vunpack.c.l.b16 %v1145
  %v1180 = vunpack.c.h.b16 %v1145
  %v1181 = vunpack.c.l.b16 %v1146
  %v1182 = vunpack.c.h.b16 %v1146
  %v1183 = vunpack.c.l.b16 %v1147
  %v1184 = vunpack.c.h.b16 %v1147
  %v1185 = vunpack.c.l.b16 %v1148
  %v1186 = vunpack.c.h.b16 %v1148
  %v1187 = vunpack.c.l.b16 %v1149
  %v1188 = vunpack.c.h.b16 %v1149
  %v1189 = vunpack.c.l.b16 %v1150
  %v1190 = vunpack.c.h.b16 %v1150
  %v1191 = vunpack.c.l.b16 %v1151
  %v1192 = vunpack.c.h.b16 %v1151
  %v1193 = vunpack.c.l.b16 %v1152
  %v1194 = vunpack.c.h.b16 %v1152
  %v1195 = vunpack.c.l.b16 %v1153
  %v1196 = vunpack.c.h.b16 %v1153
  %v1197 = vunpack.c.l.b16 %v1154
  %v1198 = vunpack.c.h.b16 %v1154
  %v1199 = vunpack.c.l.b16 %v1155
  %v1200 = vunpack.c.h.b16 %v1155
  %v1201 = vunpack.c.l.b16 %v1156
  %v1202 = vunpack.c.h.b16 %v1156
  %v1203 = vunpack.c.l.b16 %v1157
  %v1204 = vunpack.c.h.b16 %v1157
  %v1205 = vunpack.c.l.b16 %v1158
  %v1206 = vunpack.c.h.b16 %v1158
  %v1207 = vpack.c.b16 %v1183, %v1175
  %v1208 = vpack.c.b16 %v1184, %v1176
  %v1209 = vpack.c.b16 %v1185, %v1177
  %v1210 = vpack.c.b16 %v1186, %v1178
  %v1211 = vpack.c.b16 %v1187, %v1179
  %v1212 = vpack.c.b16 %v1188, %v1180
  %v1213 = vpack.c.b16 %v1189, %v1181
  %v1214 = vpack.c.b16 %v1190, %v1182
  %v1215 = vpack.c.b16 %v1199, %v1191
  %v1216 = vpack.c.b16 %v1200, %v1192
  %v1217 = vpack.c.b16 %v1201, %v1193
  %v1218 = vpack.c.b16 %v1202, %v1194
  %v1219 = vpack.c.b16 %v1203, %v1195
  %v1220 = vpack.c.b16 %v1204, %v1196
  %v1221 = vpack.c.b16 %v1205, %v1197
  %v1222 = vpack.c.b16 %v1206, %v1198
  %1239 = vmatpush.bf16.msra.mxu0 0
  %1240 = vmatpush.bf16.msra.mxu0 0
  %1241 = vmatpush.bf16.msra.mxu0 0
  %1242 = vmatpush.bf16.msra.mxu0 0
  %1243 = vmatpush.bf16.msra.mxu0 0
  %1244 = vmatpush.bf16.msra.mxu0 0
  %1245 = vmatpush.bf16.msra.mxu0 %v1215
  %1246 = vmatpush.bf16.msra.mxu0 %v1207
  %1247 = vmatmul.bf16.gmra.mxu0 %v138
  %v1248 = vpop.f32.mrf.mxu0
  %v1249 = vadd.f32 %v44, %v1248
  %v1250 = vpop.f32.mrf.mxu0
  %v1251 = vadd.f32 %v49, %v1250
  %1252 = vdwg.mxu0
  %1253 = vmatpush.bf16.msra.mxu0 0
  %1254 = vmatpush.bf16.msra.mxu0 0
  %1255 = vmatpush.bf16.msra.mxu0 0
  %1256 = vmatpush.bf16.msra.mxu0 0
  %1257 = vmatpush.bf16.msra.mxu0 0
  %1258 = vmatpush.bf16.msra.mxu0 0
  %1259 = vmatpush.bf16.msra.mxu0 %v1216
  %1260 = vmatpush.bf16.msra.mxu0 %v1208
  %1261 = vmatmul.bf16.gmra.mxu0 %v138
  %v1262 = vpop.f32.mrf.mxu0
  %v1263 = vadd.f32 %v44, %v1262
  %v1264 = vpop.f32.mrf.mxu0
  %v1265 = vadd.f32 %v49, %v1264
  %1266 = vdwg.mxu0
  %1267 = vmatpush.bf16.msra.mxu0 0
  %1268 = vmatpush.bf16.msra.mxu0 0
  %1269 = vmatpush.bf16.msra.mxu0 0
  %1270 = vmatpush.bf16.msra.mxu0 0
  %1271 = vmatpush.bf16.msra.mxu0 0
  %1272 = vmatpush.bf16.msra.mxu0 0
  %1273 = vmatpush.bf16.msra.mxu0 %v1217
  %1274 = vmatpush.bf16.msra.mxu0 %v1209
  %1275 = vmatmul.bf16.gmra.mxu0 %v138
  %v1276 = vpop.f32.mrf.mxu0
  %v1277 = vadd.f32 %v44, %v1276
  %v1278 = vpop.f32.mrf.mxu0
  %v1279 = vadd.f32 %v49, %v1278
  %1280 = vdwg.mxu0
  %1281 = vmatpush.bf16.msra.mxu0 0
  %1282 = vmatpush.bf16.msra.mxu0 0
  %1283 = vmatpush.bf16.msra.mxu0 0
  %1284 = vmatpush.bf16.msra.mxu0 0
  %1285 = vmatpush.bf16.msra.mxu0 0
  %1286 = vmatpush.bf16.msra.mxu0 0
  %1287 = vmatpush.bf16.msra.mxu0 %v1218
  %1288 = vmatpush.bf16.msra.mxu0 %v1210
  %1289 = vmatmul.bf16.gmra.mxu0 %v138
  %v1290 = vpop.f32.mrf.mxu0
  %v1291 = vadd.f32 %v44, %v1290
  %v1292 = vpop.f32.mrf.mxu0
  %v1293 = vadd.f32 %v49, %v1292
  %1294 = vdwg.mxu0
  %1295 = vmatpush.bf16.msra.mxu0 0
  %1296 = vmatpush.bf16.msra.mxu0 0
  %1297 = vmatpush.bf16.msra.mxu0 0
  %1298 = vmatpush.bf16.msra.mxu0 0
  %1299 = vmatpush.bf16.msra.mxu0 0
  %1300 = vmatpush.bf16.msra.mxu0 0
  %1301 = vmatpush.bf16.msra.mxu0 %v1219
  %1302 = vmatpush.bf16.msra.mxu0 %v1211
  %1303 = vmatmul.bf16.gmra.mxu0 %v138
  %v1304 = vpop.f32.mrf.mxu0
  %v1305 = vadd.f32 %v44, %v1304
  %v1306 = vpop.f32.mrf.mxu0
  %v1307 = vadd.f32 %v49, %v1306
  %1308 = vdwg.mxu0
  %1309 = vmatpush.bf16.msra.mxu0 0
  %1310 = vmatpush.bf16.msra.mxu0 0
  %1311 = vmatpush.bf16.msra.mxu0 0
  %1312 = vmatpush.bf16.msra.mxu0 0
  %1313 = vmatpush.bf16.msra.mxu0 0
  %1314 = vmatpush.bf16.msra.mxu0 0
  %1315 = vmatpush.bf16.msra.mxu0 %v1220
  %1316 = vmatpush.bf16.msra.mxu0 %v1212
  %1317 = vmatmul.bf16.gmra.mxu0 %v138
  %v1318 = vpop.f32.mrf.mxu0
  %v1319 = vadd.f32 %v44, %v1318
  %v1320 = vpop.f32.mrf.mxu0
  %v1321 = vadd.f32 %v49, %v1320
  %1322 = vdwg.mxu0
  %1323 = vmatpush.bf16.msra.mxu0 0
  %1324 = vmatpush.bf16.msra.mxu0 0
  %1325 = vmatpush.bf16.msra.mxu0 0
  %1326 = vmatpush.bf16.msra.mxu0 0
  %1327 = vmatpush.bf16.msra.mxu0 0
  %1328 = vmatpush.bf16.msra.mxu0 0
  %1329 = vmatpush.bf16.msra.mxu0 %v1221
  %1330 = vmatpush.bf16.msra.mxu0 %v1213
  %1331 = vmatmul.bf16.gmra.mxu0 %v138
  %v1332 = vpop.f32.mrf.mxu0
  %v1333 = vadd.f32 %v44, %v1332
  %v1334 = vpop.f32.mrf.mxu0
  %v1335 = vadd.f32 %v49, %v1334
  %1336 = vdwg.mxu0
  %1337 = vmatpush.bf16.msra.mxu0 0
  %1338 = vmatpush.bf16.msra.mxu0 0
  %1339 = vmatpush.bf16.msra.mxu0 0
  %1340 = vmatpush.bf16.msra.mxu0 0
  %1341 = vmatpush.bf16.msra.mxu0 0
  %1342 = vmatpush.bf16.msra.mxu0 0
  %1343 = vmatpush.bf16.msra.mxu0 %v1222
  %1344 = vmatpush.bf16.msra.mxu0 %v1214
  %1345 = vmatmul.bf16.gmra.mxu0 %v138
  %v1346 = vpop.f32.mrf.mxu0
  %v1347 = vadd.f32 %v44, %v1346
  %v1348 = vpop.f32.mrf.mxu0
  %v1349 = vadd.f32 %v49, %v1348
  %1350 = vdwg.mxu0
  %v1351 = vmax.f32 %v1249, 0.0
  %v1352 = vmax.f32 %v1263, 0.0
  %v1353 = vmax.f32 %v1277, 0.0
  %v1354 = vmax.f32 %v1291, 0.0
  %v1355 = vmax.f32 %v1305, 0.0
  %v1356 = vmax.f32 %v1319, 0.0
  %v1357 = vmax.f32 %v1333, 0.0
  %v1358 = vmax.f32 %v1347, 0.0
  %v1359 = vmax.f32 %v1251, 0.0
  %v1360 = vmax.f32 %v1265, 0.0
  %v1361 = vmax.f32 %v1279, 0.0
  %v1362 = vmax.f32 %v1293, 0.0
  %v1363 = vmax.f32 %v1307, 0.0
  %v1364 = vmax.f32 %v1321, 0.0
  %v1365 = vmax.f32 %v1335, 0.0
  %v1366 = vmax.f32 %v1349, 0.0
  %v1367 = vmax.f32 %v1351, %v1353
  %v1368 = vmax.f32 %v1352, %v1354
  %v1369 = vmax.f32 %v1359, %v1361
  %v1370 = vmax.f32 %v1360, %v1362
  %v1371 = vmax.f32 %v1355, %v1357
  %v1372 = vmax.f32 %v1356, %v1358
  %v1373 = vmax.f32 %v1363, %v1365
  %v1374 = vmax.f32 %v1364, %v1366
  %v1375 = vmax.f32 %v1367, %v1371
  %v1376 = vmax.f32 %v1368, %v1372
  %v1377 = vmax.f32 %v1369, %v1373
  %v1378 = vmax.f32 %v1370, %v1374
  %v1381 = vrot.slane %v1376, 7
  %v1382 = vsel %vm283, %v1375, %v1381
  %s1384 = scalar_lea.vmem [#allocation2], 3
  %1385 = vst.msk [vmem:[%s1384] ss:$8 sm:$0x3] %vm289, %v1382
  %1386 = vst.msk [vmem:[%s1384] ss:$8 sm:$0x0] %vm289, %v1382
  %1387 = vst [vmem:[#allocation1] sm:$0xff] %v1375
  %1388 = vst [vmem:[#allocation1 + $0x9] sm:$0xff] %v1376
  %s1389 = scalar_lea.vmem [#allocation1], 1
  %v1390 = vld [vmem:[%s1389] ss:$9 sm:$0xff]
  %s1392 = scalar_lea.vmem [#allocation2], 19
  %1393 = vst.msk [vmem:[%s1392] ss:$8 sm:$0x3] %vm289, %v1390
  %1394 = vst.msk [vmem:[%s1392] ss:$8 sm:$0x0] %vm289, %v1390
  %1395 = vst [vmem:[#allocation1] sm:$0xff] %v1375
  %1396 = vst [vmem:[#allocation1 + $0x9] sm:$0xff] %v1376
  %s1397 = scalar_lea.vmem [#allocation1], 2
  %v1398 = vld [vmem:[%s1397] ss:$9 sm:$0xff]
  %s1400 = scalar_lea.vmem [#allocation2], 35
  %1401 = vst.msk [vmem:[%s1400] ss:$8 sm:$0x3] %vm289, %v1398
  %1402 = vst.msk [vmem:[%s1400] ss:$8 sm:$0x0] %vm289, %v1398
  %1403 = vst [vmem:[#allocation1] sm:$0xff] %v1375
  %1404 = vst [vmem:[#allocation1 + $0x9] sm:$0xff] %v1376
  %s1405 = scalar_lea.vmem [#allocation1], 3
  %v1406 = vld [vmem:[%s1405] ss:$9 sm:$0xff]
  %s1408 = scalar_lea.vmem [#allocation2], 51
  %1409 = vst.msk [vmem:[%s1408] ss:$8 sm:$0x3] %vm289, %v1406
  %1410 = vst.msk [vmem:[%s1408] ss:$8 sm:$0x0] %vm289, %v1406
  %1411 = vst [vmem:[#allocation1] sm:$0xff] %v1375
  %1412 = vst [vmem:[#allocation1 + $0x9] sm:$0xff] %v1376
  %s1413 = scalar_lea.vmem [#allocation1], 4
  %v1414 = vld [vmem:[%s1413] ss:$9 sm:$0xff]
  %s1416 = scalar_lea.vmem [#allocation2], 67
  %1417 = vst.msk [vmem:[%s1416] ss:$8 sm:$0x3] %vm289, %v1414
  %1418 = vst.msk [vmem:[%s1416] ss:$8 sm:$0x0] %vm289, %v1414
  %1419 = vst [vmem:[#allocation1] sm:$0xff] %v1375
  %1420 = vst [vmem:[#allocation1 + $0x9] sm:$0xff] %v1376
  %s1421 = scalar_lea.vmem [#allocation1], 5
  %v1422 = vld [vmem:[%s1421] ss:$9 sm:$0xff]
  %s1424 = scalar_lea.vmem [#allocation2], 83
  %1425 = vst.msk [vmem:[%s1424] ss:$8 sm:$0x3] %vm289, %v1422
  %1426 = vst.msk [vmem:[%s1424] ss:$8 sm:$0x0] %vm289, %v1422
  %1427 = vst [vmem:[#allocation1] sm:$0xff] %v1375
  %1428 = vst [vmem:[#allocation1 + $0x9] sm:$0xff] %v1376
  %s1429 = scalar_lea.vmem [#allocation1], 6
  %v1430 = vld [vmem:[%s1429] ss:$9 sm:$0xff]
  %s1432 = scalar_lea.vmem [#allocation2], 99
  %1433 = vst.msk [vmem:[%s1432] ss:$8 sm:$0x3] %vm289, %v1430
  %1434 = vst.msk [vmem:[%s1432] ss:$8 sm:$0x0] %vm289, %v1430
  %1435 = vst [vmem:[#allocation1] sm:$0xff] %v1375
  %1436 = vst [vmem:[#allocation1 + $0x9] sm:$0xff] %v1376
  %s1437 = scalar_lea.vmem [#allocation1], 7
  %v1438 = vld [vmem:[%s1437] ss:$9 sm:$0xff]
  %s1440 = scalar_lea.vmem [#allocation2], 115
  %1441 = vst.msk [vmem:[%s1440] ss:$8 sm:$0x3] %vm289, %v1438
  %1442 = vst.msk [vmem:[%s1440] ss:$8 sm:$0x0] %vm289, %v1438
  %v1445 = vrot.slane %v1378, 7
  %v1446 = vsel %vm283, %v1377, %v1445
  %s1448 = scalar_lea.vmem [#allocation2], 131
  %1449 = vst.msk [vmem:[%s1448] ss:$8 sm:$0x3] %vm289, %v1446
  %1450 = vst.msk [vmem:[%s1448] ss:$8 sm:$0x0] %vm289, %v1446
  %1451 = vst [vmem:[#allocation1] sm:$0xff] %v1377
  %1452 = vst [vmem:[#allocation1 + $0x9] sm:$0xff] %v1378
  %s1453 = scalar_lea.vmem [#allocation1], 1
  %v1454 = vld [vmem:[%s1453] ss:$9 sm:$0xff]
  %s1456 = scalar_lea.vmem [#allocation2], 147
  %1457 = vst.msk [vmem:[%s1456] ss:$8 sm:$0x3] %vm289, %v1454
  %1458 = vst.msk [vmem:[%s1456] ss:$8 sm:$0x0] %vm289, %v1454
  %1459 = vst [vmem:[#allocation1] sm:$0xff] %v1377
  %1460 = vst [vmem:[#allocation1 + $0x9] sm:$0xff] %v1378
  %s1461 = scalar_lea.vmem [#allocation1], 2
  %v1462 = vld [vmem:[%s1461] ss:$9 sm:$0xff]
  %s1464 = scalar_lea.vmem [#allocation2], 163
  %1465 = vst.msk [vmem:[%s1464] ss:$8 sm:$0x3] %vm289, %v1462
  %1466 = vst.msk [vmem:[%s1464] ss:$8 sm:$0x0] %vm289, %v1462
  %1467 = vst [vmem:[#allocation1] sm:$0xff] %v1377
  %1468 = vst [vmem:[#allocation1 + $0x9] sm:$0xff] %v1378
  %s1469 = scalar_lea.vmem [#allocation1], 3
  %v1470 = vld [vmem:[%s1469] ss:$9 sm:$0xff]
  %s1472 = scalar_lea.vmem [#allocation2], 179
  %1473 = vst.msk [vmem:[%s1472] ss:$8 sm:$0x3] %vm289, %v1470
  %1474 = vst.msk [vmem:[%s1472] ss:$8 sm:$0x0] %vm289, %v1470
  %1475 = vst [vmem:[#allocation1] sm:$0xff] %v1377
  %1476 = vst [vmem:[#allocation1 + $0x9] sm:$0xff] %v1378
  %s1477 = scalar_lea.vmem [#allocation1], 4
  %v1478 = vld [vmem:[%s1477] ss:$9 sm:$0xff]
  %s1480 = scalar_lea.vmem [#allocation2], 195
  %1481 = vst.msk [vmem:[%s1480] ss:$8 sm:$0x3] %vm289, %v1478
  %1482 = vst.msk [vmem:[%s1480] ss:$8 sm:$0x0] %vm289, %v1478
  %1483 = vst [vmem:[#allocation1] sm:$0xff] %v1377
  %1484 = vst [vmem:[#allocation1 + $0x9] sm:$0xff] %v1378
  %s1485 = scalar_lea.vmem [#allocation1], 5
  %v1486 = vld [vmem:[%s1485] ss:$9 sm:$0xff]
  %s1488 = scalar_lea.vmem [#allocation2], 211
  %1489 = vst.msk [vmem:[%s1488] ss:$8 sm:$0x3] %vm289, %v1486
  %1490 = vst.msk [vmem:[%s1488] ss:$8 sm:$0x0] %vm289, %v1486
  %1491 = vst [vmem:[#allocation1] sm:$0xff] %v1377
  %1492 = vst [vmem:[#allocation1 + $0x9] sm:$0xff] %v1378
  %s1493 = scalar_lea.vmem [#allocation1], 6
  %v1494 = vld [vmem:[%s1493] ss:$9 sm:$0xff]
  %s1496 = scalar_lea.vmem [#allocation2], 227
  %1497 = vst.msk [vmem:[%s1496] ss:$8 sm:$0x3] %vm289, %v1494
  %1498 = vst.msk [vmem:[%s1496] ss:$8 sm:$0x0] %vm289, %v1494
  %1499 = vst [vmem:[#allocation1] sm:$0xff] %v1377
  %1500 = vst [vmem:[#allocation1 + $0x9] sm:$0xff] %v1378
  %s1501 = scalar_lea.vmem [#allocation1], 7
  %v1502 = vld [vmem:[%s1501] ss:$9 sm:$0xff]
  %s1504 = scalar_lea.vmem [#allocation2], 243
  %1505 = vst.msk [vmem:[%s1504] ss:$8 sm:$0x3] %vm289, %v1502
  %1506 = vst.msk [vmem:[%s1504] ss:$8 sm:$0x0] %vm289, %v1502
  %s1507 = scalar_lea.vmem %s0, 512
  %v1508 = vld [vmem:[%s1507] sm:$0xff]
  %v1509 = vld [vmem:[%s1507 + $0x8] sm:$0xff]
  %v1510 = vld [vmem:[%s1507 + $0x10] sm:$0xff]
  %v1511 = vld [vmem:[%s1507 + $0x18] sm:$0xff]
  %v1512 = vld [vmem:[%s1507 + $0x20] sm:$0xff]
  %v1513 = vld [vmem:[%s1507 + $0x28] sm:$0xff]
  %v1514 = vld [vmem:[%s1507 + $0x30] sm:$0xff]
  %v1515 = vld [vmem:[%s1507 + $0x38] sm:$0xff]
  %v1516 = vld [vmem:[%s1507 + $0x40] sm:$0xff]
  %v1517 = vld [vmem:[%s1507 + $0x48] sm:$0xff]
  %v1518 = vld [vmem:[%s1507 + $0x50] sm:$0xff]
  %v1519 = vld [vmem:[%s1507 + $0x58] sm:$0xff]
  %v1520 = vld [vmem:[%s1507 + $0x60] sm:$0xff]
  %v1521 = vld [vmem:[%s1507 + $0x68] sm:$0xff]
  %v1522 = vld [vmem:[%s1507 + $0x70] sm:$0xff]
  %v1523 = vld [vmem:[%s1507 + $0x78] sm:$0xff]
  %v1540 = vunpack.c.l.b16 %v1508
  %v1541 = vunpack.c.h.b16 %v1508
  %v1542 = vunpack.c.l.b16 %v1509
  %v1543 = vunpack.c.h.b16 %v1509
  %v1544 = vunpack.c.l.b16 %v1510
  %v1545 = vunpack.c.h.b16 %v1510
  %v1546 = vunpack.c.l.b16 %v1511
  %v1547 = vunpack.c.h.b16 %v1511
  %v1548 = vunpack.c.l.b16 %v1512
  %v1549 = vunpack.c.h.b16 %v1512
  %v1550 = vunpack.c.l.b16 %v1513
  %v1551 = vunpack.c.h.b16 %v1513
  %v1552 = vunpack.c.l.b16 %v1514
  %v1553 = vunpack.c.h.b16 %v1514
  %v1554 = vunpack.c.l.b16 %v1515
  %v1555 = vunpack.c.h.b16 %v1515
  %v1556 = vunpack.c.l.b16 %v1516
  %v1557 = vunpack.c.h.b16 %v1516
  %v1558 = vunpack.c.l.b16 %v1517
  %v1559 = vunpack.c.h.b16 %v1517
  %v1560 = vunpack.c.l.b16 %v1518
  %v1561 = vunpack.c.h.b16 %v1518
  %v1562 = vunpack.c.l.b16 %v1519
  %v1563 = vunpack.c.h.b16 %v1519
  %v1564 = vunpack.c.l.b16 %v1520
  %v1565 = vunpack.c.h.b16 %v1520
  %v1566 = vunpack.c.l.b16 %v1521
  %v1567 = vunpack.c.h.b16 %v1521
  %v1568 = vunpack.c.l.b16 %v1522
  %v1569 = vunpack.c.h.b16 %v1522
  %v1570 = vunpack.c.l.b16 %v1523
  %v1571 = vunpack.c.h.b16 %v1523
  %v1572 = vpack.c.b16 %v1548, %v1540
  %v1573 = vpack.c.b16 %v1549, %v1541
  %v1574 = vpack.c.b16 %v1550, %v1542
  %v1575 = vpack.c.b16 %v1551, %v1543
  %v1576 = vpack.c.b16 %v1552, %v1544
  %v1577 = vpack.c.b16 %v1553, %v1545
  %v1578 = vpack.c.b16 %v1554, %v1546
  %v1579 = vpack.c.b16 %v1555, %v1547
  %v1580 = vpack.c.b16 %v1564, %v1556
  %v1581 = vpack.c.b16 %v1565, %v1557
  %v1582 = vpack.c.b16 %v1566, %v1558
  %v1583 = vpack.c.b16 %v1567, %v1559
  %v1584 = vpack.c.b16 %v1568, %v1560
  %v1585 = vpack.c.b16 %v1569, %v1561
  %v1586 = vpack.c.b16 %v1570, %v1562
  %v1587 = vpack.c.b16 %v1571, %v1563
  %1604 = vmatpush.bf16.msra.mxu0 0
  %1605 = vmatpush.bf16.msra.mxu0 0
  %1606 = vmatpush.bf16.msra.mxu0 0
  %1607 = vmatpush.bf16.msra.mxu0 0
  %1608 = vmatpush.bf16.msra.mxu0 0
  %1609 = vmatpush.bf16.msra.mxu0 0
  %1610 = vmatpush.bf16.msra.mxu0 %v1580
  %1611 = vmatpush.bf16.msra.mxu0 %v1572
  %1612 = vmatmul.bf16.gmra.mxu0 %v138
  %v1613 = vpop.f32.mrf.mxu0
  %v1614 = vadd.f32 %v44, %v1613
  %v1615 = vpop.f32.mrf.mxu0
  %v1616 = vadd.f32 %v49, %v1615
  %1617 = vdwg.mxu0
  %1618 = vmatpush.bf16.msra.mxu0 0
  %1619 = vmatpush.bf16.msra.mxu0 0
  %1620 = vmatpush.bf16.msra.mxu0 0
  %1621 = vmatpush.bf16.msra.mxu0 0
  %1622 = vmatpush.bf16.msra.mxu0 0
  %1623 = vmatpush.bf16.msra.mxu0 0
  %1624 = vmatpush.bf16.msra.mxu0 %v1581
  %1625 = vmatpush.bf16.msra.mxu0 %v1573
  %1626 = vmatmul.bf16.gmra.mxu0 %v138
  %v1627 = vpop.f32.mrf.mxu0
  %v1628 = vadd.f32 %v44, %v1627
  %v1629 = vpop.f32.mrf.mxu0
  %v1630 = vadd.f32 %v49, %v1629
  %1631 = vdwg.mxu0
  %1632 = vmatpush.bf16.msra.mxu0 0
  %1633 = vmatpush.bf16.msra.mxu0 0
  %1634 = vmatpush.bf16.msra.mxu0 0
  %1635 = vmatpush.bf16.msra.mxu0 0
  %1636 = vmatpush.bf16.msra.mxu0 0
  %1637 = vmatpush.bf16.msra.mxu0 0
  %1638 = vmatpush.bf16.msra.mxu0 %v1582
  %1639 = vmatpush.bf16.msra.mxu0 %v1574
  %1640 = vmatmul.bf16.gmra.mxu0 %v138
  %v1641 = vpop.f32.mrf.mxu0
  %v1642 = vadd.f32 %v44, %v1641
  %v1643 = vpop.f32.mrf.mxu0
  %v1644 = vadd.f32 %v49, %v1643
  %1645 = vdwg.mxu0
  %1646 = vmatpush.bf16.msra.mxu0 0
  %1647 = vmatpush.bf16.msra.mxu0 0
  %1648 = vmatpush.bf16.msra.mxu0 0
  %1649 = vmatpush.bf16.msra.mxu0 0
  %1650 = vmatpush.bf16.msra.mxu0 0
  %1651 = vmatpush.bf16.msra.mxu0 0
  %1652 = vmatpush.bf16.msra.mxu0 %v1583
  %1653 = vmatpush.bf16.msra.mxu0 %v1575
  %1654 = vmatmul.bf16.gmra.mxu0 %v138
  %v1655 = vpop.f32.mrf.mxu0
  %v1656 = vadd.f32 %v44, %v1655
  %v1657 = vpop.f32.mrf.mxu0
  %v1658 = vadd.f32 %v49, %v1657
  %1659 = vdwg.mxu0
  %1660 = vmatpush.bf16.msra.mxu0 0
  %1661 = vmatpush.bf16.msra.mxu0 0
  %1662 = vmatpush.bf16.msra.mxu0 0
  %1663 = vmatpush.bf16.msra.mxu0 0
  %1664 = vmatpush.bf16.msra.mxu0 0
  %1665 = vmatpush.bf16.msra.mxu0 0
  %1666 = vmatpush.bf16.msra.mxu0 %v1584
  %1667 = vmatpush.bf16.msra.mxu0 %v1576
  %1668 = vmatmul.bf16.gmra.mxu0 %v138
  %v1669 = vpop.f32.mrf.mxu0
  %v1670 = vadd.f32 %v44, %v1669
  %v1671 = vpop.f32.mrf.mxu0
  %v1672 = vadd.f32 %v49, %v1671
  %1673 = vdwg.mxu0
  %1674 = vmatpush.bf16.msra.mxu0 0
  %1675 = vmatpush.bf16.msra.mxu0 0
  %1676 = vmatpush.bf16.msra.mxu0 0
  %1677 = vmatpush.bf16.msra.mxu0 0
  %1678 = vmatpush.bf16.msra.mxu0 0
  %1679 = vmatpush.bf16.msra.mxu0 0
  %1680 = vmatpush.bf16.msra.mxu0 %v1585
  %1681 = vmatpush.bf16.msra.mxu0 %v1577
  %1682 = vmatmul.bf16.gmra.mxu0 %v138
  %v1683 = vpop.f32.mrf.mxu0
  %v1684 = vadd.f32 %v44, %v1683
  %v1685 = vpop.f32.mrf.mxu0
  %v1686 = vadd.f32 %v49, %v1685
  %1687 = vdwg.mxu0
  %1688 = vmatpush.bf16.msra.mxu0 0
  %1689 = vmatpush.bf16.msra.mxu0 0
  %1690 = vmatpush.bf16.msra.mxu0 0
  %1691 = vmatpush.bf16.msra.mxu0 0
  %1692 = vmatpush.bf16.msra.mxu0 0
  %1693 = vmatpush.bf16.msra.mxu0 0
  %1694 = vmatpush.bf16.msra.mxu0 %v1586
  %1695 = vmatpush.bf16.msra.mxu0 %v1578
  %1696 = vmatmul.bf16.gmra.mxu0 %v138
  %v1697 = vpop.f32.mrf.mxu0
  %v1698 = vadd.f32 %v44, %v1697
  %v1699 = vpop.f32.mrf.mxu0
  %v1700 = vadd.f32 %v49, %v1699
  %1701 = vdwg.mxu0
  %1702 = vmatpush.bf16.msra.mxu0 0
  %1703 = vmatpush.bf16.msra.mxu0 0
  %1704 = vmatpush.bf16.msra.mxu0 0
  %1705 = vmatpush.bf16.msra.mxu0 0
  %1706 = vmatpush.bf16.msra.mxu0 0
  %1707 = vmatpush.bf16.msra.mxu0 0
  %1708 = vmatpush.bf16.msra.mxu0 %v1587
  %1709 = vmatpush.bf16.msra.mxu0 %v1579
  %1710 = vmatmul.bf16.gmra.mxu0 %v138
  %v1711 = vpop.f32.mrf.mxu0
  %v1712 = vadd.f32 %v44, %v1711
  %v1713 = vpop.f32.mrf.mxu0
  %v1714 = vadd.f32 %v49, %v1713
  %1715 = vdwg.mxu0
  %v1716 = vmax.f32 %v1614, 0.0
  %v1717 = vmax.f32 %v1628, 0.0
  %v1718 = vmax.f32 %v1642, 0.0
  %v1719 = vmax.f32 %v1656, 0.0
  %v1720 = vmax.f32 %v1670, 0.0
  %v1721 = vmax.f32 %v1684, 0.0
  %v1722 = vmax.f32 %v1698, 0.0
  %v1723 = vmax.f32 %v1712, 0.0
  %v1724 = vmax.f32 %v1616, 0.0
  %v1725 = vmax.f32 %v1630, 0.0
  %v1726 = vmax.f32 %v1644, 0.0
  %v1727 = vmax.f32 %v1658, 0.0
  %v1728 = vmax.f32 %v1672, 0.0
  %v1729 = vmax.f32 %v1686, 0.0
  %v1730 = vmax.f32 %v1700, 0.0
  %v1731 = vmax.f32 %v1714, 0.0
  %v1732 = vmax.f32 %v1716, %v1718
  %v1733 = vmax.f32 %v1717, %v1719
  %v1734 = vmax.f32 %v1724, %v1726
  %v1735 = vmax.f32 %v1725, %v1727
  %v1736 = vmax.f32 %v1720, %v1722
  %v1737 = vmax.f32 %v1721, %v1723
  %v1738 = vmax.f32 %v1728, %v1730
  %v1739 = vmax.f32 %v1729, %v1731
  %v1740 = vmax.f32 %v1732, %v1736
  %v1741 = vmax.f32 %v1733, %v1737
  %v1742 = vmax.f32 %v1734, %v1738
  %v1743 = vmax.f32 %v1735, %v1739
  %v1746 = vrot.slane %v1741, 7
  %v1747 = vsel %vm283, %v1740, %v1746
  %s1749 = scalar_lea.vmem [#allocation2], 4
  %1750 = vst.msk [vmem:[%s1749] ss:$8 sm:$0x3] %vm289, %v1747
  %1751 = vst.msk [vmem:[%s1749] ss:$8 sm:$0x0] %vm289, %v1747
  %1752 = vst [vmem:[#allocation1] sm:$0xff] %v1740
  %1753 = vst [vmem:[#allocation1 + $0x9] sm:$0xff] %v1741
  %s1754 = scalar_lea.vmem [#allocation1], 1
  %v1755 = vld [vmem:[%s1754] ss:$9 sm:$0xff]
  %s1757 = scalar_lea.vmem [#allocation2], 20
  %1758 = vst.msk [vmem:[%s1757] ss:$8 sm:$0x3] %vm289, %v1755
  %1759 = vst.msk [vmem:[%s1757] ss:$8 sm:$0x0] %vm289, %v1755
  %1760 = vst [vmem:[#allocation1] sm:$0xff] %v1740
  %1761 = vst [vmem:[#allocation1 + $0x9] sm:$0xff] %v1741
  %s1762 = scalar_lea.vmem [#allocation1], 2
  %v1763 = vld [vmem:[%s1762] ss:$9 sm:$0xff]
  %s1765 = scalar_lea.vmem [#allocation2], 36
  %1766 = vst.msk [vmem:[%s1765] ss:$8 sm:$0x3] %vm289, %v1763
  %1767 = vst.msk [vmem:[%s1765] ss:$8 sm:$0x0] %vm289, %v1763
  %1768 = vst [vmem:[#allocation1] sm:$0xff] %v1740
  %1769 = vst [vmem:[#allocation1 + $0x9] sm:$0xff] %v1741
  %s1770 = scalar_lea.vmem [#allocation1], 3
  %v1771 = vld [vmem:[%s1770] ss:$9 sm:$0xff]
  %s1773 = scalar_lea.vmem [#allocation2], 52
  %1774 = vst.msk [vmem:[%s1773] ss:$8 sm:$0x3] %vm289, %v1771
  %1775 = vst.msk [vmem:[%s1773] ss:$8 sm:$0x0] %vm289, %v1771
  %1776 = vst [vmem:[#allocation1] sm:$0xff] %v1740
  %1777 = vst [vmem:[#allocation1 + $0x9] sm:$0xff] %v1741
  %s1778 = scalar_lea.vmem [#allocation1], 4
  %v1779 = vld [vmem:[%s1778] ss:$9 sm:$0xff]
  %s1781 = scalar_lea.vmem [#allocation2], 68
  %1782 = vst.msk [vmem:[%s1781] ss:$8 sm:$0x3] %vm289, %v1779
  %1783 = vst.msk [vmem:[%s1781] ss:$8 sm:$0x0] %vm289, %v1779
  %1784 = vst [vmem:[#allocation1] sm:$0xff] %v1740
  %1785 = vst [vmem:[#allocation1 + $0x9] sm:$0xff] %v1741
  %s1786 = scalar_lea.vmem [#allocation1], 5
  %v1787 = vld [vmem:[%s1786] ss:$9 sm:$0xff]
  %s1789 = scalar_lea.vmem [#allocation2], 84
  %1790 = vst.msk [vmem:[%s1789] ss:$8 sm:$0x3] %vm289, %v1787
  %1791 = vst.msk [vmem:[%s1789] ss:$8 sm:$0x0] %vm289, %v1787
  %1792 = vst [vmem:[#allocation1] sm:$0xff] %v1740
  %1793 = vst [vmem:[#allocation1 + $0x9] sm:$0xff] %v1741
  %s1794 = scalar_lea.vmem [#allocation1], 6
  %v1795 = vld [vmem:[%s1794] ss:$9 sm:$0xff]
  %s1797 = scalar_lea.vmem [#allocation2], 100
  %1798 = vst.msk [vmem:[%s1797] ss:$8 sm:$0x3] %vm289, %v1795
  %1799 = vst.msk [vmem:[%s1797] ss:$8 sm:$0x0] %vm289, %v1795
  %1800 = vst [vmem:[#allocation1] sm:$0xff] %v1740
  %1801 = vst [vmem:[#allocation1 + $0x9] sm:$0xff] %v1741
  %s1802 = scalar_lea.vmem [#allocation1], 7
  %v1803 = vld [vmem:[%s1802] ss:$9 sm:$0xff]
  %s1805 = scalar_lea.vmem [#allocation2], 116
  %1806 = vst.msk [vmem:[%s1805] ss:$8 sm:$0x3] %vm289, %v1803
  %1807 = vst.msk [vmem:[%s1805] ss:$8 sm:$0x0] %vm289, %v1803
  %v1810 = vrot.slane %v1743, 7
  %v1811 = vsel %vm283, %v1742, %v1810
  %s1813 = scalar_lea.vmem [#allocation2], 132
  %1814 = vst.msk [vmem:[%s1813] ss:$8 sm:$0x3] %vm289, %v1811
  %1815 = vst.msk [vmem:[%s1813] ss:$8 sm:$0x0] %vm289, %v1811
  %1816 = vst [vmem:[#allocation1] sm:$0xff] %v1742
  %1817 = vst [vmem:[#allocation1 + $0x9] sm:$0xff] %v1743
  %s1818 = scalar_lea.vmem [#allocation1], 1
  %v1819 = vld [vmem:[%s1818] ss:$9 sm:$0xff]
  %s1821 = scalar_lea.vmem [#allocation2], 148
  %1822 = vst.msk [vmem:[%s1821] ss:$8 sm:$0x3] %vm289, %v1819
  %1823 = vst.msk [vmem:[%s1821] ss:$8 sm:$0x0] %vm289, %v1819
  %1824 = vst [vmem:[#allocation1] sm:$0xff] %v1742
  %1825 = vst [vmem:[#allocation1 + $0x9] sm:$0xff] %v1743
  %s1826 = scalar_lea.vmem [#allocation1], 2
  %v1827 = vld [vmem:[%s1826] ss:$9 sm:$0xff]
  %s1829 = scalar_lea.vmem [#allocation2], 164
  %1830 = vst.msk [vmem:[%s1829] ss:$8 sm:$0x3] %vm289, %v1827
  %1831 = vst.msk [vmem:[%s1829] ss:$8 sm:$0x0] %vm289, %v1827
  %1832 = vst [vmem:[#allocation1] sm:$0xff] %v1742
  %1833 = vst [vmem:[#allocation1 + $0x9] sm:$0xff] %v1743
  %s1834 = scalar_lea.vmem [#allocation1], 3
  %v1835 = vld [vmem:[%s1834] ss:$9 sm:$0xff]
  %s1837 = scalar_lea.vmem [#allocation2], 180
  %1838 = vst.msk [vmem:[%s1837] ss:$8 sm:$0x3] %vm289, %v1835
  %1839 = vst.msk [vmem:[%s1837] ss:$8 sm:$0x0] %vm289, %v1835
  %1840 = vst [vmem:[#allocation1] sm:$0xff] %v1742
  %1841 = vst [vmem:[#allocation1 + $0x9] sm:$0xff] %v1743
  %s1842 = scalar_lea.vmem [#allocation1], 4
  %v1843 = vld [vmem:[%s1842] ss:$9 sm:$0xff]
  %s1845 = scalar_lea.vmem [#allocation2], 196
  %1846 = vst.msk [vmem:[%s1845] ss:$8 sm:$0x3] %vm289, %v1843
  %1847 = vst.msk [vmem:[%s1845] ss:$8 sm:$0x0] %vm289, %v1843
  %1848 = vst [vmem:[#allocation1] sm:$0xff] %v1742
  %1849 = vst [vmem:[#allocation1 + $0x9] sm:$0xff] %v1743
  %s1850 = scalar_lea.vmem [#allocation1], 5
  %v1851 = vld [vmem:[%s1850] ss:$9 sm:$0xff]
  %s1853 = scalar_lea.vmem [#allocation2], 212
  %1854 = vst.msk [vmem:[%s1853] ss:$8 sm:$0x3] %vm289, %v1851
  %1855 = vst.msk [vmem:[%s1853] ss:$8 sm:$0x0] %vm289, %v1851
  %1856 = vst [vmem:[#allocation1] sm:$0xff] %v1742
  %1857 = vst [vmem:[#allocation1 + $0x9] sm:$0xff] %v1743
  %s1858 = scalar_lea.vmem [#allocation1], 6
  %v1859 = vld [vmem:[%s1858] ss:$9 sm:$0xff]
  %s1861 = scalar_lea.vmem [#allocation2], 228
  %1862 = vst.msk [vmem:[%s1861] ss:$8 sm:$0x3] %vm289, %v1859
  %1863 = vst.msk [vmem:[%s1861] ss:$8 sm:$0x0] %vm289, %v1859
  %1864 = vst [vmem:[#allocation1] sm:$0xff] %v1742
  %1865 = vst [vmem:[#allocation1 + $0x9] sm:$0xff] %v1743
  %s1866 = scalar_lea.vmem [#allocation1], 7
  %v1867 = vld [vmem:[%s1866] ss:$9 sm:$0xff]
  %s1869 = scalar_lea.vmem [#allocation2], 244
  %1870 = vst.msk [vmem:[%s1869] ss:$8 sm:$0x3] %vm289, %v1867
  %1871 = vst.msk [vmem:[%s1869] ss:$8 sm:$0x0] %vm289, %v1867
  %s1872 = scalar_lea.vmem %s0, 640
  %v1873 = vld [vmem:[%s1872] sm:$0xff]
  %v1874 = vld [vmem:[%s1872 + $0x8] sm:$0xff]
  %v1875 = vld [vmem:[%s1872 + $0x10] sm:$0xff]
  %v1876 = vld [vmem:[%s1872 + $0x18] sm:$0xff]
  %v1877 = vld [vmem:[%s1872 + $0x20] sm:$0xff]
  %v1878 = vld [vmem:[%s1872 + $0x28] sm:$0xff]
  %v1879 = vld [vmem:[%s1872 + $0x30] sm:$0xff]
  %v1880 = vld [vmem:[%s1872 + $0x38] sm:$0xff]
  %v1881 = vld [vmem:[%s1872 + $0x40] sm:$0xff]
  %v1882 = vld [vmem:[%s1872 + $0x48] sm:$0xff]
  %v1883 = vld [vmem:[%s1872 + $0x50] sm:$0xff]
  %v1884 = vld [vmem:[%s1872 + $0x58] sm:$0xff]
  %v1885 = vld [vmem:[%s1872 + $0x60] sm:$0xff]
  %v1886 = vld [vmem:[%s1872 + $0x68] sm:$0xff]
  %v1887 = vld [vmem:[%s1872 + $0x70] sm:$0xff]
  %v1888 = vld [vmem:[%s1872 + $0x78] sm:$0xff]
  %v1905 = vunpack.c.l.b16 %v1873
  %v1906 = vunpack.c.h.b16 %v1873
  %v1907 = vunpack.c.l.b16 %v1874
  %v1908 = vunpack.c.h.b16 %v1874
  %v1909 = vunpack.c.l.b16 %v1875
  %v1910 = vunpack.c.h.b16 %v1875
  %v1911 = vunpack.c.l.b16 %v1876
  %v1912 = vunpack.c.h.b16 %v1876
  %v1913 = vunpack.c.l.b16 %v1877
  %v1914 = vunpack.c.h.b16 %v1877
  %v1915 = vunpack.c.l.b16 %v1878
  %v1916 = vunpack.c.h.b16 %v1878
  %v1917 = vunpack.c.l.b16 %v1879
  %v1918 = vunpack.c.h.b16 %v1879
  %v1919 = vunpack.c.l.b16 %v1880
  %v1920 = vunpack.c.h.b16 %v1880
  %v1921 = vunpack.c.l.b16 %v1881
  %v1922 = vunpack.c.h.b16 %v1881
  %v1923 = vunpack.c.l.b16 %v1882
  %v1924 = vunpack.c.h.b16 %v1882
  %v1925 = vunpack.c.l.b16 %v1883
  %v1926 = vunpack.c.h.b16 %v1883
  %v1927 = vunpack.c.l.b16 %v1884
  %v1928 = vunpack.c.h.b16 %v1884
  %v1929 = vunpack.c.l.b16 %v1885
  %v1930 = vunpack.c.h.b16 %v1885
  %v1931 = vunpack.c.l.b16 %v1886
  %v1932 = vunpack.c.h.b16 %v1886
  %v1933 = vunpack.c.l.b16 %v1887
  %v1934 = vunpack.c.h.b16 %v1887
  %v1935 = vunpack.c.l.b16 %v1888
  %v1936 = vunpack.c.h.b16 %v1888
  %v1937 = vpack.c.b16 %v1913, %v1905
  %v1938 = vpack.c.b16 %v1914, %v1906
  %v1939 = vpack.c.b16 %v1915, %v1907
  %v1940 = vpack.c.b16 %v1916, %v1908
  %v1941 = vpack.c.b16 %v1917, %v1909
  %v1942 = vpack.c.b16 %v1918, %v1910
  %v1943 = vpack.c.b16 %v1919, %v1911
  %v1944 = vpack.c.b16 %v1920, %v1912
  %v1945 = vpack.c.b16 %v1929, %v1921
  %v1946 = vpack.c.b16 %v1930, %v1922
  %v1947 = vpack.c.b16 %v1931, %v1923
  %v1948 = vpack.c.b16 %v1932, %v1924
  %v1949 = vpack.c.b16 %v1933, %v1925
  %v1950 = vpack.c.b16 %v1934, %v1926
  %v1951 = vpack.c.b16 %v1935, %v1927
  %v1952 = vpack.c.b16 %v1936, %v1928
  %1969 = vmatpush.bf16.msra.mxu0 0
  %1970 = vmatpush.bf16.msra.mxu0 0
  %1971 = vmatpush.bf16.msra.mxu0 0
  %1972 = vmatpush.bf16.msra.mxu0 0
  %1973 = vmatpush.bf16.msra.mxu0 0
  %1974 = vmatpush.bf16.msra.mxu0 0
  %1975 = vmatpush.bf16.msra.mxu0 %v1945
  %1976 = vmatpush.bf16.msra.mxu0 %v1937
  %1977 = vmatmul.bf16.gmra.mxu0 %v138
  %v1978 = vpop.f32.mrf.mxu0
  %v1979 = vadd.f32 %v44, %v1978
  %v1980 = vpop.f32.mrf.mxu0
  %v1981 = vadd.f32 %v49, %v1980
  %1982 = vdwg.mxu0
  %1983 = vmatpush.bf16.msra.mxu0 0
  %1984 = vmatpush.bf16.msra.mxu0 0
  %1985 = vmatpush.bf16.msra.mxu0 0
  %1986 = vmatpush.bf16.msra.mxu0 0
  %1987 = vmatpush.bf16.msra.mxu0 0
  %1988 = vmatpush.bf16.msra.mxu0 0
  %1989 = vmatpush.bf16.msra.mxu0 %v1946
  %1990 = vmatpush.bf16.msra.mxu0 %v1938
  %1991 = vmatmul.bf16.gmra.mxu0 %v138
  %v1992 = vpop.f32.mrf.mxu0
  %v1993 = vadd.f32 %v44, %v1992
  %v1994 = vpop.f32.mrf.mxu0
  %v1995 = vadd.f32 %v49, %v1994
  %1996 = vdwg.mxu0
  %1997 = vmatpush.bf16.msra.mxu0 0
  %1998 = vmatpush.bf16.msra.mxu0 0
  %1999 = vmatpush.bf16.msra.mxu0 0
  %2000 = vmatpush.bf16.msra.mxu0 0
  %2001 = vmatpush.bf16.msra.mxu0 0
  %2002 = vmatpush.bf16.msra.mxu0 0
  %2003 = vmatpush.bf16.msra.mxu0 %v1947
  %2004 = vmatpush.bf16.msra.mxu0 %v1939
  %2005 = vmatmul.bf16.gmra.mxu0 %v138
  %v2006 = vpop.f32.mrf.mxu0
  %v2007 = vadd.f32 %v44, %v2006
  %v2008 = vpop.f32.mrf.mxu0
  %v2009 = vadd.f32 %v49, %v2008
  %2010 = vdwg.mxu0
  %2011 = vmatpush.bf16.msra.mxu0 0
  %2012 = vmatpush.bf16.msra.mxu0 0
  %2013 = vmatpush.bf16.msra.mxu0 0
  %2014 = vmatpush.bf16.msra.mxu0 0
  %2015 = vmatpush.bf16.msra.mxu0 0
  %2016 = vmatpush.bf16.msra.mxu0 0
  %2017 = vmatpush.bf16.msra.mxu0 %v1948
  %2018 = vmatpush.bf16.msra.mxu0 %v1940
  %2019 = vmatmul.bf16.gmra.mxu0 %v138
  %v2020 = vpop.f32.mrf.mxu0
  %v2021 = vadd.f32 %v44, %v2020
  %v2022 = vpop.f32.mrf.mxu0
  %v2023 = vadd.f32 %v49, %v2022
  %2024 = vdwg.mxu0
  %2025 = vmatpush.bf16.msra.mxu0 0
  %2026 = vmatpush.bf16.msra.mxu0 0
  %2027 = vmatpush.bf16.msra.mxu0 0
  %2028 = vmatpush.bf16.msra.mxu0 0
  %2029 = vmatpush.bf16.msra.mxu0 0
  %2030 = vmatpush.bf16.msra.mxu0 0
  %2031 = vmatpush.bf16.msra.mxu0 %v1949
  %2032 = vmatpush.bf16.msra.mxu0 %v1941
  %2033 = vmatmul.bf16.gmra.mxu0 %v138
  %v2034 = vpop.f32.mrf.mxu0
  %v2035 = vadd.f32 %v44, %v2034
  %v2036 = vpop.f32.mrf.mxu0
  %v2037 = vadd.f32 %v49, %v2036
  %2038 = vdwg.mxu0
  %2039 = vmatpush.bf16.msra.mxu0 0
  %2040 = vmatpush.bf16.msra.mxu0 0
  %2041 = vmatpush.bf16.msra.mxu0 0
  %2042 = vmatpush.bf16.msra.mxu0 0
  %2043 = vmatpush.bf16.msra.mxu0 0
  %2044 = vmatpush.bf16.msra.mxu0 0
  %2045 = vmatpush.bf16.msra.mxu0 %v1950
  %2046 = vmatpush.bf16.msra.mxu0 %v1942
  %2047 = vmatmul.bf16.gmra.mxu0 %v138
  %v2048 = vpop.f32.mrf.mxu0
  %v2049 = vadd.f32 %v44, %v2048
  %v2050 = vpop.f32.mrf.mxu0
  %v2051 = vadd.f32 %v49, %v2050
  %2052 = vdwg.mxu0
  %2053 = vmatpush.bf16.msra.mxu0 0
  %2054 = vmatpush.bf16.msra.mxu0 0
  %2055 = vmatpush.bf16.msra.mxu0 0
  %2056 = vmatpush.bf16.msra.mxu0 0
  %2057 = vmatpush.bf16.msra.mxu0 0
  %2058 = vmatpush.bf16.msra.mxu0 0
  %2059 = vmatpush.bf16.msra.mxu0 %v1951
  %2060 = vmatpush.bf16.msra.mxu0 %v1943
  %2061 = vmatmul.bf16.gmra.mxu0 %v138
  %v2062 = vpop.f32.mrf.mxu0
  %v2063 = vadd.f32 %v44, %v2062
  %v2064 = vpop.f32.mrf.mxu0
  %v2065 = vadd.f32 %v49, %v2064
  %2066 = vdwg.mxu0
  %2067 = vmatpush.bf16.msra.mxu0 0
  %2068 = vmatpush.bf16.msra.mxu0 0
  %2069 = vmatpush.bf16.msra.mxu0 0
  %2070 = vmatpush.bf16.msra.mxu0 0
  %2071 = vmatpush.bf16.msra.mxu0 0
  %2072 = vmatpush.bf16.msra.mxu0 0
  %2073 = vmatpush.bf16.msra.mxu0 %v1952
  %2074 = vmatpush.bf16.msra.mxu0 %v1944
  %2075 = vmatmul.bf16.gmra.mxu0 %v138
  %v2076 = vpop.f32.mrf.mxu0
  %v2077 = vadd.f32 %v44, %v2076
  %v2078 = vpop.f32.mrf.mxu0
  %v2079 = vadd.f32 %v49, %v2078
  %2080 = vdwg.mxu0
  %v2081 = vmax.f32 %v1979, 0.0
  %v2082 = vmax.f32 %v1993, 0.0
  %v2083 = vmax.f32 %v2007, 0.0
  %v2084 = vmax.f32 %v2021, 0.0
  %v2085 = vmax.f32 %v2035, 0.0
  %v2086 = vmax.f32 %v2049, 0.0
  %v2087 = vmax.f32 %v2063, 0.0
  %v2088 = vmax.f32 %v2077, 0.0
  %v2089 = vmax.f32 %v1981, 0.0
  %v2090 = vmax.f32 %v1995, 0.0
  %v2091 = vmax.f32 %v2009, 0.0
  %v2092 = vmax.f32 %v2023, 0.0
  %v2093 = vmax.f32 %v2037, 0.0
  %v2094 = vmax.f32 %v2051, 0.0
  %v2095 = vmax.f32 %v2065, 0.0
  %v2096 = vmax.f32 %v2079, 0.0
  %v2097 = vmax.f32 %v2081, %v2083
  %v2098 = vmax.f32 %v2082, %v2084
  %v2099 = vmax.f32 %v2089, %v2091
  %v2100 = vmax.f32 %v2090, %v2092
  %v2101 = vmax.f32 %v2085, %v2087
  %v2102 = vmax.f32 %v2086, %v2088
  %v2103 = vmax.f32 %v2093, %v2095
  %v2104 = vmax.f32 %v2094, %v2096
  %v2105 = vmax.f32 %v2097, %v2101
  %v2106 = vmax.f32 %v2098, %v2102
  %v2107 = vmax.f32 %v2099, %v2103
  %v2108 = vmax.f32 %v2100, %v2104
  %v2111 = vrot.slane %v2106, 7
  %v2112 = vsel %vm283, %v2105, %v2111
  %s2114 = scalar_lea.vmem [#allocation2], 5
  %2115 = vst.msk [vmem:[%s2114] ss:$8 sm:$0x3] %vm289, %v2112
  %2116 = vst.msk [vmem:[%s2114] ss:$8 sm:$0x0] %vm289, %v2112
  %2117 = vst [vmem:[#allocation1] sm:$0xff] %v2105
  %2118 = vst [vmem:[#allocation1 + $0x9] sm:$0xff] %v2106
  %s2119 = scalar_lea.vmem [#allocation1], 1
  %v2120 = vld [vmem:[%s2119] ss:$9 sm:$0xff]
  %s2122 = scalar_lea.vmem [#allocation2], 21
  %2123 = vst.msk [vmem:[%s2122] ss:$8 sm:$0x3] %vm289, %v2120
  %2124 = vst.msk [vmem:[%s2122] ss:$8 sm:$0x0] %vm289, %v2120
  %2125 = vst [vmem:[#allocation1] sm:$0xff] %v2105
  %2126 = vst [vmem:[#allocation1 + $0x9] sm:$0xff] %v2106
  %s2127 = scalar_lea.vmem [#allocation1], 2
  %v2128 = vld [vmem:[%s2127] ss:$9 sm:$0xff]
  %s2130 = scalar_lea.vmem [#allocation2], 37
  %2131 = vst.msk [vmem:[%s2130] ss:$8 sm:$0x3] %vm289, %v2128
  %2132 = vst.msk [vmem:[%s2130] ss:$8 sm:$0x0] %vm289, %v2128
  %2133 = vst [vmem:[#allocation1] sm:$0xff] %v2105
  %2134 = vst [vmem:[#allocation1 + $0x9] sm:$0xff] %v2106
  %s2135 = scalar_lea.vmem [#allocation1], 3
  %v2136 = vld [vmem:[%s2135] ss:$9 sm:$0xff]
  %s2138 = scalar_lea.vmem [#allocation2], 53
  %2139 = vst.msk [vmem:[%s2138] ss:$8 sm:$0x3] %vm289, %v2136
  %2140 = vst.msk [vmem:[%s2138] ss:$8 sm:$0x0] %vm289, %v2136
  %2141 = vst [vmem:[#allocation1] sm:$0xff] %v2105
  %2142 = vst [vmem:[#allocation1 + $0x9] sm:$0xff] %v2106
  %s2143 = scalar_lea.vmem [#allocation1], 4
  %v2144 = vld [vmem:[%s2143] ss:$9 sm:$0xff]
  %s2146 = scalar_lea.vmem [#allocation2], 69
  %2147 = vst.msk [vmem:[%s2146] ss:$8 sm:$0x3] %vm289, %v2144
  %2148 = vst.msk [vmem:[%s2146] ss:$8 sm:$0x0] %vm289, %v2144
  %2149 = vst [vmem:[#allocation1] sm:$0xff] %v2105
  %2150 = vst [vmem:[#allocation1 + $0x9] sm:$0xff] %v2106
  %s2151 = scalar_lea.vmem [#allocation1], 5
  %v2152 = vld [vmem:[%s2151] ss:$9 sm:$0xff]
  %s2154 = scalar_lea.vmem [#allocation2], 85
  %2155 = vst.msk [vmem:[%s2154] ss:$8 sm:$0x3] %vm289, %v2152
  %2156 = vst.msk [vmem:[%s2154] ss:$8 sm:$0x0] %vm289, %v2152
  %2157 = vst [vmem:[#allocation1] sm:$0xff] %v2105
  %2158 = vst [vmem:[#allocation1 + $0x9] sm:$0xff] %v2106
  %s2159 = scalar_lea.vmem [#allocation1], 6
  %v2160 = vld [vmem:[%s2159] ss:$9 sm:$0xff]
  %s2162 = scalar_lea.vmem [#allocation2], 101
  %2163 = vst.msk [vmem:[%s2162] ss:$8 sm:$0x3] %vm289, %v2160
  %2164 = vst.msk [vmem:[%s2162] ss:$8 sm:$0x0] %vm289, %v2160
  %2165 = vst [vmem:[#allocation1] sm:$0xff] %v2105
  %2166 = vst [vmem:[#allocation1 + $0x9] sm:$0xff] %v2106
  %s2167 = scalar_lea.vmem [#allocation1], 7
  %v2168 = vld [vmem:[%s2167] ss:$9 sm:$0xff]
  %s2170 = scalar_lea.vmem [#allocation2], 117
  %2171 = vst.msk [vmem:[%s2170] ss:$8 sm:$0x3] %vm289, %v2168
  %2172 = vst.msk [vmem:[%s2170] ss:$8 sm:$0x0] %vm289, %v2168
  %v2175 = vrot.slane %v2108, 7
  %v2176 = vsel %vm283, %v2107, %v2175
  %s2178 = scalar_lea.vmem [#allocation2], 133
  %2179 = vst.msk [vmem:[%s2178] ss:$8 sm:$0x3] %vm289, %v2176
  %2180 = vst.msk [vmem:[%s2178] ss:$8 sm:$0x0] %vm289, %v2176
  %2181 = vst [vmem:[#allocation1] sm:$0xff] %v2107
  %2182 = vst [vmem:[#allocation1 + $0x9] sm:$0xff] %v2108
  %s2183 = scalar_lea.vmem [#allocation1], 1
  %v2184 = vld [vmem:[%s2183] ss:$9 sm:$0xff]
  %s2186 = scalar_lea.vmem [#allocation2], 149
  %2187 = vst.msk [vmem:[%s2186] ss:$8 sm:$0x3] %vm289, %v2184
  %2188 = vst.msk [vmem:[%s2186] ss:$8 sm:$0x0] %vm289, %v2184
  %2189 = vst [vmem:[#allocation1] sm:$0xff] %v2107
  %2190 = vst [vmem:[#allocation1 + $0x9] sm:$0xff] %v2108
  %s2191 = scalar_lea.vmem [#allocation1], 2
  %v2192 = vld [vmem:[%s2191] ss:$9 sm:$0xff]
  %s2194 = scalar_lea.vmem [#allocation2], 165
  %2195 = vst.msk [vmem:[%s2194] ss:$8 sm:$0x3] %vm289, %v2192
  %2196 = vst.msk [vmem:[%s2194] ss:$8 sm:$0x0] %vm289, %v2192
  %2197 = vst [vmem:[#allocation1] sm:$0xff] %v2107
  %2198 = vst [vmem:[#allocation1 + $0x9] sm:$0xff] %v2108
  %s2199 = scalar_lea.vmem [#allocation1], 3
  %v2200 = vld [vmem:[%s2199] ss:$9 sm:$0xff]
  %s2202 = scalar_lea.vmem [#allocation2], 181
  %2203 = vst.msk [vmem:[%s2202] ss:$8 sm:$0x3] %vm289, %v2200
  %2204 = vst.msk [vmem:[%s2202] ss:$8 sm:$0x0] %vm289, %v2200
  %2205 = vst [vmem:[#allocation1] sm:$0xff] %v2107
  %2206 = vst [vmem:[#allocation1 + $0x9] sm:$0xff] %v2108
  %s2207 = scalar_lea.vmem [#allocation1], 4
  %v2208 = vld [vmem:[%s2207] ss:$9 sm:$0xff]
  %s2210 = scalar_lea.vmem [#allocation2], 197
  %2211 = vst.msk [vmem:[%s2210] ss:$8 sm:$0x3] %vm289, %v2208
  %2212 = vst.msk [vmem:[%s2210] ss:$8 sm:$0x0] %vm289, %v2208
  %2213 = vst [vmem:[#allocation1] sm:$0xff] %v2107
  %2214 = vst [vmem:[#allocation1 + $0x9] sm:$0xff] %v2108
  %s2215 = scalar_lea.vmem [#allocation1], 5
  %v2216 = vld [vmem:[%s2215] ss:$9 sm:$0xff]
  %s2218 = scalar_lea.vmem [#allocation2], 213
  %2219 = vst.msk [vmem:[%s2218] ss:$8 sm:$0x3] %vm289, %v2216
  %2220 = vst.msk [vmem:[%s2218] ss:$8 sm:$0x0] %vm289, %v2216
  %2221 = vst [vmem:[#allocation1] sm:$0xff] %v2107
  %2222 = vst [vmem:[#allocation1 + $0x9] sm:$0xff] %v2108
  %s2223 = scalar_lea.vmem [#allocation1], 6
  %v2224 = vld [vmem:[%s2223] ss:$9 sm:$0xff]
  %s2226 = scalar_lea.vmem [#allocation2], 229
  %2227 = vst.msk [vmem:[%s2226] ss:$8 sm:$0x3] %vm289, %v2224
  %2228 = vst.msk [vmem:[%s2226] ss:$8 sm:$0x0] %vm289, %v2224
  %2229 = vst [vmem:[#allocation1] sm:$0xff] %v2107
  %2230 = vst [vmem:[#allocation1 + $0x9] sm:$0xff] %v2108
  %s2231 = scalar_lea.vmem [#allocation1], 7
  %v2232 = vld [vmem:[%s2231] ss:$9 sm:$0xff]
  %s2234 = scalar_lea.vmem [#allocation2], 245
  %2235 = vst.msk [vmem:[%s2234] ss:$8 sm:$0x3] %vm289, %v2232
  %2236 = vst.msk [vmem:[%s2234] ss:$8 sm:$0x0] %vm289, %v2232
  %s2237 = scalar_lea.vmem %s0, 768
  %v2238 = vld [vmem:[%s2237] sm:$0xff]
  %v2239 = vld [vmem:[%s2237 + $0x8] sm:$0xff]
  %v2240 = vld [vmem:[%s2237 + $0x10] sm:$0xff]
  %v2241 = vld [vmem:[%s2237 + $0x18] sm:$0xff]
  %v2242 = vld [vmem:[%s2237 + $0x20] sm:$0xff]
  %v2243 = vld [vmem:[%s2237 + $0x28] sm:$0xff]
  %v2244 = vld [vmem:[%s2237 + $0x30] sm:$0xff]
  %v2245 = vld [vmem:[%s2237 + $0x38] sm:$0xff]
  %v2246 = vld [vmem:[%s2237 + $0x40] sm:$0xff]
  %v2247 = vld [vmem:[%s2237 + $0x48] sm:$0xff]
  %v2248 = vld [vmem:[%s2237 + $0x50] sm:$0xff]
  %v2249 = vld [vmem:[%s2237 + $0x58] sm:$0xff]
  %v2250 = vld [vmem:[%s2237 + $0x60] sm:$0xff]
  %v2251 = vld [vmem:[%s2237 + $0x68] sm:$0xff]
  %v2252 = vld [vmem:[%s2237 + $0x70] sm:$0xff]
  %v2253 = vld [vmem:[%s2237 + $0x78] sm:$0xff]
  %v2270 = vunpack.c.l.b16 %v2238
  %v2271 = vunpack.c.h.b16 %v2238
  %v2272 = vunpack.c.l.b16 %v2239
  %v2273 = vunpack.c.h.b16 %v2239
  %v2274 = vunpack.c.l.b16 %v2240
  %v2275 = vunpack.c.h.b16 %v2240
  %v2276 = vunpack.c.l.b16 %v2241
  %v2277 = vunpack.c.h.b16 %v2241
  %v2278 = vunpack.c.l.b16 %v2242
  %v2279 = vunpack.c.h.b16 %v2242
  %v2280 = vunpack.c.l.b16 %v2243
  %v2281 = vunpack.c.h.b16 %v2243
  %v2282 = vunpack.c.l.b16 %v2244
  %v2283 = vunpack.c.h.b16 %v2244
  %v2284 = vunpack.c.l.b16 %v2245
  %v2285 = vunpack.c.h.b16 %v2245
  %v2286 = vunpack.c.l.b16 %v2246
  %v2287 = vunpack.c.h.b16 %v2246
  %v2288 = vunpack.c.l.b16 %v2247
  %v2289 = vunpack.c.h.b16 %v2247
  %v2290 = vunpack.c.l.b16 %v2248
  %v2291 = vunpack.c.h.b16 %v2248
  %v2292 = vunpack.c.l.b16 %v2249
  %v2293 = vunpack.c.h.b16 %v2249
  %v2294 = vunpack.c.l.b16 %v2250
  %v2295 = vunpack.c.h.b16 %v2250
  %v2296 = vunpack.c.l.b16 %v2251
  %v2297 = vunpack.c.h.b16 %v2251
  %v2298 = vunpack.c.l.b16 %v2252
  %v2299 = vunpack.c.h.b16 %v2252
  %v2300 = vunpack.c.l.b16 %v2253
  %v2301 = vunpack.c.h.b16 %v2253
  %v2302 = vpack.c.b16 %v2278, %v2270
  %v2303 = vpack.c.b16 %v2279, %v2271
  %v2304 = vpack.c.b16 %v2280, %v2272
  %v2305 = vpack.c.b16 %v2281, %v2273
  %v2306 = vpack.c.b16 %v2282, %v2274
  %v2307 = vpack.c.b16 %v2283, %v2275
  %v2308 = vpack.c.b16 %v2284, %v2276
  %v2309 = vpack.c.b16 %v2285, %v2277
  %v2310 = vpack.c.b16 %v2294, %v2286
  %v2311 = vpack.c.b16 %v2295, %v2287
  %v2312 = vpack.c.b16 %v2296, %v2288
  %v2313 = vpack.c.b16 %v2297, %v2289
  %v2314 = vpack.c.b16 %v2298, %v2290
  %v2315 = vpack.c.b16 %v2299, %v2291
  %v2316 = vpack.c.b16 %v2300, %v2292
  %v2317 = vpack.c.b16 %v2301, %v2293
  %2334 = vmatpush.bf16.msra.mxu0 0
  %2335 = vmatpush.bf16.msra.mxu0 0
  %2336 = vmatpush.bf16.msra.mxu0 0
  %2337 = vmatpush.bf16.msra.mxu0 0
  %2338 = vmatpush.bf16.msra.mxu0 0
  %2339 = vmatpush.bf16.msra.mxu0 0
  %2340 = vmatpush.bf16.msra.mxu0 %v2310
  %2341 = vmatpush.bf16.msra.mxu0 %v2302
  %2342 = vmatmul.bf16.gmra.mxu0 %v138
  %v2343 = vpop.f32.mrf.mxu0
  %v2344 = vadd.f32 %v44, %v2343
  %v2345 = vpop.f32.mrf.mxu0
  %v2346 = vadd.f32 %v49, %v2345
  %2347 = vdwg.mxu0
  %2348 = vmatpush.bf16.msra.mxu0 0
  %2349 = vmatpush.bf16.msra.mxu0 0
  %2350 = vmatpush.bf16.msra.mxu0 0
  %2351 = vmatpush.bf16.msra.mxu0 0
  %2352 = vmatpush.bf16.msra.mxu0 0
  %2353 = vmatpush.bf16.msra.mxu0 0
  %2354 = vmatpush.bf16.msra.mxu0 %v2311
  %2355 = vmatpush.bf16.msra.mxu0 %v2303
  %2356 = vmatmul.bf16.gmra.mxu0 %v138
  %v2357 = vpop.f32.mrf.mxu0
  %v2358 = vadd.f32 %v44, %v2357
  %v2359 = vpop.f32.mrf.mxu0
  %v2360 = vadd.f32 %v49, %v2359
  %2361 = vdwg.mxu0
  %2362 = vmatpush.bf16.msra.mxu0 0
  %2363 = vmatpush.bf16.msra.mxu0 0
  %2364 = vmatpush.bf16.msra.mxu0 0
  %2365 = vmatpush.bf16.msra.mxu0 0
  %2366 = vmatpush.bf16.msra.mxu0 0
  %2367 = vmatpush.bf16.msra.mxu0 0
  %2368 = vmatpush.bf16.msra.mxu0 %v2312
  %2369 = vmatpush.bf16.msra.mxu0 %v2304
  %2370 = vmatmul.bf16.gmra.mxu0 %v138
  %v2371 = vpop.f32.mrf.mxu0
  %v2372 = vadd.f32 %v44, %v2371
  %v2373 = vpop.f32.mrf.mxu0
  %v2374 = vadd.f32 %v49, %v2373
  %2375 = vdwg.mxu0
  %2376 = vmatpush.bf16.msra.mxu0 0
  %2377 = vmatpush.bf16.msra.mxu0 0
  %2378 = vmatpush.bf16.msra.mxu0 0
  %2379 = vmatpush.bf16.msra.mxu0 0
  %2380 = vmatpush.bf16.msra.mxu0 0
  %2381 = vmatpush.bf16.msra.mxu0 0
  %2382 = vmatpush.bf16.msra.mxu0 %v2313
  %2383 = vmatpush.bf16.msra.mxu0 %v2305
  %2384 = vmatmul.bf16.gmra.mxu0 %v138
  %v2385 = vpop.f32.mrf.mxu0
  %v2386 = vadd.f32 %v44, %v2385
  %v2387 = vpop.f32.mrf.mxu0
  %v2388 = vadd.f32 %v49, %v2387
  %2389 = vdwg.mxu0
  %2390 = vmatpush.bf16.msra.mxu0 0
  %2391 = vmatpush.bf16.msra.mxu0 0
  %2392 = vmatpush.bf16.msra.mxu0 0
  %2393 = vmatpush.bf16.msra.mxu0 0
  %2394 = vmatpush.bf16.msra.mxu0 0
  %2395 = vmatpush.bf16.msra.mxu0 0
  %2396 = vmatpush.bf16.msra.mxu0 %v2314
  %2397 = vmatpush.bf16.msra.mxu0 %v2306
  %2398 = vmatmul.bf16.gmra.mxu0 %v138
  %v2399 = vpop.f32.mrf.mxu0
  %v2400 = vadd.f32 %v44, %v2399
  %v2401 = vpop.f32.mrf.mxu0
  %v2402 = vadd.f32 %v49, %v2401
  %2403 = vdwg.mxu0
  %2404 = vmatpush.bf16.msra.mxu0 0
  %2405 = vmatpush.bf16.msra.mxu0 0
  %2406 = vmatpush.bf16.msra.mxu0 0
  %2407 = vmatpush.bf16.msra.mxu0 0
  %2408 = vmatpush.bf16.msra.mxu0 0
  %2409 = vmatpush.bf16.msra.mxu0 0
  %2410 = vmatpush.bf16.msra.mxu0 %v2315
  %2411 = vmatpush.bf16.msra.mxu0 %v2307
  %2412 = vmatmul.bf16.gmra.mxu0 %v138
  %v2413 = vpop.f32.mrf.mxu0
  %v2414 = vadd.f32 %v44, %v2413
  %v2415 = vpop.f32.mrf.mxu0
  %v2416 = vadd.f32 %v49, %v2415
  %2417 = vdwg.mxu0
  %2418 = vmatpush.bf16.msra.mxu0 0
  %2419 = vmatpush.bf16.msra.mxu0 0
  %2420 = vmatpush.bf16.msra.mxu0 0
  %2421 = vmatpush.bf16.msra.mxu0 0
  %2422 = vmatpush.bf16.msra.mxu0 0
  %2423 = vmatpush.bf16.msra.mxu0 0
  %2424 = vmatpush.bf16.msra.mxu0 %v2316
  %2425 = vmatpush.bf16.msra.mxu0 %v2308
  %2426 = vmatmul.bf16.gmra.mxu0 %v138
  %v2427 = vpop.f32.mrf.mxu0
  %v2428 = vadd.f32 %v44, %v2427
  %v2429 = vpop.f32.mrf.mxu0
  %v2430 = vadd.f32 %v49, %v2429
  %2431 = vdwg.mxu0
  %2432 = vmatpush.bf16.msra.mxu0 0
  %2433 = vmatpush.bf16.msra.mxu0 0
  %2434 = vmatpush.bf16.msra.mxu0 0
  %2435 = vmatpush.bf16.msra.mxu0 0
  %2436 = vmatpush.bf16.msra.mxu0 0
  %2437 = vmatpush.bf16.msra.mxu0 0
  %2438 = vmatpush.bf16.msra.mxu0 %v2317
  %2439 = vmatpush.bf16.msra.mxu0 %v2309
  %2440 = vmatmul.bf16.gmra.mxu0 %v138
  %v2441 = vpop.f32.mrf.mxu0
  %v2442 = vadd.f32 %v44, %v2441
  %v2443 = vpop.f32.mrf.mxu0
  %v2444 = vadd.f32 %v49, %v2443
  %2445 = vdwg.mxu0
  %v2446 = vmax.f32 %v2344, 0.0
  %v2447 = vmax.f32 %v2358, 0.0
  %v2448 = vmax.f32 %v2372, 0.0
  %v2449 = vmax.f32 %v2386, 0.0
  %v2450 = vmax.f32 %v2400, 0.0
  %v2451 = vmax.f32 %v2414, 0.0
  %v2452 = vmax.f32 %v2428, 0.0
  %v2453 = vmax.f32 %v2442, 0.0
  %v2454 = vmax.f32 %v2346, 0.0
  %v2455 = vmax.f32 %v2360, 0.0
  %v2456 = vmax.f32 %v2374, 0.0
  %v2457 = vmax.f32 %v2388, 0.0
  %v2458 = vmax.f32 %v2402, 0.0
  %v2459 = vmax.f32 %v2416, 0.0
  %v2460 = vmax.f32 %v2430, 0.0
  %v2461 = vmax.f32 %v2444, 0.0
  %v2462 = vmax.f32 %v2446, %v2448
  %v2463 = vmax.f32 %v2447, %v2449
  %v2464 = vmax.f32 %v2454, %v2456
  %v2465 = vmax.f32 %v2455, %v2457
  %v2466 = vmax.f32 %v2450, %v2452
  %v2467 = vmax.f32 %v2451, %v2453
  %v2468 = vmax.f32 %v2458, %v2460
  %v2469 = vmax.f32 %v2459, %v2461
  %v2470 = vmax.f32 %v2462, %v2466
  %v2471 = vmax.f32 %v2463, %v2467
  %v2472 = vmax.f32 %v2464, %v2468
  %v2473 = vmax.f32 %v2465, %v2469
  %v2476 = vrot.slane %v2471, 7
  %v2477 = vsel %vm283, %v2470, %v2476
  %s2479 = scalar_lea.vmem [#allocation2], 6
  %2480 = vst.msk [vmem:[%s2479] ss:$8 sm:$0x3] %vm289, %v2477
  %2481 = vst.msk [vmem:[%s2479] ss:$8 sm:$0x0] %vm289, %v2477
  %2482 = vst [vmem:[#allocation1] sm:$0xff] %v2470
  %2483 = vst [vmem:[#allocation1 + $0x9] sm:$0xff] %v2471
  %s2484 = scalar_lea.vmem [#allocation1], 1
  %v2485 = vld [vmem:[%s2484] ss:$9 sm:$0xff]
  %s2487 = scalar_lea.vmem [#allocation2], 22
  %2488 = vst.msk [vmem:[%s2487] ss:$8 sm:$0x3] %vm289, %v2485
  %2489 = vst.msk [vmem:[%s2487] ss:$8 sm:$0x0] %vm289, %v2485
  %2490 = vst [vmem:[#allocation1] sm:$0xff] %v2470
  %2491 = vst [vmem:[#allocation1 + $0x9] sm:$0xff] %v2471
  %s2492 = scalar_lea.vmem [#allocation1], 2
  %v2493 = vld [vmem:[%s2492] ss:$9 sm:$0xff]
  %s2495 = scalar_lea.vmem [#allocation2], 38
  %2496 = vst.msk [vmem:[%s2495] ss:$8 sm:$0x3] %vm289, %v2493
  %2497 = vst.msk [vmem:[%s2495] ss:$8 sm:$0x0] %vm289, %v2493
  %2498 = vst [vmem:[#allocation1] sm:$0xff] %v2470
  %2499 = vst [vmem:[#allocation1 + $0x9] sm:$0xff] %v2471
  %s2500 = scalar_lea.vmem [#allocation1], 3
  %v2501 = vld [vmem:[%s2500] ss:$9 sm:$0xff]
  %s2503 = scalar_lea.vmem [#allocation2], 54
  %2504 = vst.msk [vmem:[%s2503] ss:$8 sm:$0x3] %vm289, %v2501
  %2505 = vst.msk [vmem:[%s2503] ss:$8 sm:$0x0] %vm289, %v2501
  %2506 = vst [vmem:[#allocation1] sm:$0xff] %v2470
  %2507 = vst [vmem:[#allocation1 + $0x9] sm:$0xff] %v2471
  %s2508 = scalar_lea.vmem [#allocation1], 4
  %v2509 = vld [vmem:[%s2508] ss:$9 sm:$0xff]
  %s2511 = scalar_lea.vmem [#allocation2], 70
  %2512 = vst.msk [vmem:[%s2511] ss:$8 sm:$0x3] %vm289, %v2509
  %2513 = vst.msk [vmem:[%s2511] ss:$8 sm:$0x0] %vm289, %v2509
  %2514 = vst [vmem:[#allocation1] sm:$0xff] %v2470
  %2515 = vst [vmem:[#allocation1 + $0x9] sm:$0xff] %v2471
  %s2516 = scalar_lea.vmem [#allocation1], 5
  %v2517 = vld [vmem:[%s2516] ss:$9 sm:$0xff]
  %s2519 = scalar_lea.vmem [#allocation2], 86
  %2520 = vst.msk [vmem:[%s2519] ss:$8 sm:$0x3] %vm289, %v2517
  %2521 = vst.msk [vmem:[%s2519] ss:$8 sm:$0x0] %vm289, %v2517
  %2522 = vst [vmem:[#allocation1] sm:$0xff] %v2470
  %2523 = vst [vmem:[#allocation1 + $0x9] sm:$0xff] %v2471
  %s2524 = scalar_lea.vmem [#allocation1], 6
  %v2525 = vld [vmem:[%s2524] ss:$9 sm:$0xff]
  %s2527 = scalar_lea.vmem [#allocation2], 102
  %2528 = vst.msk [vmem:[%s2527] ss:$8 sm:$0x3] %vm289, %v2525
  %2529 = vst.msk [vmem:[%s2527] ss:$8 sm:$0x0] %vm289, %v2525
  %2530 = vst [vmem:[#allocation1] sm:$0xff] %v2470
  %2531 = vst [vmem:[#allocation1 + $0x9] sm:$0xff] %v2471
  %s2532 = scalar_lea.vmem [#allocation1], 7
  %v2533 = vld [vmem:[%s2532] ss:$9 sm:$0xff]
  %s2535 = scalar_lea.vmem [#allocation2], 118
  %2536 = vst.msk [vmem:[%s2535] ss:$8 sm:$0x3] %vm289, %v2533
  %2537 = vst.msk [vmem:[%s2535] ss:$8 sm:$0x0] %vm289, %v2533
  %v2540 = vrot.slane %v2473, 7
  %v2541 = vsel %vm283, %v2472, %v2540
  %s2543 = scalar_lea.vmem [#allocation2], 134
  %2544 = vst.msk [vmem:[%s2543] ss:$8 sm:$0x3] %vm289, %v2541
  %2545 = vst.msk [vmem:[%s2543] ss:$8 sm:$0x0] %vm289, %v2541
  %2546 = vst [vmem:[#allocation1] sm:$0xff] %v2472
  %2547 = vst [vmem:[#allocation1 + $0x9] sm:$0xff] %v2473
  %s2548 = scalar_lea.vmem [#allocation1], 1
  %v2549 = vld [vmem:[%s2548] ss:$9 sm:$0xff]
  %s2551 = scalar_lea.vmem [#allocation2], 150
  %2552 = vst.msk [vmem:[%s2551] ss:$8 sm:$0x3] %vm289, %v2549
  %2553 = vst.msk [vmem:[%s2551] ss:$8 sm:$0x0] %vm289, %v2549
  %2554 = vst [vmem:[#allocation1] sm:$0xff] %v2472
  %2555 = vst [vmem:[#allocation1 + $0x9] sm:$0xff] %v2473
  %s2556 = scalar_lea.vmem [#allocation1], 2
  %v2557 = vld [vmem:[%s2556] ss:$9 sm:$0xff]
  %s2559 = scalar_lea.vmem [#allocation2], 166
  %2560 = vst.msk [vmem:[%s2559] ss:$8 sm:$0x3] %vm289, %v2557
  %2561 = vst.msk [vmem:[%s2559] ss:$8 sm:$0x0] %vm289, %v2557
  %2562 = vst [vmem:[#allocation1] sm:$0xff] %v2472
  %2563 = vst [vmem:[#allocation1 + $0x9] sm:$0xff] %v2473
  %s2564 = scalar_lea.vmem [#allocation1], 3
  %v2565 = vld [vmem:[%s2564] ss:$9 sm:$0xff]
  %s2567 = scalar_lea.vmem [#allocation2], 182
  %2568 = vst.msk [vmem:[%s2567] ss:$8 sm:$0x3] %vm289, %v2565
  %2569 = vst.msk [vmem:[%s2567] ss:$8 sm:$0x0] %vm289, %v2565
  %2570 = vst [vmem:[#allocation1] sm:$0xff] %v2472
  %2571 = vst [vmem:[#allocation1 + $0x9] sm:$0xff] %v2473
  %s2572 = scalar_lea.vmem [#allocation1], 4
  %v2573 = vld [vmem:[%s2572] ss:$9 sm:$0xff]
  %s2575 = scalar_lea.vmem [#allocation2], 198
  %2576 = vst.msk [vmem:[%s2575] ss:$8 sm:$0x3] %vm289, %v2573
  %2577 = vst.msk [vmem:[%s2575] ss:$8 sm:$0x0] %vm289, %v2573
  %2578 = vst [vmem:[#allocation1] sm:$0xff] %v2472
  %2579 = vst [vmem:[#allocation1 + $0x9] sm:$0xff] %v2473
  %s2580 = scalar_lea.vmem [#allocation1], 5
  %v2581 = vld [vmem:[%s2580] ss:$9 sm:$0xff]
  %s2583 = scalar_lea.vmem [#allocation2], 214
  %2584 = vst.msk [vmem:[%s2583] ss:$8 sm:$0x3] %vm289, %v2581
  %2585 = vst.msk [vmem:[%s2583] ss:$8 sm:$0x0] %vm289, %v2581
  %2586 = vst [vmem:[#allocation1] sm:$0xff] %v2472
  %2587 = vst [vmem:[#allocation1 + $0x9] sm:$0xff] %v2473
  %s2588 = scalar_lea.vmem [#allocation1], 6
  %v2589 = vld [vmem:[%s2588] ss:$9 sm:$0xff]
  %s2591 = scalar_lea.vmem [#allocation2], 230
  %2592 = vst.msk [vmem:[%s2591] ss:$8 sm:$0x3] %vm289, %v2589
  %2593 = vst.msk [vmem:[%s2591] ss:$8 sm:$0x0] %vm289, %v2589
  %2594 = vst [vmem:[#allocation1] sm:$0xff] %v2472
  %2595 = vst [vmem:[#allocation1 + $0x9] sm:$0xff] %v2473
  %s2596 = scalar_lea.vmem [#allocation1], 7
  %v2597 = vld [vmem:[%s2596] ss:$9 sm:$0xff]
  %s2599 = scalar_lea.vmem [#allocation2], 246
  %2600 = vst.msk [vmem:[%s2599] ss:$8 sm:$0x3] %vm289, %v2597
  %2601 = vst.msk [vmem:[%s2599] ss:$8 sm:$0x0] %vm289, %v2597
  %s2602 = scalar_lea.vmem %s0, 896
  %v2603 = vld [vmem:[%s2602] sm:$0xff]
  %v2604 = vld [vmem:[%s2602 + $0x8] sm:$0xff]
  %v2605 = vld [vmem:[%s2602 + $0x10] sm:$0xff]
  %v2606 = vld [vmem:[%s2602 + $0x18] sm:$0xff]
  %v2607 = vld [vmem:[%s2602 + $0x20] sm:$0xff]
  %v2608 = vld [vmem:[%s2602 + $0x28] sm:$0xff]
  %v2609 = vld [vmem:[%s2602 + $0x30] sm:$0xff]
  %v2610 = vld [vmem:[%s2602 + $0x38] sm:$0xff]
  %v2611 = vld [vmem:[%s2602 + $0x40] sm:$0xff]
  %v2612 = vld [vmem:[%s2602 + $0x48] sm:$0xff]
  %v2613 = vld [vmem:[%s2602 + $0x50] sm:$0xff]
  %v2614 = vld [vmem:[%s2602 + $0x58] sm:$0xff]
  %v2615 = vld [vmem:[%s2602 + $0x60] sm:$0xff]
  %v2616 = vld [vmem:[%s2602 + $0x68] sm:$0xff]
  %v2617 = vld [vmem:[%s2602 + $0x70] sm:$0xff]
  %v2618 = vld [vmem:[%s2602 + $0x78] sm:$0xff]
  %v2635 = vunpack.c.l.b16 %v2603
  %v2636 = vunpack.c.h.b16 %v2603
  %v2637 = vunpack.c.l.b16 %v2604
  %v2638 = vunpack.c.h.b16 %v2604
  %v2639 = vunpack.c.l.b16 %v2605
  %v2640 = vunpack.c.h.b16 %v2605
  %v2641 = vunpack.c.l.b16 %v2606
  %v2642 = vunpack.c.h.b16 %v2606
  %v2643 = vunpack.c.l.b16 %v2607
  %v2644 = vunpack.c.h.b16 %v2607
  %v2645 = vunpack.c.l.b16 %v2608
  %v2646 = vunpack.c.h.b16 %v2608
  %v2647 = vunpack.c.l.b16 %v2609
  %v2648 = vunpack.c.h.b16 %v2609
  %v2649 = vunpack.c.l.b16 %v2610
  %v2650 = vunpack.c.h.b16 %v2610
  %v2651 = vunpack.c.l.b16 %v2611
  %v2652 = vunpack.c.h.b16 %v2611
  %v2653 = vunpack.c.l.b16 %v2612
  %v2654 = vunpack.c.h.b16 %v2612
  %v2655 = vunpack.c.l.b16 %v2613
  %v2656 = vunpack.c.h.b16 %v2613
  %v2657 = vunpack.c.l.b16 %v2614
  %v2658 = vunpack.c.h.b16 %v2614
  %v2659 = vunpack.c.l.b16 %v2615
  %v2660 = vunpack.c.h.b16 %v2615
  %v2661 = vunpack.c.l.b16 %v2616
  %v2662 = vunpack.c.h.b16 %v2616
  %v2663 = vunpack.c.l.b16 %v2617
  %v2664 = vunpack.c.h.b16 %v2617
  %v2665 = vunpack.c.l.b16 %v2618
  %v2666 = vunpack.c.h.b16 %v2618
  %v2667 = vpack.c.b16 %v2643, %v2635
  %v2668 = vpack.c.b16 %v2644, %v2636
  %v2669 = vpack.c.b16 %v2645, %v2637
  %v2670 = vpack.c.b16 %v2646, %v2638
  %v2671 = vpack.c.b16 %v2647, %v2639
  %v2672 = vpack.c.b16 %v2648, %v2640
  %v2673 = vpack.c.b16 %v2649, %v2641
  %v2674 = vpack.c.b16 %v2650, %v2642
  %v2675 = vpack.c.b16 %v2659, %v2651
  %v2676 = vpack.c.b16 %v2660, %v2652
  %v2677 = vpack.c.b16 %v2661, %v2653
  %v2678 = vpack.c.b16 %v2662, %v2654
  %v2679 = vpack.c.b16 %v2663, %v2655
  %v2680 = vpack.c.b16 %v2664, %v2656
  %v2681 = vpack.c.b16 %v2665, %v2657
  %v2682 = vpack.c.b16 %v2666, %v2658
  %2699 = vmatpush.bf16.msra.mxu0 0
  %2700 = vmatpush.bf16.msra.mxu0 0
  %2701 = vmatpush.bf16.msra.mxu0 0
  %2702 = vmatpush.bf16.msra.mxu0 0
  %2703 = vmatpush.bf16.msra.mxu0 0
  %2704 = vmatpush.bf16.msra.mxu0 0
  %2705 = vmatpush.bf16.msra.mxu0 %v2675
  %2706 = vmatpush.bf16.msra.mxu0 %v2667
  %2707 = vmatmul.bf16.gmra.mxu0 %v138
  %v2708 = vpop.f32.mrf.mxu0
  %v2709 = vadd.f32 %v44, %v2708
  %v2710 = vpop.f32.mrf.mxu0
  %v2711 = vadd.f32 %v49, %v2710
  %2712 = vdwg.mxu0
  %2713 = vmatpush.bf16.msra.mxu0 0
  %2714 = vmatpush.bf16.msra.mxu0 0
  %2715 = vmatpush.bf16.msra.mxu0 0
  %2716 = vmatpush.bf16.msra.mxu0 0
  %2717 = vmatpush.bf16.msra.mxu0 0
  %2718 = vmatpush.bf16.msra.mxu0 0
  %2719 = vmatpush.bf16.msra.mxu0 %v2676
  %2720 = vmatpush.bf16.msra.mxu0 %v2668
  %2721 = vmatmul.bf16.gmra.mxu0 %v138
  %v2722 = vpop.f32.mrf.mxu0
  %v2723 = vadd.f32 %v44, %v2722
  %v2724 = vpop.f32.mrf.mxu0
  %v2725 = vadd.f32 %v49, %v2724
  %2726 = vdwg.mxu0
  %2727 = vmatpush.bf16.msra.mxu0 0
  %2728 = vmatpush.bf16.msra.mxu0 0
  %2729 = vmatpush.bf16.msra.mxu0 0
  %2730 = vmatpush.bf16.msra.mxu0 0
  %2731 = vmatpush.bf16.msra.mxu0 0
  %2732 = vmatpush.bf16.msra.mxu0 0
  %2733 = vmatpush.bf16.msra.mxu0 %v2677
  %2734 = vmatpush.bf16.msra.mxu0 %v2669
  %2735 = vmatmul.bf16.gmra.mxu0 %v138
  %v2736 = vpop.f32.mrf.mxu0
  %v2737 = vadd.f32 %v44, %v2736
  %v2738 = vpop.f32.mrf.mxu0
  %v2739 = vadd.f32 %v49, %v2738
  %2740 = vdwg.mxu0
  %2741 = vmatpush.bf16.msra.mxu0 0
  %2742 = vmatpush.bf16.msra.mxu0 0
  %2743 = vmatpush.bf16.msra.mxu0 0
  %2744 = vmatpush.bf16.msra.mxu0 0
  %2745 = vmatpush.bf16.msra.mxu0 0
  %2746 = vmatpush.bf16.msra.mxu0 0
  %2747 = vmatpush.bf16.msra.mxu0 %v2678
  %2748 = vmatpush.bf16.msra.mxu0 %v2670
  %2749 = vmatmul.bf16.gmra.mxu0 %v138
  %v2750 = vpop.f32.mrf.mxu0
  %v2751 = vadd.f32 %v44, %v2750
  %v2752 = vpop.f32.mrf.mxu0
  %v2753 = vadd.f32 %v49, %v2752
  %2754 = vdwg.mxu0
  %2755 = vmatpush.bf16.msra.mxu0 0
  %2756 = vmatpush.bf16.msra.mxu0 0
  %2757 = vmatpush.bf16.msra.mxu0 0
  %2758 = vmatpush.bf16.msra.mxu0 0
  %2759 = vmatpush.bf16.msra.mxu0 0
  %2760 = vmatpush.bf16.msra.mxu0 0
  %2761 = vmatpush.bf16.msra.mxu0 %v2679
  %2762 = vmatpush.bf16.msra.mxu0 %v2671
  %2763 = vmatmul.bf16.gmra.mxu0 %v138
  %v2764 = vpop.f32.mrf.mxu0
  %v2765 = vadd.f32 %v44, %v2764
  %v2766 = vpop.f32.mrf.mxu0
  %v2767 = vadd.f32 %v49, %v2766
  %2768 = vdwg.mxu0
  %2769 = vmatpush.bf16.msra.mxu0 0
  %2770 = vmatpush.bf16.msra.mxu0 0
  %2771 = vmatpush.bf16.msra.mxu0 0
  %2772 = vmatpush.bf16.msra.mxu0 0
  %2773 = vmatpush.bf16.msra.mxu0 0
  %2774 = vmatpush.bf16.msra.mxu0 0
  %2775 = vmatpush.bf16.msra.mxu0 %v2680
  %2776 = vmatpush.bf16.msra.mxu0 %v2672
  %2777 = vmatmul.bf16.gmra.mxu0 %v138
  %v2778 = vpop.f32.mrf.mxu0
  %v2779 = vadd.f32 %v44, %v2778
  %v2780 = vpop.f32.mrf.mxu0
  %v2781 = vadd.f32 %v49, %v2780
  %2782 = vdwg.mxu0
  %2783 = vmatpush.bf16.msra.mxu0 0
  %2784 = vmatpush.bf16.msra.mxu0 0
  %2785 = vmatpush.bf16.msra.mxu0 0
  %2786 = vmatpush.bf16.msra.mxu0 0
  %2787 = vmatpush.bf16.msra.mxu0 0
  %2788 = vmatpush.bf16.msra.mxu0 0
  %2789 = vmatpush.bf16.msra.mxu0 %v2681
  %2790 = vmatpush.bf16.msra.mxu0 %v2673
  %2791 = vmatmul.bf16.gmra.mxu0 %v138
  %v2792 = vpop.f32.mrf.mxu0
  %v2793 = vadd.f32 %v44, %v2792
  %v2794 = vpop.f32.mrf.mxu0
  %v2795 = vadd.f32 %v49, %v2794
  %2796 = vdwg.mxu0
  %2797 = vmatpush.bf16.msra.mxu0 0
  %2798 = vmatpush.bf16.msra.mxu0 0
  %2799 = vmatpush.bf16.msra.mxu0 0
  %2800 = vmatpush.bf16.msra.mxu0 0
  %2801 = vmatpush.bf16.msra.mxu0 0
  %2802 = vmatpush.bf16.msra.mxu0 0
  %2803 = vmatpush.bf16.msra.mxu0 %v2682
  %2804 = vmatpush.bf16.msra.mxu0 %v2674
  %2805 = vmatmul.bf16.gmra.mxu0 %v138
  %v2806 = vpop.f32.mrf.mxu0
  %v2807 = vadd.f32 %v44, %v2806
  %v2808 = vpop.f32.mrf.mxu0
  %v2809 = vadd.f32 %v49, %v2808
  %2810 = vdwg.mxu0
  %v2811 = vmax.f32 %v2709, 0.0
  %v2812 = vmax.f32 %v2723, 0.0
  %v2813 = vmax.f32 %v2737, 0.0
  %v2814 = vmax.f32 %v2751, 0.0
  %v2815 = vmax.f32 %v2765, 0.0
  %v2816 = vmax.f32 %v2779, 0.0
  %v2817 = vmax.f32 %v2793, 0.0
  %v2818 = vmax.f32 %v2807, 0.0
  %v2819 = vmax.f32 %v2711, 0.0
  %v2820 = vmax.f32 %v2725, 0.0
  %v2821 = vmax.f32 %v2739, 0.0
  %v2822 = vmax.f32 %v2753, 0.0
  %v2823 = vmax.f32 %v2767, 0.0
  %v2824 = vmax.f32 %v2781, 0.0
  %v2825 = vmax.f32 %v2795, 0.0
  %v2826 = vmax.f32 %v2809, 0.0
  %v2827 = vmax.f32 %v2811, %v2813
  %v2828 = vmax.f32 %v2812, %v2814
  %v2829 = vmax.f32 %v2819, %v2821
  %v2830 = vmax.f32 %v2820, %v2822
  %v2831 = vmax.f32 %v2815, %v2817
  %v2832 = vmax.f32 %v2816, %v2818
  %v2833 = vmax.f32 %v2823, %v2825
  %v2834 = vmax.f32 %v2824, %v2826
  %v2835 = vmax.f32 %v2827, %v2831
  %v2836 = vmax.f32 %v2828, %v2832
  %v2837 = vmax.f32 %v2829, %v2833
  %v2838 = vmax.f32 %v2830, %v2834
  %v2841 = vrot.slane %v2836, 7
  %v2842 = vsel %vm283, %v2835, %v2841
  %s2844 = scalar_lea.vmem [#allocation2], 7
  %2845 = vst.msk [vmem:[%s2844] ss:$8 sm:$0x3] %vm289, %v2842
  %2846 = vst.msk [vmem:[%s2844] ss:$8 sm:$0x0] %vm289, %v2842
  %2847 = vst [vmem:[#allocation1] sm:$0xff] %v2835
  %2848 = vst [vmem:[#allocation1 + $0x9] sm:$0xff] %v2836
  %s2849 = scalar_lea.vmem [#allocation1], 1
  %v2850 = vld [vmem:[%s2849] ss:$9 sm:$0xff]
  %s2852 = scalar_lea.vmem [#allocation2], 23
  %2853 = vst.msk [vmem:[%s2852] ss:$8 sm:$0x3] %vm289, %v2850
  %2854 = vst.msk [vmem:[%s2852] ss:$8 sm:$0x0] %vm289, %v2850
  %2855 = vst [vmem:[#allocation1] sm:$0xff] %v2835
  %2856 = vst [vmem:[#allocation1 + $0x9] sm:$0xff] %v2836
  %s2857 = scalar_lea.vmem [#allocation1], 2
  %v2858 = vld [vmem:[%s2857] ss:$9 sm:$0xff]
  %s2860 = scalar_lea.vmem [#allocation2], 39
  %2861 = vst.msk [vmem:[%s2860] ss:$8 sm:$0x3] %vm289, %v2858
  %2862 = vst.msk [vmem:[%s2860] ss:$8 sm:$0x0] %vm289, %v2858
  %2863 = vst [vmem:[#allocation1] sm:$0xff] %v2835
  %2864 = vst [vmem:[#allocation1 + $0x9] sm:$0xff] %v2836
  %s2865 = scalar_lea.vmem [#allocation1], 3
  %v2866 = vld [vmem:[%s2865] ss:$9 sm:$0xff]
  %s2868 = scalar_lea.vmem [#allocation2], 55
  %2869 = vst.msk [vmem:[%s2868] ss:$8 sm:$0x3] %vm289, %v2866
  %2870 = vst.msk [vmem:[%s2868] ss:$8 sm:$0x0] %vm289, %v2866
  %2871 = vst [vmem:[#allocation1] sm:$0xff] %v2835
  %2872 = vst [vmem:[#allocation1 + $0x9] sm:$0xff] %v2836
  %s2873 = scalar_lea.vmem [#allocation1], 4
  %v2874 = vld [vmem:[%s2873] ss:$9 sm:$0xff]
  %s2876 = scalar_lea.vmem [#allocation2], 71
  %2877 = vst.msk [vmem:[%s2876] ss:$8 sm:$0x3] %vm289, %v2874
  %2878 = vst.msk [vmem:[%s2876] ss:$8 sm:$0x0] %vm289, %v2874
  %2879 = vst [vmem:[#allocation1] sm:$0xff] %v2835
  %2880 = vst [vmem:[#allocation1 + $0x9] sm:$0xff] %v2836
  %s2881 = scalar_lea.vmem [#allocation1], 5
  %v2882 = vld [vmem:[%s2881] ss:$9 sm:$0xff]
  %s2884 = scalar_lea.vmem [#allocation2], 87
  %2885 = vst.msk [vmem:[%s2884] ss:$8 sm:$0x3] %vm289, %v2882
  %2886 = vst.msk [vmem:[%s2884] ss:$8 sm:$0x0] %vm289, %v2882
  %2887 = vst [vmem:[#allocation1] sm:$0xff] %v2835
  %2888 = vst [vmem:[#allocation1 + $0x9] sm:$0xff] %v2836
  %s2889 = scalar_lea.vmem [#allocation1], 6
  %v2890 = vld [vmem:[%s2889] ss:$9 sm:$0xff]
  %s2892 = scalar_lea.vmem [#allocation2], 103
  %2893 = vst.msk [vmem:[%s2892] ss:$8 sm:$0x3] %vm289, %v2890
  %2894 = vst.msk [vmem:[%s2892] ss:$8 sm:$0x0] %vm289, %v2890
  %2895 = vst [vmem:[#allocation1] sm:$0xff] %v2835
  %2896 = vst [vmem:[#allocation1 + $0x9] sm:$0xff] %v2836
  %s2897 = scalar_lea.vmem [#allocation1], 7
  %v2898 = vld [vmem:[%s2897] ss:$9 sm:$0xff]
  %s2900 = scalar_lea.vmem [#allocation2], 119
  %2901 = vst.msk [vmem:[%s2900] ss:$8 sm:$0x3] %vm289, %v2898
  %2902 = vst.msk [vmem:[%s2900] ss:$8 sm:$0x0] %vm289, %v2898
  %v2905 = vrot.slane %v2838, 7
  %v2906 = vsel %vm283, %v2837, %v2905
  %s2908 = scalar_lea.vmem [#allocation2], 135
  %2909 = vst.msk [vmem:[%s2908] ss:$8 sm:$0x3] %vm289, %v2906
  %2910 = vst.msk [vmem:[%s2908] ss:$8 sm:$0x0] %vm289, %v2906
  %2911 = vst [vmem:[#allocation1] sm:$0xff] %v2837
  %2912 = vst [vmem:[#allocation1 + $0x9] sm:$0xff] %v2838
  %s2913 = scalar_lea.vmem [#allocation1], 1
  %v2914 = vld [vmem:[%s2913] ss:$9 sm:$0xff]
  %s2916 = scalar_lea.vmem [#allocation2], 151
  %2917 = vst.msk [vmem:[%s2916] ss:$8 sm:$0x3] %vm289, %v2914
  %2918 = vst.msk [vmem:[%s2916] ss:$8 sm:$0x0] %vm289, %v2914
  %2919 = vst [vmem:[#allocation1] sm:$0xff] %v2837
  %2920 = vst [vmem:[#allocation1 + $0x9] sm:$0xff] %v2838
  %s2921 = scalar_lea.vmem [#allocation1], 2
  %v2922 = vld [vmem:[%s2921] ss:$9 sm:$0xff]
  %s2924 = scalar_lea.vmem [#allocation2], 167
  %2925 = vst.msk [vmem:[%s2924] ss:$8 sm:$0x3] %vm289, %v2922
  %2926 = vst.msk [vmem:[%s2924] ss:$8 sm:$0x0] %vm289, %v2922
  %2927 = vst [vmem:[#allocation1] sm:$0xff] %v2837
  %2928 = vst [vmem:[#allocation1 + $0x9] sm:$0xff] %v2838
  %s2929 = scalar_lea.vmem [#allocation1], 3
  %v2930 = vld [vmem:[%s2929] ss:$9 sm:$0xff]
  %s2932 = scalar_lea.vmem [#allocation2], 183
  %2933 = vst.msk [vmem:[%s2932] ss:$8 sm:$0x3] %vm289, %v2930
  %2934 = vst.msk [vmem:[%s2932] ss:$8 sm:$0x0] %vm289, %v2930
  %2935 = vst [vmem:[#allocation1] sm:$0xff] %v2837
  %2936 = vst [vmem:[#allocation1 + $0x9] sm:$0xff] %v2838
  %s2937 = scalar_lea.vmem [#allocation1], 4
  %v2938 = vld [vmem:[%s2937] ss:$9 sm:$0xff]
  %s2940 = scalar_lea.vmem [#allocation2], 199
  %2941 = vst.msk [vmem:[%s2940] ss:$8 sm:$0x3] %vm289, %v2938
  %2942 = vst.msk [vmem:[%s2940] ss:$8 sm:$0x0] %vm289, %v2938
  %2943 = vst [vmem:[#allocation1] sm:$0xff] %v2837
  %2944 = vst [vmem:[#allocation1 + $0x9] sm:$0xff] %v2838
  %s2945 = scalar_lea.vmem [#allocation1], 5
  %v2946 = vld [vmem:[%s2945] ss:$9 sm:$0xff]
  %s2948 = scalar_lea.vmem [#allocation2], 215
  %2949 = vst.msk [vmem:[%s2948] ss:$8 sm:$0x3] %vm289, %v2946
  %2950 = vst.msk [vmem:[%s2948] ss:$8 sm:$0x0] %vm289, %v2946
  %2951 = vst [vmem:[#allocation1] sm:$0xff] %v2837
  %2952 = vst [vmem:[#allocation1 + $0x9] sm:$0xff] %v2838
  %s2953 = scalar_lea.vmem [#allocation1], 6
  %v2954 = vld [vmem:[%s2953] ss:$9 sm:$0xff]
  %s2956 = scalar_lea.vmem [#allocation2], 231
  %2957 = vst.msk [vmem:[%s2956] ss:$8 sm:$0x3] %vm289, %v2954
  %2958 = vst.msk [vmem:[%s2956] ss:$8 sm:$0x0] %vm289, %v2954
  %2959 = vst [vmem:[#allocation1] sm:$0xff] %v2837
  %2960 = vst [vmem:[#allocation1 + $0x9] sm:$0xff] %v2838
  %s2961 = scalar_lea.vmem [#allocation1], 7
  %v2962 = vld [vmem:[%s2961] ss:$9 sm:$0xff]
  %s2964 = scalar_lea.vmem [#allocation2], 247
  %2965 = vst.msk [vmem:[%s2964] ss:$8 sm:$0x3] %vm289, %v2962
  %2966 = vst.msk [vmem:[%s2964] ss:$8 sm:$0x0] %vm289, %v2962
  %v2967 = vld [vmem:[#allocation2] sm:$0xff]
  %v2968 = vld [vmem:[#allocation2 + $0x8] sm:$0xff]
  %v2969 = vld [vmem:[#allocation2 + $0x10] sm:$0xff]
  %v2970 = vld [vmem:[#allocation2 + $0x18] sm:$0xff]
  %v2971 = vld [vmem:[#allocation2 + $0x20] sm:$0xff]
  %v2972 = vld [vmem:[#allocation2 + $0x28] sm:$0xff]
  %v2973 = vld [vmem:[#allocation2 + $0x30] sm:$0xff]
  %v2974 = vld [vmem:[#allocation2 + $0x38] sm:$0xff]
  %v2975 = vld [vmem:[#allocation2 + $0x40] sm:$0xff]
  %v2976 = vld [vmem:[#allocation2 + $0x48] sm:$0xff]
  %v2977 = vld [vmem:[#allocation2 + $0x50] sm:$0xff]
  %v2978 = vld [vmem:[#allocation2 + $0x58] sm:$0xff]
  %v2979 = vld [vmem:[#allocation2 + $0x60] sm:$0xff]
  %v2980 = vld [vmem:[#allocation2 + $0x68] sm:$0xff]
  %v2981 = vld [vmem:[#allocation2 + $0x70] sm:$0xff]
  %v2982 = vld [vmem:[#allocation2 + $0x78] sm:$0xff]
  %v2983 = vld [vmem:[#allocation2 + $0x80] sm:$0xff]
  %v2984 = vld [vmem:[#allocation2 + $0x88] sm:$0xff]
  %v2985 = vld [vmem:[#allocation2 + $0x90] sm:$0xff]
  %v2986 = vld [vmem:[#allocation2 + $0x98] sm:$0xff]
  %v2987 = vld [vmem:[#allocation2 + $0xa0] sm:$0xff]
  %v2988 = vld [vmem:[#allocation2 + $0xa8] sm:$0xff]
  %v2989 = vld [vmem:[#allocation2 + $0xb0] sm:$0xff]
  %v2990 = vld [vmem:[#allocation2 + $0xb8] sm:$0xff]
  %v2991 = vld [vmem:[#allocation2 + $0xc0] sm:$0xff]
  %v2992 = vld [vmem:[#allocation2 + $0xc8] sm:$0xff]
  %v2993 = vld [vmem:[#allocation2 + $0xd0] sm:$0xff]
  %v2994 = vld [vmem:[#allocation2 + $0xd8] sm:$0xff]
  %v2995 = vld [vmem:[#allocation2 + $0xe0] sm:$0xff]
  %v2996 = vld [vmem:[#allocation2 + $0xe8] sm:$0xff]
  %v2997 = vld [vmem:[#allocation2 + $0xf0] sm:$0xff]
  %v2998 = vld [vmem:[#allocation2 + $0xf8] sm:$0xff]
  %v2999 = vpack.c.bf16 %v2967, %v2967
  %v3000 = vpack.c.bf16 %v2968, %v2968
  %v3001 = vpack.c.bf16 %v2969, %v2969
  %v3002 = vpack.c.bf16 %v2970, %v2970
  %v3003 = vpack.c.bf16 %v2971, %v2971
  %v3004 = vpack.c.bf16 %v2972, %v2972
  %v3005 = vpack.c.bf16 %v2973, %v2973
  %v3006 = vpack.c.bf16 %v2974, %v2974
  %v3007 = vpack.c.bf16 %v2975, %v2975
  %v3008 = vpack.c.bf16 %v2976, %v2976
  %v3009 = vpack.c.bf16 %v2977, %v2977
  %v3010 = vpack.c.bf16 %v2978, %v2978
  %v3011 = vpack.c.bf16 %v2979, %v2979
  %v3012 = vpack.c.bf16 %v2980, %v2980
  %v3013 = vpack.c.bf16 %v2981, %v2981
  %v3014 = vpack.c.bf16 %v2982, %v2982
  %v3015 = vpack.c.bf16 %v2983, %v2983
  %v3016 = vpack.c.bf16 %v2984, %v2984
  %v3017 = vpack.c.bf16 %v2985, %v2985
  %v3018 = vpack.c.bf16 %v2986, %v2986
  %v3019 = vpack.c.bf16 %v2987, %v2987
  %v3020 = vpack.c.bf16 %v2988, %v2988
  %v3021 = vpack.c.bf16 %v2989, %v2989
  %v3022 = vpack.c.bf16 %v2990, %v2990
  %v3023 = vpack.c.bf16 %v2991, %v2991
  %v3024 = vpack.c.bf16 %v2992, %v2992
  %v3025 = vpack.c.bf16 %v2993, %v2993
  %v3026 = vpack.c.bf16 %v2994, %v2994
  %v3027 = vpack.c.bf16 %v2995, %v2995
  %v3028 = vpack.c.bf16 %v2996, %v2996
  %v3029 = vpack.c.bf16 %v2997, %v2997
  %v3030 = vpack.c.bf16 %v2998, %v2998
  %v3031 = vld [vmem:[%s3] sm:$0xf]
  %v3032 = vld [vmem:[%s3 + $0x4] sm:$0xf]
  %v3033 = vld [vmem:[%s3 + $0x8] sm:$0xf]
  %v3034 = vld [vmem:[%s3 + $0xc] sm:$0xf]
  %v3035 = vld [vmem:[%s3 + $0x10] sm:$0xf]
  %v3036 = vld [vmem:[%s3 + $0x14] sm:$0xf]
  %v3037 = vld [vmem:[%s3 + $0x18] sm:$0xf]
  %v3038 = vld [vmem:[%s3 + $0x1c] sm:$0xf]
  %v3039 = vld [vmem:[%s3 + $0x20] sm:$0xf]
  %v3040 = vld [vmem:[%s3 + $0x24] sm:$0xf]
  %v3041 = vld [vmem:[%s3 + $0x28] sm:$0xf]
  %v3042 = vld [vmem:[%s3 + $0x2c] sm:$0xf]
  %v3043 = vld [vmem:[%s3 + $0x30] sm:$0xf]
  %v3044 = vld [vmem:[%s3 + $0x34] sm:$0xf]
  %v3045 = vld [vmem:[%s3 + $0x38] sm:$0xf]
  %v3046 = vld [vmem:[%s3 + $0x3c] sm:$0xf]
  %v3047 = vld [vmem:[%s3 + $0x40] sm:$0xf]
  %v3048 = vld [vmem:[%s3 + $0x44] sm:$0xf]
  %v3049 = vld [vmem:[%s3 + $0x48] sm:$0xf]
  %v3050 = vld [vmem:[%s3 + $0x4c] sm:$0xf]
  %v3051 = vld [vmem:[%s3 + $0x50] sm:$0xf]
  %v3052 = vld [vmem:[%s3 + $0x54] sm:$0xf]
  %v3053 = vld [vmem:[%s3 + $0x58] sm:$0xf]
  %v3054 = vld [vmem:[%s3 + $0x5c] sm:$0xf]
  %v3055 = vld [vmem:[%s3 + $0x60] sm:$0xf]
  %v3056 = vld [vmem:[%s3 + $0x64] sm:$0xf]
  %v3057 = vld [vmem:[%s3 + $0x68] sm:$0xf]
  %v3058 = vld [vmem:[%s3 + $0x6c] sm:$0xf]
  %v3059 = vld [vmem:[%s3 + $0x70] sm:$0xf]
  %v3060 = vld [vmem:[%s3 + $0x74] sm:$0xf]
  %v3061 = vld [vmem:[%s3 + $0x78] sm:$0xf]
  %v3062 = vld [vmem:[%s3 + $0x7c] sm:$0xf]
  %v3063 = vld [vmem:[%s3 + $0x80] sm:$0xf]
  %v3064 = vld [vmem:[%s3 + $0x84] sm:$0xf]
  %v3065 = vld [vmem:[%s3 + $0x88] sm:$0xf]
  %v3066 = vld [vmem:[%s3 + $0x8c] sm:$0xf]
  %v3067 = vld [vmem:[%s3 + $0x90] sm:$0xf]
  %v3068 = vld [vmem:[%s3 + $0x94] sm:$0xf]
  %v3069 = vld [vmem:[%s3 + $0x98] sm:$0xf]
  %v3070 = vld [vmem:[%s3 + $0x9c] sm:$0xf]
  %v3071 = vld [vmem:[%s3 + $0xa0] sm:$0xf]
  %v3072 = vld [vmem:[%s3 + $0xa4] sm:$0xf]
  %v3073 = vld [vmem:[%s3 + $0xa8] sm:$0xf]
  %v3074 = vld [vmem:[%s3 + $0xac] sm:$0xf]
  %v3075 = vld [vmem:[%s3 + $0xb0] sm:$0xf]
  %v3076 = vld [vmem:[%s3 + $0xb4] sm:$0xf]
  %v3077 = vld [vmem:[%s3 + $0xb8] sm:$0xf]
  %v3078 = vld [vmem:[%s3 + $0xbc] sm:$0xf]
  %v3079 = vld [vmem:[%s3 + $0xc0] sm:$0xf]
  %v3080 = vld [vmem:[%s3 + $0xc4] sm:$0xf]
  %v3081 = vld [vmem:[%s3 + $0xc8] sm:$0xf]
  %v3082 = vld [vmem:[%s3 + $0xcc] sm:$0xf]
  %v3083 = vld [vmem:[%s3 + $0xd0] sm:$0xf]
  %v3084 = vld [vmem:[%s3 + $0xd4] sm:$0xf]
  %v3085 = vld [vmem:[%s3 + $0xd8] sm:$0xf]
  %v3086 = vld [vmem:[%s3 + $0xdc] sm:$0xf]
  %v3087 = vld [vmem:[%s3 + $0xe0] sm:$0xf]
  %v3088 = vld [vmem:[%s3 + $0xe4] sm:$0xf]
  %v3089 = vld [vmem:[%s3 + $0xe8] sm:$0xf]
  %v3090 = vld [vmem:[%s3 + $0xec] sm:$0xf]
  %v3091 = vld [vmem:[%s3 + $0xf0] sm:$0xf]
  %v3092 = vld [vmem:[%s3 + $0xf4] sm:$0xf]
  %v3093 = vld [vmem:[%s3 + $0xf8] sm:$0xf]
  %v3094 = vld [vmem:[%s3 + $0xfc] sm:$0xf]
  %v3095 = vld [vmem:[%s3 + $0x100] sm:$0xf]
  %v3096 = vld [vmem:[%s3 + $0x104] sm:$0xf]
  %v3097 = vld [vmem:[%s3 + $0x108] sm:$0xf]
  %v3098 = vld [vmem:[%s3 + $0x10c] sm:$0xf]
  %v3099 = vld [vmem:[%s3 + $0x110] sm:$0xf]
  %v3100 = vld [vmem:[%s3 + $0x114] sm:$0xf]
  %v3101 = vld [vmem:[%s3 + $0x118] sm:$0xf]
  %v3102 = vld [vmem:[%s3 + $0x11c] sm:$0xf]
  %v3103 = vld [vmem:[%s3 + $0x120] sm:$0xf]
  %v3104 = vld [vmem:[%s3 + $0x124] sm:$0xf]
  %v3105 = vld [vmem:[%s3 + $0x128] sm:$0xf]
  %v3106 = vld [vmem:[%s3 + $0x12c] sm:$0xf]
  %v3107 = vld [vmem:[%s3 + $0x130] sm:$0xf]
  %v3108 = vld [vmem:[%s3 + $0x134] sm:$0xf]
  %v3109 = vld [vmem:[%s3 + $0x138] sm:$0xf]
  %v3110 = vld [vmem:[%s3 + $0x13c] sm:$0xf]
  %v3111 = vld [vmem:[%s3 + $0x140] sm:$0xf]
  %v3112 = vld [vmem:[%s3 + $0x144] sm:$0xf]
  %v3113 = vld [vmem:[%s3 + $0x148] sm:$0xf]
  %v3114 = vld [vmem:[%s3 + $0x14c] sm:$0xf]
  %v3115 = vld [vmem:[%s3 + $0x150] sm:$0xf]
  %v3116 = vld [vmem:[%s3 + $0x154] sm:$0xf]
  %v3117 = vld [vmem:[%s3 + $0x158] sm:$0xf]
  %v3118 = vld [vmem:[%s3 + $0x15c] sm:$0xf]
  %v3119 = vld [vmem:[%s3 + $0x160] sm:$0xf]
  %v3120 = vld [vmem:[%s3 + $0x164] sm:$0xf]
  %v3121 = vld [vmem:[%s3 + $0x168] sm:$0xf]
  %v3122 = vld [vmem:[%s3 + $0x16c] sm:$0xf]
  %v3123 = vld [vmem:[%s3 + $0x170] sm:$0xf]
  %v3124 = vld [vmem:[%s3 + $0x174] sm:$0xf]
  %v3125 = vld [vmem:[%s3 + $0x178] sm:$0xf]
  %v3126 = vld [vmem:[%s3 + $0x17c] sm:$0xf]
  %v3127 = vld [vmem:[%s3 + $0x180] sm:$0xf]
  %v3128 = vld [vmem:[%s3 + $0x184] sm:$0xf]
  %v3129 = vld [vmem:[%s3 + $0x188] sm:$0xf]
  %v3130 = vld [vmem:[%s3 + $0x18c] sm:$0xf]
  %v3131 = vld [vmem:[%s3 + $0x190] sm:$0xf]
  %v3132 = vld [vmem:[%s3 + $0x194] sm:$0xf]
  %v3133 = vld [vmem:[%s3 + $0x198] sm:$0xf]
  %v3134 = vld [vmem:[%s3 + $0x19c] sm:$0xf]
  %v3135 = vld [vmem:[%s3 + $0x1a0] sm:$0xf]
  %v3136 = vld [vmem:[%s3 + $0x1a4] sm:$0xf]
  %v3137 = vld [vmem:[%s3 + $0x1a8] sm:$0xf]
  %v3138 = vld [vmem:[%s3 + $0x1ac] sm:$0xf]
  %v3139 = vld [vmem:[%s3 + $0x1b0] sm:$0xf]
  %v3140 = vld [vmem:[%s3 + $0x1b4] sm:$0xf]
  %v3141 = vld [vmem:[%s3 + $0x1b8] sm:$0xf]
  %v3142 = vld [vmem:[%s3 + $0x1bc] sm:$0xf]
  %v3143 = vld [vmem:[%s3 + $0x1c0] sm:$0xf]
  %v3144 = vld [vmem:[%s3 + $0x1c4] sm:$0xf]
  %v3145 = vld [vmem:[%s3 + $0x1c8] sm:$0xf]
  %v3146 = vld [vmem:[%s3 + $0x1cc] sm:$0xf]
  %v3147 = vld [vmem:[%s3 + $0x1d0] sm:$0xf]
  %v3148 = vld [vmem:[%s3 + $0x1d4] sm:$0xf]
  %v3149 = vld [vmem:[%s3 + $0x1d8] sm:$0xf]
  %v3150 = vld [vmem:[%s3 + $0x1dc] sm:$0xf]
  %v3151 = vld [vmem:[%s3 + $0x1e0] sm:$0xf]
  %v3152 = vld [vmem:[%s3 + $0x1e4] sm:$0xf]
  %v3153 = vld [vmem:[%s3 + $0x1e8] sm:$0xf]
  %v3154 = vld [vmem:[%s3 + $0x1ec] sm:$0xf]
  %v3155 = vld [vmem:[%s3 + $0x1f0] sm:$0xf]
  %v3156 = vld [vmem:[%s3 + $0x1f4] sm:$0xf]
  %v3157 = vld [vmem:[%s3 + $0x1f8] sm:$0xf]
  %v3158 = vld [vmem:[%s3 + $0x1fc] sm:$0xf]
  %v3159 = vld [vmem:[%s3 + $0x200] sm:$0xf]
  %v3160 = vld [vmem:[%s3 + $0x204] sm:$0xf]
  %v3161 = vld [vmem:[%s3 + $0x208] sm:$0xf]
  %v3162 = vld [vmem:[%s3 + $0x20c] sm:$0xf]
  %v3163 = vld [vmem:[%s3 + $0x210] sm:$0xf]
  %v3164 = vld [vmem:[%s3 + $0x214] sm:$0xf]
  %v3165 = vld [vmem:[%s3 + $0x218] sm:$0xf]
  %v3166 = vld [vmem:[%s3 + $0x21c] sm:$0xf]
  %v3167 = vld [vmem:[%s3 + $0x220] sm:$0xf]
  %v3168 = vld [vmem:[%s3 + $0x224] sm:$0xf]
  %v3169 = vld [vmem:[%s3 + $0x228] sm:$0xf]
  %v3170 = vld [vmem:[%s3 + $0x22c] sm:$0xf]
  %v3171 = vld [vmem:[%s3 + $0x230] sm:$0xf]
  %v3172 = vld [vmem:[%s3 + $0x234] sm:$0xf]
  %v3173 = vld [vmem:[%s3 + $0x238] sm:$0xf]
  %v3174 = vld [vmem:[%s3 + $0x23c] sm:$0xf]
  %v3175 = vld [vmem:[%s3 + $0x240] sm:$0xf]
  %v3176 = vld [vmem:[%s3 + $0x244] sm:$0xf]
  %v3177 = vld [vmem:[%s3 + $0x248] sm:$0xf]
  %v3178 = vld [vmem:[%s3 + $0x24c] sm:$0xf]
  %v3179 = vld [vmem:[%s3 + $0x250] sm:$0xf]
  %v3180 = vld [vmem:[%s3 + $0x254] sm:$0xf]
  %v3181 = vld [vmem:[%s3 + $0x258] sm:$0xf]
  %v3182 = vld [vmem:[%s3 + $0x25c] sm:$0xf]
  %v3183 = vld [vmem:[%s3 + $0x260] sm:$0xf]
  %v3184 = vld [vmem:[%s3 + $0x264] sm:$0xf]
  %v3185 = vld [vmem:[%s3 + $0x268] sm:$0xf]
  %v3186 = vld [vmem:[%s3 + $0x26c] sm:$0xf]
  %v3187 = vld [vmem:[%s3 + $0x270] sm:$0xf]
  %v3188 = vld [vmem:[%s3 + $0x274] sm:$0xf]
  %v3189 = vld [vmem:[%s3 + $0x278] sm:$0xf]
  %v3190 = vld [vmem:[%s3 + $0x27c] sm:$0xf]
  %v3191 = vld [vmem:[%s3 + $0x280] sm:$0xf]
  %v3192 = vld [vmem:[%s3 + $0x284] sm:$0xf]
  %v3193 = vld [vmem:[%s3 + $0x288] sm:$0xf]
  %v3194 = vld [vmem:[%s3 + $0x28c] sm:$0xf]
  %v3195 = vld [vmem:[%s3 + $0x290] sm:$0xf]
  %v3196 = vld [vmem:[%s3 + $0x294] sm:$0xf]
  %v3197 = vld [vmem:[%s3 + $0x298] sm:$0xf]
  %v3198 = vld [vmem:[%s3 + $0x29c] sm:$0xf]
  %v3199 = vld [vmem:[%s3 + $0x2a0] sm:$0xf]
  %v3200 = vld [vmem:[%s3 + $0x2a4] sm:$0xf]
  %v3201 = vld [vmem:[%s3 + $0x2a8] sm:$0xf]
  %v3202 = vld [vmem:[%s3 + $0x2ac] sm:$0xf]
  %v3203 = vld [vmem:[%s3 + $0x2b0] sm:$0xf]
  %v3204 = vld [vmem:[%s3 + $0x2b4] sm:$0xf]
  %v3205 = vld [vmem:[%s3 + $0x2b8] sm:$0xf]
  %v3206 = vld [vmem:[%s3 + $0x2bc] sm:$0xf]
  %v3207 = vld [vmem:[%s3 + $0x2c0] sm:$0xf]
  %v3208 = vld [vmem:[%s3 + $0x2c4] sm:$0xf]
  %v3209 = vld [vmem:[%s3 + $0x2c8] sm:$0xf]
  %v3210 = vld [vmem:[%s3 + $0x2cc] sm:$0xf]
  %v3211 = vld [vmem:[%s3 + $0x2d0] sm:$0xf]
  %v3212 = vld [vmem:[%s3 + $0x2d4] sm:$0xf]
  %v3213 = vld [vmem:[%s3 + $0x2d8] sm:$0xf]
  %v3214 = vld [vmem:[%s3 + $0x2dc] sm:$0xf]
  %v3215 = vld [vmem:[%s3 + $0x2e0] sm:$0xf]
  %v3216 = vld [vmem:[%s3 + $0x2e4] sm:$0xf]
  %v3217 = vld [vmem:[%s3 + $0x2e8] sm:$0xf]
  %v3218 = vld [vmem:[%s3 + $0x2ec] sm:$0xf]
  %v3219 = vld [vmem:[%s3 + $0x2f0] sm:$0xf]
  %v3220 = vld [vmem:[%s3 + $0x2f4] sm:$0xf]
  %v3221 = vld [vmem:[%s3 + $0x2f8] sm:$0xf]
  %v3222 = vld [vmem:[%s3 + $0x2fc] sm:$0xf]
  %v3223 = vld [vmem:[%s3 + $0x300] sm:$0xf]
  %v3224 = vld [vmem:[%s3 + $0x304] sm:$0xf]
  %v3225 = vld [vmem:[%s3 + $0x308] sm:$0xf]
  %v3226 = vld [vmem:[%s3 + $0x30c] sm:$0xf]
  %v3227 = vld [vmem:[%s3 + $0x310] sm:$0xf]
  %v3228 = vld [vmem:[%s3 + $0x314] sm:$0xf]
  %v3229 = vld [vmem:[%s3 + $0x318] sm:$0xf]
  %v3230 = vld [vmem:[%s3 + $0x31c] sm:$0xf]
  %v3231 = vld [vmem:[%s3 + $0x320] sm:$0xf]
  %v3232 = vld [vmem:[%s3 + $0x324] sm:$0xf]
  %v3233 = vld [vmem:[%s3 + $0x328] sm:$0xf]
  %v3234 = vld [vmem:[%s3 + $0x32c] sm:$0xf]
  %v3235 = vld [vmem:[%s3 + $0x330] sm:$0xf]
  %v3236 = vld [vmem:[%s3 + $0x334] sm:$0xf]
  %v3237 = vld [vmem:[%s3 + $0x338] sm:$0xf]
  %v3238 = vld [vmem:[%s3 + $0x33c] sm:$0xf]
  %v3239 = vld [vmem:[%s3 + $0x340] sm:$0xf]
  %v3240 = vld [vmem:[%s3 + $0x344] sm:$0xf]
  %v3241 = vld [vmem:[%s3 + $0x348] sm:$0xf]
  %v3242 = vld [vmem:[%s3 + $0x34c] sm:$0xf]
  %v3243 = vld [vmem:[%s3 + $0x350] sm:$0xf]
  %v3244 = vld [vmem:[%s3 + $0x354] sm:$0xf]
  %v3245 = vld [vmem:[%s3 + $0x358] sm:$0xf]
  %v3246 = vld [vmem:[%s3 + $0x35c] sm:$0xf]
  %v3247 = vld [vmem:[%s3 + $0x360] sm:$0xf]
  %v3248 = vld [vmem:[%s3 + $0x364] sm:$0xf]
  %v3249 = vld [vmem:[%s3 + $0x368] sm:$0xf]
  %v3250 = vld [vmem:[%s3 + $0x36c] sm:$0xf]
  %v3251 = vld [vmem:[%s3 + $0x370] sm:$0xf]
  %v3252 = vld [vmem:[%s3 + $0x374] sm:$0xf]
  %v3253 = vld [vmem:[%s3 + $0x378] sm:$0xf]
  %v3254 = vld [vmem:[%s3 + $0x37c] sm:$0xf]
  %v3255 = vld [vmem:[%s3 + $0x380] sm:$0xf]
  %v3256 = vld [vmem:[%s3 + $0x384] sm:$0xf]
  %v3257 = vld [vmem:[%s3 + $0x388] sm:$0xf]
  %v3258 = vld [vmem:[%s3 + $0x38c] sm:$0xf]
  %v3259 = vld [vmem:[%s3 + $0x390] sm:$0xf]
  %v3260 = vld [vmem:[%s3 + $0x394] sm:$0xf]
  %v3261 = vld [vmem:[%s3 + $0x398] sm:$0xf]
  %v3262 = vld [vmem:[%s3 + $0x39c] sm:$0xf]
  %v3263 = vld [vmem:[%s3 + $0x3a0] sm:$0xf]
  %v3264 = vld [vmem:[%s3 + $0x3a4] sm:$0xf]
  %v3265 = vld [vmem:[%s3 + $0x3a8] sm:$0xf]
  %v3266 = vld [vmem:[%s3 + $0x3ac] sm:$0xf]
  %v3267 = vld [vmem:[%s3 + $0x3b0] sm:$0xf]
  %v3268 = vld [vmem:[%s3 + $0x3b4] sm:$0xf]
  %v3269 = vld [vmem:[%s3 + $0x3b8] sm:$0xf]
  %v3270 = vld [vmem:[%s3 + $0x3bc] sm:$0xf]
  %v3271 = vld [vmem:[%s3 + $0x3c0] sm:$0xf]
  %v3272 = vld [vmem:[%s3 + $0x3c4] sm:$0xf]
  %v3273 = vld [vmem:[%s3 + $0x3c8] sm:$0xf]
  %v3274 = vld [vmem:[%s3 + $0x3cc] sm:$0xf]
  %v3275 = vld [vmem:[%s3 + $0x3d0] sm:$0xf]
  %v3276 = vld [vmem:[%s3 + $0x3d4] sm:$0xf]
  %v3277 = vld [vmem:[%s3 + $0x3d8] sm:$0xf]
  %v3278 = vld [vmem:[%s3 + $0x3dc] sm:$0xf]
  %v3279 = vld [vmem:[%s3 + $0x3e0] sm:$0xf]
  %v3280 = vld [vmem:[%s3 + $0x3e4] sm:$0xf]
  %v3281 = vld [vmem:[%s3 + $0x3e8] sm:$0xf]
  %v3282 = vld [vmem:[%s3 + $0x3ec] sm:$0xf]
  %v3283 = vld [vmem:[%s3 + $0x3f0] sm:$0xf]
  %v3284 = vld [vmem:[%s3 + $0x3f4] sm:$0xf]
  %v3285 = vld [vmem:[%s3 + $0x3f8] sm:$0xf]
  %v3286 = vld [vmem:[%s3 + $0x3fc] sm:$0xf]
  %v3287 = vld [vmem:[%s3 + $0x400] sm:$0xf]
  %v3288 = vld [vmem:[%s3 + $0x404] sm:$0xf]
  %v3289 = vld [vmem:[%s3 + $0x408] sm:$0xf]
  %v3290 = vld [vmem:[%s3 + $0x40c] sm:$0xf]
  %v3291 = vld [vmem:[%s3 + $0x410] sm:$0xf]
  %v3292 = vld [vmem:[%s3 + $0x414] sm:$0xf]
  %v3293 = vld [vmem:[%s3 + $0x418] sm:$0xf]
  %v3294 = vld [vmem:[%s3 + $0x41c] sm:$0xf]
  %v3295 = vld [vmem:[%s3 + $0x420] sm:$0xf]
  %v3296 = vld [vmem:[%s3 + $0x424] sm:$0xf]
  %v3297 = vld [vmem:[%s3 + $0x428] sm:$0xf]
  %v3298 = vld [vmem:[%s3 + $0x42c] sm:$0xf]
  %v3299 = vld [vmem:[%s3 + $0x430] sm:$0xf]
  %v3300 = vld [vmem:[%s3 + $0x434] sm:$0xf]
  %v3301 = vld [vmem:[%s3 + $0x438] sm:$0xf]
  %v3302 = vld [vmem:[%s3 + $0x43c] sm:$0xf]
  %v3303 = vld [vmem:[%s3 + $0x440] sm:$0xf]
  %v3304 = vld [vmem:[%s3 + $0x444] sm:$0xf]
  %v3305 = vld [vmem:[%s3 + $0x448] sm:$0xf]
  %v3306 = vld [vmem:[%s3 + $0x44c] sm:$0xf]
  %v3307 = vld [vmem:[%s3 + $0x450] sm:$0xf]
  %v3308 = vld [vmem:[%s3 + $0x454] sm:$0xf]
  %v3309 = vld [vmem:[%s3 + $0x458] sm:$0xf]
  %v3310 = vld [vmem:[%s3 + $0x45c] sm:$0xf]
  %v3311 = vld [vmem:[%s3 + $0x460] sm:$0xf]
  %v3312 = vld [vmem:[%s3 + $0x464] sm:$0xf]
  %v3313 = vld [vmem:[%s3 + $0x468] sm:$0xf]
  %v3314 = vld [vmem:[%s3 + $0x46c] sm:$0xf]
  %v3315 = vld [vmem:[%s3 + $0x470] sm:$0xf]
  %v3316 = vld [vmem:[%s3 + $0x474] sm:$0xf]
  %v3317 = vld [vmem:[%s3 + $0x478] sm:$0xf]
  %v3318 = vld [vmem:[%s3 + $0x47c] sm:$0xf]
  %v3319 = vld [vmem:[%s3 + $0x480] sm:$0xf]
  %v3320 = vld [vmem:[%s3 + $0x484] sm:$0xf]
  %v3321 = vld [vmem:[%s3 + $0x488] sm:$0xf]
  %v3322 = vld [vmem:[%s3 + $0x48c] sm:$0xf]
  %v3323 = vld [vmem:[%s3 + $0x490] sm:$0xf]
  %v3324 = vld [vmem:[%s3 + $0x494] sm:$0xf]
  %v3325 = vld [vmem:[%s3 + $0x498] sm:$0xf]
  %v3326 = vld [vmem:[%s3 + $0x49c] sm:$0xf]
  %v3327 = vld [vmem:[%s3 + $0x4a0] sm:$0xf]
  %v3328 = vld [vmem:[%s3 + $0x4a4] sm:$0xf]
  %v3329 = vld [vmem:[%s3 + $0x4a8] sm:$0xf]
  %v3330 = vld [vmem:[%s3 + $0x4ac] sm:$0xf]
  %v3331 = vld [vmem:[%s3 + $0x4b0] sm:$0xf]
  %v3332 = vld [vmem:[%s3 + $0x4b4] sm:$0xf]
  %v3333 = vld [vmem:[%s3 + $0x4b8] sm:$0xf]
  %v3334 = vld [vmem:[%s3 + $0x4bc] sm:$0xf]
  %v3335 = vld [vmem:[%s3 + $0x4c0] sm:$0xf]
  %v3336 = vld [vmem:[%s3 + $0x4c4] sm:$0xf]
  %v3337 = vld [vmem:[%s3 + $0x4c8] sm:$0xf]
  %v3338 = vld [vmem:[%s3 + $0x4cc] sm:$0xf]
  %v3339 = vld [vmem:[%s3 + $0x4d0] sm:$0xf]
  %v3340 = vld [vmem:[%s3 + $0x4d4] sm:$0xf]
  %v3341 = vld [vmem:[%s3 + $0x4d8] sm:$0xf]
  %v3342 = vld [vmem:[%s3 + $0x4dc] sm:$0xf]
  %v3343 = vld [vmem:[%s3 + $0x4e0] sm:$0xf]
  %v3344 = vld [vmem:[%s3 + $0x4e4] sm:$0xf]
  %v3345 = vld [vmem:[%s3 + $0x4e8] sm:$0xf]
  %v3346 = vld [vmem:[%s3 + $0x4ec] sm:$0xf]
  %v3347 = vld [vmem:[%s3 + $0x4f0] sm:$0xf]
  %v3348 = vld [vmem:[%s3 + $0x4f4] sm:$0xf]
  %v3349 = vld [vmem:[%s3 + $0x4f8] sm:$0xf]
  %v3350 = vld [vmem:[%s3 + $0x4fc] sm:$0xf]
  %v3351 = vld [vmem:[%s3 + $0x500] sm:$0xf]
  %v3352 = vld [vmem:[%s3 + $0x504] sm:$0xf]
  %v3353 = vld [vmem:[%s3 + $0x508] sm:$0xf]
  %v3354 = vld [vmem:[%s3 + $0x50c] sm:$0xf]
  %v3355 = vld [vmem:[%s3 + $0x510] sm:$0xf]
  %v3356 = vld [vmem:[%s3 + $0x514] sm:$0xf]
  %v3357 = vld [vmem:[%s3 + $0x518] sm:$0xf]
  %v3358 = vld [vmem:[%s3 + $0x51c] sm:$0xf]
  %v3359 = vld [vmem:[%s3 + $0x520] sm:$0xf]
  %v3360 = vld [vmem:[%s3 + $0x524] sm:$0xf]
  %v3361 = vld [vmem:[%s3 + $0x528] sm:$0xf]
  %v3362 = vld [vmem:[%s3 + $0x52c] sm:$0xf]
  %v3363 = vld [vmem:[%s3 + $0x530] sm:$0xf]
  %v3364 = vld [vmem:[%s3 + $0x534] sm:$0xf]
  %v3365 = vld [vmem:[%s3 + $0x538] sm:$0xf]
  %v3366 = vld [vmem:[%s3 + $0x53c] sm:$0xf]
  %v3367 = vld [vmem:[%s3 + $0x540] sm:$0xf]
  %v3368 = vld [vmem:[%s3 + $0x544] sm:$0xf]
  %v3369 = vld [vmem:[%s3 + $0x548] sm:$0xf]
  %v3370 = vld [vmem:[%s3 + $0x54c] sm:$0xf]
  %v3371 = vld [vmem:[%s3 + $0x550] sm:$0xf]
  %v3372 = vld [vmem:[%s3 + $0x554] sm:$0xf]
  %v3373 = vld [vmem:[%s3 + $0x558] sm:$0xf]
  %v3374 = vld [vmem:[%s3 + $0x55c] sm:$0xf]
  %v3375 = vld [vmem:[%s3 + $0x560] sm:$0xf]
  %v3376 = vld [vmem:[%s3 + $0x564] sm:$0xf]
  %v3377 = vld [vmem:[%s3 + $0x568] sm:$0xf]
  %v3378 = vld [vmem:[%s3 + $0x56c] sm:$0xf]
  %v3379 = vld [vmem:[%s3 + $0x570] sm:$0xf]
  %v3380 = vld [vmem:[%s3 + $0x574] sm:$0xf]
  %v3381 = vld [vmem:[%s3 + $0x578] sm:$0xf]
  %v3382 = vld [vmem:[%s3 + $0x57c] sm:$0xf]
  %v3383 = vld [vmem:[%s3 + $0x580] sm:$0xf]
  %v3384 = vld [vmem:[%s3 + $0x584] sm:$0xf]
  %v3385 = vld [vmem:[%s3 + $0x588] sm:$0xf]
  %v3386 = vld [vmem:[%s3 + $0x58c] sm:$0xf]
  %v3387 = vld [vmem:[%s3 + $0x590] sm:$0xf]
  %v3388 = vld [vmem:[%s3 + $0x594] sm:$0xf]
  %v3389 = vld [vmem:[%s3 + $0x598] sm:$0xf]
  %v3390 = vld [vmem:[%s3 + $0x59c] sm:$0xf]
  %v3391 = vld [vmem:[%s3 + $0x5a0] sm:$0xf]
  %v3392 = vld [vmem:[%s3 + $0x5a4] sm:$0xf]
  %v3393 = vld [vmem:[%s3 + $0x5a8] sm:$0xf]
  %v3394 = vld [vmem:[%s3 + $0x5ac] sm:$0xf]
  %v3395 = vld [vmem:[%s3 + $0x5b0] sm:$0xf]
  %v3396 = vld [vmem:[%s3 + $0x5b4] sm:$0xf]
  %v3397 = vld [vmem:[%s3 + $0x5b8] sm:$0xf]
  %v3398 = vld [vmem:[%s3 + $0x5bc] sm:$0xf]
  %v3399 = vld [vmem:[%s3 + $0x5c0] sm:$0xf]
  %v3400 = vld [vmem:[%s3 + $0x5c4] sm:$0xf]
  %v3401 = vld [vmem:[%s3 + $0x5c8] sm:$0xf]
  %v3402 = vld [vmem:[%s3 + $0x5cc] sm:$0xf]
  %v3403 = vld [vmem:[%s3 + $0x5d0] sm:$0xf]
  %v3404 = vld [vmem:[%s3 + $0x5d4] sm:$0xf]
  %v3405 = vld [vmem:[%s3 + $0x5d8] sm:$0xf]
  %v3406 = vld [vmem:[%s3 + $0x5dc] sm:$0xf]
  %v3407 = vld [vmem:[%s3 + $0x5e0] sm:$0xf]
  %v3408 = vld [vmem:[%s3 + $0x5e4] sm:$0xf]
  %v3409 = vld [vmem:[%s3 + $0x5e8] sm:$0xf]
  %v3410 = vld [vmem:[%s3 + $0x5ec] sm:$0xf]
  %v3411 = vld [vmem:[%s3 + $0x5f0] sm:$0xf]
  %v3412 = vld [vmem:[%s3 + $0x5f4] sm:$0xf]
  %v3413 = vld [vmem:[%s3 + $0x5f8] sm:$0xf]
  %v3414 = vld [vmem:[%s3 + $0x5fc] sm:$0xf]
  %v3415 = vld [vmem:[%s3 + $0x600] sm:$0xf]
  %v3416 = vld [vmem:[%s3 + $0x604] sm:$0xf]
  %v3417 = vld [vmem:[%s3 + $0x608] sm:$0xf]
  %v3418 = vld [vmem:[%s3 + $0x60c] sm:$0xf]
  %v3419 = vld [vmem:[%s3 + $0x610] sm:$0xf]
  %v3420 = vld [vmem:[%s3 + $0x614] sm:$0xf]
  %v3421 = vld [vmem:[%s3 + $0x618] sm:$0xf]
  %v3422 = vld [vmem:[%s3 + $0x61c] sm:$0xf]
  %v3423 = vld [vmem:[%s3 + $0x620] sm:$0xf]
  %v3424 = vld [vmem:[%s3 + $0x624] sm:$0xf]
  %v3425 = vld [vmem:[%s3 + $0x628] sm:$0xf]
  %v3426 = vld [vmem:[%s3 + $0x62c] sm:$0xf]
  %v3427 = vld [vmem:[%s3 + $0x630] sm:$0xf]
  %v3428 = vld [vmem:[%s3 + $0x634] sm:$0xf]
  %v3429 = vld [vmem:[%s3 + $0x638] sm:$0xf]
  %v3430 = vld [vmem:[%s3 + $0x63c] sm:$0xf]
  %v3431 = vld [vmem:[%s3 + $0x640] sm:$0xf]
  %v3432 = vld [vmem:[%s3 + $0x644] sm:$0xf]
  %v3433 = vld [vmem:[%s3 + $0x648] sm:$0xf]
  %v3434 = vld [vmem:[%s3 + $0x64c] sm:$0xf]
  %v3435 = vld [vmem:[%s3 + $0x650] sm:$0xf]
  %v3436 = vld [vmem:[%s3 + $0x654] sm:$0xf]
  %v3437 = vld [vmem:[%s3 + $0x658] sm:$0xf]
  %v3438 = vld [vmem:[%s3 + $0x65c] sm:$0xf]
  %v3439 = vld [vmem:[%s3 + $0x660] sm:$0xf]
  %v3440 = vld [vmem:[%s3 + $0x664] sm:$0xf]
  %v3441 = vld [vmem:[%s3 + $0x668] sm:$0xf]
  %v3442 = vld [vmem:[%s3 + $0x66c] sm:$0xf]
  %v3443 = vld [vmem:[%s3 + $0x670] sm:$0xf]
  %v3444 = vld [vmem:[%s3 + $0x674] sm:$0xf]
  %v3445 = vld [vmem:[%s3 + $0x678] sm:$0xf]
  %v3446 = vld [vmem:[%s3 + $0x67c] sm:$0xf]
  %v3447 = vld [vmem:[%s3 + $0x680] sm:$0xf]
  %v3448 = vld [vmem:[%s3 + $0x684] sm:$0xf]
  %v3449 = vld [vmem:[%s3 + $0x688] sm:$0xf]
  %v3450 = vld [vmem:[%s3 + $0x68c] sm:$0xf]
  %v3451 = vld [vmem:[%s3 + $0x690] sm:$0xf]
  %v3452 = vld [vmem:[%s3 + $0x694] sm:$0xf]
  %v3453 = vld [vmem:[%s3 + $0x698] sm:$0xf]
  %v3454 = vld [vmem:[%s3 + $0x69c] sm:$0xf]
  %v3455 = vld [vmem:[%s3 + $0x6a0] sm:$0xf]
  %v3456 = vld [vmem:[%s3 + $0x6a4] sm:$0xf]
  %v3457 = vld [vmem:[%s3 + $0x6a8] sm:$0xf]
  %v3458 = vld [vmem:[%s3 + $0x6ac] sm:$0xf]
  %v3459 = vld [vmem:[%s3 + $0x6b0] sm:$0xf]
  %v3460 = vld [vmem:[%s3 + $0x6b4] sm:$0xf]
  %v3461 = vld [vmem:[%s3 + $0x6b8] sm:$0xf]
  %v3462 = vld [vmem:[%s3 + $0x6bc] sm:$0xf]
  %v3463 = vld [vmem:[%s3 + $0x6c0] sm:$0xf]
  %v3464 = vld [vmem:[%s3 + $0x6c4] sm:$0xf]
  %v3465 = vld [vmem:[%s3 + $0x6c8] sm:$0xf]
  %v3466 = vld [vmem:[%s3 + $0x6cc] sm:$0xf]
  %v3467 = vld [vmem:[%s3 + $0x6d0] sm:$0xf]
  %v3468 = vld [vmem:[%s3 + $0x6d4] sm:$0xf]
  %v3469 = vld [vmem:[%s3 + $0x6d8] sm:$0xf]
  %v3470 = vld [vmem:[%s3 + $0x6dc] sm:$0xf]
  %v3471 = vld [vmem:[%s3 + $0x6e0] sm:$0xf]
  %v3472 = vld [vmem:[%s3 + $0x6e4] sm:$0xf]
  %v3473 = vld [vmem:[%s3 + $0x6e8] sm:$0xf]
  %v3474 = vld [vmem:[%s3 + $0x6ec] sm:$0xf]
  %v3475 = vld [vmem:[%s3 + $0x6f0] sm:$0xf]
  %v3476 = vld [vmem:[%s3 + $0x6f4] sm:$0xf]
  %v3477 = vld [vmem:[%s3 + $0x6f8] sm:$0xf]
  %v3478 = vld [vmem:[%s3 + $0x6fc] sm:$0xf]
  %v3479 = vld [vmem:[%s3 + $0x700] sm:$0xf]
  %v3480 = vld [vmem:[%s3 + $0x704] sm:$0xf]
  %v3481 = vld [vmem:[%s3 + $0x708] sm:$0xf]
  %v3482 = vld [vmem:[%s3 + $0x70c] sm:$0xf]
  %v3483 = vld [vmem:[%s3 + $0x710] sm:$0xf]
  %v3484 = vld [vmem:[%s3 + $0x714] sm:$0xf]
  %v3485 = vld [vmem:[%s3 + $0x718] sm:$0xf]
  %v3486 = vld [vmem:[%s3 + $0x71c] sm:$0xf]
  %v3487 = vld [vmem:[%s3 + $0x720] sm:$0xf]
  %v3488 = vld [vmem:[%s3 + $0x724] sm:$0xf]
  %v3489 = vld [vmem:[%s3 + $0x728] sm:$0xf]
  %v3490 = vld [vmem:[%s3 + $0x72c] sm:$0xf]
  %v3491 = vld [vmem:[%s3 + $0x730] sm:$0xf]
  %v3492 = vld [vmem:[%s3 + $0x734] sm:$0xf]
  %v3493 = vld [vmem:[%s3 + $0x738] sm:$0xf]
  %v3494 = vld [vmem:[%s3 + $0x73c] sm:$0xf]
  %v3495 = vld [vmem:[%s3 + $0x740] sm:$0xf]
  %v3496 = vld [vmem:[%s3 + $0x744] sm:$0xf]
  %v3497 = vld [vmem:[%s3 + $0x748] sm:$0xf]
  %v3498 = vld [vmem:[%s3 + $0x74c] sm:$0xf]
  %v3499 = vld [vmem:[%s3 + $0x750] sm:$0xf]
  %v3500 = vld [vmem:[%s3 + $0x754] sm:$0xf]
  %v3501 = vld [vmem:[%s3 + $0x758] sm:$0xf]
  %v3502 = vld [vmem:[%s3 + $0x75c] sm:$0xf]
  %v3503 = vld [vmem:[%s3 + $0x760] sm:$0xf]
  %v3504 = vld [vmem:[%s3 + $0x764] sm:$0xf]
  %v3505 = vld [vmem:[%s3 + $0x768] sm:$0xf]
  %v3506 = vld [vmem:[%s3 + $0x76c] sm:$0xf]
  %v3507 = vld [vmem:[%s3 + $0x770] sm:$0xf]
  %v3508 = vld [vmem:[%s3 + $0x774] sm:$0xf]
  %v3509 = vld [vmem:[%s3 + $0x778] sm:$0xf]
  %v3510 = vld [vmem:[%s3 + $0x77c] sm:$0xf]
  %v3511 = vld [vmem:[%s3 + $0x780] sm:$0xf]
  %v3512 = vld [vmem:[%s3 + $0x784] sm:$0xf]
  %v3513 = vld [vmem:[%s3 + $0x788] sm:$0xf]
  %v3514 = vld [vmem:[%s3 + $0x78c] sm:$0xf]
  %v3515 = vld [vmem:[%s3 + $0x790] sm:$0xf]
  %v3516 = vld [vmem:[%s3 + $0x794] sm:$0xf]
  %v3517 = vld [vmem:[%s3 + $0x798] sm:$0xf]
  %v3518 = vld [vmem:[%s3 + $0x79c] sm:$0xf]
  %v3519 = vld [vmem:[%s3 + $0x7a0] sm:$0xf]
  %v3520 = vld [vmem:[%s3 + $0x7a4] sm:$0xf]
  %v3521 = vld [vmem:[%s3 + $0x7a8] sm:$0xf]
  %v3522 = vld [vmem:[%s3 + $0x7ac] sm:$0xf]
  %v3523 = vld [vmem:[%s3 + $0x7b0] sm:$0xf]
  %v3524 = vld [vmem:[%s3 + $0x7b4] sm:$0xf]
  %v3525 = vld [vmem:[%s3 + $0x7b8] sm:$0xf]
  %v3526 = vld [vmem:[%s3 + $0x7bc] sm:$0xf]
  %v3527 = vld [vmem:[%s3 + $0x7c0] sm:$0xf]
  %v3528 = vld [vmem:[%s3 + $0x7c4] sm:$0xf]
  %v3529 = vld [vmem:[%s3 + $0x7c8] sm:$0xf]
  %v3530 = vld [vmem:[%s3 + $0x7cc] sm:$0xf]
  %v3531 = vld [vmem:[%s3 + $0x7d0] sm:$0xf]
  %v3532 = vld [vmem:[%s3 + $0x7d4] sm:$0xf]
  %v3533 = vld [vmem:[%s3 + $0x7d8] sm:$0xf]
  %v3534 = vld [vmem:[%s3 + $0x7dc] sm:$0xf]
  %v3535 = vld [vmem:[%s3 + $0x7e0] sm:$0xf]
  %v3536 = vld [vmem:[%s3 + $0x7e4] sm:$0xf]
  %v3537 = vld [vmem:[%s3 + $0x7e8] sm:$0xf]
  %v3538 = vld [vmem:[%s3 + $0x7ec] sm:$0xf]
  %v3539 = vld [vmem:[%s3 + $0x7f0] sm:$0xf]
  %v3540 = vld [vmem:[%s3 + $0x7f4] sm:$0xf]
  %v3541 = vld [vmem:[%s3 + $0x7f8] sm:$0xf]
  %v3542 = vld [vmem:[%s3 + $0x7fc] sm:$0xf]
  %v3543 = vld [vmem:[%s4] sm:$0x1]
  %v3545 = vperm.slane %v3543, 0
  %v4059 = vunpack.c.l.b16 %v3031
  %v4060 = vunpack.c.l.b16 %v3032
  %v4061 = vunpack.c.l.b16 %v3033
  %v4062 = vunpack.c.l.b16 %v3034
  %v4063 = vunpack.c.l.b16 %v3035
  %v4064 = vunpack.c.l.b16 %v3036
  %v4065 = vunpack.c.l.b16 %v3037
  %v4066 = vunpack.c.l.b16 %v3038
  %v4067 = vunpack.c.l.b16 %v3039
  %v4068 = vunpack.c.l.b16 %v3040
  %v4069 = vunpack.c.l.b16 %v3041
  %v4070 = vunpack.c.l.b16 %v3042
  %v4071 = vunpack.c.l.b16 %v3043
  %v4072 = vunpack.c.l.b16 %v3044
  %v4073 = vunpack.c.l.b16 %v3045
  %v4074 = vunpack.c.l.b16 %v3046
  %v4075 = vunpack.c.l.b16 %v3047
  %v4076 = vunpack.c.l.b16 %v3048
  %v4077 = vunpack.c.l.b16 %v3049
  %v4078 = vunpack.c.l.b16 %v3050
  %v4079 = vunpack.c.l.b16 %v3051
  %v4080 = vunpack.c.l.b16 %v3052
  %v4081 = vunpack.c.l.b16 %v3053
  %v4082 = vunpack.c.l.b16 %v3054
  %v4083 = vunpack.c.l.b16 %v3055
  %v4084 = vunpack.c.l.b16 %v3056
  %v4085 = vunpack.c.l.b16 %v3057
  %v4086 = vunpack.c.l.b16 %v3058
  %v4087 = vunpack.c.l.b16 %v3059
  %v4088 = vunpack.c.l.b16 %v3060
  %v4089 = vunpack.c.l.b16 %v3061
  %v4090 = vunpack.c.l.b16 %v3062
  %v4091 = vunpack.c.l.b16 %v3063
  %v4092 = vunpack.c.l.b16 %v3064
  %v4093 = vunpack.c.l.b16 %v3065
  %v4094 = vunpack.c.l.b16 %v3066
  %v4095 = vunpack.c.l.b16 %v3067
  %v4096 = vunpack.c.l.b16 %v3068
  %v4097 = vunpack.c.l.b16 %v3069
  %v4098 = vunpack.c.l.b16 %v3070
  %v4099 = vunpack.c.l.b16 %v3071
  %v4100 = vunpack.c.l.b16 %v3072
  %v4101 = vunpack.c.l.b16 %v3073
  %v4102 = vunpack.c.l.b16 %v3074
  %v4103 = vunpack.c.l.b16 %v3075
  %v4104 = vunpack.c.l.b16 %v3076
  %v4105 = vunpack.c.l.b16 %v3077
  %v4106 = vunpack.c.l.b16 %v3078
  %v4107 = vunpack.c.l.b16 %v3079
  %v4108 = vunpack.c.l.b16 %v3080
  %v4109 = vunpack.c.l.b16 %v3081
  %v4110 = vunpack.c.l.b16 %v3082
  %v4111 = vunpack.c.l.b16 %v3083
  %v4112 = vunpack.c.l.b16 %v3084
  %v4113 = vunpack.c.l.b16 %v3085
  %v4114 = vunpack.c.l.b16 %v3086
  %v4115 = vunpack.c.l.b16 %v3087
  %v4116 = vunpack.c.l.b16 %v3088
  %v4117 = vunpack.c.l.b16 %v3089
  %v4118 = vunpack.c.l.b16 %v3090
  %v4119 = vunpack.c.l.b16 %v3091
  %v4120 = vunpack.c.l.b16 %v3092
  %v4121 = vunpack.c.l.b16 %v3093
  %v4122 = vunpack.c.l.b16 %v3094
  %v4123 = vunpack.c.l.b16 %v3095
  %v4124 = vunpack.c.l.b16 %v3096
  %v4125 = vunpack.c.l.b16 %v3097
  %v4126 = vunpack.c.l.b16 %v3098
  %v4127 = vunpack.c.l.b16 %v3099
  %v4128 = vunpack.c.l.b16 %v3100
  %v4129 = vunpack.c.l.b16 %v3101
  %v4130 = vunpack.c.l.b16 %v3102
  %v4131 = vunpack.c.l.b16 %v3103
  %v4132 = vunpack.c.l.b16 %v3104
  %v4133 = vunpack.c.l.b16 %v3105
  %v4134 = vunpack.c.l.b16 %v3106
  %v4135 = vunpack.c.l.b16 %v3107
  %v4136 = vunpack.c.l.b16 %v3108
  %v4137 = vunpack.c.l.b16 %v3109
  %v4138 = vunpack.c.l.b16 %v3110
  %v4139 = vunpack.c.l.b16 %v3111
  %v4140 = vunpack.c.l.b16 %v3112
  %v4141 = vunpack.c.l.b16 %v3113
  %v4142 = vunpack.c.l.b16 %v3114
  %v4143 = vunpack.c.l.b16 %v3115
  %v4144 = vunpack.c.l.b16 %v3116
  %v4145 = vunpack.c.l.b16 %v3117
  %v4146 = vunpack.c.l.b16 %v3118
  %v4147 = vunpack.c.l.b16 %v3119
  %v4148 = vunpack.c.l.b16 %v3120
  %v4149 = vunpack.c.l.b16 %v3121
  %v4150 = vunpack.c.l.b16 %v3122
  %v4151 = vunpack.c.l.b16 %v3123
  %v4152 = vunpack.c.l.b16 %v3124
  %v4153 = vunpack.c.l.b16 %v3125
  %v4154 = vunpack.c.l.b16 %v3126
  %v4155 = vunpack.c.l.b16 %v3127
  %v4156 = vunpack.c.l.b16 %v3128
  %v4157 = vunpack.c.l.b16 %v3129
  %v4158 = vunpack.c.l.b16 %v3130
  %v4159 = vunpack.c.l.b16 %v3131
  %v4160 = vunpack.c.l.b16 %v3132
  %v4161 = vunpack.c.l.b16 %v3133
  %v4162 = vunpack.c.l.b16 %v3134
  %v4163 = vunpack.c.l.b16 %v3135
  %v4164 = vunpack.c.l.b16 %v3136
  %v4165 = vunpack.c.l.b16 %v3137
  %v4166 = vunpack.c.l.b16 %v3138
  %v4167 = vunpack.c.l.b16 %v3139
  %v4168 = vunpack.c.l.b16 %v3140
  %v4169 = vunpack.c.l.b16 %v3141
  %v4170 = vunpack.c.l.b16 %v3142
  %v4171 = vunpack.c.l.b16 %v3143
  %v4172 = vunpack.c.l.b16 %v3144
  %v4173 = vunpack.c.l.b16 %v3145
  %v4174 = vunpack.c.l.b16 %v3146
  %v4175 = vunpack.c.l.b16 %v3147
  %v4176 = vunpack.c.l.b16 %v3148
  %v4177 = vunpack.c.l.b16 %v3149
  %v4178 = vunpack.c.l.b16 %v3150
  %v4179 = vunpack.c.l.b16 %v3151
  %v4180 = vunpack.c.l.b16 %v3152
  %v4181 = vunpack.c.l.b16 %v3153
  %v4182 = vunpack.c.l.b16 %v3154
  %v4183 = vunpack.c.l.b16 %v3155
  %v4184 = vunpack.c.l.b16 %v3156
  %v4185 = vunpack.c.l.b16 %v3157
  %v4186 = vunpack.c.l.b16 %v3158
  %v4187 = vunpack.c.l.b16 %v3159
  %v4188 = vunpack.c.l.b16 %v3160
  %v4189 = vunpack.c.l.b16 %v3161
  %v4190 = vunpack.c.l.b16 %v3162
  %v4191 = vunpack.c.l.b16 %v3163
  %v4192 = vunpack.c.l.b16 %v3164
  %v4193 = vunpack.c.l.b16 %v3165
  %v4194 = vunpack.c.l.b16 %v3166
  %v4195 = vunpack.c.l.b16 %v3167
  %v4196 = vunpack.c.l.b16 %v3168
  %v4197 = vunpack.c.l.b16 %v3169
  %v4198 = vunpack.c.l.b16 %v3170
  %v4199 = vunpack.c.l.b16 %v3171
  %v4200 = vunpack.c.l.b16 %v3172
  %v4201 = vunpack.c.l.b16 %v3173
  %v4202 = vunpack.c.l.b16 %v3174
  %v4203 = vunpack.c.l.b16 %v3175
  %v4204 = vunpack.c.l.b16 %v3176
  %v4205 = vunpack.c.l.b16 %v3177
  %v4206 = vunpack.c.l.b16 %v3178
  %v4207 = vunpack.c.l.b16 %v3179
  %v4208 = vunpack.c.l.b16 %v3180
  %v4209 = vunpack.c.l.b16 %v3181
  %v4210 = vunpack.c.l.b16 %v3182
  %v4211 = vunpack.c.l.b16 %v3183
  %v4212 = vunpack.c.l.b16 %v3184
  %v4213 = vunpack.c.l.b16 %v3185
  %v4214 = vunpack.c.l.b16 %v3186
  %v4215 = vunpack.c.l.b16 %v3187
  %v4216 = vunpack.c.l.b16 %v3188
  %v4217 = vunpack.c.l.b16 %v3189
  %v4218 = vunpack.c.l.b16 %v3190
  %v4219 = vunpack.c.l.b16 %v3191
  %v4220 = vunpack.c.l.b16 %v3192
  %v4221 = vunpack.c.l.b16 %v3193
  %v4222 = vunpack.c.l.b16 %v3194
  %v4223 = vunpack.c.l.b16 %v3195
  %v4224 = vunpack.c.l.b16 %v3196
  %v4225 = vunpack.c.l.b16 %v3197
  %v4226 = vunpack.c.l.b16 %v3198
  %v4227 = vunpack.c.l.b16 %v3199
  %v4228 = vunpack.c.l.b16 %v3200
  %v4229 = vunpack.c.l.b16 %v3201
  %v4230 = vunpack.c.l.b16 %v3202
  %v4231 = vunpack.c.l.b16 %v3203
  %v4232 = vunpack.c.l.b16 %v3204
  %v4233 = vunpack.c.l.b16 %v3205
  %v4234 = vunpack.c.l.b16 %v3206
  %v4235 = vunpack.c.l.b16 %v3207
  %v4236 = vunpack.c.l.b16 %v3208
  %v4237 = vunpack.c.l.b16 %v3209
  %v4238 = vunpack.c.l.b16 %v3210
  %v4239 = vunpack.c.l.b16 %v3211
  %v4240 = vunpack.c.l.b16 %v3212
  %v4241 = vunpack.c.l.b16 %v3213
  %v4242 = vunpack.c.l.b16 %v3214
  %v4243 = vunpack.c.l.b16 %v3215
  %v4244 = vunpack.c.l.b16 %v3216
  %v4245 = vunpack.c.l.b16 %v3217
  %v4246 = vunpack.c.l.b16 %v3218
  %v4247 = vunpack.c.l.b16 %v3219
  %v4248 = vunpack.c.l.b16 %v3220
  %v4249 = vunpack.c.l.b16 %v3221
  %v4250 = vunpack.c.l.b16 %v3222
  %v4251 = vunpack.c.l.b16 %v3223
  %v4252 = vunpack.c.l.b16 %v3224
  %v4253 = vunpack.c.l.b16 %v3225
  %v4254 = vunpack.c.l.b16 %v3226
  %v4255 = vunpack.c.l.b16 %v3227
  %v4256 = vunpack.c.l.b16 %v3228
  %v4257 = vunpack.c.l.b16 %v3229
  %v4258 = vunpack.c.l.b16 %v3230
  %v4259 = vunpack.c.l.b16 %v3231
  %v4260 = vunpack.c.l.b16 %v3232
  %v4261 = vunpack.c.l.b16 %v3233
  %v4262 = vunpack.c.l.b16 %v3234
  %v4263 = vunpack.c.l.b16 %v3235
  %v4264 = vunpack.c.l.b16 %v3236
  %v4265 = vunpack.c.l.b16 %v3237
  %v4266 = vunpack.c.l.b16 %v3238
  %v4267 = vunpack.c.l.b16 %v3239
  %v4268 = vunpack.c.l.b16 %v3240
  %v4269 = vunpack.c.l.b16 %v3241
  %v4270 = vunpack.c.l.b16 %v3242
  %v4271 = vunpack.c.l.b16 %v3243
  %v4272 = vunpack.c.l.b16 %v3244
  %v4273 = vunpack.c.l.b16 %v3245
  %v4274 = vunpack.c.l.b16 %v3246
  %v4275 = vunpack.c.l.b16 %v3247
  %v4276 = vunpack.c.l.b16 %v3248
  %v4277 = vunpack.c.l.b16 %v3249
  %v4278 = vunpack.c.l.b16 %v3250
  %v4279 = vunpack.c.l.b16 %v3251
  %v4280 = vunpack.c.l.b16 %v3252
  %v4281 = vunpack.c.l.b16 %v3253
  %v4282 = vunpack.c.l.b16 %v3254
  %v4283 = vunpack.c.l.b16 %v3255
  %v4284 = vunpack.c.l.b16 %v3256
  %v4285 = vunpack.c.l.b16 %v3257
  %v4286 = vunpack.c.l.b16 %v3258
  %v4287 = vunpack.c.l.b16 %v3259
  %v4288 = vunpack.c.l.b16 %v3260
  %v4289 = vunpack.c.l.b16 %v3261
  %v4290 = vunpack.c.l.b16 %v3262
  %v4291 = vunpack.c.l.b16 %v3263
  %v4292 = vunpack.c.l.b16 %v3264
  %v4293 = vunpack.c.l.b16 %v3265
  %v4294 = vunpack.c.l.b16 %v3266
  %v4295 = vunpack.c.l.b16 %v3267
  %v4296 = vunpack.c.l.b16 %v3268
  %v4297 = vunpack.c.l.b16 %v3269
  %v4298 = vunpack.c.l.b16 %v3270
  %v4299 = vunpack.c.l.b16 %v3271
  %v4300 = vunpack.c.l.b16 %v3272
  %v4301 = vunpack.c.l.b16 %v3273
  %v4302 = vunpack.c.l.b16 %v3274
  %v4303 = vunpack.c.l.b16 %v3275
  %v4304 = vunpack.c.l.b16 %v3276
  %v4305 = vunpack.c.l.b16 %v3277
  %v4306 = vunpack.c.l.b16 %v3278
  %v4307 = vunpack.c.l.b16 %v3279
  %v4308 = vunpack.c.l.b16 %v3280
  %v4309 = vunpack.c.l.b16 %v3281
  %v4310 = vunpack.c.l.b16 %v3282
  %v4311 = vunpack.c.l.b16 %v3283
  %v4312 = vunpack.c.l.b16 %v3284
  %v4313 = vunpack.c.l.b16 %v3285
  %v4314 = vunpack.c.l.b16 %v3286
  %v4315 = vunpack.c.l.b16 %v3287
  %v4316 = vunpack.c.l.b16 %v3288
  %v4317 = vunpack.c.l.b16 %v3289
  %v4318 = vunpack.c.l.b16 %v3290
  %v4319 = vunpack.c.l.b16 %v3291
  %v4320 = vunpack.c.l.b16 %v3292
  %v4321 = vunpack.c.l.b16 %v3293
  %v4322 = vunpack.c.l.b16 %v3294
  %v4323 = vunpack.c.l.b16 %v3295
  %v4324 = vunpack.c.l.b16 %v3296
  %v4325 = vunpack.c.l.b16 %v3297
  %v4326 = vunpack.c.l.b16 %v3298
  %v4327 = vunpack.c.l.b16 %v3299
  %v4328 = vunpack.c.l.b16 %v3300
  %v4329 = vunpack.c.l.b16 %v3301
  %v4330 = vunpack.c.l.b16 %v3302
  %v4331 = vunpack.c.l.b16 %v3303
  %v4332 = vunpack.c.l.b16 %v3304
  %v4333 = vunpack.c.l.b16 %v3305
  %v4334 = vunpack.c.l.b16 %v3306
  %v4335 = vunpack.c.l.b16 %v3307
  %v4336 = vunpack.c.l.b16 %v3308
  %v4337 = vunpack.c.l.b16 %v3309
  %v4338 = vunpack.c.l.b16 %v3310
  %v4339 = vunpack.c.l.b16 %v3311
  %v4340 = vunpack.c.l.b16 %v3312
  %v4341 = vunpack.c.l.b16 %v3313
  %v4342 = vunpack.c.l.b16 %v3314
  %v4343 = vunpack.c.l.b16 %v3315
  %v4344 = vunpack.c.l.b16 %v3316
  %v4345 = vunpack.c.l.b16 %v3317
  %v4346 = vunpack.c.l.b16 %v3318
  %v4347 = vunpack.c.l.b16 %v3319
  %v4348 = vunpack.c.l.b16 %v3320
  %v4349 = vunpack.c.l.b16 %v3321
  %v4350 = vunpack.c.l.b16 %v3322
  %v4351 = vunpack.c.l.b16 %v3323
  %v4352 = vunpack.c.l.b16 %v3324
  %v4353 = vunpack.c.l.b16 %v3325
  %v4354 = vunpack.c.l.b16 %v3326
  %v4355 = vunpack.c.l.b16 %v3327
  %v4356 = vunpack.c.l.b16 %v3328
  %v4357 = vunpack.c.l.b16 %v3329
  %v4358 = vunpack.c.l.b16 %v3330
  %v4359 = vunpack.c.l.b16 %v3331
  %v4360 = vunpack.c.l.b16 %v3332
  %v4361 = vunpack.c.l.b16 %v3333
  %v4362 = vunpack.c.l.b16 %v3334
  %v4363 = vunpack.c.l.b16 %v3335
  %v4364 = vunpack.c.l.b16 %v3336
  %v4365 = vunpack.c.l.b16 %v3337
  %v4366 = vunpack.c.l.b16 %v3338
  %v4367 = vunpack.c.l.b16 %v3339
  %v4368 = vunpack.c.l.b16 %v3340
  %v4369 = vunpack.c.l.b16 %v3341
  %v4370 = vunpack.c.l.b16 %v3342
  %v4371 = vunpack.c.l.b16 %v3343
  %v4372 = vunpack.c.l.b16 %v3344
  %v4373 = vunpack.c.l.b16 %v3345
  %v4374 = vunpack.c.l.b16 %v3346
  %v4375 = vunpack.c.l.b16 %v3347
  %v4376 = vunpack.c.l.b16 %v3348
  %v4377 = vunpack.c.l.b16 %v3349
  %v4378 = vunpack.c.l.b16 %v3350
  %v4379 = vunpack.c.l.b16 %v3351
  %v4380 = vunpack.c.l.b16 %v3352
  %v4381 = vunpack.c.l.b16 %v3353
  %v4382 = vunpack.c.l.b16 %v3354
  %v4383 = vunpack.c.l.b16 %v3355
  %v4384 = vunpack.c.l.b16 %v3356
  %v4385 = vunpack.c.l.b16 %v3357
  %v4386 = vunpack.c.l.b16 %v3358
  %v4387 = vunpack.c.l.b16 %v3359
  %v4388 = vunpack.c.l.b16 %v3360
  %v4389 = vunpack.c.l.b16 %v3361
  %v4390 = vunpack.c.l.b16 %v3362
  %v4391 = vunpack.c.l.b16 %v3363
  %v4392 = vunpack.c.l.b16 %v3364
  %v4393 = vunpack.c.l.b16 %v3365
  %v4394 = vunpack.c.l.b16 %v3366
  %v4395 = vunpack.c.l.b16 %v3367
  %v4396 = vunpack.c.l.b16 %v3368
  %v4397 = vunpack.c.l.b16 %v3369
  %v4398 = vunpack.c.l.b16 %v3370
  %v4399 = vunpack.c.l.b16 %v3371
  %v4400 = vunpack.c.l.b16 %v3372
  %v4401 = vunpack.c.l.b16 %v3373
  %v4402 = vunpack.c.l.b16 %v3374
  %v4403 = vunpack.c.l.b16 %v3375
  %v4404 = vunpack.c.l.b16 %v3376
  %v4405 = vunpack.c.l.b16 %v3377
  %v4406 = vunpack.c.l.b16 %v3378
  %v4407 = vunpack.c.l.b16 %v3379
  %v4408 = vunpack.c.l.b16 %v3380
  %v4409 = vunpack.c.l.b16 %v3381
  %v4410 = vunpack.c.l.b16 %v3382
  %v4411 = vunpack.c.l.b16 %v3383
  %v4412 = vunpack.c.l.b16 %v3384
  %v4413 = vunpack.c.l.b16 %v3385
  %v4414 = vunpack.c.l.b16 %v3386
  %v4415 = vunpack.c.l.b16 %v3387
  %v4416 = vunpack.c.l.b16 %v3388
  %v4417 = vunpack.c.l.b16 %v3389
  %v4418 = vunpack.c.l.b16 %v3390
  %v4419 = vunpack.c.l.b16 %v3391
  %v4420 = vunpack.c.l.b16 %v3392
  %v4421 = vunpack.c.l.b16 %v3393
  %v4422 = vunpack.c.l.b16 %v3394
  %v4423 = vunpack.c.l.b16 %v3395
  %v4424 = vunpack.c.l.b16 %v3396
  %v4425 = vunpack.c.l.b16 %v3397
  %v4426 = vunpack.c.l.b16 %v3398
  %v4427 = vunpack.c.l.b16 %v3399
  %v4428 = vunpack.c.l.b16 %v3400
  %v4429 = vunpack.c.l.b16 %v3401
  %v4430 = vunpack.c.l.b16 %v3402
  %v4431 = vunpack.c.l.b16 %v3403
  %v4432 = vunpack.c.l.b16 %v3404
  %v4433 = vunpack.c.l.b16 %v3405
  %v4434 = vunpack.c.l.b16 %v3406
  %v4435 = vunpack.c.l.b16 %v3407
  %v4436 = vunpack.c.l.b16 %v3408
  %v4437 = vunpack.c.l.b16 %v3409
  %v4438 = vunpack.c.l.b16 %v3410
  %v4439 = vunpack.c.l.b16 %v3411
  %v4440 = vunpack.c.l.b16 %v3412
  %v4441 = vunpack.c.l.b16 %v3413
  %v4442 = vunpack.c.l.b16 %v3414
  %v4443 = vunpack.c.l.b16 %v3415
  %v4444 = vunpack.c.l.b16 %v3416
  %v4445 = vunpack.c.l.b16 %v3417
  %v4446 = vunpack.c.l.b16 %v3418
  %v4447 = vunpack.c.l.b16 %v3419
  %v4448 = vunpack.c.l.b16 %v3420
  %v4449 = vunpack.c.l.b16 %v3421
  %v4450 = vunpack.c.l.b16 %v3422
  %v4451 = vunpack.c.l.b16 %v3423
  %v4452 = vunpack.c.l.b16 %v3424
  %v4453 = vunpack.c.l.b16 %v3425
  %v4454 = vunpack.c.l.b16 %v3426
  %v4455 = vunpack.c.l.b16 %v3427
  %v4456 = vunpack.c.l.b16 %v3428
  %v4457 = vunpack.c.l.b16 %v3429
  %v4458 = vunpack.c.l.b16 %v3430
  %v4459 = vunpack.c.l.b16 %v3431
  %v4460 = vunpack.c.l.b16 %v3432
  %v4461 = vunpack.c.l.b16 %v3433
  %v4462 = vunpack.c.l.b16 %v3434
  %v4463 = vunpack.c.l.b16 %v3435
  %v4464 = vunpack.c.l.b16 %v3436
  %v4465 = vunpack.c.l.b16 %v3437
  %v4466 = vunpack.c.l.b16 %v3438
  %v4467 = vunpack.c.l.b16 %v3439
  %v4468 = vunpack.c.l.b16 %v3440
  %v4469 = vunpack.c.l.b16 %v3441
  %v4470 = vunpack.c.l.b16 %v3442
  %v4471 = vunpack.c.l.b16 %v3443
  %v4472 = vunpack.c.l.b16 %v3444
  %v4473 = vunpack.c.l.b16 %v3445
  %v4474 = vunpack.c.l.b16 %v3446
  %v4475 = vunpack.c.l.b16 %v3447
  %v4476 = vunpack.c.l.b16 %v3448
  %v4477 = vunpack.c.l.b16 %v3449
  %v4478 = vunpack.c.l.b16 %v3450
  %v4479 = vunpack.c.l.b16 %v3451
  %v4480 = vunpack.c.l.b16 %v3452
  %v4481 = vunpack.c.l.b16 %v3453
  %v4482 = vunpack.c.l.b16 %v3454
  %v4483 = vunpack.c.l.b16 %v3455
  %v4484 = vunpack.c.l.b16 %v3456
  %v4485 = vunpack.c.l.b16 %v3457
  %v4486 = vunpack.c.l.b16 %v3458
  %v4487 = vunpack.c.l.b16 %v3459
  %v4488 = vunpack.c.l.b16 %v3460
  %v4489 = vunpack.c.l.b16 %v3461
  %v4490 = vunpack.c.l.b16 %v3462
  %v4491 = vunpack.c.l.b16 %v3463
  %v4492 = vunpack.c.l.b16 %v3464
  %v4493 = vunpack.c.l.b16 %v3465
  %v4494 = vunpack.c.l.b16 %v3466
  %v4495 = vunpack.c.l.b16 %v3467
  %v4496 = vunpack.c.l.b16 %v3468
  %v4497 = vunpack.c.l.b16 %v3469
  %v4498 = vunpack.c.l.b16 %v3470
  %v4499 = vunpack.c.l.b16 %v3471
  %v4500 = vunpack.c.l.b16 %v3472
  %v4501 = vunpack.c.l.b16 %v3473
  %v4502 = vunpack.c.l.b16 %v3474
  %v4503 = vunpack.c.l.b16 %v3475
  %v4504 = vunpack.c.l.b16 %v3476
  %v4505 = vunpack.c.l.b16 %v3477
  %v4506 = vunpack.c.l.b16 %v3478
  %v4507 = vunpack.c.l.b16 %v3479
  %v4508 = vunpack.c.l.b16 %v3480
  %v4509 = vunpack.c.l.b16 %v3481
  %v4510 = vunpack.c.l.b16 %v3482
  %v4511 = vunpack.c.l.b16 %v3483
  %v4512 = vunpack.c.l.b16 %v3484
  %v4513 = vunpack.c.l.b16 %v3485
  %v4514 = vunpack.c.l.b16 %v3486
  %v4515 = vunpack.c.l.b16 %v3487
  %v4516 = vunpack.c.l.b16 %v3488
  %v4517 = vunpack.c.l.b16 %v3489
  %v4518 = vunpack.c.l.b16 %v3490
  %v4519 = vunpack.c.l.b16 %v3491
  %v4520 = vunpack.c.l.b16 %v3492
  %v4521 = vunpack.c.l.b16 %v3493
  %v4522 = vunpack.c.l.b16 %v3494
  %v4523 = vunpack.c.l.b16 %v3495
  %v4524 = vunpack.c.l.b16 %v3496
  %v4525 = vunpack.c.l.b16 %v3497
  %v4526 = vunpack.c.l.b16 %v3498
  %v4527 = vunpack.c.l.b16 %v3499
  %v4528 = vunpack.c.l.b16 %v3500
  %v4529 = vunpack.c.l.b16 %v3501
  %v4530 = vunpack.c.l.b16 %v3502
  %v4531 = vunpack.c.l.b16 %v3503
  %v4532 = vunpack.c.l.b16 %v3504
  %v4533 = vunpack.c.l.b16 %v3505
  %v4534 = vunpack.c.l.b16 %v3506
  %v4535 = vunpack.c.l.b16 %v3507
  %v4536 = vunpack.c.l.b16 %v3508
  %v4537 = vunpack.c.l.b16 %v3509
  %v4538 = vunpack.c.l.b16 %v3510
  %v4539 = vunpack.c.l.b16 %v3511
  %v4540 = vunpack.c.l.b16 %v3512
  %v4541 = vunpack.c.l.b16 %v3513
  %v4542 = vunpack.c.l.b16 %v3514
  %v4543 = vunpack.c.l.b16 %v3515
  %v4544 = vunpack.c.l.b16 %v3516
  %v4545 = vunpack.c.l.b16 %v3517
  %v4546 = vunpack.c.l.b16 %v3518
  %v4547 = vunpack.c.l.b16 %v3519
  %v4548 = vunpack.c.l.b16 %v3520
  %v4549 = vunpack.c.l.b16 %v3521
  %v4550 = vunpack.c.l.b16 %v3522
  %v4551 = vunpack.c.l.b16 %v3523
  %v4552 = vunpack.c.l.b16 %v3524
  %v4553 = vunpack.c.l.b16 %v3525
  %v4554 = vunpack.c.l.b16 %v3526
  %v4555 = vunpack.c.l.b16 %v3527
  %v4556 = vunpack.c.l.b16 %v3528
  %v4557 = vunpack.c.l.b16 %v3529
  %v4558 = vunpack.c.l.b16 %v3530
  %v4559 = vunpack.c.l.b16 %v3531
  %v4560 = vunpack.c.l.b16 %v3532
  %v4561 = vunpack.c.l.b16 %v3533
  %v4562 = vunpack.c.l.b16 %v3534
  %v4563 = vunpack.c.l.b16 %v3535
  %v4564 = vunpack.c.l.b16 %v3536
  %v4565 = vunpack.c.l.b16 %v3537
  %v4566 = vunpack.c.l.b16 %v3538
  %v4567 = vunpack.c.l.b16 %v3539
  %v4568 = vunpack.c.l.b16 %v3540
  %v4569 = vunpack.c.l.b16 %v3541
  %v4570 = vunpack.c.l.b16 %v3542
  %v4571 = vpack.c.b16 %v4060, %v4059
  %v4572 = vpack.c.b16 %v4062, %v4061
  %v4573 = vpack.c.b16 %v4064, %v4063
  %v4574 = vpack.c.b16 %v4066, %v4065
  %v4575 = vpack.c.b16 %v4068, %v4067
  %v4576 = vpack.c.b16 %v4070, %v4069
  %v4577 = vpack.c.b16 %v4072, %v4071
  %v4578 = vpack.c.b16 %v4074, %v4073
  %v4579 = vpack.c.b16 %v4076, %v4075
  %v4580 = vpack.c.b16 %v4078, %v4077
  %v4581 = vpack.c.b16 %v4080, %v4079
  %v4582 = vpack.c.b16 %v4082, %v4081
  %v4583 = vpack.c.b16 %v4084, %v4083
  %v4584 = vpack.c.b16 %v4086, %v4085
  %v4585 = vpack.c.b16 %v4088, %v4087
  %v4586 = vpack.c.b16 %v4090, %v4089
  %v4587 = vpack.c.b16 %v4092, %v4091
  %v4588 = vpack.c.b16 %v4094, %v4093
  %v4589 = vpack.c.b16 %v4096, %v4095
  %v4590 = vpack.c.b16 %v4098, %v4097
  %v4591 = vpack.c.b16 %v4100, %v4099
  %v4592 = vpack.c.b16 %v4102, %v4101
  %v4593 = vpack.c.b16 %v4104, %v4103
  %v4594 = vpack.c.b16 %v4106, %v4105
  %v4595 = vpack.c.b16 %v4108, %v4107
  %v4596 = vpack.c.b16 %v4110, %v4109
  %v4597 = vpack.c.b16 %v4112, %v4111
  %v4598 = vpack.c.b16 %v4114, %v4113
  %v4599 = vpack.c.b16 %v4116, %v4115
  %v4600 = vpack.c.b16 %v4118, %v4117
  %v4601 = vpack.c.b16 %v4120, %v4119
  %v4602 = vpack.c.b16 %v4122, %v4121
  %v4603 = vpack.c.b16 %v4124, %v4123
  %v4604 = vpack.c.b16 %v4126, %v4125
  %v4605 = vpack.c.b16 %v4128, %v4127
  %v4606 = vpack.c.b16 %v4130, %v4129
  %v4607 = vpack.c.b16 %v4132, %v4131
  %v4608 = vpack.c.b16 %v4134, %v4133
  %v4609 = vpack.c.b16 %v4136, %v4135
  %v4610 = vpack.c.b16 %v4138, %v4137
  %v4611 = vpack.c.b16 %v4140, %v4139
  %v4612 = vpack.c.b16 %v4142, %v4141
  %v4613 = vpack.c.b16 %v4144, %v4143
  %v4614 = vpack.c.b16 %v4146, %v4145
  %v4615 = vpack.c.b16 %v4148, %v4147
  %v4616 = vpack.c.b16 %v4150, %v4149
  %v4617 = vpack.c.b16 %v4152, %v4151
  %v4618 = vpack.c.b16 %v4154, %v4153
  %v4619 = vpack.c.b16 %v4156, %v4155
  %v4620 = vpack.c.b16 %v4158, %v4157
  %v4621 = vpack.c.b16 %v4160, %v4159
  %v4622 = vpack.c.b16 %v4162, %v4161
  %v4623 = vpack.c.b16 %v4164, %v4163
  %v4624 = vpack.c.b16 %v4166, %v4165
  %v4625 = vpack.c.b16 %v4168, %v4167
  %v4626 = vpack.c.b16 %v4170, %v4169
  %v4627 = vpack.c.b16 %v4172, %v4171
  %v4628 = vpack.c.b16 %v4174, %v4173
  %v4629 = vpack.c.b16 %v4176, %v4175
  %v4630 = vpack.c.b16 %v4178, %v4177
  %v4631 = vpack.c.b16 %v4180, %v4179
  %v4632 = vpack.c.b16 %v4182, %v4181
  %v4633 = vpack.c.b16 %v4184, %v4183
  %v4634 = vpack.c.b16 %v4186, %v4185
  %v4635 = vpack.c.b16 %v4188, %v4187
  %v4636 = vpack.c.b16 %v4190, %v4189
  %v4637 = vpack.c.b16 %v4192, %v4191
  %v4638 = vpack.c.b16 %v4194, %v4193
  %v4639 = vpack.c.b16 %v4196, %v4195
  %v4640 = vpack.c.b16 %v4198, %v4197
  %v4641 = vpack.c.b16 %v4200, %v4199
  %v4642 = vpack.c.b16 %v4202, %v4201
  %v4643 = vpack.c.b16 %v4204, %v4203
  %v4644 = vpack.c.b16 %v4206, %v4205
  %v4645 = vpack.c.b16 %v4208, %v4207
  %v4646 = vpack.c.b16 %v4210, %v4209
  %v4647 = vpack.c.b16 %v4212, %v4211
  %v4648 = vpack.c.b16 %v4214, %v4213
  %v4649 = vpack.c.b16 %v4216, %v4215
  %v4650 = vpack.c.b16 %v4218, %v4217
  %v4651 = vpack.c.b16 %v4220, %v4219
  %v4652 = vpack.c.b16 %v4222, %v4221
  %v4653 = vpack.c.b16 %v4224, %v4223
  %v4654 = vpack.c.b16 %v4226, %v4225
  %v4655 = vpack.c.b16 %v4228, %v4227
  %v4656 = vpack.c.b16 %v4230, %v4229
  %v4657 = vpack.c.b16 %v4232, %v4231
  %v4658 = vpack.c.b16 %v4234, %v4233
  %v4659 = vpack.c.b16 %v4236, %v4235
  %v4660 = vpack.c.b16 %v4238, %v4237
  %v4661 = vpack.c.b16 %v4240, %v4239
  %v4662 = vpack.c.b16 %v4242, %v4241
  %v4663 = vpack.c.b16 %v4244, %v4243
  %v4664 = vpack.c.b16 %v4246, %v4245
  %v4665 = vpack.c.b16 %v4248, %v4247
  %v4666 = vpack.c.b16 %v4250, %v4249
  %v4667 = vpack.c.b16 %v4252, %v4251
  %v4668 = vpack.c.b16 %v4254, %v4253
  %v4669 = vpack.c.b16 %v4256, %v4255
  %v4670 = vpack.c.b16 %v4258, %v4257
  %v4671 = vpack.c.b16 %v4260, %v4259
  %v4672 = vpack.c.b16 %v4262, %v4261
  %v4673 = vpack.c.b16 %v4264, %v4263
  %v4674 = vpack.c.b16 %v4266, %v4265
  %v4675 = vpack.c.b16 %v4268, %v4267
  %v4676 = vpack.c.b16 %v4270, %v4269
  %v4677 = vpack.c.b16 %v4272, %v4271
  %v4678 = vpack.c.b16 %v4274, %v4273
  %v4679 = vpack.c.b16 %v4276, %v4275
  %v4680 = vpack.c.b16 %v4278, %v4277
  %v4681 = vpack.c.b16 %v4280, %v4279
  %v4682 = vpack.c.b16 %v4282, %v4281
  %v4683 = vpack.c.b16 %v4284, %v4283
  %v4684 = vpack.c.b16 %v4286, %v4285
  %v4685 = vpack.c.b16 %v4288, %v4287
  %v4686 = vpack.c.b16 %v4290, %v4289
  %v4687 = vpack.c.b16 %v4292, %v4291
  %v4688 = vpack.c.b16 %v4294, %v4293
  %v4689 = vpack.c.b16 %v4296, %v4295
  %v4690 = vpack.c.b16 %v4298, %v4297
  %v4691 = vpack.c.b16 %v4300, %v4299
  %v4692 = vpack.c.b16 %v4302, %v4301
  %v4693 = vpack.c.b16 %v4304, %v4303
  %v4694 = vpack.c.b16 %v4306, %v4305
  %v4695 = vpack.c.b16 %v4308, %v4307
  %v4696 = vpack.c.b16 %v4310, %v4309
  %v4697 = vpack.c.b16 %v4312, %v4311
  %v4698 = vpack.c.b16 %v4314, %v4313
  %v4699 = vpack.c.b16 %v4316, %v4315
  %v4700 = vpack.c.b16 %v4318, %v4317
  %v4701 = vpack.c.b16 %v4320, %v4319
  %v4702 = vpack.c.b16 %v4322, %v4321
  %v4703 = vpack.c.b16 %v4324, %v4323
  %v4704 = vpack.c.b16 %v4326, %v4325
  %v4705 = vpack.c.b16 %v4328, %v4327
  %v4706 = vpack.c.b16 %v4330, %v4329
  %v4707 = vpack.c.b16 %v4332, %v4331
  %v4708 = vpack.c.b16 %v4334, %v4333
  %v4709 = vpack.c.b16 %v4336, %v4335
  %v4710 = vpack.c.b16 %v4338, %v4337
  %v4711 = vpack.c.b16 %v4340, %v4339
  %v4712 = vpack.c.b16 %v4342, %v4341
  %v4713 = vpack.c.b16 %v4344, %v4343
  %v4714 = vpack.c.b16 %v4346, %v4345
  %v4715 = vpack.c.b16 %v4348, %v4347
  %v4716 = vpack.c.b16 %v4350, %v4349
  %v4717 = vpack.c.b16 %v4352, %v4351
  %v4718 = vpack.c.b16 %v4354, %v4353
  %v4719 = vpack.c.b16 %v4356, %v4355
  %v4720 = vpack.c.b16 %v4358, %v4357
  %v4721 = vpack.c.b16 %v4360, %v4359
  %v4722 = vpack.c.b16 %v4362, %v4361
  %v4723 = vpack.c.b16 %v4364, %v4363
  %v4724 = vpack.c.b16 %v4366, %v4365
  %v4725 = vpack.c.b16 %v4368, %v4367
  %v4726 = vpack.c.b16 %v4370, %v4369
  %v4727 = vpack.c.b16 %v4372, %v4371
  %v4728 = vpack.c.b16 %v4374, %v4373
  %v4729 = vpack.c.b16 %v4376, %v4375
  %v4730 = vpack.c.b16 %v4378, %v4377
  %v4731 = vpack.c.b16 %v4380, %v4379
  %v4732 = vpack.c.b16 %v4382, %v4381
  %v4733 = vpack.c.b16 %v4384, %v4383
  %v4734 = vpack.c.b16 %v4386, %v4385
  %v4735 = vpack.c.b16 %v4388, %v4387
  %v4736 = vpack.c.b16 %v4390, %v4389
  %v4737 = vpack.c.b16 %v4392, %v4391
  %v4738 = vpack.c.b16 %v4394, %v4393
  %v4739 = vpack.c.b16 %v4396, %v4395
  %v4740 = vpack.c.b16 %v4398, %v4397
  %v4741 = vpack.c.b16 %v4400, %v4399
  %v4742 = vpack.c.b16 %v4402, %v4401
  %v4743 = vpack.c.b16 %v4404, %v4403
  %v4744 = vpack.c.b16 %v4406, %v4405
  %v4745 = vpack.c.b16 %v4408, %v4407
  %v4746 = vpack.c.b16 %v4410, %v4409
  %v4747 = vpack.c.b16 %v4412, %v4411
  %v4748 = vpack.c.b16 %v4414, %v4413
  %v4749 = vpack.c.b16 %v4416, %v4415
  %v4750 = vpack.c.b16 %v4418, %v4417
  %v4751 = vpack.c.b16 %v4420, %v4419
  %v4752 = vpack.c.b16 %v4422, %v4421
  %v4753 = vpack.c.b16 %v4424, %v4423
  %v4754 = vpack.c.b16 %v4426, %v4425
  %v4755 = vpack.c.b16 %v4428, %v4427
  %v4756 = vpack.c.b16 %v4430, %v4429
  %v4757 = vpack.c.b16 %v4432, %v4431
  %v4758 = vpack.c.b16 %v4434, %v4433
  %v4759 = vpack.c.b16 %v4436, %v4435
  %v4760 = vpack.c.b16 %v4438, %v4437
  %v4761 = vpack.c.b16 %v4440, %v4439
  %v4762 = vpack.c.b16 %v4442, %v4441
  %v4763 = vpack.c.b16 %v4444, %v4443
  %v4764 = vpack.c.b16 %v4446, %v4445
  %v4765 = vpack.c.b16 %v4448, %v4447
  %v4766 = vpack.c.b16 %v4450, %v4449
  %v4767 = vpack.c.b16 %v4452, %v4451
  %v4768 = vpack.c.b16 %v4454, %v4453
  %v4769 = vpack.c.b16 %v4456, %v4455
  %v4770 = vpack.c.b16 %v4458, %v4457
  %v4771 = vpack.c.b16 %v4460, %v4459
  %v4772 = vpack.c.b16 %v4462, %v4461
  %v4773 = vpack.c.b16 %v4464, %v4463
  %v4774 = vpack.c.b16 %v4466, %v4465
  %v4775 = vpack.c.b16 %v4468, %v4467
  %v4776 = vpack.c.b16 %v4470, %v4469
  %v4777 = vpack.c.b16 %v4472, %v4471
  %v4778 = vpack.c.b16 %v4474, %v4473
  %v4779 = vpack.c.b16 %v4476, %v4475
  %v4780 = vpack.c.b16 %v4478, %v4477
  %v4781 = vpack.c.b16 %v4480, %v4479
  %v4782 = vpack.c.b16 %v4482, %v4481
  %v4783 = vpack.c.b16 %v4484, %v4483
  %v4784 = vpack.c.b16 %v4486, %v4485
  %v4785 = vpack.c.b16 %v4488, %v4487
  %v4786 = vpack.c.b16 %v4490, %v4489
  %v4787 = vpack.c.b16 %v4492, %v4491
  %v4788 = vpack.c.b16 %v4494, %v4493
  %v4789 = vpack.c.b16 %v4496, %v4495
  %v4790 = vpack.c.b16 %v4498, %v4497
  %v4791 = vpack.c.b16 %v4500, %v4499
  %v4792 = vpack.c.b16 %v4502, %v4501
  %v4793 = vpack.c.b16 %v4504, %v4503
  %v4794 = vpack.c.b16 %v4506, %v4505
  %v4795 = vpack.c.b16 %v4508, %v4507
  %v4796 = vpack.c.b16 %v4510, %v4509
  %v4797 = vpack.c.b16 %v4512, %v4511
  %v4798 = vpack.c.b16 %v4514, %v4513
  %v4799 = vpack.c.b16 %v4516, %v4515
  %v4800 = vpack.c.b16 %v4518, %v4517
  %v4801 = vpack.c.b16 %v4520, %v4519
  %v4802 = vpack.c.b16 %v4522, %v4521
  %v4803 = vpack.c.b16 %v4524, %v4523
  %v4804 = vpack.c.b16 %v4526, %v4525
  %v4805 = vpack.c.b16 %v4528, %v4527
  %v4806 = vpack.c.b16 %v4530, %v4529
  %v4807 = vpack.c.b16 %v4532, %v4531
  %v4808 = vpack.c.b16 %v4534, %v4533
  %v4809 = vpack.c.b16 %v4536, %v4535
  %v4810 = vpack.c.b16 %v4538, %v4537
  %v4811 = vpack.c.b16 %v4540, %v4539
  %v4812 = vpack.c.b16 %v4542, %v4541
  %v4813 = vpack.c.b16 %v4544, %v4543
  %v4814 = vpack.c.b16 %v4546, %v4545
  %v4815 = vpack.c.b16 %v4548, %v4547
  %v4816 = vpack.c.b16 %v4550, %v4549
  %v4817 = vpack.c.b16 %v4552, %v4551
  %v4818 = vpack.c.b16 %v4554, %v4553
  %v4819 = vpack.c.b16 %v4556, %v4555
  %v4820 = vpack.c.b16 %v4558, %v4557
  %v4821 = vpack.c.b16 %v4560, %v4559
  %v4822 = vpack.c.b16 %v4562, %v4561
  %v4823 = vpack.c.b16 %v4564, %v4563
  %v4824 = vpack.c.b16 %v4566, %v4565
  %v4825 = vpack.c.b16 %v4568, %v4567
  %v4826 = vpack.c.b16 %v4570, %v4569
  %5083 = vmatpush.bf16.msra.mxu0 %v4578
  %5084 = vmatpush.bf16.msra.mxu0 %v4577
  %5085 = vmatpush.bf16.msra.mxu0 %v4576
  %5086 = vmatpush.bf16.msra.mxu0 %v4575
  %5087 = vmatpush.bf16.msra.mxu0 %v4574
  %5088 = vmatpush.bf16.msra.mxu0 %v4573
  %5089 = vmatpush.bf16.msra.mxu0 %v4572
  %5090 = vmatpush.bf16.msra.mxu0 %v4571
  %5091 = vmatmul.bf16.gmra.mxu0 %v2999
  %v5092 = vpop.f32.mrf.mxu0
  %v5093 = vadd.f32 %v3545, %v5092
  %v5094 = vpop.f32.mrf.mxu0
  %5095 = vdwg.mxu0
  %5096 = vmatpush.bf16.msra.mxu0 %v4586
  %5097 = vmatpush.bf16.msra.mxu0 %v4585
  %5098 = vmatpush.bf16.msra.mxu0 %v4584
  %5099 = vmatpush.bf16.msra.mxu0 %v4583
  %5100 = vmatpush.bf16.msra.mxu0 %v4582
  %5101 = vmatpush.bf16.msra.mxu0 %v4581
  %5102 = vmatpush.bf16.msra.mxu0 %v4580
  %5103 = vmatpush.bf16.msra.mxu0 %v4579
  %5104 = vmatmul.bf16.gmra.mxu0 %v3000
  %v5105 = vpop.f32.mrf.mxu0
  %v5106 = vadd.f32 %v5093, %v5105
  %v5107 = vpop.f32.mrf.mxu0
  %5108 = vdwg.mxu0
  %5109 = vmatpush.bf16.msra.mxu0 %v4594
  %5110 = vmatpush.bf16.msra.mxu0 %v4593
  %5111 = vmatpush.bf16.msra.mxu0 %v4592
  %5112 = vmatpush.bf16.msra.mxu0 %v4591
  %5113 = vmatpush.bf16.msra.mxu0 %v4590
  %5114 = vmatpush.bf16.msra.mxu0 %v4589
  %5115 = vmatpush.bf16.msra.mxu0 %v4588
  %5116 = vmatpush.bf16.msra.mxu0 %v4587
  %5117 = vmatmul.bf16.gmra.mxu0 %v3001
  %v5118 = vpop.f32.mrf.mxu0
  %v5119 = vadd.f32 %v5106, %v5118
  %v5120 = vpop.f32.mrf.mxu0
  %5121 = vdwg.mxu0
  %5122 = vmatpush.bf16.msra.mxu0 %v4602
  %5123 = vmatpush.bf16.msra.mxu0 %v4601
  %5124 = vmatpush.bf16.msra.mxu0 %v4600
  %5125 = vmatpush.bf16.msra.mxu0 %v4599
  %5126 = vmatpush.bf16.msra.mxu0 %v4598
  %5127 = vmatpush.bf16.msra.mxu0 %v4597
  %5128 = vmatpush.bf16.msra.mxu0 %v4596
  %5129 = vmatpush.bf16.msra.mxu0 %v4595
  %5130 = vmatmul.bf16.gmra.mxu0 %v3002
  %v5131 = vpop.f32.mrf.mxu0
  %v5132 = vadd.f32 %v5119, %v5131
  %v5133 = vpop.f32.mrf.mxu0
  %5134 = vdwg.mxu0
  %5135 = vmatpush.bf16.msra.mxu0 %v4610
  %5136 = vmatpush.bf16.msra.mxu0 %v4609
  %5137 = vmatpush.bf16.msra.mxu0 %v4608
  %5138 = vmatpush.bf16.msra.mxu0 %v4607
  %5139 = vmatpush.bf16.msra.mxu0 %v4606
  %5140 = vmatpush.bf16.msra.mxu0 %v4605
  %5141 = vmatpush.bf16.msra.mxu0 %v4604
  %5142 = vmatpush.bf16.msra.mxu0 %v4603
  %5143 = vmatmul.bf16.gmra.mxu0 %v3003
  %v5144 = vpop.f32.mrf.mxu0
  %v5145 = vadd.f32 %v5132, %v5144
  %v5146 = vpop.f32.mrf.mxu0
  %5147 = vdwg.mxu0
  %5148 = vmatpush.bf16.msra.mxu0 %v4618
  %5149 = vmatpush.bf16.msra.mxu0 %v4617
  %5150 = vmatpush.bf16.msra.mxu0 %v4616
  %5151 = vmatpush.bf16.msra.mxu0 %v4615
  %5152 = vmatpush.bf16.msra.mxu0 %v4614
  %5153 = vmatpush.bf16.msra.mxu0 %v4613
  %5154 = vmatpush.bf16.msra.mxu0 %v4612
  %5155 = vmatpush.bf16.msra.mxu0 %v4611
  %5156 = vmatmul.bf16.gmra.mxu0 %v3004
  %v5157 = vpop.f32.mrf.mxu0
  %v5158 = vadd.f32 %v5145, %v5157
  %v5159 = vpop.f32.mrf.mxu0
  %5160 = vdwg.mxu0
  %5161 = vmatpush.bf16.msra.mxu0 %v4626
  %5162 = vmatpush.bf16.msra.mxu0 %v4625
  %5163 = vmatpush.bf16.msra.mxu0 %v4624
  %5164 = vmatpush.bf16.msra.mxu0 %v4623
  %5165 = vmatpush.bf16.msra.mxu0 %v4622
  %5166 = vmatpush.bf16.msra.mxu0 %v4621
  %5167 = vmatpush.bf16.msra.mxu0 %v4620
  %5168 = vmatpush.bf16.msra.mxu0 %v4619
  %5169 = vmatmul.bf16.gmra.mxu0 %v3005
  %v5170 = vpop.f32.mrf.mxu0
  %v5171 = vadd.f32 %v5158, %v5170
  %v5172 = vpop.f32.mrf.mxu0
  %5173 = vdwg.mxu0
  %5174 = vmatpush.bf16.msra.mxu0 %v4634
  %5175 = vmatpush.bf16.msra.mxu0 %v4633
  %5176 = vmatpush.bf16.msra.mxu0 %v4632
  %5177 = vmatpush.bf16.msra.mxu0 %v4631
  %5178 = vmatpush.bf16.msra.mxu0 %v4630
  %5179 = vmatpush.bf16.msra.mxu0 %v4629
  %5180 = vmatpush.bf16.msra.mxu0 %v4628
  %5181 = vmatpush.bf16.msra.mxu0 %v4627
  %5182 = vmatmul.bf16.gmra.mxu0 %v3006
  %v5183 = vpop.f32.mrf.mxu0
  %v5184 = vadd.f32 %v5171, %v5183
  %v5185 = vpop.f32.mrf.mxu0
  %5186 = vdwg.mxu0
  %5187 = vmatpush.bf16.msra.mxu0 %v4642
  %5188 = vmatpush.bf16.msra.mxu0 %v4641
  %5189 = vmatpush.bf16.msra.mxu0 %v4640
  %5190 = vmatpush.bf16.msra.mxu0 %v4639
  %5191 = vmatpush.bf16.msra.mxu0 %v4638
  %5192 = vmatpush.bf16.msra.mxu0 %v4637
  %5193 = vmatpush.bf16.msra.mxu0 %v4636
  %5194 = vmatpush.bf16.msra.mxu0 %v4635
  %5195 = vmatmul.bf16.gmra.mxu0 %v3007
  %v5196 = vpop.f32.mrf.mxu0
  %v5197 = vadd.f32 %v5184, %v5196
  %v5198 = vpop.f32.mrf.mxu0
  %5199 = vdwg.mxu0
  %5200 = vmatpush.bf16.msra.mxu0 %v4650
  %5201 = vmatpush.bf16.msra.mxu0 %v4649
  %5202 = vmatpush.bf16.msra.mxu0 %v4648
  %5203 = vmatpush.bf16.msra.mxu0 %v4647
  %5204 = vmatpush.bf16.msra.mxu0 %v4646
  %5205 = vmatpush.bf16.msra.mxu0 %v4645
  %5206 = vmatpush.bf16.msra.mxu0 %v4644
  %5207 = vmatpush.bf16.msra.mxu0 %v4643
  %5208 = vmatmul.bf16.gmra.mxu0 %v3008
  %v5209 = vpop.f32.mrf.mxu0
  %v5210 = vadd.f32 %v5197, %v5209
  %v5211 = vpop.f32.mrf.mxu0
  %5212 = vdwg.mxu0
  %5213 = vmatpush.bf16.msra.mxu0 %v4658
  %5214 = vmatpush.bf16.msra.mxu0 %v4657
  %5215 = vmatpush.bf16.msra.mxu0 %v4656
  %5216 = vmatpush.bf16.msra.mxu0 %v4655
  %5217 = vmatpush.bf16.msra.mxu0 %v4654
  %5218 = vmatpush.bf16.msra.mxu0 %v4653
  %5219 = vmatpush.bf16.msra.mxu0 %v4652
  %5220 = vmatpush.bf16.msra.mxu0 %v4651
  %5221 = vmatmul.bf16.gmra.mxu0 %v3009
  %v5222 = vpop.f32.mrf.mxu0
  %v5223 = vadd.f32 %v5210, %v5222
  %v5224 = vpop.f32.mrf.mxu0
  %5225 = vdwg.mxu0
  %5226 = vmatpush.bf16.msra.mxu0 %v4666
  %5227 = vmatpush.bf16.msra.mxu0 %v4665
  %5228 = vmatpush.bf16.msra.mxu0 %v4664
  %5229 = vmatpush.bf16.msra.mxu0 %v4663
  %5230 = vmatpush.bf16.msra.mxu0 %v4662
  %5231 = vmatpush.bf16.msra.mxu0 %v4661
  %5232 = vmatpush.bf16.msra.mxu0 %v4660
  %5233 = vmatpush.bf16.msra.mxu0 %v4659
  %5234 = vmatmul.bf16.gmra.mxu0 %v3010
  %v5235 = vpop.f32.mrf.mxu0
  %v5236 = vadd.f32 %v5223, %v5235
  %v5237 = vpop.f32.mrf.mxu0
  %5238 = vdwg.mxu0
  %5239 = vmatpush.bf16.msra.mxu0 %v4674
  %5240 = vmatpush.bf16.msra.mxu0 %v4673
  %5241 = vmatpush.bf16.msra.mxu0 %v4672
  %5242 = vmatpush.bf16.msra.mxu0 %v4671
  %5243 = vmatpush.bf16.msra.mxu0 %v4670
  %5244 = vmatpush.bf16.msra.mxu0 %v4669
  %5245 = vmatpush.bf16.msra.mxu0 %v4668
  %5246 = vmatpush.bf16.msra.mxu0 %v4667
  %5247 = vmatmul.bf16.gmra.mxu0 %v3011
  %v5248 = vpop.f32.mrf.mxu0
  %v5249 = vadd.f32 %v5236, %v5248
  %v5250 = vpop.f32.mrf.mxu0
  %5251 = vdwg.mxu0
  %5252 = vmatpush.bf16.msra.mxu0 %v4682
  %5253 = vmatpush.bf16.msra.mxu0 %v4681
  %5254 = vmatpush.bf16.msra.mxu0 %v4680
  %5255 = vmatpush.bf16.msra.mxu0 %v4679
  %5256 = vmatpush.bf16.msra.mxu0 %v4678
  %5257 = vmatpush.bf16.msra.mxu0 %v4677
  %5258 = vmatpush.bf16.msra.mxu0 %v4676
  %5259 = vmatpush.bf16.msra.mxu0 %v4675
  %5260 = vmatmul.bf16.gmra.mxu0 %v3012
  %v5261 = vpop.f32.mrf.mxu0
  %v5262 = vadd.f32 %v5249, %v5261
  %v5263 = vpop.f32.mrf.mxu0
  %5264 = vdwg.mxu0
  %5265 = vmatpush.bf16.msra.mxu0 %v4690
  %5266 = vmatpush.bf16.msra.mxu0 %v4689
  %5267 = vmatpush.bf16.msra.mxu0 %v4688
  %5268 = vmatpush.bf16.msra.mxu0 %v4687
  %5269 = vmatpush.bf16.msra.mxu0 %v4686
  %5270 = vmatpush.bf16.msra.mxu0 %v4685
  %5271 = vmatpush.bf16.msra.mxu0 %v4684
  %5272 = vmatpush.bf16.msra.mxu0 %v4683
  %5273 = vmatmul.bf16.gmra.mxu0 %v3013
  %v5274 = vpop.f32.mrf.mxu0
  %v5275 = vadd.f32 %v5262, %v5274
  %v5276 = vpop.f32.mrf.mxu0
  %5277 = vdwg.mxu0
  %5278 = vmatpush.bf16.msra.mxu0 %v4698
  %5279 = vmatpush.bf16.msra.mxu0 %v4697
  %5280 = vmatpush.bf16.msra.mxu0 %v4696
  %5281 = vmatpush.bf16.msra.mxu0 %v4695
  %5282 = vmatpush.bf16.msra.mxu0 %v4694
  %5283 = vmatpush.bf16.msra.mxu0 %v4693
  %5284 = vmatpush.bf16.msra.mxu0 %v4692
  %5285 = vmatpush.bf16.msra.mxu0 %v4691
  %5286 = vmatmul.bf16.gmra.mxu0 %v3014
  %v5287 = vpop.f32.mrf.mxu0
  %v5288 = vadd.f32 %v5275, %v5287
  %v5289 = vpop.f32.mrf.mxu0
  %5290 = vdwg.mxu0
  %5291 = vmatpush.bf16.msra.mxu0 %v4706
  %5292 = vmatpush.bf16.msra.mxu0 %v4705
  %5293 = vmatpush.bf16.msra.mxu0 %v4704
  %5294 = vmatpush.bf16.msra.mxu0 %v4703
  %5295 = vmatpush.bf16.msra.mxu0 %v4702
  %5296 = vmatpush.bf16.msra.mxu0 %v4701
  %5297 = vmatpush.bf16.msra.mxu0 %v4700
  %5298 = vmatpush.bf16.msra.mxu0 %v4699
  %5299 = vmatmul.bf16.gmra.mxu0 %v3015
  %v5300 = vpop.f32.mrf.mxu0
  %v5301 = vadd.f32 %v5288, %v5300
  %v5302 = vpop.f32.mrf.mxu0
  %5303 = vdwg.mxu0
  %5304 = vmatpush.bf16.msra.mxu0 %v4714
  %5305 = vmatpush.bf16.msra.mxu0 %v4713
  %5306 = vmatpush.bf16.msra.mxu0 %v4712
  %5307 = vmatpush.bf16.msra.mxu0 %v4711
  %5308 = vmatpush.bf16.msra.mxu0 %v4710
  %5309 = vmatpush.bf16.msra.mxu0 %v4709
  %5310 = vmatpush.bf16.msra.mxu0 %v4708
  %5311 = vmatpush.bf16.msra.mxu0 %v4707
  %5312 = vmatmul.bf16.gmra.mxu0 %v3016
  %v5313 = vpop.f32.mrf.mxu0
  %v5314 = vadd.f32 %v5301, %v5313
  %v5315 = vpop.f32.mrf.mxu0
  %5316 = vdwg.mxu0
  %5317 = vmatpush.bf16.msra.mxu0 %v4722
  %5318 = vmatpush.bf16.msra.mxu0 %v4721
  %5319 = vmatpush.bf16.msra.mxu0 %v4720
  %5320 = vmatpush.bf16.msra.mxu0 %v4719
  %5321 = vmatpush.bf16.msra.mxu0 %v4718
  %5322 = vmatpush.bf16.msra.mxu0 %v4717
  %5323 = vmatpush.bf16.msra.mxu0 %v4716
  %5324 = vmatpush.bf16.msra.mxu0 %v4715
  %5325 = vmatmul.bf16.gmra.mxu0 %v3017
  %v5326 = vpop.f32.mrf.mxu0
  %v5327 = vadd.f32 %v5314, %v5326
  %v5328 = vpop.f32.mrf.mxu0
  %5329 = vdwg.mxu0
  %5330 = vmatpush.bf16.msra.mxu0 %v4730
  %5331 = vmatpush.bf16.msra.mxu0 %v4729
  %5332 = vmatpush.bf16.msra.mxu0 %v4728
  %5333 = vmatpush.bf16.msra.mxu0 %v4727
  %5334 = vmatpush.bf16.msra.mxu0 %v4726
  %5335 = vmatpush.bf16.msra.mxu0 %v4725
  %5336 = vmatpush.bf16.msra.mxu0 %v4724
  %5337 = vmatpush.bf16.msra.mxu0 %v4723
  %5338 = vmatmul.bf16.gmra.mxu0 %v3018
  %v5339 = vpop.f32.mrf.mxu0
  %v5340 = vadd.f32 %v5327, %v5339
  %v5341 = vpop.f32.mrf.mxu0
  %5342 = vdwg.mxu0
  %5343 = vmatpush.bf16.msra.mxu0 %v4738
  %5344 = vmatpush.bf16.msra.mxu0 %v4737
  %5345 = vmatpush.bf16.msra.mxu0 %v4736
  %5346 = vmatpush.bf16.msra.mxu0 %v4735
  %5347 = vmatpush.bf16.msra.mxu0 %v4734
  %5348 = vmatpush.bf16.msra.mxu0 %v4733
  %5349 = vmatpush.bf16.msra.mxu0 %v4732
  %5350 = vmatpush.bf16.msra.mxu0 %v4731
  %5351 = vmatmul.bf16.gmra.mxu0 %v3019
  %v5352 = vpop.f32.mrf.mxu0
  %v5353 = vadd.f32 %v5340, %v5352
  %v5354 = vpop.f32.mrf.mxu0
  %5355 = vdwg.mxu0
  %5356 = vmatpush.bf16.msra.mxu0 %v4746
  %5357 = vmatpush.bf16.msra.mxu0 %v4745
  %5358 = vmatpush.bf16.msra.mxu0 %v4744
  %5359 = vmatpush.bf16.msra.mxu0 %v4743
  %5360 = vmatpush.bf16.msra.mxu0 %v4742
  %5361 = vmatpush.bf16.msra.mxu0 %v4741
  %5362 = vmatpush.bf16.msra.mxu0 %v4740
  %5363 = vmatpush.bf16.msra.mxu0 %v4739
  %5364 = vmatmul.bf16.gmra.mxu0 %v3020
  %v5365 = vpop.f32.mrf.mxu0
  %v5366 = vadd.f32 %v5353, %v5365
  %v5367 = vpop.f32.mrf.mxu0
  %5368 = vdwg.mxu0
  %5369 = vmatpush.bf16.msra.mxu0 %v4754
  %5370 = vmatpush.bf16.msra.mxu0 %v4753
  %5371 = vmatpush.bf16.msra.mxu0 %v4752
  %5372 = vmatpush.bf16.msra.mxu0 %v4751
  %5373 = vmatpush.bf16.msra.mxu0 %v4750
  %5374 = vmatpush.bf16.msra.mxu0 %v4749
  %5375 = vmatpush.bf16.msra.mxu0 %v4748
  %5376 = vmatpush.bf16.msra.mxu0 %v4747
  %5377 = vmatmul.bf16.gmra.mxu0 %v3021
  %v5378 = vpop.f32.mrf.mxu0
  %v5379 = vadd.f32 %v5366, %v5378
  %v5380 = vpop.f32.mrf.mxu0
  %5381 = vdwg.mxu0
  %5382 = vmatpush.bf16.msra.mxu0 %v4762
  %5383 = vmatpush.bf16.msra.mxu0 %v4761
  %5384 = vmatpush.bf16.msra.mxu0 %v4760
  %5385 = vmatpush.bf16.msra.mxu0 %v4759
  %5386 = vmatpush.bf16.msra.mxu0 %v4758
  %5387 = vmatpush.bf16.msra.mxu0 %v4757
  %5388 = vmatpush.bf16.msra.mxu0 %v4756
  %5389 = vmatpush.bf16.msra.mxu0 %v4755
  %5390 = vmatmul.bf16.gmra.mxu0 %v3022
  %v5391 = vpop.f32.mrf.mxu0
  %v5392 = vadd.f32 %v5379, %v5391
  %v5393 = vpop.f32.mrf.mxu0
  %5394 = vdwg.mxu0
  %5395 = vmatpush.bf16.msra.mxu0 %v4770
  %5396 = vmatpush.bf16.msra.mxu0 %v4769
  %5397 = vmatpush.bf16.msra.mxu0 %v4768
  %5398 = vmatpush.bf16.msra.mxu0 %v4767
  %5399 = vmatpush.bf16.msra.mxu0 %v4766
  %5400 = vmatpush.bf16.msra.mxu0 %v4765
  %5401 = vmatpush.bf16.msra.mxu0 %v4764
  %5402 = vmatpush.bf16.msra.mxu0 %v4763
  %5403 = vmatmul.bf16.gmra.mxu0 %v3023
  %v5404 = vpop.f32.mrf.mxu0
  %v5405 = vadd.f32 %v5392, %v5404
  %v5406 = vpop.f32.mrf.mxu0
  %5407 = vdwg.mxu0
  %5408 = vmatpush.bf16.msra.mxu0 %v4778
  %5409 = vmatpush.bf16.msra.mxu0 %v4777
  %5410 = vmatpush.bf16.msra.mxu0 %v4776
  %5411 = vmatpush.bf16.msra.mxu0 %v4775
  %5412 = vmatpush.bf16.msra.mxu0 %v4774
  %5413 = vmatpush.bf16.msra.mxu0 %v4773
  %5414 = vmatpush.bf16.msra.mxu0 %v4772
  %5415 = vmatpush.bf16.msra.mxu0 %v4771
  %5416 = vmatmul.bf16.gmra.mxu0 %v3024
  %v5417 = vpop.f32.mrf.mxu0
  %v5418 = vadd.f32 %v5405, %v5417
  %v5419 = vpop.f32.mrf.mxu0
  %5420 = vdwg.mxu0
  %5421 = vmatpush.bf16.msra.mxu0 %v4786
  %5422 = vmatpush.bf16.msra.mxu0 %v4785
  %5423 = vmatpush.bf16.msra.mxu0 %v4784
  %5424 = vmatpush.bf16.msra.mxu0 %v4783
  %5425 = vmatpush.bf16.msra.mxu0 %v4782
  %5426 = vmatpush.bf16.msra.mxu0 %v4781
  %5427 = vmatpush.bf16.msra.mxu0 %v4780
  %5428 = vmatpush.bf16.msra.mxu0 %v4779
  %5429 = vmatmul.bf16.gmra.mxu0 %v3025
  %v5430 = vpop.f32.mrf.mxu0
  %v5431 = vadd.f32 %v5418, %v5430
  %v5432 = vpop.f32.mrf.mxu0
  %5433 = vdwg.mxu0
  %5434 = vmatpush.bf16.msra.mxu0 %v4794
  %5435 = vmatpush.bf16.msra.mxu0 %v4793
  %5436 = vmatpush.bf16.msra.mxu0 %v4792
  %5437 = vmatpush.bf16.msra.mxu0 %v4791
  %5438 = vmatpush.bf16.msra.mxu0 %v4790
  %5439 = vmatpush.bf16.msra.mxu0 %v4789
  %5440 = vmatpush.bf16.msra.mxu0 %v4788
  %5441 = vmatpush.bf16.msra.mxu0 %v4787
  %5442 = vmatmul.bf16.gmra.mxu0 %v3026
  %v5443 = vpop.f32.mrf.mxu0
  %v5444 = vadd.f32 %v5431, %v5443
  %v5445 = vpop.f32.mrf.mxu0
  %5446 = vdwg.mxu0
  %5447 = vmatpush.bf16.msra.mxu0 %v4802
  %5448 = vmatpush.bf16.msra.mxu0 %v4801
  %5449 = vmatpush.bf16.msra.mxu0 %v4800
  %5450 = vmatpush.bf16.msra.mxu0 %v4799
  %5451 = vmatpush.bf16.msra.mxu0 %v4798
  %5452 = vmatpush.bf16.msra.mxu0 %v4797
  %5453 = vmatpush.bf16.msra.mxu0 %v4796
  %5454 = vmatpush.bf16.msra.mxu0 %v4795
  %5455 = vmatmul.bf16.gmra.mxu0 %v3027
  %v5456 = vpop.f32.mrf.mxu0
  %v5457 = vadd.f32 %v5444, %v5456
  %v5458 = vpop.f32.mrf.mxu0
  %5459 = vdwg.mxu0
  %5460 = vmatpush.bf16.msra.mxu0 %v4810
  %5461 = vmatpush.bf16.msra.mxu0 %v4809
  %5462 = vmatpush.bf16.msra.mxu0 %v4808
  %5463 = vmatpush.bf16.msra.mxu0 %v4807
  %5464 = vmatpush.bf16.msra.mxu0 %v4806
  %5465 = vmatpush.bf16.msra.mxu0 %v4805
  %5466 = vmatpush.bf16.msra.mxu0 %v4804
  %5467 = vmatpush.bf16.msra.mxu0 %v4803
  %5468 = vmatmul.bf16.gmra.mxu0 %v3028
  %v5469 = vpop.f32.mrf.mxu0
  %v5470 = vadd.f32 %v5457, %v5469
  %v5471 = vpop.f32.mrf.mxu0
  %5472 = vdwg.mxu0
  %5473 = vmatpush.bf16.msra.mxu0 %v4818
  %5474 = vmatpush.bf16.msra.mxu0 %v4817
  %5475 = vmatpush.bf16.msra.mxu0 %v4816
  %5476 = vmatpush.bf16.msra.mxu0 %v4815
  %5477 = vmatpush.bf16.msra.mxu0 %v4814
  %5478 = vmatpush.bf16.msra.mxu0 %v4813
  %5479 = vmatpush.bf16.msra.mxu0 %v4812
  %5480 = vmatpush.bf16.msra.mxu0 %v4811
  %5481 = vmatmul.bf16.gmra.mxu0 %v3029
  %v5482 = vpop.f32.mrf.mxu0
  %v5483 = vadd.f32 %v5470, %v5482
  %v5484 = vpop.f32.mrf.mxu0
  %5485 = vdwg.mxu0
  %5486 = vmatpush.bf16.msra.mxu0 %v4826
  %5487 = vmatpush.bf16.msra.mxu0 %v4825
  %5488 = vmatpush.bf16.msra.mxu0 %v4824
  %5489 = vmatpush.bf16.msra.mxu0 %v4823
  %5490 = vmatpush.bf16.msra.mxu0 %v4822
  %5491 = vmatpush.bf16.msra.mxu0 %v4821
  %5492 = vmatpush.bf16.msra.mxu0 %v4820
  %5493 = vmatpush.bf16.msra.mxu0 %v4819
  %5494 = vmatmul.bf16.gmra.mxu0 %v3030
  %v5495 = vpop.f32.mrf.mxu0
  %v5496 = vadd.f32 %v5483, %v5495
  %v5497 = vpop.f32.mrf.mxu0
  %5498 = vdwg.mxu0
  %5499 = vst [vmem:[%s5] sm:$0xff] %v5496
  // Predicated region
  $region22: #{convnet3_forward.1} parent=0 // pred_check
    _
  $region23: #{convnet3_forward.1} parent=0 // pred_check_branch
    %5501 = sbr.rel (0) target = $region25
  $region24: #{convnet3_forward.1} parent=0 // pred_region
    _
  $region25: #{convnet3_forward.1} parent=0 // pred_fallthru
    _
  // Predicated region
  $region26: #{convnet3_forward.1} parent=0 // pred_check
    _
  $region27: #{convnet3_forward.1} parent=0 // pred_check_branch
    %5503 = sbr.rel (0) target = $region29
  $region28: #{convnet3_forward.1} parent=0 // pred_region
    _
  $region29: #{convnet3_forward.1} parent=0 // pred_fallthru
    _

</llo_original>
